<compile_context>
chip_gen: v6e
topology: v6e:2x2x1
jax: 0.10.0
libtpu: 0.0.40
codegen_flags: <defaults>
</compile_context>

<pallas_src>
import functools

import jax
import jax.numpy as jnp
import numpy as np
from jax.experimental import pallas as pl
from jax.experimental.pallas import tpu as pltpu

# ------------------------- model config (scaled down) -------------------------
STEM_W = 16
STAGE_WIDTHS = [16, 32]          # one stride-2 Y-block per stage
GROUP_WIDTH = 8
SE_RATIO = 0.25
BN_EPS = 1e-5

VMEM_LIMIT = 32 * 1024 * 1024    # safe on v5e/v6e (128 MiB) and v7x (64 MiB physical)

# tap order t = (dy+1)*3 + (dx+1) == torch weight (ki, kj) row-major
_TAPS = [(dy, dx) for dy in (-1, 0, 1) for dx in (-1, 0, 1)]


# ------------------------------ Pallas kernels --------------------------------
def _stem_kernel(xt_ref, wt_ref, aff_ref, o_ref, *, m):
    # 3x3 stride-2 pad-1 conv as 9 accumulated GEMM taps + folded BN + ReLU.
    # xt_ref: (1, 9m, 3) bf16 tap-row layout; wt_ref: (9, 3, COUT) bf16; aff: (2, COUT) f32.
    cout = wt_ref.shape[2]
    acc = jnp.zeros((m, cout), jnp.float32)
    for t in range(9):
        acc = acc + jnp.dot(xt_ref[0, t * m:(t + 1) * m, :], wt_ref[t],
                            preferred_element_type=jnp.float32)
    y = jnp.maximum(acc * aff_ref[0:1, :] + aff_ref[1:2, :], 0.0)
    o_ref[0] = y.astype(o_ref.dtype)


def _yblock_kernel(xt_ref, mask_ref, wa_ref, affa_ref, wbt_ref, affb_ref,
                   w1_ref, b1_ref, w2_ref, b2_ref,
                   wc_ref, affc_ref, wp_ref, affp_ref,
                   *rest, m, with_head):
    # Fully fused RegNet-Y block; optionally also the GAP+BN1d+L2-normalize head.
    # xt_ref: (1, 9m, Cin) bf16, rows [t*m:(t+1)*m) = block input at tap t's stride-2
    #         source pixels (zeros where the 3x3 pad-1 window reads padding).
    # mask_ref: (9m, 1) f32, zeros on rows whose tap reads padding (pad applies to the
    #         'a' activation, not to x, so relu(shift_a) at x==0 rows must be zeroed).
    if with_head:
        head_ref, o_ref = rest
    else:
        (o_ref,) = rest

    wb = wbt_ref.shape[2]

    # a (1x1 conv + BN + ReLU), then grouped 3x3 stride-2 conv as 9 accumulated
    # full-width GEMMs with block-diagonal per-tap weights (lane-dense, no per-group loop).
    accb = jnp.zeros((m, wb), jnp.float32)
    for t, (dy, dx) in enumerate(_TAPS):
        xt_t = xt_ref[0, t * m:(t + 1) * m, :]                           # (m, Cin) bf16
        a_t = jnp.dot(xt_t, wa_ref[...], preferred_element_type=jnp.float32)
        a_t = jnp.maximum(a_t * affa_ref[0:1, :] + affa_ref[1:2, :], 0.0)
        if dy == -1 or dx == -1:                                         # only these taps pad
            a_t = a_t * mask_ref[t * m:(t + 1) * m, :]
        accb = accb + jnp.dot(a_t.astype(jnp.bfloat16), wbt_ref[t],
                              preferred_element_type=jnp.float32)
    b = jnp.maximum(accb * affb_ref[0:1, :] + affb_ref[1:2, :], 0.0)     # (m, WB) f32

    # SE: GAP -> fc1 -> ReLU -> fc2 -> sigmoid -> per-channel gate (bf16 GEMMs, f32 epi).
    pooled = jnp.mean(b, axis=0, keepdims=True)                          # (1, WB)
    h = jnp.dot(pooled.astype(jnp.bfloat16), w1_ref[...],
                preferred_element_type=jnp.float32) + b1_ref[...]
    h = jnp.maximum(h, 0.0)
    gate = jax.nn.sigmoid(jnp.dot(h.astype(jnp.bfloat16), w2_ref[...],
                                  preferred_element_type=jnp.float32) + b2_ref[...])
    # NOTE: gated activation is recast to bf16 before the MXU (small bf16-level deviation
    # vs. the f32 PyTorch reference - accepted tolerance).
    bg = (b * gate).astype(jnp.bfloat16)                                 # (m, WB)

    # c: 1x1 conv + folded BN (no activation).
    yc = jnp.dot(bg, wc_ref[...], preferred_element_type=jnp.float32)
    yc = yc * affc_ref[0:1, :] + affc_ref[1:2, :]                        # (m, COUT)

    # shortcut: stride-2 1x1 projection + BN; stride-2 pixels == centre tap rows [4m, 5m).
    sc = jnp.dot(xt_ref[0, 4 * m:5 * m, :], wp_ref[...],
                 preferred_element_type=jnp.float32)
    sc = sc * affp_ref[0:1, :] + affp_ref[1:2, :]

    out = jnp.maximum(yc + sc, 0.0)                                      # (m, COUT) f32

    if with_head:
        # Fused head: GAP + eval BatchNorm1d + F.normalize (L2, eps=1e-12).
        pooled2 = jnp.mean(out, axis=0, keepdims=True)                   # (1, COUT)
        ybn = (pooled2 - head_ref[2:3, :]) * jax.lax.rsqrt(head_ref[3:4, :] + BN_EPS) \
            * head_ref[0:1, :] + head_ref[1:2, :]
        nrm = jnp.sqrt(jnp.sum(ybn * ybn, axis=1, keepdims=True))
        o_ref[0] = ybn / jnp.maximum(nrm, 1e-12)
    else:
        o_ref[0] = out.astype(o_ref.dtype)


# ------------------------------ pallas_call wrappers ----------------------------
def stem_apply(x_taps, stem, m):
    N, m9, cin = x_taps.shape
    cout = stem["wtap"].shape[2]
    cost = pl.CostEstimate(
        flops=2 * N * m * 9 * cin * cout, transcendentals=0,
        bytes_accessed=int(x_taps.size) * 2 + int(stem["wtap"].size) * 2
        + int(stem["aff"].size) * 4 + N * m * cout * 2)
    return pl.pallas_call(
        functools.partial(_stem_kernel, m=m),
        out_shape=jax.ShapeDtypeStruct((N, m, cout), jnp.bfloat16),
        grid=(N,),
        in_specs=[
            pl.BlockSpec((1, m9, cin), lambda n: (n, 0, 0)),
            pl.BlockSpec(stem["wtap"].shape, lambda n: (0, 0, 0)),
            pl.BlockSpec(stem["aff"].shape, lambda n: (0, 0)),
        ],
        out_specs=pl.BlockSpec((1, m, cout), lambda n: (n, 0, 0)),
        compiler_params=pltpu.CompilerParams(
            dimension_semantics=("parallel",), vmem_limit_bytes=VMEM_LIMIT),
        cost_estimate=cost,
    )(x_taps, stem["wtap"], stem["aff"])


def yblock_apply(x_taps, mask, blk, m, head_aff=None):
    N, m9, cin = x_taps.shape
    wb = blk["wa"].shape[1]
    cout = blk["wc"].shape[1]
    se = blk["w1"].shape[1]
    with_head = head_aff is not None

    args = [x_taps, mask, blk["wa"], blk["affa"], blk["wbt"], blk["affb"],
            blk["w1"], blk["b1"], blk["w2"], blk["b2"],
            blk["wc"], blk["affc"], blk["wp"], blk["affp"]]
    in_specs = [pl.BlockSpec((1, m9, cin), lambda n: (n, 0, 0))]
    for a in args[1:]:
        in_specs.append(pl.BlockSpec(
            a.shape, (lambda n: (0, 0)) if a.ndim == 2 else (lambda n: (0, 0, 0))))

    if with_head:
        args.append(head_aff)
        in_specs.append(pl.BlockSpec(head_aff.shape, lambda n: (0, 0)))
        out_shape = jax.ShapeDtypeStruct((N, 1, cout), jnp.float32)
        out_spec = pl.BlockSpec((1, 1, cout), lambda n: (n, 0, 0))
        out_bytes = N * cout * 4
    else:
        out_shape = jax.ShapeDtypeStruct((N, m, cout), jnp.bfloat16)
        out_spec = pl.BlockSpec((1, m, cout), lambda n: (n, 0, 0))
        out_bytes = N * m * cout * 2

    flops = 2 * N * (m9 * cin * wb + 9 * m * wb * wb + m * wb * cout
                     + m * cin * cout + 2 * wb * se)
    bytes_acc = sum(int(a.size) * a.dtype.itemsize for a in args) + out_bytes
    cost = pl.CostEstimate(flops=flops, transcendentals=N * (wb + se),
                           bytes_accessed=bytes_acc)

    out = pl.pallas_call(
        functools.partial(_yblock_kernel, m=m, with_head=with_head),
        out_shape=out_shape, grid=(N,), in_specs=in_specs, out_specs=out_spec,
        compiler_params=pltpu.CompilerParams(
            dimension_semantics=("parallel",), vmem_limit_bytes=VMEM_LIMIT),
        cost_estimate=cost,
    )(*args)
    return out.reshape(N, cout) if with_head else out


# ------------------------------- JAX glue --------------------------------------
def tap_expand(x_nhwc):
    """(N, H, W, C) -> (N, 9*(H//2)*(W//2), C): stride-2 pad-1 3x3 tap-row layout.

    Row (t*m + oy*ow + ox) holds x[n, 2*oy+dy, 2*ox+dx, :] (zeros where padded), with
    t = (dy+1)*3 + (dx+1) matching the torch (ki, kj) weight ordering.  This is the only
    geometric re-layout in the forward and runs as tiny XLA ops in HBM (1-2x traffic).
    """
    N, H, W, C = x_nhwc.shape
    oh, ow = H // 2, W // 2
    xp = jnp.pad(x_nhwc, ((0, 0), (1, 1), (1, 1), (0, 0)))
    slabs = []
    for dy, dx in _TAPS:
        s = jax.lax.slice(xp, (0, 1 + dy, 1 + dx, 0),
                          (N, 1 + dy + H, 1 + dx + W, C), (1, 2, 2, 1))
        slabs.append(s.reshape(N, oh * ow, C))
    return jnp.concatenate(slabs, axis=1)


def tap_pad_mask(oh, ow):
    """(9*oh*ow, 1) f32: 0 on rows whose tap reads the 3x3 pad-1 zero padding, else 1."""
    m = oh * ow
    oy = np.arange(m) // ow
    ox = np.arange(m) % ow
    rows = []
    for dy, dx in _TAPS:
        valid = np.ones(m, np.float32)
        if dy == -1:
            valid = valid * (oy != 0)
        if dx == -1:
            valid = valid * (ox != 0)
        rows.append(valid)
    return jnp.asarray(np.concatenate(rows).reshape(9 * m, 1), jnp.float32)


def regnet_forward(x_nchw, prep):
    x = jnp.transpose(x_nchw, (0, 2, 3, 1)).astype(jnp.bfloat16)         # NCHW -> NHWC
    N, H, W, _ = x.shape
    oh, ow = H // 2, W // 2
    x = stem_apply(tap_expand(x), prep["stem"], oh * ow)                 # (N, oh*ow, STEM_W)
    h, w = oh, ow
    nblk = len(prep["blocks"])
    for i, blk in enumerate(prep["blocks"]):
        c_in = x.shape[-1]
        oh, ow = h // 2, w // 2
        xt = tap_expand(x.reshape(N, h, w, c_in))                        # (N, 9*oh*ow, c_in)
        head = prep["feat_bn"] if i == nblk - 1 else None                # fuse head into last block
        x = yblock_apply(xt, tap_pad_mask(oh, ow), blk, oh * ow, head_aff=head)
        h, w = oh, ow
    return x                                                             # (N, C) f32, L2-normalized


# ------------------------------ parameters --------------------------------------
def init_params(key):
    keys = iter(jax.random.split(key, 64))

    def conv_w(shape, k):
        fan_out = shape[0] * shape[2] * shape[3]     # kaiming fan_out
        return jax.random.normal(k, shape, jnp.float32) * (2.0 / fan_out) ** 0.5

    def bn(c):
        return (jnp.ones(c, jnp.float32), jnp.zeros(c, jnp.float32),
                jnp.zeros(c, jnp.float32), jnp.ones(c, jnp.float32))

    params = {"stem_w": conv_w((STEM_W, 3, 3, 3), next(keys)), "stem_bn": bn(STEM_W)}
    blocks = []
    w_in = STEM_W
    for w_out in STAGE_WIDTHS:
        w_b = w_out
        groups = w_b // GROUP_WIDTH
        se_ch = max(1, int(round(SE_RATIO * w_in)))
        blocks.append({
            "proj_w": conv_w((w_out, w_in, 1, 1), next(keys)), "proj_bn": bn(w_out),
            "a_w": conv_w((w_b, w_in, 1, 1), next(keys)), "a_bn": bn(w_b),
            "b_w": conv_w((w_b, w_b // groups, 3, 3), next(keys)), "b_bn": bn(w_b),
            "se1_w": conv_w((se_ch, w_b, 1, 1), next(keys)),
            "se1_b": jnp.zeros(se_ch, jnp.float32),
            "se2_w": conv_w((w_b, se_ch, 1, 1), next(keys)),
            "se2_b": jnp.zeros(w_b, jnp.float32),
            "c_w": conv_w((w_out, w_b, 1, 1), next(keys)), "c_bn": bn(w_out),
            "groups": groups,
        })
        w_in = w_out
    params["blocks"] = blocks
    params["feat_bn"] = bn(STAGE_WIDTHS[-1])
    return params


def _fold_bn(bn):
    gamma, beta, mean, var = bn
    scale = gamma * jax.lax.rsqrt(var + BN_EPS)
    shift = beta - mean * scale
    return jnp.stack([scale, shift]).astype(jnp.float32)                 # (2, C)


def _conv1x1_mat(w):                                                     # (cout,cin,1,1)->(cin,cout)
    return jnp.transpose(w[:, :, 0, 0], (1, 0)).astype(jnp.bfloat16)


def _conv3x3_taps(w):                                                    # (cout,cin,3,3)->(9,cin,cout)
    return jnp.transpose(w, (2, 3, 1, 0)).reshape(9, w.shape[1], w.shape[0])


def _grouped_taps_blockdiag(w, groups):
    # grouped (cout, cin_g, 3, 3) -> per-tap block-diagonal (9, cin, cout): one full-width
    # GEMM per tap inside the kernel (no per-group 8-column matmuls, no regroup transpose).
    cout, cin_g = w.shape[0], w.shape[1]
    cout_g = cout // groups
    cin = cin_g * groups
    taps = _conv3x3_taps(w)                                              # (9, cin_g, cout)
    bd = jnp.zeros((9, cin, cout), jnp.float32)
    for g in range(groups):
        bd = bd.at[:, g * cin_g:(g + 1) * cin_g, g * cout_g:(g + 1) * cout_g].set(
            taps[:, :, g * cout_g:(g + 1) * cout_g])
    return bd.astype(jnp.bfloat16)


def prepare_params(params):
    # Hoisted weight re-layout + eval-mode BN folding: done once, outside the forward path.
    prep = {
        "stem": {"wtap": _conv3x3_taps(params["stem_w"]).astype(jnp.bfloat16),
                 "aff": _fold_bn(params["stem_bn"])},
        "feat_bn": jnp.stack(params["feat_bn"]).astype(jnp.float32),     # (4, C) gamma,beta,mean,var
    }
    blocks = []
    for p in params["blocks"]:
        wb = p["b_w"].shape[0]
        se_ch = p["se1_w"].shape[0]
        blocks.append({
            "wa": _conv1x1_mat(p["a_w"]), "affa": _fold_bn(p["a_bn"]),
            "wbt": _grouped_taps_blockdiag(p["b_w"], p["groups"]), "affb": _fold_bn(p["b_bn"]),
            "w1": jnp.transpose(p["se1_w"][:, :, 0, 0], (1, 0)).astype(jnp.bfloat16),
            "b1": p["se1_b"].reshape(1, se_ch).astype(jnp.float32),
            "w2": jnp.transpose(p["se2_w"][:, :, 0, 0], (1, 0)).astype(jnp.bfloat16),
            "b2": p["se2_b"].reshape(1, wb).astype(jnp.float32),
            "wc": _conv1x1_mat(p["c_w"]), "affc": _fold_bn(p["c_bn"]),
            "wp": _conv1x1_mat(p["proj_w"]), "affp": _fold_bn(p["proj_bn"]),
        })
    prep["blocks"] = blocks
    return prep


# ----------------------------------- main ---------------------------------------
if __name__ == "__main__":
    key = jax.random.PRNGKey(0)
    pkey, xkey = jax.random.split(key)
    params = init_params(pkey)
    prep = prepare_params(params)                          # once per parameter set
    x = jax.random.normal(xkey, (2, 3, 32, 32), jnp.float32)   # PyTorch-style NCHW

    fwd = jax.jit(lambda inp: regnet_forward(inp, prep))       # prep folded as constants
    out = jax.block_until_ready(fwd(x))

    assert out.shape == (2, STAGE_WIDTHS[-1])
    # F.normalize output must be (near) unit-norm rows
    norms = jnp.linalg.norm(out, axis=1)
    assert bool(jnp.all(jnp.abs(norms - 1.0) < 1e-3))
    print("KERNEL_OK")
</pallas_src>

<mosaic_0001>
module attributes {stable_mosaic.version = 11 : i64} {
  func.func @_stem_kernel(%arg0: i32, %arg1: memref<1x2304x3xbf16, #tpu.memory_space<vmem>>, %arg2: memref<9x3x16xbf16, #tpu.memory_space<vmem>>, %arg3: memref<2x16xf32, #tpu.memory_space<vmem>>, %arg4: memref<1x256x16xbf16, #tpu.memory_space<vmem>>) attributes {dimension_semantics = [#tpu.dimension_semantics<parallel>], iteration_bounds = array<i64: 2>, scalar_prefetch = 0 : i64, scratch_operands = 0 : i64, tpu.core_type = #tpu.core_type<tc>, window_params = [{transform_indices = @transform_0, window_bounds = array<i64: 1, 2304, 3>}, {pipeline_mode = #tpu.pipeline_mode<synchronous>, transform_indices = @transform_1, window_bounds = array<i64: 9, 3, 16>}, {pipeline_mode = #tpu.pipeline_mode<synchronous>, transform_indices = @transform_2, window_bounds = array<i64: 2, 16>}, {transform_indices = @transform_3, window_bounds = array<i64: 1, 256, 16>}]} {
    %cst = arith.constant 0.000000e+00 : f32
    %0 = vector.broadcast %cst : f32 to vector<256x16xf32>
    %c0 = arith.constant 0 : index
    %c0_0 = arith.constant 0 : index
    %c0_1 = arith.constant 0 : index
    %1 = vector.load %arg1[%c0, %c0_0, %c0_1] : memref<1x2304x3xbf16, #tpu.memory_space<vmem>>, vector<1x256x3xbf16>
    %2 = vector.shape_cast %1 : vector<1x256x3xbf16> to vector<256x3xbf16>
    %c0_2 = arith.constant 0 : index
    %c0_3 = arith.constant 0 : index
    %c0_4 = arith.constant 0 : index
    %3 = vector.load %arg2[%c0_2, %c0_3, %c0_4] : memref<9x3x16xbf16, #tpu.memory_space<vmem>>, vector<1x3x16xbf16>
    %4 = vector.shape_cast %3 : vector<1x3x16xbf16> to vector<3x16xbf16>
    %cst_5 = arith.constant dense<0.000000e+00> : vector<256x16xf32>
    %5 = tpu.matmul %2, %4, %cst_5 {dimension_numbers = #tpu.dot_dimension_numbers<[1], [0], [0], [1], [0, 0, 1, 1], [], []>} : vector<256x3xbf16>, vector<3x16xbf16>, vector<256x16xf32> -> vector<256x16xf32>
    %6 = arith.addf %0, %5 : vector<256x16xf32>
    %c0_6 = arith.constant 0 : index
    %c256 = arith.constant 256 : index
    %c0_7 = arith.constant 0 : index
    %7 = vector.load %arg1[%c0_6, %c256, %c0_7] : memref<1x2304x3xbf16, #tpu.memory_space<vmem>>, vector<1x256x3xbf16>
    %8 = vector.shape_cast %7 : vector<1x256x3xbf16> to vector<256x3xbf16>
    %c1 = arith.constant 1 : index
    %c0_8 = arith.constant 0 : index
    %c0_9 = arith.constant 0 : index
    %9 = vector.load %arg2[%c1, %c0_8, %c0_9] : memref<9x3x16xbf16, #tpu.memory_space<vmem>>, vector<1x3x16xbf16>
    %10 = vector.shape_cast %9 : vector<1x3x16xbf16> to vector<3x16xbf16>
    %cst_10 = arith.constant dense<0.000000e+00> : vector<256x16xf32>
    %11 = tpu.matmul %8, %10, %cst_10 {dimension_numbers = #tpu.dot_dimension_numbers<[1], [0], [0], [1], [0, 0, 1, 1], [], []>} : vector<256x3xbf16>, vector<3x16xbf16>, vector<256x16xf32> -> vector<256x16xf32>
    %12 = arith.addf %6, %11 : vector<256x16xf32>
    %c0_11 = arith.constant 0 : index
    %c512 = arith.constant 512 : index
    %c0_12 = arith.constant 0 : index
    %13 = vector.load %arg1[%c0_11, %c512, %c0_12] : memref<1x2304x3xbf16, #tpu.memory_space<vmem>>, vector<1x256x3xbf16>
    %14 = vector.shape_cast %13 : vector<1x256x3xbf16> to vector<256x3xbf16>
    %c2 = arith.constant 2 : index
    %c0_13 = arith.constant 0 : index
    %c0_14 = arith.constant 0 : index
    %15 = vector.load %arg2[%c2, %c0_13, %c0_14] : memref<9x3x16xbf16, #tpu.memory_space<vmem>>, vector<1x3x16xbf16>
    %16 = vector.shape_cast %15 : vector<1x3x16xbf16> to vector<3x16xbf16>
    %cst_15 = arith.constant dense<0.000000e+00> : vector<256x16xf32>
    %17 = tpu.matmul %14, %16, %cst_15 {dimension_numbers = #tpu.dot_dimension_numbers<[1], [0], [0], [1], [0, 0, 1, 1], [], []>} : vector<256x3xbf16>, vector<3x16xbf16>, vector<256x16xf32> -> vector<256x16xf32>
    %18 = arith.addf %12, %17 : vector<256x16xf32>
    %c0_16 = arith.constant 0 : index
    %c768 = arith.constant 768 : index
    %c0_17 = arith.constant 0 : index
    %19 = vector.load %arg1[%c0_16, %c768, %c0_17] : memref<1x2304x3xbf16, #tpu.memory_space<vmem>>, vector<1x256x3xbf16>
    %20 = vector.shape_cast %19 : vector<1x256x3xbf16> to vector<256x3xbf16>
    %c3 = arith.constant 3 : index
    %c0_18 = arith.constant 0 : index
    %c0_19 = arith.constant 0 : index
    %21 = vector.load %arg2[%c3, %c0_18, %c0_19] : memref<9x3x16xbf16, #tpu.memory_space<vmem>>, vector<1x3x16xbf16>
    %22 = vector.shape_cast %21 : vector<1x3x16xbf16> to vector<3x16xbf16>
    %cst_20 = arith.constant dense<0.000000e+00> : vector<256x16xf32>
    %23 = tpu.matmul %20, %22, %cst_20 {dimension_numbers = #tpu.dot_dimension_numbers<[1], [0], [0], [1], [0, 0, 1, 1], [], []>} : vector<256x3xbf16>, vector<3x16xbf16>, vector<256x16xf32> -> vector<256x16xf32>
    %24 = arith.addf %18, %23 : vector<256x16xf32>
    %c0_21 = arith.constant 0 : index
    %c1024 = arith.constant 1024 : index
    %c0_22 = arith.constant 0 : index
    %25 = vector.load %arg1[%c0_21, %c1024, %c0_22] : memref<1x2304x3xbf16, #tpu.memory_space<vmem>>, vector<1x256x3xbf16>
    %26 = vector.shape_cast %25 : vector<1x256x3xbf16> to vector<256x3xbf16>
    %c4 = arith.constant 4 : index
    %c0_23 = arith.constant 0 : index
    %c0_24 = arith.constant 0 : index
    %27 = vector.load %arg2[%c4, %c0_23, %c0_24] : memref<9x3x16xbf16, #tpu.memory_space<vmem>>, vector<1x3x16xbf16>
    %28 = vector.shape_cast %27 : vector<1x3x16xbf16> to vector<3x16xbf16>
    %cst_25 = arith.constant dense<0.000000e+00> : vector<256x16xf32>
    %29 = tpu.matmul %26, %28, %cst_25 {dimension_numbers = #tpu.dot_dimension_numbers<[1], [0], [0], [1], [0, 0, 1, 1], [], []>} : vector<256x3xbf16>, vector<3x16xbf16>, vector<256x16xf32> -> vector<256x16xf32>
    %30 = arith.addf %24, %29 : vector<256x16xf32>
    %c0_26 = arith.constant 0 : index
    %c1280 = arith.constant 1280 : index
    %c0_27 = arith.constant 0 : index
    %31 = vector.load %arg1[%c0_26, %c1280, %c0_27] : memref<1x2304x3xbf16, #tpu.memory_space<vmem>>, vector<1x256x3xbf16>
    %32 = vector.shape_cast %31 : vector<1x256x3xbf16> to vector<256x3xbf16>
    %c5 = arith.constant 5 : index
    %c0_28 = arith.constant 0 : index
    %c0_29 = arith.constant 0 : index
    %33 = vector.load %arg2[%c5, %c0_28, %c0_29] : memref<9x3x16xbf16, #tpu.memory_space<vmem>>, vector<1x3x16xbf16>
    %34 = vector.shape_cast %33 : vector<1x3x16xbf16> to vector<3x16xbf16>
    %cst_30 = arith.constant dense<0.000000e+00> : vector<256x16xf32>
    %35 = tpu.matmul %32, %34, %cst_30 {dimension_numbers = #tpu.dot_dimension_numbers<[1], [0], [0], [1], [0, 0, 1, 1], [], []>} : vector<256x3xbf16>, vector<3x16xbf16>, vector<256x16xf32> -> vector<256x16xf32>
    %36 = arith.addf %30, %35 : vector<256x16xf32>
    %c0_31 = arith.constant 0 : index
    %c1536 = arith.constant 1536 : index
    %c0_32 = arith.constant 0 : index
    %37 = vector.load %arg1[%c0_31, %c1536, %c0_32] : memref<1x2304x3xbf16, #tpu.memory_space<vmem>>, vector<1x256x3xbf16>
    %38 = vector.shape_cast %37 : vector<1x256x3xbf16> to vector<256x3xbf16>
    %c6 = arith.constant 6 : index
    %c0_33 = arith.constant 0 : index
    %c0_34 = arith.constant 0 : index
    %39 = vector.load %arg2[%c6, %c0_33, %c0_34] : memref<9x3x16xbf16, #tpu.memory_space<vmem>>, vector<1x3x16xbf16>
    %40 = vector.shape_cast %39 : vector<1x3x16xbf16> to vector<3x16xbf16>
    %cst_35 = arith.constant dense<0.000000e+00> : vector<256x16xf32>
    %41 = tpu.matmul %38, %40, %cst_35 {dimension_numbers = #tpu.dot_dimension_numbers<[1], [0], [0], [1], [0, 0, 1, 1], [], []>} : vector<256x3xbf16>, vector<3x16xbf16>, vector<256x16xf32> -> vector<256x16xf32>
    %42 = arith.addf %36, %41 : vector<256x16xf32>
    %c0_36 = arith.constant 0 : index
    %c1792 = arith.constant 1792 : index
    %c0_37 = arith.constant 0 : index
    %43 = vector.load %arg1[%c0_36, %c1792, %c0_37] : memref<1x2304x3xbf16, #tpu.memory_space<vmem>>, vector<1x256x3xbf16>
    %44 = vector.shape_cast %43 : vector<1x256x3xbf16> to vector<256x3xbf16>
    %c7 = arith.constant 7 : index
    %c0_38 = arith.constant 0 : index
    %c0_39 = arith.constant 0 : index
    %45 = vector.load %arg2[%c7, %c0_38, %c0_39] : memref<9x3x16xbf16, #tpu.memory_space<vmem>>, vector<1x3x16xbf16>
    %46 = vector.shape_cast %45 : vector<1x3x16xbf16> to vector<3x16xbf16>
    %cst_40 = arith.constant dense<0.000000e+00> : vector<256x16xf32>
    %47 = tpu.matmul %44, %46, %cst_40 {dimension_numbers = #tpu.dot_dimension_numbers<[1], [0], [0], [1], [0, 0, 1, 1], [], []>} : vector<256x3xbf16>, vector<3x16xbf16>, vector<256x16xf32> -> vector<256x16xf32>
    %48 = arith.addf %42, %47 : vector<256x16xf32>
    %c0_41 = arith.constant 0 : index
    %c2048 = arith.constant 2048 : index
    %c0_42 = arith.constant 0 : index
    %49 = vector.load %arg1[%c0_41, %c2048, %c0_42] : memref<1x2304x3xbf16, #tpu.memory_space<vmem>>, vector<1x256x3xbf16>
    %50 = vector.shape_cast %49 : vector<1x256x3xbf16> to vector<256x3xbf16>
    %c8 = arith.constant 8 : index
    %c0_43 = arith.constant 0 : index
    %c0_44 = arith.constant 0 : index
    %51 = vector.load %arg2[%c8, %c0_43, %c0_44] : memref<9x3x16xbf16, #tpu.memory_space<vmem>>, vector<1x3x16xbf16>
    %52 = vector.shape_cast %51 : vector<1x3x16xbf16> to vector<3x16xbf16>
    %cst_45 = arith.constant dense<0.000000e+00> : vector<256x16xf32>
    %53 = tpu.matmul %50, %52, %cst_45 {dimension_numbers = #tpu.dot_dimension_numbers<[1], [0], [0], [1], [0, 0, 1, 1], [], []>} : vector<256x3xbf16>, vector<3x16xbf16>, vector<256x16xf32> -> vector<256x16xf32>
    %54 = arith.addf %48, %53 : vector<256x16xf32>
    %c0_46 = arith.constant 0 : index
    %c0_47 = arith.constant 0 : index
    %55 = vector.load %arg3[%c0_46, %c0_47] : memref<2x16xf32, #tpu.memory_space<vmem>>, vector<1x16xf32>
    %56 = vector.broadcast %55 : vector<1x16xf32> to vector<256x16xf32>
    %57 = arith.mulf %54, %56 : vector<256x16xf32>
    %c1_48 = arith.constant 1 : index
    %c0_49 = arith.constant 0 : index
    %58 = vector.load %arg3[%c1_48, %c0_49] : memref<2x16xf32, #tpu.memory_space<vmem>>, vector<1x16xf32>
    %59 = vector.broadcast %58 : vector<1x16xf32> to vector<256x16xf32>
    %60 = arith.addf %57, %59 : vector<256x16xf32>
    %cst_50 = arith.constant 0.000000e+00 : f32
    %61 = vector.broadcast %cst_50 : f32 to vector<256x16xf32>
    %62 = arith.maximumf %60, %61 : vector<256x16xf32>
    %63 = arith.truncf %62 : vector<256x16xf32> to vector<256x16xbf16>
    %c0_51 = arith.constant 0 : index
    %c0_52 = arith.constant 0 : index
    %c0_53 = arith.constant 0 : index
    %64 = vector.load %arg4[%c0_51, %c0_52, %c0_53] : memref<1x256x16xbf16, #tpu.memory_space<vmem>>, vector<1x256x16xbf16>
    %65 = vector.shape_cast %64 : vector<1x256x16xbf16> to vector<256x16xbf16>
    %66 = vector.shape_cast %63 : vector<256x16xbf16> to vector<1x256x16xbf16>
    tpu.vector_store %arg4[%c0_51, %c0_52, %c0_53], %66 {strides = array<i32>} : memref<1x256x16xbf16, #tpu.memory_space<vmem>>, vector<1x256x16xbf16>,
    return
  }
  func.func @transform_0(%arg0: i32) -> (i32, i32, i32) {
    %c0_i32 = arith.constant 0 : i32
    %c0_i32_0 = arith.constant 0 : i32
    %c0_i32_1 = arith.constant 0 : i32
    return %arg0, %c0_i32, %c0_i32_0 : i32, i32, i32
  }
  func.func @transform_1(%arg0: i32) -> (i32, i32, i32) {
    %c0_i32 = arith.constant 0 : i32
    %c0_i32_0 = arith.constant 0 : i32
    %c0_i32_1 = arith.constant 0 : i32
    %c0_i32_2 = arith.constant 0 : i32
    return %c0_i32, %c0_i32_0, %c0_i32_1 : i32, i32, i32
  }
  func.func @transform_2(%arg0: i32) -> (i32, i32) {
    %c0_i32 = arith.constant 0 : i32
    %c0_i32_0 = arith.constant 0 : i32
    %c0_i32_1 = arith.constant 0 : i32
    return %c0_i32, %c0_i32_0 : i32, i32
  }
  func.func @transform_3(%arg0: i32) -> (i32, i32, i32) {
    %c0_i32 = arith.constant 0 : i32
    %c0_i32_0 = arith.constant 0 : i32
    %c0_i32_1 = arith.constant 0 : i32
    return %arg0, %c0_i32, %c0_i32_0 : i32, i32, i32
  }
}

module attributes {stable_mosaic.version = 11 : i64} {
  func.func @_yblock_kernel(%arg0: i32, %arg1: memref<1x576x16xbf16, #tpu.memory_space<vmem>>, %arg2: memref<576x1xf32, #tpu.memory_space<vmem>>, %arg3: memref<16x16xbf16, #tpu.memory_space<vmem>>, %arg4: memref<2x16xf32, #tpu.memory_space<vmem>>, %arg5: memref<9x16x16xbf16, #tpu.memory_space<vmem>>, %arg6: memref<2x16xf32, #tpu.memory_space<vmem>>, %arg7: memref<16x4xbf16, #tpu.memory_space<vmem>>, %arg8: memref<1x4xf32, #tpu.memory_space<vmem>>, %arg9: memref<4x16xbf16, #tpu.memory_space<vmem>>, %arg10: memref<1x16xf32, #tpu.memory_space<vmem>>, %arg11: memref<16x16xbf16, #tpu.memory_space<vmem>>, %arg12: memref<2x16xf32, #tpu.memory_space<vmem>>, %arg13: memref<16x16xbf16, #tpu.memory_space<vmem>>, %arg14: memref<2x16xf32, #tpu.memory_space<vmem>>, %arg15: memref<1x64x16xbf16, #tpu.memory_space<vmem>>) attributes {dimension_semantics = [#tpu.dimension_semantics<parallel>], iteration_bounds = array<i64: 2>, scalar_prefetch = 0 : i64, scratch_operands = 0 : i64, tpu.core_type = #tpu.core_type<tc>, window_params = [{transform_indices = @transform_0, window_bounds = array<i64: 1, 576, 16>}, {pipeline_mode = #tpu.pipeline_mode<synchronous>, transform_indices = @transform_1, window_bounds = array<i64: 576, 1>}, {pipeline_mode = #tpu.pipeline_mode<synchronous>, transform_indices = @transform_2, window_bounds = array<i64: 16, 16>}, {pipeline_mode = #tpu.pipeline_mode<synchronous>, transform_indices = @transform_3, window_bounds = array<i64: 2, 16>}, {pipeline_mode = #tpu.pipeline_mode<synchronous>, transform_indices = @transform_4, window_bounds = array<i64: 9, 16, 16>}, {pipeline_mode = #tpu.pipeline_mode<synchronous>, transform_indices = @transform_5, window_bounds = array<i64: 2, 16>}, {pipeline_mode = #tpu.pipeline_mode<synchronous>, transform_indices = @transform_6, window_bounds = array<i64: 16, 4>}, {pipeline_mode = #tpu.pipeline_mode<synchronous>, transform_indices = @transform_7, window_bounds = array<i64: 1, 4>}, {pipeline_mode = #tpu.pipeline_mode<synchronous>, transform_indices = @transform_8, window_bounds = array<i64: 4, 16>}, {pipeline_mode = #tpu.pipeline_mode<synchronous>, transform_indices = @transform_9, window_bounds = array<i64: 1, 16>}, {pipeline_mode = #tpu.pipeline_mode<synchronous>, transform_indices = @transform_10, window_bounds = array<i64: 16, 16>}, {pipeline_mode = #tpu.pipeline_mode<synchronous>, transform_indices = @transform_11, window_bounds = array<i64: 2, 16>}, {pipeline_mode = #tpu.pipeline_mode<synchronous>, transform_indices = @transform_12, window_bounds = array<i64: 16, 16>}, {pipeline_mode = #tpu.pipeline_mode<synchronous>, transform_indices = @transform_13, window_bounds = array<i64: 2, 16>}, {transform_indices = @transform_14, window_bounds = array<i64: 1, 64, 16>}]} {
    %cst = arith.constant 0.000000e+00 : f32
    %0 = vector.broadcast %cst : f32 to vector<64x16xf32>
    %c0 = arith.constant 0 : index
    %c0_0 = arith.constant 0 : index
    %c0_1 = arith.constant 0 : index
    %1 = vector.load %arg1[%c0, %c0_0, %c0_1] : memref<1x576x16xbf16, #tpu.memory_space<vmem>>, vector<1x64x16xbf16>
    %2 = vector.shape_cast %1 : vector<1x64x16xbf16> to vector<64x16xbf16>
    %c0_2 = arith.constant 0 : index
    %c0_3 = arith.constant 0 : index
    %3 = vector.load %arg3[%c0_2, %c0_3] : memref<16x16xbf16, #tpu.memory_space<vmem>>, vector<16x16xbf16>
    %cst_4 = arith.constant dense<0.000000e+00> : vector<64x16xf32>
    %4 = tpu.matmul %2, %3, %cst_4 {dimension_numbers = #tpu.dot_dimension_numbers<[1], [0], [0], [1], [0, 0, 1, 1], [], []>} : vector<64x16xbf16>, vector<16x16xbf16>, vector<64x16xf32> -> vector<64x16xf32>
    %c0_5 = arith.constant 0 : index
    %c0_6 = arith.constant 0 : index
    %5 = vector.load %arg4[%c0_5, %c0_6] : memref<2x16xf32, #tpu.memory_space<vmem>>, vector<1x16xf32>
    %6 = vector.broadcast %5 : vector<1x16xf32> to vector<64x16xf32>
    %7 = arith.mulf %4, %6 : vector<64x16xf32>
    %c1 = arith.constant 1 : index
    %c0_7 = arith.constant 0 : index
    %8 = vector.load %arg4[%c1, %c0_7] : memref<2x16xf32, #tpu.memory_space<vmem>>, vector<1x16xf32>
    %9 = vector.broadcast %8 : vector<1x16xf32> to vector<64x16xf32>
    %10 = arith.addf %7, %9 : vector<64x16xf32>
    %cst_8 = arith.constant 0.000000e+00 : f32
    %11 = vector.broadcast %cst_8 : f32 to vector<64x16xf32>
    %12 = arith.maximumf %10, %11 : vector<64x16xf32>
    %c0_9 = arith.constant 0 : index
    %c0_10 = arith.constant 0 : index
    %13 = vector.load %arg2[%c0_9, %c0_10] : memref<576x1xf32, #tpu.memory_space<vmem>>, vector<64x1xf32>
    %14 = vector.broadcast %13 : vector<64x1xf32> to vector<64x16xf32>
    %15 = arith.mulf %12, %14 : vector<64x16xf32>
    %16 = arith.truncf %15 : vector<64x16xf32> to vector<64x16xbf16>
    %c0_11 = arith.constant 0 : index
    %c0_12 = arith.constant 0 : index
    %c0_13 = arith.constant 0 : index
    %17 = vector.load %arg5[%c0_11, %c0_12, %c0_13] : memref<9x16x16xbf16, #tpu.memory_space<vmem>>, vector<1x16x16xbf16>
    %18 = vector.shape_cast %17 : vector<1x16x16xbf16> to vector<16x16xbf16>
    %cst_14 = arith.constant dense<0.000000e+00> : vector<64x16xf32>
    %19 = tpu.matmul %16, %18, %cst_14 {dimension_numbers = #tpu.dot_dimension_numbers<[1], [0], [0], [1], [0, 0, 1, 1], [], []>} : vector<64x16xbf16>, vector<16x16xbf16>, vector<64x16xf32> -> vector<64x16xf32>
    %20 = arith.addf %0, %19 : vector<64x16xf32>
    %c0_15 = arith.constant 0 : index
    %c64 = arith.constant 64 : index
    %c0_16 = arith.constant 0 : index
    %21 = vector.load %arg1[%c0_15, %c64, %c0_16] : memref<1x576x16xbf16, #tpu.memory_space<vmem>>, vector<1x64x16xbf16>
    %22 = vector.shape_cast %21 : vector<1x64x16xbf16> to vector<64x16xbf16>
    %c0_17 = arith.constant 0 : index
    %c0_18 = arith.constant 0 : index
    %23 = vector.load %arg3[%c0_17, %c0_18] : memref<16x16xbf16, #tpu.memory_space<vmem>>, vector<16x16xbf16>
    %cst_19 = arith.constant dense<0.000000e+00> : vector<64x16xf32>
    %24 = tpu.matmul %22, %23, %cst_19 {dimension_numbers = #tpu.dot_dimension_numbers<[1], [0], [0], [1], [0, 0, 1, 1], [], []>} : vector<64x16xbf16>, vector<16x16xbf16>, vector<64x16xf32> -> vector<64x16xf32>
    %c0_20 = arith.constant 0 : index
    %c0_21 = arith.constant 0 : index
    %25 = vector.load %arg4[%c0_20, %c0_21] : memref<2x16xf32, #tpu.memory_space<vmem>>, vector<1x16xf32>
    %26 = vector.broadcast %25 : vector<1x16xf32> to vector<64x16xf32>
    %27 = arith.mulf %24, %26 : vector<64x16xf32>
    %c1_22 = arith.constant 1 : index
    %c0_23 = arith.constant 0 : index
    %28 = vector.load %arg4[%c1_22, %c0_23] : memref<2x16xf32, #tpu.memory_space<vmem>>, vector<1x16xf32>
    %29 = vector.broadcast %28 : vector<1x16xf32> to vector<64x16xf32>
    %30 = arith.addf %27, %29 : vector<64x16xf32>
    %cst_24 = arith.constant 0.000000e+00 : f32
    %31 = vector.broadcast %cst_24 : f32 to vector<64x16xf32>
    %32 = arith.maximumf %30, %31 : vector<64x16xf32>
    %c64_25 = arith.constant 64 : index
    %c0_26 = arith.constant 0 : index
    %33 = vector.load %arg2[%c64_25, %c0_26] : memref<576x1xf32, #tpu.memory_space<vmem>>, vector<64x1xf32>
    %34 = vector.broadcast %33 : vector<64x1xf32> to vector<64x16xf32>
    %35 = arith.mulf %32, %34 : vector<64x16xf32>
    %36 = arith.truncf %35 : vector<64x16xf32> to vector<64x16xbf16>
    %c1_27 = arith.constant 1 : index
    %c0_28 = arith.constant 0 : index
    %c0_29 = arith.constant 0 : index
    %37 = vector.load %arg5[%c1_27, %c0_28, %c0_29] : memref<9x16x16xbf16, #tpu.memory_space<vmem>>, vector<1x16x16xbf16>
    %38 = vector.shape_cast %37 : vector<1x16x16xbf16> to vector<16x16xbf16>
    %cst_30 = arith.constant dense<0.000000e+00> : vector<64x16xf32>
    %39 = tpu.matmul %36, %38, %cst_30 {dimension_numbers = #tpu.dot_dimension_numbers<[1], [0], [0], [1], [0, 0, 1, 1], [], []>} : vector<64x16xbf16>, vector<16x16xbf16>, vector<64x16xf32> -> vector<64x16xf32>
    %40 = arith.addf %20, %39 : vector<64x16xf32>
    %c0_31 = arith.constant 0 : index
    %c128 = arith.constant 128 : index
    %c0_32 = arith.constant 0 : index
    %41 = vector.load %arg1[%c0_31, %c128, %c0_32] : memref<1x576x16xbf16, #tpu.memory_space<vmem>>, vector<1x64x16xbf16>
    %42 = vector.shape_cast %41 : vector<1x64x16xbf16> to vector<64x16xbf16>
    %c0_33 = arith.constant 0 : index
    %c0_34 = arith.constant 0 : index
    %43 = vector.load %arg3[%c0_33, %c0_34] : memref<16x16xbf16, #tpu.memory_space<vmem>>, vector<16x16xbf16>
    %cst_35 = arith.constant dense<0.000000e+00> : vector<64x16xf32>
    %44 = tpu.matmul %42, %43, %cst_35 {dimension_numbers = #tpu.dot_dimension_numbers<[1], [0], [0], [1], [0, 0, 1, 1], [], []>} : vector<64x16xbf16>, vector<16x16xbf16>, vector<64x16xf32> -> vector<64x16xf32>
    %c0_36 = arith.constant 0 : index
    %c0_37 = arith.constant 0 : index
    %45 = vector.load %arg4[%c0_36, %c0_37] : memref<2x16xf32, #tpu.memory_space<vmem>>, vector<1x16xf32>
    %46 = vector.broadcast %45 : vector<1x16xf32> to vector<64x16xf32>
    %47 = arith.mulf %44, %46 : vector<64x16xf32>
    %c1_38 = arith.constant 1 : index
    %c0_39 = arith.constant 0 : index
    %48 = vector.load %arg4[%c1_38, %c0_39] : memref<2x16xf32, #tpu.memory_space<vmem>>, vector<1x16xf32>
    %49 = vector.broadcast %48 : vector<1x16xf32> to vector<64x16xf32>
    %50 = arith.addf %47, %49 : vector<64x16xf32>
    %cst_40 = arith.constant 0.000000e+00 : f32
    %51 = vector.broadcast %cst_40 : f32 to vector<64x16xf32>
    %52 = arith.maximumf %50, %51 : vector<64x16xf32>
    %c128_41 = arith.constant 128 : index
    %c0_42 = arith.constant 0 : index
    %53 = vector.load %arg2[%c128_41, %c0_42] : memref<576x1xf32, #tpu.memory_space<vmem>>, vector<64x1xf32>
    %54 = vector.broadcast %53 : vector<64x1xf32> to vector<64x16xf32>
    %55 = arith.mulf %52, %54 : vector<64x16xf32>
    %56 = arith.truncf %55 : vector<64x16xf32> to vector<64x16xbf16>
    %c2 = arith.constant 2 : index
    %c0_43 = arith.constant 0 : index
    %c0_44 = arith.constant 0 : index
    %57 = vector.load %arg5[%c2, %c0_43, %c0_44] : memref<9x16x16xbf16, #tpu.memory_space<vmem>>, vector<1x16x16xbf16>
    %58 = vector.shape_cast %57 : vector<1x16x16xbf16> to vector<16x16xbf16>
    %cst_45 = arith.constant dense<0.000000e+00> : vector<64x16xf32>
    %59 = tpu.matmul %56, %58, %cst_45 {dimension_numbers = #tpu.dot_dimension_numbers<[1], [0], [0], [1], [0, 0, 1, 1], [], []>} : vector<64x16xbf16>, vector<16x16xbf16>, vector<64x16xf32> -> vector<64x16xf32>
    %60 = arith.addf %40, %59 : vector<64x16xf32>
    %c0_46 = arith.constant 0 : index
    %c192 = arith.constant 192 : index
    %c0_47 = arith.constant 0 : index
    %61 = vector.load %arg1[%c0_46, %c192, %c0_47] : memref<1x576x16xbf16, #tpu.memory_space<vmem>>, vector<1x64x16xbf16>
    %62 = vector.shape_cast %61 : vector<1x64x16xbf16> to vector<64x16xbf16>
    %c0_48 = arith.constant 0 : index
    %c0_49 = arith.constant 0 : index
    %63 = vector.load %arg3[%c0_48, %c0_49] : memref<16x16xbf16, #tpu.memory_space<vmem>>, vector<16x16xbf16>
    %cst_50 = arith.constant dense<0.000000e+00> : vector<64x16xf32>
    %64 = tpu.matmul %62, %63, %cst_50 {dimension_numbers = #tpu.dot_dimension_numbers<[1], [0], [0], [1], [0, 0, 1, 1], [], []>} : vector<64x16xbf16>, vector<16x16xbf16>, vector<64x16xf32> -> vector<64x16xf32>
    %c0_51 = arith.constant 0 : index
    %c0_52 = arith.constant 0 : index
    %65 = vector.load %arg4[%c0_51, %c0_52] : memref<2x16xf32, #tpu.memory_space<vmem>>, vector<1x16xf32>
    %66 = vector.broadcast %65 : vector<1x16xf32> to vector<64x16xf32>
    %67 = arith.mulf %64, %66 : vector<64x16xf32>
    %c1_53 = arith.constant 1 : index
    %c0_54 = arith.constant 0 : index
    %68 = vector.load %arg4[%c1_53, %c0_54] : memref<2x16xf32, #tpu.memory_space<vmem>>, vector<1x16xf32>
    %69 = vector.broadcast %68 : vector<1x16xf32> to vector<64x16xf32>
    %70 = arith.addf %67, %69 : vector<64x16xf32>
    %cst_55 = arith.constant 0.000000e+00 : f32
    %71 = vector.broadcast %cst_55 : f32 to vector<64x16xf32>
    %72 = arith.maximumf %70, %71 : vector<64x16xf32>
    %c192_56 = arith.constant 192 : index
    %c0_57 = arith.constant 0 : index
    %73 = vector.load %arg2[%c192_56, %c0_57] : memref<576x1xf32, #tpu.memory_space<vmem>>, vector<64x1xf32>
    %74 = vector.broadcast %73 : vector<64x1xf32> to vector<64x16xf32>
    %75 = arith.mulf %72, %74 : vector<64x16xf32>
    %76 = arith.truncf %75 : vector<64x16xf32> to vector<64x16xbf16>
    %c3 = arith.constant 3 : index
    %c0_58 = arith.constant 0 : index
    %c0_59 = arith.constant 0 : index
    %77 = vector.load %arg5[%c3, %c0_58, %c0_59] : memref<9x16x16xbf16, #tpu.memory_space<vmem>>, vector<1x16x16xbf16>
    %78 = vector.shape_cast %77 : vector<1x16x16xbf16> to vector<16x16xbf16>
    %cst_60 = arith.constant dense<0.000000e+00> : vector<64x16xf32>
    %79 = tpu.matmul %76, %78, %cst_60 {dimension_numbers = #tpu.dot_dimension_numbers<[1], [0], [0], [1], [0, 0, 1, 1], [], []>} : vector<64x16xbf16>, vector<16x16xbf16>, vector<64x16xf32> -> vector<64x16xf32>
    %80 = arith.addf %60, %79 : vector<64x16xf32>
    %c0_61 = arith.constant 0 : index
    %c256 = arith.constant 256 : index
    %c0_62 = arith.constant 0 : index
    %81 = vector.load %arg1[%c0_61, %c256, %c0_62] : memref<1x576x16xbf16, #tpu.memory_space<vmem>>, vector<1x64x16xbf16>
    %82 = vector.shape_cast %81 : vector<1x64x16xbf16> to vector<64x16xbf16>
    %c0_63 = arith.constant 0 : index
    %c0_64 = arith.constant 0 : index
    %83 = vector.load %arg3[%c0_63, %c0_64] : memref<16x16xbf16, #tpu.memory_space<vmem>>, vector<16x16xbf16>
    %cst_65 = arith.constant dense<0.000000e+00> : vector<64x16xf32>
    %84 = tpu.matmul %82, %83, %cst_65 {dimension_numbers = #tpu.dot_dimension_numbers<[1], [0], [0], [1], [0, 0, 1, 1], [], []>} : vector<64x16xbf16>, vector<16x16xbf16>, vector<64x16xf32> -> vector<64x16xf32>
    %c0_66 = arith.constant 0 : index
    %c0_67 = arith.constant 0 : index
    %85 = vector.load %arg4[%c0_66, %c0_67] : memref<2x16xf32, #tpu.memory_space<vmem>>, vector<1x16xf32>
    %86 = vector.broadcast %85 : vector<1x16xf32> to vector<64x16xf32>
    %87 = arith.mulf %84, %86 : vector<64x16xf32>
    %c1_68 = arith.constant 1 : index
    %c0_69 = arith.constant 0 : index
    %88 = vector.load %arg4[%c1_68, %c0_69] : memref<2x16xf32, #tpu.memory_space<vmem>>, vector<1x16xf32>
    %89 = vector.broadcast %88 : vector<1x16xf32> to vector<64x16xf32>
    %90 = arith.addf %87, %89 : vector<64x16xf32>
    %cst_70 = arith.constant 0.000000e+00 : f32
    %91 = vector.broadcast %cst_70 : f32 to vector<64x16xf32>
    %92 = arith.maximumf %90, %91 : vector<64x16xf32>
    %93 = arith.truncf %92 : vector<64x16xf32> to vector<64x16xbf16>
    %c4 = arith.constant 4 : index
    %c0_71 = arith.constant 0 : index
    %c0_72 = arith.constant 0 : index
    %94 = vector.load %arg5[%c4, %c0_71, %c0_72] : memref<9x16x16xbf16, #tpu.memory_space<vmem>>, vector<1x16x16xbf16>
    %95 = vector.shape_cast %94 : vector<1x16x16xbf16> to vector<16x16xbf16>
    %cst_73 = arith.constant dense<0.000000e+00> : vector<64x16xf32>
    %96 = tpu.matmul %93, %95, %cst_73 {dimension_numbers = #tpu.dot_dimension_numbers<[1], [0], [0], [1], [0, 0, 1, 1], [], []>} : vector<64x16xbf16>, vector<16x16xbf16>, vector<64x16xf32> -> vector<64x16xf32>
    %97 = arith.addf %80, %96 : vector<64x16xf32>
    %c0_74 = arith.constant 0 : index
    %c320 = arith.constant 320 : index
    %c0_75 = arith.constant 0 : index
    %98 = vector.load %arg1[%c0_74, %c320, %c0_75] : memref<1x576x16xbf16, #tpu.memory_space<vmem>>, vector<1x64x16xbf16>
    %99 = vector.shape_cast %98 : vector<1x64x16xbf16> to vector<64x16xbf16>
    %c0_76 = arith.constant 0 : index
    %c0_77 = arith.constant 0 : index
    %100 = vector.load %arg3[%c0_76, %c0_77] : memref<16x16xbf16, #tpu.memory_space<vmem>>, vector<16x16xbf16>
    %cst_78 = arith.constant dense<0.000000e+00> : vector<64x16xf32>
    %101 = tpu.matmul %99, %100, %cst_78 {dimension_numbers = #tpu.dot_dimension_numbers<[1], [0], [0], [1], [0, 0, 1, 1], [], []>} : vector<64x16xbf16>, vector<16x16xbf16>, vector<64x16xf32> -> vector<64x16xf32>
    %c0_79 = arith.constant 0 : index
    %c0_80 = arith.constant 0 : index
    %102 = vector.load %arg4[%c0_79, %c0_80] : memref<2x16xf32, #tpu.memory_space<vmem>>, vector<1x16xf32>
    %103 = vector.broadcast %102 : vector<1x16xf32> to vector<64x16xf32>
    %104 = arith.mulf %101, %103 : vector<64x16xf32>
    %c1_81 = arith.constant 1 : index
    %c0_82 = arith.constant 0 : index
    %105 = vector.load %arg4[%c1_81, %c0_82] : memref<2x16xf32, #tpu.memory_space<vmem>>, vector<1x16xf32>
    %106 = vector.broadcast %105 : vector<1x16xf32> to vector<64x16xf32>
    %107 = arith.addf %104, %106 : vector<64x16xf32>
    %cst_83 = arith.constant 0.000000e+00 : f32
    %108 = vector.broadcast %cst_83 : f32 to vector<64x16xf32>
    %109 = arith.maximumf %107, %108 : vector<64x16xf32>
    %110 = arith.truncf %109 : vector<64x16xf32> to vector<64x16xbf16>
    %c5 = arith.constant 5 : index
    %c0_84 = arith.constant 0 : index
    %c0_85 = arith.constant 0 : index
    %111 = vector.load %arg5[%c5, %c0_84, %c0_85] : memref<9x16x16xbf16, #tpu.memory_space<vmem>>, vector<1x16x16xbf16>
    %112 = vector.shape_cast %111 : vector<1x16x16xbf16> to vector<16x16xbf16>
    %cst_86 = arith.constant dense<0.000000e+00> : vector<64x16xf32>
    %113 = tpu.matmul %110, %112, %cst_86 {dimension_numbers = #tpu.dot_dimension_numbers<[1], [0], [0], [1], [0, 0, 1, 1], [], []>} : vector<64x16xbf16>, vector<16x16xbf16>, vector<64x16xf32> -> vector<64x16xf32>
    %114 = arith.addf %97, %113 : vector<64x16xf32>
    %c0_87 = arith.constant 0 : index
    %c384 = arith.constant 384 : index
    %c0_88 = arith.constant 0 : index
    %115 = vector.load %arg1[%c0_87, %c384, %c0_88] : memref<1x576x16xbf16, #tpu.memory_space<vmem>>, vector<1x64x16xbf16>
    %116 = vector.shape_cast %115 : vector<1x64x16xbf16> to vector<64x16xbf16>
    %c0_89 = arith.constant 0 : index
    %c0_90 = arith.constant 0 : index
    %117 = vector.load %arg3[%c0_89, %c0_90] : memref<16x16xbf16, #tpu.memory_space<vmem>>, vector<16x16xbf16>
    %cst_91 = arith.constant dense<0.000000e+00> : vector<64x16xf32>
    %118 = tpu.matmul %116, %117, %cst_91 {dimension_numbers = #tpu.dot_dimension_numbers<[1], [0], [0], [1], [0, 0, 1, 1], [], []>} : vector<64x16xbf16>, vector<16x16xbf16>, vector<64x16xf32> -> vector<64x16xf32>
    %c0_92 = arith.constant 0 : index
    %c0_93 = arith.constant 0 : index
    %119 = vector.load %arg4[%c0_92, %c0_93] : memref<2x16xf32, #tpu.memory_space<vmem>>, vector<1x16xf32>
    %120 = vector.broadcast %119 : vector<1x16xf32> to vector<64x16xf32>
    %121 = arith.mulf %118, %120 : vector<64x16xf32>
    %c1_94 = arith.constant 1 : index
    %c0_95 = arith.constant 0 : index
    %122 = vector.load %arg4[%c1_94, %c0_95] : memref<2x16xf32, #tpu.memory_space<vmem>>, vector<1x16xf32>
    %123 = vector.broadcast %122 : vector<1x16xf32> to vector<64x16xf32>
    %124 = arith.addf %121, %123 : vector<64x16xf32>
    %cst_96 = arith.constant 0.000000e+00 : f32
    %125 = vector.broadcast %cst_96 : f32 to vector<64x16xf32>
    %126 = arith.maximumf %124, %125 : vector<64x16xf32>
    %c384_97 = arith.constant 384 : index
    %c0_98 = arith.constant 0 : index
    %127 = vector.load %arg2[%c384_97, %c0_98] : memref<576x1xf32, #tpu.memory_space<vmem>>, vector<64x1xf32>
    %128 = vector.broadcast %127 : vector<64x1xf32> to vector<64x16xf32>
    %129 = arith.mulf %126, %128 : vector<64x16xf32>
    %130 = arith.truncf %129 : vector<64x16xf32> to vector<64x16xbf16>
    %c6 = arith.constant 6 : index
    %c0_99 = arith.constant 0 : index
    %c0_100 = arith.constant 0 : index
    %131 = vector.load %arg5[%c6, %c0_99, %c0_100] : memref<9x16x16xbf16, #tpu.memory_space<vmem>>, vector<1x16x16xbf16>
    %132 = vector.shape_cast %131 : vector<1x16x16xbf16> to vector<16x16xbf16>
    %cst_101 = arith.constant dense<0.000000e+00> : vector<64x16xf32>
    %133 = tpu.matmul %130, %132, %cst_101 {dimension_numbers = #tpu.dot_dimension_numbers<[1], [0], [0], [1], [0, 0, 1, 1], [], []>} : vector<64x16xbf16>, vector<16x16xbf16>, vector<64x16xf32> -> vector<64x16xf32>
    %134 = arith.addf %114, %133 : vector<64x16xf32>
    %c0_102 = arith.constant 0 : index
    %c448 = arith.constant 448 : index
    %c0_103 = arith.constant 0 : index
    %135 = vector.load %arg1[%c0_102, %c448, %c0_103] : memref<1x576x16xbf16, #tpu.memory_space<vmem>>, vector<1x64x16xbf16>
    %136 = vector.shape_cast %135 : vector<1x64x16xbf16> to vector<64x16xbf16>
    %c0_104 = arith.constant 0 : index
    %c0_105 = arith.constant 0 : index
    %137 = vector.load %arg3[%c0_104, %c0_105] : memref<16x16xbf16, #tpu.memory_space<vmem>>, vector<16x16xbf16>
    %cst_106 = arith.constant dense<0.000000e+00> : vector<64x16xf32>
    %138 = tpu.matmul %136, %137, %cst_106 {dimension_numbers = #tpu.dot_dimension_numbers<[1], [0], [0], [1], [0, 0, 1, 1], [], []>} : vector<64x16xbf16>, vector<16x16xbf16>, vector<64x16xf32> -> vector<64x16xf32>
    %c0_107 = arith.constant 0 : index
    %c0_108 = arith.constant 0 : index
    %139 = vector.load %arg4[%c0_107, %c0_108] : memref<2x16xf32, #tpu.memory_space<vmem>>, vector<1x16xf32>
    %140 = vector.broadcast %139 : vector<1x16xf32> to vector<64x16xf32>
    %141 = arith.mulf %138, %140 : vector<64x16xf32>
    %c1_109 = arith.constant 1 : index
    %c0_110 = arith.constant 0 : index
    %142 = vector.load %arg4[%c1_109, %c0_110] : memref<2x16xf32, #tpu.memory_space<vmem>>, vector<1x16xf32>
    %143 = vector.broadcast %142 : vector<1x16xf32> to vector<64x16xf32>
    %144 = arith.addf %141, %143 : vector<64x16xf32>
    %cst_111 = arith.constant 0.000000e+00 : f32
    %145 = vector.broadcast %cst_111 : f32 to vector<64x16xf32>
    %146 = arith.maximumf %144, %145 : vector<64x16xf32>
    %147 = arith.truncf %146 : vector<64x16xf32> to vector<64x16xbf16>
    %c7 = arith.constant 7 : index
    %c0_112 = arith.constant 0 : index
    %c0_113 = arith.constant 0 : index
    %148 = vector.load %arg5[%c7, %c0_112, %c0_113] : memref<9x16x16xbf16, #tpu.memory_space<vmem>>, vector<1x16x16xbf16>
    %149 = vector.shape_cast %148 : vector<1x16x16xbf16> to vector<16x16xbf16>
    %cst_114 = arith.constant dense<0.000000e+00> : vector<64x16xf32>
    %150 = tpu.matmul %147, %149, %cst_114 {dimension_numbers = #tpu.dot_dimension_numbers<[1], [0], [0], [1], [0, 0, 1, 1], [], []>} : vector<64x16xbf16>, vector<16x16xbf16>, vector<64x16xf32> -> vector<64x16xf32>
    %151 = arith.addf %134, %150 : vector<64x16xf32>
    %c0_115 = arith.constant 0 : index
    %c512 = arith.constant 512 : index
    %c0_116 = arith.constant 0 : index
    %152 = vector.load %arg1[%c0_115, %c512, %c0_116] : memref<1x576x16xbf16, #tpu.memory_space<vmem>>, vector<1x64x16xbf16>
    %153 = vector.shape_cast %152 : vector<1x64x16xbf16> to vector<64x16xbf16>
    %c0_117 = arith.constant 0 : index
    %c0_118 = arith.constant 0 : index
    %154 = vector.load %arg3[%c0_117, %c0_118] : memref<16x16xbf16, #tpu.memory_space<vmem>>, vector<16x16xbf16>
    %cst_119 = arith.constant dense<0.000000e+00> : vector<64x16xf32>
    %155 = tpu.matmul %153, %154, %cst_119 {dimension_numbers = #tpu.dot_dimension_numbers<[1], [0], [0], [1], [0, 0, 1, 1], [], []>} : vector<64x16xbf16>, vector<16x16xbf16>, vector<64x16xf32> -> vector<64x16xf32>
    %c0_120 = arith.constant 0 : index
    %c0_121 = arith.constant 0 : index
    %156 = vector.load %arg4[%c0_120, %c0_121] : memref<2x16xf32, #tpu.memory_space<vmem>>, vector<1x16xf32>
    %157 = vector.broadcast %156 : vector<1x16xf32> to vector<64x16xf32>
    %158 = arith.mulf %155, %157 : vector<64x16xf32>
    %c1_122 = arith.constant 1 : index
    %c0_123 = arith.constant 0 : index
    %159 = vector.load %arg4[%c1_122, %c0_123] : memref<2x16xf32, #tpu.memory_space<vmem>>, vector<1x16xf32>
    %160 = vector.broadcast %159 : vector<1x16xf32> to vector<64x16xf32>
    %161 = arith.addf %158, %160 : vector<64x16xf32>
    %cst_124 = arith.constant 0.000000e+00 : f32
    %162 = vector.broadcast %cst_124 : f32 to vector<64x16xf32>
    %163 = arith.maximumf %161, %162 : vector<64x16xf32>
    %164 = arith.truncf %163 : vector<64x16xf32> to vector<64x16xbf16>
    %c8 = arith.constant 8 : index
    %c0_125 = arith.constant 0 : index
    %c0_126 = arith.constant 0 : index
    %165 = vector.load %arg5[%c8, %c0_125, %c0_126] : memref<9x16x16xbf16, #tpu.memory_space<vmem>>, vector<1x16x16xbf16>
    %166 = vector.shape_cast %165 : vector<1x16x16xbf16> to vector<16x16xbf16>
    %cst_127 = arith.constant dense<0.000000e+00> : vector<64x16xf32>
    %167 = tpu.matmul %164, %166, %cst_127 {dimension_numbers = #tpu.dot_dimension_numbers<[1], [0], [0], [1], [0, 0, 1, 1], [], []>} : vector<64x16xbf16>, vector<16x16xbf16>, vector<64x16xf32> -> vector<64x16xf32>
    %168 = arith.addf %151, %167 : vector<64x16xf32>
    %c0_128 = arith.constant 0 : index
    %c0_129 = arith.constant 0 : index
    %169 = vector.load %arg6[%c0_128, %c0_129] : memref<2x16xf32, #tpu.memory_space<vmem>>, vector<1x16xf32>
    %170 = vector.broadcast %169 : vector<1x16xf32> to vector<64x16xf32>
    %171 = arith.mulf %168, %170 : vector<64x16xf32>
    %c1_130 = arith.constant 1 : index
    %c0_131 = arith.constant 0 : index
    %172 = vector.load %arg6[%c1_130, %c0_131] : memref<2x16xf32, #tpu.memory_space<vmem>>, vector<1x16xf32>
    %173 = vector.broadcast %172 : vector<1x16xf32> to vector<64x16xf32>
    %174 = arith.addf %171, %173 : vector<64x16xf32>
    %cst_132 = arith.constant 0.000000e+00 : f32
    %175 = vector.broadcast %cst_132 : f32 to vector<64x16xf32>
    %176 = arith.maximumf %174, %175 : vector<64x16xf32>
    %cst_133 = arith.constant dense<0.000000e+00> : vector<16xf32>
    %177 = vector.multi_reduction <add>, %176, %cst_133 [0] : vector<64x16xf32> to vector<16xf32>
    %178 = vector.shape_cast %177 : vector<16xf32> to vector<1x16xf32>
    %cst_134 = arith.constant 6.400000e+01 : f32
    %179 = vector.broadcast %cst_134 : f32 to vector<1x16xf32>
    %180 = arith.divf %178, %179 : vector<1x16xf32>
    %181 = arith.truncf %180 : vector<1x16xf32> to vector<1x16xbf16>
    %c0_135 = arith.constant 0 : index
    %c0_136 = arith.constant 0 : index
    %182 = vector.load %arg7[%c0_135, %c0_136] : memref<16x4xbf16, #tpu.memory_space<vmem>>, vector<16x4xbf16>
    %cst_137 = arith.constant dense<0.000000e+00> : vector<1x4xf32>
    %183 = tpu.matmul %181, %182, %cst_137 {dimension_numbers = #tpu.dot_dimension_numbers<[1], [0], [0], [1], [0, 0, 1, 1], [], []>} : vector<1x16xbf16>, vector<16x4xbf16>, vector<1x4xf32> -> vector<1x4xf32>
    %c0_138 = arith.constant 0 : index
    %c0_139 = arith.constant 0 : index
    %184 = vector.load %arg8[%c0_138, %c0_139] : memref<1x4xf32, #tpu.memory_space<vmem>>, vector<1x4xf32>
    %185 = arith.addf %183, %184 : vector<1x4xf32>
    %cst_140 = arith.constant 0.000000e+00 : f32
    %186 = vector.broadcast %cst_140 : f32 to vector<1x4xf32>
    %187 = arith.maximumf %185, %186 : vector<1x4xf32>
    %188 = arith.truncf %187 : vector<1x4xf32> to vector<1x4xbf16>
    %c0_141 = arith.constant 0 : index
    %c0_142 = arith.constant 0 : index
    %189 = vector.load %arg9[%c0_141, %c0_142] : memref<4x16xbf16, #tpu.memory_space<vmem>>, vector<4x16xbf16>
    %cst_143 = arith.constant dense<0.000000e+00> : vector<1x16xf32>
    %190 = tpu.matmul %188, %189, %cst_143 {dimension_numbers = #tpu.dot_dimension_numbers<[1], [0], [0], [1], [0, 0, 1, 1], [], []>} : vector<1x4xbf16>, vector<4x16xbf16>, vector<1x16xf32> -> vector<1x16xf32>
    %c0_144 = arith.constant 0 : index
    %c0_145 = arith.constant 0 : index
    %191 = vector.load %arg10[%c0_144, %c0_145] : memref<1x16xf32, #tpu.memory_space<vmem>>, vector<1x16xf32>
    %192 = arith.addf %190, %191 : vector<1x16xf32>
    %193 = arith.negf %192 : vector<1x16xf32>
    %194 = math.exp %193 : vector<1x16xf32>
    %cst_146 = arith.constant 1.000000e+00 : f32
    %195 = vector.broadcast %cst_146 : f32 to vector<1x16xf32>
    %196 = arith.addf %195, %194 : vector<1x16xf32>
    %197 = arith.divf %195, %196 : vector<1x16xf32>
    %198 = vector.broadcast %197 : vector<1x16xf32> to vector<64x16xf32>
    %199 = arith.mulf %176, %198 : vector<64x16xf32>
    %200 = arith.truncf %199 : vector<64x16xf32> to vector<64x16xbf16>
    %c0_147 = arith.constant 0 : index
    %c0_148 = arith.constant 0 : index
    %201 = vector.load %arg11[%c0_147, %c0_148] : memref<16x16xbf16, #tpu.memory_space<vmem>>, vector<16x16xbf16>
    %cst_149 = arith.constant dense<0.000000e+00> : vector<64x16xf32>
    %202 = tpu.matmul %200, %201, %cst_149 {dimension_numbers = #tpu.dot_dimension_numbers<[1], [0], [0], [1], [0, 0, 1, 1], [], []>} : vector<64x16xbf16>, vector<16x16xbf16>, vector<64x16xf32> -> vector<64x16xf32>
    %c0_150 = arith.constant 0 : index
    %c0_151 = arith.constant 0 : index
    %203 = vector.load %arg12[%c0_150, %c0_151] : memref<2x16xf32, #tpu.memory_space<vmem>>, vector<1x16xf32>
    %204 = vector.broadcast %203 : vector<1x16xf32> to vector<64x16xf32>
    %205 = arith.mulf %202, %204 : vector<64x16xf32>
    %c1_152 = arith.constant 1 : index
    %c0_153 = arith.constant 0 : index
    %206 = vector.load %arg12[%c1_152, %c0_153] : memref<2x16xf32, #tpu.memory_space<vmem>>, vector<1x16xf32>
    %207 = vector.broadcast %206 : vector<1x16xf32> to vector<64x16xf32>
    %208 = arith.addf %205, %207 : vector<64x16xf32>
    %c0_154 = arith.constant 0 : index
    %c256_155 = arith.constant 256 : index
    %c0_156 = arith.constant 0 : index
    %209 = vector.load %arg1[%c0_154, %c256_155, %c0_156] : memref<1x576x16xbf16, #tpu.memory_space<vmem>>, vector<1x64x16xbf16>
    %210 = vector.shape_cast %209 : vector<1x64x16xbf16> to vector<64x16xbf16>
    %c0_157 = arith.constant 0 : index
    %c0_158 = arith.constant 0 : index
    %211 = vector.load %arg13[%c0_157, %c0_158] : memref<16x16xbf16, #tpu.memory_space<vmem>>, vector<16x16xbf16>
    %cst_159 = arith.constant dense<0.000000e+00> : vector<64x16xf32>
    %212 = tpu.matmul %210, %211, %cst_159 {dimension_numbers = #tpu.dot_dimension_numbers<[1], [0], [0], [1], [0, 0, 1, 1], [], []>} : vector<64x16xbf16>, vector<16x16xbf16>, vector<64x16xf32> -> vector<64x16xf32>
    %c0_160 = arith.constant 0 : index
    %c0_161 = arith.constant 0 : index
    %213 = vector.load %arg14[%c0_160, %c0_161] : memref<2x16xf32, #tpu.memory_space<vmem>>, vector<1x16xf32>
    %214 = vector.broadcast %213 : vector<1x16xf32> to vector<64x16xf32>
    %215 = arith.mulf %212, %214 : vector<64x16xf32>
    %c1_162 = arith.constant 1 : index
    %c0_163 = arith.constant 0 : index
    %216 = vector.load %arg14[%c1_162, %c0_163] : memref<2x16xf32, #tpu.memory_space<vmem>>, vector<1x16xf32>
    %217 = vector.broadcast %216 : vector<1x16xf32> to vector<64x16xf32>
    %218 = arith.addf %215, %217 : vector<64x16xf32>
    %219 = arith.addf %208, %218 : vector<64x16xf32>
    %cst_164 = arith.constant 0.000000e+00 : f32
    %220 = vector.broadcast %cst_164 : f32 to vector<64x16xf32>
    %221 = arith.maximumf %219, %220 : vector<64x16xf32>
    %222 = arith.truncf %221 : vector<64x16xf32> to vector<64x16xbf16>
    %c0_165 = arith.constant 0 : index
    %c0_166 = arith.constant 0 : index
    %c0_167 = arith.constant 0 : index
    %223 = vector.load %arg15[%c0_165, %c0_166, %c0_167] : memref<1x64x16xbf16, #tpu.memory_space<vmem>>, vector<1x64x16xbf16>
    %224 = vector.shape_cast %223 : vector<1x64x16xbf16> to vector<64x16xbf16>
    %225 = vector.shape_cast %222 : vector<64x16xbf16> to vector<1x64x16xbf16>
    tpu.vector_store %arg15[%c0_165, %c0_166, %c0_167], %225 {strides = array<i32>} : memref<1x64x16xbf16, #tpu.memory_space<vmem>>, vector<1x64x16xbf16>,
    return
  }
  func.func @transform_0(%arg0: i32) -> (i32, i32, i32) {
    %c0_i32 = arith.constant 0 : i32
    %c0_i32_0 = arith.constant 0 : i32
    %c0_i32_1 = arith.constant 0 : i32
    return %arg0, %c0_i32, %c0_i32_0 : i32, i32, i32
  }
  func.func @transform_1(%arg0: i32) -> (i32, i32) {
    %c0_i32 = arith.constant 0 : i32
    %c0_i32_0 = arith.constant 0 : i32
    %c0_i32_1 = arith.constant 0 : i32
    return %c0_i32, %c0_i32_0 : i32, i32
  }
  func.func @transform_2(%arg0: i32) -> (i32, i32) {
    %c0_i32 = arith.constant 0 : i32
    %c0_i32_0 = arith.constant 0 : i32
    %c0_i32_1 = arith.constant 0 : i32
    return %c0_i32, %c0_i32_0 : i32, i32
  }
  func.func @transform_3(%arg0: i32) -> (i32, i32) {
    %c0_i32 = arith.constant 0 : i32
    %c0_i32_0 = arith.constant 0 : i32
    %c0_i32_1 = arith.constant 0 : i32
    return %c0_i32, %c0_i32_0 : i32, i32
  }
  func.func @transform_4(%arg0: i32) -> (i32, i32, i32) {
    %c0_i32 = arith.constant 0 : i32
    %c0_i32_0 = arith.constant 0 : i32
    %c0_i32_1 = arith.constant 0 : i32
    %c0_i32_2 = arith.constant 0 : i32
    return %c0_i32, %c0_i32_0, %c0_i32_1 : i32, i32, i32
  }
  func.func @transform_5(%arg0: i32) -> (i32, i32) {
    %c0_i32 = arith.constant 0 : i32
    %c0_i32_0 = arith.constant 0 : i32
    %c0_i32_1 = arith.constant 0 : i32
    return %c0_i32, %c0_i32_0 : i32, i32
  }
  func.func @transform_6(%arg0: i32) -> (i32, i32) {
    %c0_i32 = arith.constant 0 : i32
    %c0_i32_0 = arith.constant 0 : i32
    %c0_i32_1 = arith.constant 0 : i32
    return %c0_i32, %c0_i32_0 : i32, i32
  }
  func.func @transform_7(%arg0: i32) -> (i32, i32) {
    %c0_i32 = arith.constant 0 : i32
    %c0_i32_0 = arith.constant 0 : i32
    %c0_i32_1 = arith.constant 0 : i32
    return %c0_i32, %c0_i32_0 : i32, i32
  }
  func.func @transform_8(%arg0: i32) -> (i32, i32) {
    %c0_i32 = arith.constant 0 : i32
    %c0_i32_0 = arith.constant 0 : i32
    %c0_i32_1 = arith.constant 0 : i32
    return %c0_i32, %c0_i32_0 : i32, i32
  }
  func.func @transform_9(%arg0: i32) -> (i32, i32) {
    %c0_i32 = arith.constant 0 : i32
    %c0_i32_0 = arith.constant 0 : i32
    %c0_i32_1 = arith.constant 0 : i32
    return %c0_i32, %c0_i32_0 : i32, i32
  }
  func.func @transform_10(%arg0: i32) -> (i32, i32) {
    %c0_i32 = arith.constant 0 : i32
    %c0_i32_0 = arith.constant 0 : i32
    %c0_i32_1 = arith.constant 0 : i32
    return %c0_i32, %c0_i32_0 : i32, i32
  }
  func.func @transform_11(%arg0: i32) -> (i32, i32) {
    %c0_i32 = arith.constant 0 : i32
    %c0_i32_0 = arith.constant 0 : i32
    %c0_i32_1 = arith.constant 0 : i32
    return %c0_i32, %c0_i32_0 : i32, i32
  }
  func.func @transform_12(%arg0: i32) -> (i32, i32) {
    %c0_i32 = arith.constant 0 : i32
    %c0_i32_0 = arith.constant 0 : i32
    %c0_i32_1 = arith.constant 0 : i32
    return %c0_i32, %c0_i32_0 : i32, i32
  }
  func.func @transform_13(%arg0: i32) -> (i32, i32) {
    %c0_i32 = arith.constant 0 : i32
    %c0_i32_0 = arith.constant 0 : i32
    %c0_i32_1 = arith.constant 0 : i32
    return %c0_i32, %c0_i32_0 : i32, i32
  }
  func.func @transform_14(%arg0: i32) -> (i32, i32, i32) {
    %c0_i32 = arith.constant 0 : i32
    %c0_i32_0 = arith.constant 0 : i32
    %c0_i32_1 = arith.constant 0 : i32
    return %arg0, %c0_i32, %c0_i32_0 : i32, i32, i32
  }
}

module attributes {stable_mosaic.version = 11 : i64} {
  func.func @_yblock_kernel(%arg0: i32, %arg1: memref<1x144x16xbf16, #tpu.memory_space<vmem>>, %arg2: memref<144x1xf32, #tpu.memory_space<vmem>>, %arg3: memref<16x32xbf16, #tpu.memory_space<vmem>>, %arg4: memref<2x32xf32, #tpu.memory_space<vmem>>, %arg5: memref<9x32x32xbf16, #tpu.memory_space<vmem>>, %arg6: memref<2x32xf32, #tpu.memory_space<vmem>>, %arg7: memref<32x4xbf16, #tpu.memory_space<vmem>>, %arg8: memref<1x4xf32, #tpu.memory_space<vmem>>, %arg9: memref<4x32xbf16, #tpu.memory_space<vmem>>, %arg10: memref<1x32xf32, #tpu.memory_space<vmem>>, %arg11: memref<32x32xbf16, #tpu.memory_space<vmem>>, %arg12: memref<2x32xf32, #tpu.memory_space<vmem>>, %arg13: memref<16x32xbf16, #tpu.memory_space<vmem>>, %arg14: memref<2x32xf32, #tpu.memory_space<vmem>>, %arg15: memref<4x32xf32, #tpu.memory_space<vmem>>, %arg16: memref<1x1x32xf32, #tpu.memory_space<vmem>>) attributes {dimension_semantics = [#tpu.dimension_semantics<parallel>], iteration_bounds = array<i64: 2>, scalar_prefetch = 0 : i64, scratch_operands = 0 : i64, tpu.core_type = #tpu.core_type<tc>, window_params = [{transform_indices = @transform_0, window_bounds = array<i64: 1, 144, 16>}, {pipeline_mode = #tpu.pipeline_mode<synchronous>, transform_indices = @transform_1, window_bounds = array<i64: 144, 1>}, {pipeline_mode = #tpu.pipeline_mode<synchronous>, transform_indices = @transform_2, window_bounds = array<i64: 16, 32>}, {pipeline_mode = #tpu.pipeline_mode<synchronous>, transform_indices = @transform_3, window_bounds = array<i64: 2, 32>}, {pipeline_mode = #tpu.pipeline_mode<synchronous>, transform_indices = @transform_4, window_bounds = array<i64: 9, 32, 32>}, {pipeline_mode = #tpu.pipeline_mode<synchronous>, transform_indices = @transform_5, window_bounds = array<i64: 2, 32>}, {pipeline_mode = #tpu.pipeline_mode<synchronous>, transform_indices = @transform_6, window_bounds = array<i64: 32, 4>}, {pipeline_mode = #tpu.pipeline_mode<synchronous>, transform_indices = @transform_7, window_bounds = array<i64: 1, 4>}, {pipeline_mode = #tpu.pipeline_mode<synchronous>, transform_indices = @transform_8, window_bounds = array<i64: 4, 32>}, {pipeline_mode = #tpu.pipeline_mode<synchronous>, transform_indices = @transform_9, window_bounds = array<i64: 1, 32>}, {pipeline_mode = #tpu.pipeline_mode<synchronous>, transform_indices = @transform_10, window_bounds = array<i64: 32, 32>}, {pipeline_mode = #tpu.pipeline_mode<synchronous>, transform_indices = @transform_11, window_bounds = array<i64: 2, 32>}, {pipeline_mode = #tpu.pipeline_mode<synchronous>, transform_indices = @transform_12, window_bounds = array<i64: 16, 32>}, {pipeline_mode = #tpu.pipeline_mode<synchronous>, transform_indices = @transform_13, window_bounds = array<i64: 2, 32>}, {pipeline_mode = #tpu.pipeline_mode<synchronous>, transform_indices = @transform_14, window_bounds = array<i64: 4, 32>}, {transform_indices = @transform_15, window_bounds = array<i64: 1, 1, 32>}]} {
    %cst = arith.constant 0.000000e+00 : f32
    %0 = vector.broadcast %cst : f32 to vector<16x32xf32>
    %c0 = arith.constant 0 : index
    %c0_0 = arith.constant 0 : index
    %c0_1 = arith.constant 0 : index
    %1 = vector.load %arg1[%c0, %c0_0, %c0_1] : memref<1x144x16xbf16, #tpu.memory_space<vmem>>, vector<1x16x16xbf16>
    %2 = vector.shape_cast %1 : vector<1x16x16xbf16> to vector<16x16xbf16>
    %c0_2 = arith.constant 0 : index
    %c0_3 = arith.constant 0 : index
    %3 = vector.load %arg3[%c0_2, %c0_3] : memref<16x32xbf16, #tpu.memory_space<vmem>>, vector<16x32xbf16>
    %cst_4 = arith.constant dense<0.000000e+00> : vector<16x32xf32>
    %4 = tpu.matmul %2, %3, %cst_4 {dimension_numbers = #tpu.dot_dimension_numbers<[1], [0], [0], [1], [0, 0, 1, 1], [], []>} : vector<16x16xbf16>, vector<16x32xbf16>, vector<16x32xf32> -> vector<16x32xf32>
    %c0_5 = arith.constant 0 : index
    %c0_6 = arith.constant 0 : index
    %5 = vector.load %arg4[%c0_5, %c0_6] : memref<2x32xf32, #tpu.memory_space<vmem>>, vector<1x32xf32>
    %6 = vector.broadcast %5 : vector<1x32xf32> to vector<16x32xf32>
    %7 = arith.mulf %4, %6 : vector<16x32xf32>
    %c1 = arith.constant 1 : index
    %c0_7 = arith.constant 0 : index
    %8 = vector.load %arg4[%c1, %c0_7] : memref<2x32xf32, #tpu.memory_space<vmem>>, vector<1x32xf32>
    %9 = vector.broadcast %8 : vector<1x32xf32> to vector<16x32xf32>
    %10 = arith.addf %7, %9 : vector<16x32xf32>
    %cst_8 = arith.constant 0.000000e+00 : f32
    %11 = vector.broadcast %cst_8 : f32 to vector<16x32xf32>
    %12 = arith.maximumf %10, %11 : vector<16x32xf32>
    %c0_9 = arith.constant 0 : index
    %c0_10 = arith.constant 0 : index
    %13 = vector.load %arg2[%c0_9, %c0_10] : memref<144x1xf32, #tpu.memory_space<vmem>>, vector<16x1xf32>
    %14 = vector.broadcast %13 : vector<16x1xf32> to vector<16x32xf32>
    %15 = arith.mulf %12, %14 : vector<16x32xf32>
    %16 = arith.truncf %15 : vector<16x32xf32> to vector<16x32xbf16>
    %c0_11 = arith.constant 0 : index
    %c0_12 = arith.constant 0 : index
    %c0_13 = arith.constant 0 : index
    %17 = vector.load %arg5[%c0_11, %c0_12, %c0_13] : memref<9x32x32xbf16, #tpu.memory_space<vmem>>, vector<1x32x32xbf16>
    %18 = vector.shape_cast %17 : vector<1x32x32xbf16> to vector<32x32xbf16>
    %cst_14 = arith.constant dense<0.000000e+00> : vector<16x32xf32>
    %19 = tpu.matmul %16, %18, %cst_14 {dimension_numbers = #tpu.dot_dimension_numbers<[1], [0], [0], [1], [0, 0, 1, 1], [], []>} : vector<16x32xbf16>, vector<32x32xbf16>, vector<16x32xf32> -> vector<16x32xf32>
    %20 = arith.addf %0, %19 : vector<16x32xf32>
    %c0_15 = arith.constant 0 : index
    %c16 = arith.constant 16 : index
    %c0_16 = arith.constant 0 : index
    %21 = vector.load %arg1[%c0_15, %c16, %c0_16] : memref<1x144x16xbf16, #tpu.memory_space<vmem>>, vector<1x16x16xbf16>
    %22 = vector.shape_cast %21 : vector<1x16x16xbf16> to vector<16x16xbf16>
    %c0_17 = arith.constant 0 : index
    %c0_18 = arith.constant 0 : index
    %23 = vector.load %arg3[%c0_17, %c0_18] : memref<16x32xbf16, #tpu.memory_space<vmem>>, vector<16x32xbf16>
    %cst_19 = arith.constant dense<0.000000e+00> : vector<16x32xf32>
    %24 = tpu.matmul %22, %23, %cst_19 {dimension_numbers = #tpu.dot_dimension_numbers<[1], [0], [0], [1], [0, 0, 1, 1], [], []>} : vector<16x16xbf16>, vector<16x32xbf16>, vector<16x32xf32> -> vector<16x32xf32>
    %c0_20 = arith.constant 0 : index
    %c0_21 = arith.constant 0 : index
    %25 = vector.load %arg4[%c0_20, %c0_21] : memref<2x32xf32, #tpu.memory_space<vmem>>, vector<1x32xf32>
    %26 = vector.broadcast %25 : vector<1x32xf32> to vector<16x32xf32>
    %27 = arith.mulf %24, %26 : vector<16x32xf32>
    %c1_22 = arith.constant 1 : index
    %c0_23 = arith.constant 0 : index
    %28 = vector.load %arg4[%c1_22, %c0_23] : memref<2x32xf32, #tpu.memory_space<vmem>>, vector<1x32xf32>
    %29 = vector.broadcast %28 : vector<1x32xf32> to vector<16x32xf32>
    %30 = arith.addf %27, %29 : vector<16x32xf32>
    %cst_24 = arith.constant 0.000000e+00 : f32
    %31 = vector.broadcast %cst_24 : f32 to vector<16x32xf32>
    %32 = arith.maximumf %30, %31 : vector<16x32xf32>
    %c16_25 = arith.constant 16 : index
    %c0_26 = arith.constant 0 : index
    %33 = vector.load %arg2[%c16_25, %c0_26] : memref<144x1xf32, #tpu.memory_space<vmem>>, vector<16x1xf32>
    %34 = vector.broadcast %33 : vector<16x1xf32> to vector<16x32xf32>
    %35 = arith.mulf %32, %34 : vector<16x32xf32>
    %36 = arith.truncf %35 : vector<16x32xf32> to vector<16x32xbf16>
    %c1_27 = arith.constant 1 : index
    %c0_28 = arith.constant 0 : index
    %c0_29 = arith.constant 0 : index
    %37 = vector.load %arg5[%c1_27, %c0_28, %c0_29] : memref<9x32x32xbf16, #tpu.memory_space<vmem>>, vector<1x32x32xbf16>
    %38 = vector.shape_cast %37 : vector<1x32x32xbf16> to vector<32x32xbf16>
    %cst_30 = arith.constant dense<0.000000e+00> : vector<16x32xf32>
    %39 = tpu.matmul %36, %38, %cst_30 {dimension_numbers = #tpu.dot_dimension_numbers<[1], [0], [0], [1], [0, 0, 1, 1], [], []>} : vector<16x32xbf16>, vector<32x32xbf16>, vector<16x32xf32> -> vector<16x32xf32>
    %40 = arith.addf %20, %39 : vector<16x32xf32>
    %c0_31 = arith.constant 0 : index
    %c32 = arith.constant 32 : index
    %c0_32 = arith.constant 0 : index
    %41 = vector.load %arg1[%c0_31, %c32, %c0_32] : memref<1x144x16xbf16, #tpu.memory_space<vmem>>, vector<1x16x16xbf16>
    %42 = vector.shape_cast %41 : vector<1x16x16xbf16> to vector<16x16xbf16>
    %c0_33 = arith.constant 0 : index
    %c0_34 = arith.constant 0 : index
    %43 = vector.load %arg3[%c0_33, %c0_34] : memref<16x32xbf16, #tpu.memory_space<vmem>>, vector<16x32xbf16>
    %cst_35 = arith.constant dense<0.000000e+00> : vector<16x32xf32>
    %44 = tpu.matmul %42, %43, %cst_35 {dimension_numbers = #tpu.dot_dimension_numbers<[1], [0], [0], [1], [0, 0, 1, 1], [], []>} : vector<16x16xbf16>, vector<16x32xbf16>, vector<16x32xf32> -> vector<16x32xf32>
    %c0_36 = arith.constant 0 : index
    %c0_37 = arith.constant 0 : index
    %45 = vector.load %arg4[%c0_36, %c0_37] : memref<2x32xf32, #tpu.memory_space<vmem>>, vector<1x32xf32>
    %46 = vector.broadcast %45 : vector<1x32xf32> to vector<16x32xf32>
    %47 = arith.mulf %44, %46 : vector<16x32xf32>
    %c1_38 = arith.constant 1 : index
    %c0_39 = arith.constant 0 : index
    %48 = vector.load %arg4[%c1_38, %c0_39] : memref<2x32xf32, #tpu.memory_space<vmem>>, vector<1x32xf32>
    %49 = vector.broadcast %48 : vector<1x32xf32> to vector<16x32xf32>
    %50 = arith.addf %47, %49 : vector<16x32xf32>
    %cst_40 = arith.constant 0.000000e+00 : f32
    %51 = vector.broadcast %cst_40 : f32 to vector<16x32xf32>
    %52 = arith.maximumf %50, %51 : vector<16x32xf32>
    %c32_41 = arith.constant 32 : index
    %c0_42 = arith.constant 0 : index
    %53 = vector.load %arg2[%c32_41, %c0_42] : memref<144x1xf32, #tpu.memory_space<vmem>>, vector<16x1xf32>
    %54 = vector.broadcast %53 : vector<16x1xf32> to vector<16x32xf32>
    %55 = arith.mulf %52, %54 : vector<16x32xf32>
    %56 = arith.truncf %55 : vector<16x32xf32> to vector<16x32xbf16>
    %c2 = arith.constant 2 : index
    %c0_43 = arith.constant 0 : index
    %c0_44 = arith.constant 0 : index
    %57 = vector.load %arg5[%c2, %c0_43, %c0_44] : memref<9x32x32xbf16, #tpu.memory_space<vmem>>, vector<1x32x32xbf16>
    %58 = vector.shape_cast %57 : vector<1x32x32xbf16> to vector<32x32xbf16>
    %cst_45 = arith.constant dense<0.000000e+00> : vector<16x32xf32>
    %59 = tpu.matmul %56, %58, %cst_45 {dimension_numbers = #tpu.dot_dimension_numbers<[1], [0], [0], [1], [0, 0, 1, 1], [], []>} : vector<16x32xbf16>, vector<32x32xbf16>, vector<16x32xf32> -> vector<16x32xf32>
    %60 = arith.addf %40, %59 : vector<16x32xf32>
    %c0_46 = arith.constant 0 : index
    %c48 = arith.constant 48 : index
    %c0_47 = arith.constant 0 : index
    %61 = vector.load %arg1[%c0_46, %c48, %c0_47] : memref<1x144x16xbf16, #tpu.memory_space<vmem>>, vector<1x16x16xbf16>
    %62 = vector.shape_cast %61 : vector<1x16x16xbf16> to vector<16x16xbf16>
    %c0_48 = arith.constant 0 : index
    %c0_49 = arith.constant 0 : index
    %63 = vector.load %arg3[%c0_48, %c0_49] : memref<16x32xbf16, #tpu.memory_space<vmem>>, vector<16x32xbf16>
    %cst_50 = arith.constant dense<0.000000e+00> : vector<16x32xf32>
    %64 = tpu.matmul %62, %63, %cst_50 {dimension_numbers = #tpu.dot_dimension_numbers<[1], [0], [0], [1], [0, 0, 1, 1], [], []>} : vector<16x16xbf16>, vector<16x32xbf16>, vector<16x32xf32> -> vector<16x32xf32>
    %c0_51 = arith.constant 0 : index
    %c0_52 = arith.constant 0 : index
    %65 = vector.load %arg4[%c0_51, %c0_52] : memref<2x32xf32, #tpu.memory_space<vmem>>, vector<1x32xf32>
    %66 = vector.broadcast %65 : vector<1x32xf32> to vector<16x32xf32>
    %67 = arith.mulf %64, %66 : vector<16x32xf32>
    %c1_53 = arith.constant 1 : index
    %c0_54 = arith.constant 0 : index
    %68 = vector.load %arg4[%c1_53, %c0_54] : memref<2x32xf32, #tpu.memory_space<vmem>>, vector<1x32xf32>
    %69 = vector.broadcast %68 : vector<1x32xf32> to vector<16x32xf32>
    %70 = arith.addf %67, %69 : vector<16x32xf32>
    %cst_55 = arith.constant 0.000000e+00 : f32
    %71 = vector.broadcast %cst_55 : f32 to vector<16x32xf32>
    %72 = arith.maximumf %70, %71 : vector<16x32xf32>
    %c48_56 = arith.constant 48 : index
    %c0_57 = arith.constant 0 : index
    %73 = vector.load %arg2[%c48_56, %c0_57] : memref<144x1xf32, #tpu.memory_space<vmem>>, vector<16x1xf32>
    %74 = vector.broadcast %73 : vector<16x1xf32> to vector<16x32xf32>
    %75 = arith.mulf %72, %74 : vector<16x32xf32>
    %76 = arith.truncf %75 : vector<16x32xf32> to vector<16x32xbf16>
    %c3 = arith.constant 3 : index
    %c0_58 = arith.constant 0 : index
    %c0_59 = arith.constant 0 : index
    %77 = vector.load %arg5[%c3, %c0_58, %c0_59] : memref<9x32x32xbf16, #tpu.memory_space<vmem>>, vector<1x32x32xbf16>
    %78 = vector.shape_cast %77 : vector<1x32x32xbf16> to vector<32x32xbf16>
    %cst_60 = arith.constant dense<0.000000e+00> : vector<16x32xf32>
    %79 = tpu.matmul %76, %78, %cst_60 {dimension_numbers = #tpu.dot_dimension_numbers<[1], [0], [0], [1], [0, 0, 1, 1], [], []>} : vector<16x32xbf16>, vector<32x32xbf16>, vector<16x32xf32> -> vector<16x32xf32>
    %80 = arith.addf %60, %79 : vector<16x32xf32>
    %c0_61 = arith.constant 0 : index
    %c64 = arith.constant 64 : index
    %c0_62 = arith.constant 0 : index
    %81 = vector.load %arg1[%c0_61, %c64, %c0_62] : memref<1x144x16xbf16, #tpu.memory_space<vmem>>, vector<1x16x16xbf16>
    %82 = vector.shape_cast %81 : vector<1x16x16xbf16> to vector<16x16xbf16>
    %c0_63 = arith.constant 0 : index
    %c0_64 = arith.constant 0 : index
    %83 = vector.load %arg3[%c0_63, %c0_64] : memref<16x32xbf16, #tpu.memory_space<vmem>>, vector<16x32xbf16>
    %cst_65 = arith.constant dense<0.000000e+00> : vector<16x32xf32>
    %84 = tpu.matmul %82, %83, %cst_65 {dimension_numbers = #tpu.dot_dimension_numbers<[1], [0], [0], [1], [0, 0, 1, 1], [], []>} : vector<16x16xbf16>, vector<16x32xbf16>, vector<16x32xf32> -> vector<16x32xf32>
    %c0_66 = arith.constant 0 : index
    %c0_67 = arith.constant 0 : index
    %85 = vector.load %arg4[%c0_66, %c0_67] : memref<2x32xf32, #tpu.memory_space<vmem>>, vector<1x32xf32>
    %86 = vector.broadcast %85 : vector<1x32xf32> to vector<16x32xf32>
    %87 = arith.mulf %84, %86 : vector<16x32xf32>
    %c1_68 = arith.constant 1 : index
    %c0_69 = arith.constant 0 : index
    %88 = vector.load %arg4[%c1_68, %c0_69] : memref<2x32xf32, #tpu.memory_space<vmem>>, vector<1x32xf32>
    %89 = vector.broadcast %88 : vector<1x32xf32> to vector<16x32xf32>
    %90 = arith.addf %87, %89 : vector<16x32xf32>
    %cst_70 = arith.constant 0.000000e+00 : f32
    %91 = vector.broadcast %cst_70 : f32 to vector<16x32xf32>
    %92 = arith.maximumf %90, %91 : vector<16x32xf32>
    %93 = arith.truncf %92 : vector<16x32xf32> to vector<16x32xbf16>
    %c4 = arith.constant 4 : index
    %c0_71 = arith.constant 0 : index
    %c0_72 = arith.constant 0 : index
    %94 = vector.load %arg5[%c4, %c0_71, %c0_72] : memref<9x32x32xbf16, #tpu.memory_space<vmem>>, vector<1x32x32xbf16>
    %95 = vector.shape_cast %94 : vector<1x32x32xbf16> to vector<32x32xbf16>
    %cst_73 = arith.constant dense<0.000000e+00> : vector<16x32xf32>
    %96 = tpu.matmul %93, %95, %cst_73 {dimension_numbers = #tpu.dot_dimension_numbers<[1], [0], [0], [1], [0, 0, 1, 1], [], []>} : vector<16x32xbf16>, vector<32x32xbf16>, vector<16x32xf32> -> vector<16x32xf32>
    %97 = arith.addf %80, %96 : vector<16x32xf32>
    %c0_74 = arith.constant 0 : index
    %c80 = arith.constant 80 : index
    %c0_75 = arith.constant 0 : index
    %98 = vector.load %arg1[%c0_74, %c80, %c0_75] : memref<1x144x16xbf16, #tpu.memory_space<vmem>>, vector<1x16x16xbf16>
    %99 = vector.shape_cast %98 : vector<1x16x16xbf16> to vector<16x16xbf16>
    %c0_76 = arith.constant 0 : index
    %c0_77 = arith.constant 0 : index
    %100 = vector.load %arg3[%c0_76, %c0_77] : memref<16x32xbf16, #tpu.memory_space<vmem>>, vector<16x32xbf16>
    %cst_78 = arith.constant dense<0.000000e+00> : vector<16x32xf32>
    %101 = tpu.matmul %99, %100, %cst_78 {dimension_numbers = #tpu.dot_dimension_numbers<[1], [0], [0], [1], [0, 0, 1, 1], [], []>} : vector<16x16xbf16>, vector<16x32xbf16>, vector<16x32xf32> -> vector<16x32xf32>
    %c0_79 = arith.constant 0 : index
    %c0_80 = arith.constant 0 : index
    %102 = vector.load %arg4[%c0_79, %c0_80] : memref<2x32xf32, #tpu.memory_space<vmem>>, vector<1x32xf32>
    %103 = vector.broadcast %102 : vector<1x32xf32> to vector<16x32xf32>
    %104 = arith.mulf %101, %103 : vector<16x32xf32>
    %c1_81 = arith.constant 1 : index
    %c0_82 = arith.constant 0 : index
    %105 = vector.load %arg4[%c1_81, %c0_82] : memref<2x32xf32, #tpu.memory_space<vmem>>, vector<1x32xf32>
    %106 = vector.broadcast %105 : vector<1x32xf32> to vector<16x32xf32>
    %107 = arith.addf %104, %106 : vector<16x32xf32>
    %cst_83 = arith.constant 0.000000e+00 : f32
    %108 = vector.broadcast %cst_83 : f32 to vector<16x32xf32>
    %109 = arith.maximumf %107, %108 : vector<16x32xf32>
    %110 = arith.truncf %109 : vector<16x32xf32> to vector<16x32xbf16>
    %c5 = arith.constant 5 : index
    %c0_84 = arith.constant 0 : index
    %c0_85 = arith.constant 0 : index
    %111 = vector.load %arg5[%c5, %c0_84, %c0_85] : memref<9x32x32xbf16, #tpu.memory_space<vmem>>, vector<1x32x32xbf16>
    %112 = vector.shape_cast %111 : vector<1x32x32xbf16> to vector<32x32xbf16>
    %cst_86 = arith.constant dense<0.000000e+00> : vector<16x32xf32>
    %113 = tpu.matmul %110, %112, %cst_86 {dimension_numbers = #tpu.dot_dimension_numbers<[1], [0], [0], [1], [0, 0, 1, 1], [], []>} : vector<16x32xbf16>, vector<32x32xbf16>, vector<16x32xf32> -> vector<16x32xf32>
    %114 = arith.addf %97, %113 : vector<16x32xf32>
    %c0_87 = arith.constant 0 : index
    %c96 = arith.constant 96 : index
    %c0_88 = arith.constant 0 : index
    %115 = vector.load %arg1[%c0_87, %c96, %c0_88] : memref<1x144x16xbf16, #tpu.memory_space<vmem>>, vector<1x16x16xbf16>
    %116 = vector.shape_cast %115 : vector<1x16x16xbf16> to vector<16x16xbf16>
    %c0_89 = arith.constant 0 : index
    %c0_90 = arith.constant 0 : index
    %117 = vector.load %arg3[%c0_89, %c0_90] : memref<16x32xbf16, #tpu.memory_space<vmem>>, vector<16x32xbf16>
    %cst_91 = arith.constant dense<0.000000e+00> : vector<16x32xf32>
    %118 = tpu.matmul %116, %117, %cst_91 {dimension_numbers = #tpu.dot_dimension_numbers<[1], [0], [0], [1], [0, 0, 1, 1], [], []>} : vector<16x16xbf16>, vector<16x32xbf16>, vector<16x32xf32> -> vector<16x32xf32>
    %c0_92 = arith.constant 0 : index
    %c0_93 = arith.constant 0 : index
    %119 = vector.load %arg4[%c0_92, %c0_93] : memref<2x32xf32, #tpu.memory_space<vmem>>, vector<1x32xf32>
    %120 = vector.broadcast %119 : vector<1x32xf32> to vector<16x32xf32>
    %121 = arith.mulf %118, %120 : vector<16x32xf32>
    %c1_94 = arith.constant 1 : index
    %c0_95 = arith.constant 0 : index
    %122 = vector.load %arg4[%c1_94, %c0_95] : memref<2x32xf32, #tpu.memory_space<vmem>>, vector<1x32xf32>
    %123 = vector.broadcast %122 : vector<1x32xf32> to vector<16x32xf32>
    %124 = arith.addf %121, %123 : vector<16x32xf32>
    %cst_96 = arith.constant 0.000000e+00 : f32
    %125 = vector.broadcast %cst_96 : f32 to vector<16x32xf32>
    %126 = arith.maximumf %124, %125 : vector<16x32xf32>
    %c96_97 = arith.constant 96 : index
    %c0_98 = arith.constant 0 : index
    %127 = vector.load %arg2[%c96_97, %c0_98] : memref<144x1xf32, #tpu.memory_space<vmem>>, vector<16x1xf32>
    %128 = vector.broadcast %127 : vector<16x1xf32> to vector<16x32xf32>
    %129 = arith.mulf %126, %128 : vector<16x32xf32>
    %130 = arith.truncf %129 : vector<16x32xf32> to vector<16x32xbf16>
    %c6 = arith.constant 6 : index
    %c0_99 = arith.constant 0 : index
    %c0_100 = arith.constant 0 : index
    %131 = vector.load %arg5[%c6, %c0_99, %c0_100] : memref<9x32x32xbf16, #tpu.memory_space<vmem>>, vector<1x32x32xbf16>
    %132 = vector.shape_cast %131 : vector<1x32x32xbf16> to vector<32x32xbf16>
    %cst_101 = arith.constant dense<0.000000e+00> : vector<16x32xf32>
    %133 = tpu.matmul %130, %132, %cst_101 {dimension_numbers = #tpu.dot_dimension_numbers<[1], [0], [0], [1], [0, 0, 1, 1], [], []>} : vector<16x32xbf16>, vector<32x32xbf16>, vector<16x32xf32> -> vector<16x32xf32>
    %134 = arith.addf %114, %133 : vector<16x32xf32>
    %c0_102 = arith.constant 0 : index
    %c112 = arith.constant 112 : index
    %c0_103 = arith.constant 0 : index
    %135 = vector.load %arg1[%c0_102, %c112, %c0_103] : memref<1x144x16xbf16, #tpu.memory_space<vmem>>, vector<1x16x16xbf16>
    %136 = vector.shape_cast %135 : vector<1x16x16xbf16> to vector<16x16xbf16>
    %c0_104 = arith.constant 0 : index
    %c0_105 = arith.constant 0 : index
    %137 = vector.load %arg3[%c0_104, %c0_105] : memref<16x32xbf16, #tpu.memory_space<vmem>>, vector<16x32xbf16>
    %cst_106 = arith.constant dense<0.000000e+00> : vector<16x32xf32>
    %138 = tpu.matmul %136, %137, %cst_106 {dimension_numbers = #tpu.dot_dimension_numbers<[1], [0], [0], [1], [0, 0, 1, 1], [], []>} : vector<16x16xbf16>, vector<16x32xbf16>, vector<16x32xf32> -> vector<16x32xf32>
    %c0_107 = arith.constant 0 : index
    %c0_108 = arith.constant 0 : index
    %139 = vector.load %arg4[%c0_107, %c0_108] : memref<2x32xf32, #tpu.memory_space<vmem>>, vector<1x32xf32>
    %140 = vector.broadcast %139 : vector<1x32xf32> to vector<16x32xf32>
    %141 = arith.mulf %138, %140 : vector<16x32xf32>
    %c1_109 = arith.constant 1 : index
    %c0_110 = arith.constant 0 : index
    %142 = vector.load %arg4[%c1_109, %c0_110] : memref<2x32xf32, #tpu.memory_space<vmem>>, vector<1x32xf32>
    %143 = vector.broadcast %142 : vector<1x32xf32> to vector<16x32xf32>
    %144 = arith.addf %141, %143 : vector<16x32xf32>
    %cst_111 = arith.constant 0.000000e+00 : f32
    %145 = vector.broadcast %cst_111 : f32 to vector<16x32xf32>
    %146 = arith.maximumf %144, %145 : vector<16x32xf32>
    %147 = arith.truncf %146 : vector<16x32xf32> to vector<16x32xbf16>
    %c7 = arith.constant 7 : index
    %c0_112 = arith.constant 0 : index
    %c0_113 = arith.constant 0 : index
    %148 = vector.load %arg5[%c7, %c0_112, %c0_113] : memref<9x32x32xbf16, #tpu.memory_space<vmem>>, vector<1x32x32xbf16>
    %149 = vector.shape_cast %148 : vector<1x32x32xbf16> to vector<32x32xbf16>
    %cst_114 = arith.constant dense<0.000000e+00> : vector<16x32xf32>
    %150 = tpu.matmul %147, %149, %cst_114 {dimension_numbers = #tpu.dot_dimension_numbers<[1], [0], [0], [1], [0, 0, 1, 1], [], []>} : vector<16x32xbf16>, vector<32x32xbf16>, vector<16x32xf32> -> vector<16x32xf32>
    %151 = arith.addf %134, %150 : vector<16x32xf32>
    %c0_115 = arith.constant 0 : index
    %c128 = arith.constant 128 : index
    %c0_116 = arith.constant 0 : index
    %152 = vector.load %arg1[%c0_115, %c128, %c0_116] : memref<1x144x16xbf16, #tpu.memory_space<vmem>>, vector<1x16x16xbf16>
    %153 = vector.shape_cast %152 : vector<1x16x16xbf16> to vector<16x16xbf16>
    %c0_117 = arith.constant 0 : index
    %c0_118 = arith.constant 0 : index
    %154 = vector.load %arg3[%c0_117, %c0_118] : memref<16x32xbf16, #tpu.memory_space<vmem>>, vector<16x32xbf16>
    %cst_119 = arith.constant dense<0.000000e+00> : vector<16x32xf32>
    %155 = tpu.matmul %153, %154, %cst_119 {dimension_numbers = #tpu.dot_dimension_numbers<[1], [0], [0], [1], [0, 0, 1, 1], [], []>} : vector<16x16xbf16>, vector<16x32xbf16>, vector<16x32xf32> -> vector<16x32xf32>
    %c0_120 = arith.constant 0 : index
    %c0_121 = arith.constant 0 : index
    %156 = vector.load %arg4[%c0_120, %c0_121] : memref<2x32xf32, #tpu.memory_space<vmem>>, vector<1x32xf32>
    %157 = vector.broadcast %156 : vector<1x32xf32> to vector<16x32xf32>
    %158 = arith.mulf %155, %157 : vector<16x32xf32>
    %c1_122 = arith.constant 1 : index
    %c0_123 = arith.constant 0 : index
    %159 = vector.load %arg4[%c1_122, %c0_123] : memref<2x32xf32, #tpu.memory_space<vmem>>, vector<1x32xf32>
    %160 = vector.broadcast %159 : vector<1x32xf32> to vector<16x32xf32>
    %161 = arith.addf %158, %160 : vector<16x32xf32>
    %cst_124 = arith.constant 0.000000e+00 : f32
    %162 = vector.broadcast %cst_124 : f32 to vector<16x32xf32>
    %163 = arith.maximumf %161, %162 : vector<16x32xf32>
    %164 = arith.truncf %163 : vector<16x32xf32> to vector<16x32xbf16>
    %c8 = arith.constant 8 : index
    %c0_125 = arith.constant 0 : index
    %c0_126 = arith.constant 0 : index
    %165 = vector.load %arg5[%c8, %c0_125, %c0_126] : memref<9x32x32xbf16, #tpu.memory_space<vmem>>, vector<1x32x32xbf16>
    %166 = vector.shape_cast %165 : vector<1x32x32xbf16> to vector<32x32xbf16>
    %cst_127 = arith.constant dense<0.000000e+00> : vector<16x32xf32>
    %167 = tpu.matmul %164, %166, %cst_127 {dimension_numbers = #tpu.dot_dimension_numbers<[1], [0], [0], [1], [0, 0, 1, 1], [], []>} : vector<16x32xbf16>, vector<32x32xbf16>, vector<16x32xf32> -> vector<16x32xf32>
    %168 = arith.addf %151, %167 : vector<16x32xf32>
    %c0_128 = arith.constant 0 : index
    %c0_129 = arith.constant 0 : index
    %169 = vector.load %arg6[%c0_128, %c0_129] : memref<2x32xf32, #tpu.memory_space<vmem>>, vector<1x32xf32>
    %170 = vector.broadcast %169 : vector<1x32xf32> to vector<16x32xf32>
    %171 = arith.mulf %168, %170 : vector<16x32xf32>
    %c1_130 = arith.constant 1 : index
    %c0_131 = arith.constant 0 : index
    %172 = vector.load %arg6[%c1_130, %c0_131] : memref<2x32xf32, #tpu.memory_space<vmem>>, vector<1x32xf32>
    %173 = vector.broadcast %172 : vector<1x32xf32> to vector<16x32xf32>
    %174 = arith.addf %171, %173 : vector<16x32xf32>
    %cst_132 = arith.constant 0.000000e+00 : f32
    %175 = vector.broadcast %cst_132 : f32 to vector<16x32xf32>
    %176 = arith.maximumf %174, %175 : vector<16x32xf32>
    %cst_133 = arith.constant dense<0.000000e+00> : vector<32xf32>
    %177 = vector.multi_reduction <add>, %176, %cst_133 [0] : vector<16x32xf32> to vector<32xf32>
    %178 = vector.shape_cast %177 : vector<32xf32> to vector<1x32xf32>
    %cst_134 = arith.constant 1.600000e+01 : f32
    %179 = vector.broadcast %cst_134 : f32 to vector<1x32xf32>
    %180 = arith.divf %178, %179 : vector<1x32xf32>
    %181 = arith.truncf %180 : vector<1x32xf32> to vector<1x32xbf16>
    %c0_135 = arith.constant 0 : index
    %c0_136 = arith.constant 0 : index
    %182 = vector.load %arg7[%c0_135, %c0_136] : memref<32x4xbf16, #tpu.memory_space<vmem>>, vector<32x4xbf16>
    %cst_137 = arith.constant dense<0.000000e+00> : vector<1x4xf32>
    %183 = tpu.matmul %181, %182, %cst_137 {dimension_numbers = #tpu.dot_dimension_numbers<[1], [0], [0], [1], [0, 0, 1, 1], [], []>} : vector<1x32xbf16>, vector<32x4xbf16>, vector<1x4xf32> -> vector<1x4xf32>
    %c0_138 = arith.constant 0 : index
    %c0_139 = arith.constant 0 : index
    %184 = vector.load %arg8[%c0_138, %c0_139] : memref<1x4xf32, #tpu.memory_space<vmem>>, vector<1x4xf32>
    %185 = arith.addf %183, %184 : vector<1x4xf32>
    %cst_140 = arith.constant 0.000000e+00 : f32
    %186 = vector.broadcast %cst_140 : f32 to vector<1x4xf32>
    %187 = arith.maximumf %185, %186 : vector<1x4xf32>
    %188 = arith.truncf %187 : vector<1x4xf32> to vector<1x4xbf16>
    %c0_141 = arith.constant 0 : index
    %c0_142 = arith.constant 0 : index
    %189 = vector.load %arg9[%c0_141, %c0_142] : memref<4x32xbf16, #tpu.memory_space<vmem>>, vector<4x32xbf16>
    %cst_143 = arith.constant dense<0.000000e+00> : vector<1x32xf32>
    %190 = tpu.matmul %188, %189, %cst_143 {dimension_numbers = #tpu.dot_dimension_numbers<[1], [0], [0], [1], [0, 0, 1, 1], [], []>} : vector<1x4xbf16>, vector<4x32xbf16>, vector<1x32xf32> -> vector<1x32xf32>
    %c0_144 = arith.constant 0 : index
    %c0_145 = arith.constant 0 : index
    %191 = vector.load %arg10[%c0_144, %c0_145] : memref<1x32xf32, #tpu.memory_space<vmem>>, vector<1x32xf32>
    %192 = arith.addf %190, %191 : vector<1x32xf32>
    %193 = arith.negf %192 : vector<1x32xf32>
    %194 = math.exp %193 : vector<1x32xf32>
    %cst_146 = arith.constant 1.000000e+00 : f32
    %195 = vector.broadcast %cst_146 : f32 to vector<1x32xf32>
    %196 = arith.addf %195, %194 : vector<1x32xf32>
    %197 = arith.divf %195, %196 : vector<1x32xf32>
    %198 = vector.broadcast %197 : vector<1x32xf32> to vector<16x32xf32>
    %199 = arith.mulf %176, %198 : vector<16x32xf32>
    %200 = arith.truncf %199 : vector<16x32xf32> to vector<16x32xbf16>
    %c0_147 = arith.constant 0 : index
    %c0_148 = arith.constant 0 : index
    %201 = vector.load %arg11[%c0_147, %c0_148] : memref<32x32xbf16, #tpu.memory_space<vmem>>, vector<32x32xbf16>
    %cst_149 = arith.constant dense<0.000000e+00> : vector<16x32xf32>
    %202 = tpu.matmul %200, %201, %cst_149 {dimension_numbers = #tpu.dot_dimension_numbers<[1], [0], [0], [1], [0, 0, 1, 1], [], []>} : vector<16x32xbf16>, vector<32x32xbf16>, vector<16x32xf32> -> vector<16x32xf32>
    %c0_150 = arith.constant 0 : index
    %c0_151 = arith.constant 0 : index
    %203 = vector.load %arg12[%c0_150, %c0_151] : memref<2x32xf32, #tpu.memory_space<vmem>>, vector<1x32xf32>
    %204 = vector.broadcast %203 : vector<1x32xf32> to vector<16x32xf32>
    %205 = arith.mulf %202, %204 : vector<16x32xf32>
    %c1_152 = arith.constant 1 : index
    %c0_153 = arith.constant 0 : index
    %206 = vector.load %arg12[%c1_152, %c0_153] : memref<2x32xf32, #tpu.memory_space<vmem>>, vector<1x32xf32>
    %207 = vector.broadcast %206 : vector<1x32xf32> to vector<16x32xf32>
    %208 = arith.addf %205, %207 : vector<16x32xf32>
    %c0_154 = arith.constant 0 : index
    %c64_155 = arith.constant 64 : index
    %c0_156 = arith.constant 0 : index
    %209 = vector.load %arg1[%c0_154, %c64_155, %c0_156] : memref<1x144x16xbf16, #tpu.memory_space<vmem>>, vector<1x16x16xbf16>
    %210 = vector.shape_cast %209 : vector<1x16x16xbf16> to vector<16x16xbf16>
    %c0_157 = arith.constant 0 : index
    %c0_158 = arith.constant 0 : index
    %211 = vector.load %arg13[%c0_157, %c0_158] : memref<16x32xbf16, #tpu.memory_space<vmem>>, vector<16x32xbf16>
    %cst_159 = arith.constant dense<0.000000e+00> : vector<16x32xf32>
    %212 = tpu.matmul %210, %211, %cst_159 {dimension_numbers = #tpu.dot_dimension_numbers<[1], [0], [0], [1], [0, 0, 1, 1], [], []>} : vector<16x16xbf16>, vector<16x32xbf16>, vector<16x32xf32> -> vector<16x32xf32>
    %c0_160 = arith.constant 0 : index
    %c0_161 = arith.constant 0 : index
    %213 = vector.load %arg14[%c0_160, %c0_161] : memref<2x32xf32, #tpu.memory_space<vmem>>, vector<1x32xf32>
    %214 = vector.broadcast %213 : vector<1x32xf32> to vector<16x32xf32>
    %215 = arith.mulf %212, %214 : vector<16x32xf32>
    %c1_162 = arith.constant 1 : index
    %c0_163 = arith.constant 0 : index
    %216 = vector.load %arg14[%c1_162, %c0_163] : memref<2x32xf32, #tpu.memory_space<vmem>>, vector<1x32xf32>
    %217 = vector.broadcast %216 : vector<1x32xf32> to vector<16x32xf32>
    %218 = arith.addf %215, %217 : vector<16x32xf32>
    %219 = arith.addf %208, %218 : vector<16x32xf32>
    %cst_164 = arith.constant 0.000000e+00 : f32
    %220 = vector.broadcast %cst_164 : f32 to vector<16x32xf32>
    %221 = arith.maximumf %219, %220 : vector<16x32xf32>
    %cst_165 = arith.constant dense<0.000000e+00> : vector<32xf32>
    %222 = vector.multi_reduction <add>, %221, %cst_165 [0] : vector<16x32xf32> to vector<32xf32>
    %223 = vector.shape_cast %222 : vector<32xf32> to vector<1x32xf32>
    %cst_166 = arith.constant 1.600000e+01 : f32
    %224 = vector.broadcast %cst_166 : f32 to vector<1x32xf32>
    %225 = arith.divf %223, %224 : vector<1x32xf32>
    %c2_167 = arith.constant 2 : index
    %c0_168 = arith.constant 0 : index
    %226 = vector.load %arg15[%c2_167, %c0_168] : memref<4x32xf32, #tpu.memory_space<vmem>>, vector<1x32xf32>
    %227 = arith.subf %225, %226 : vector<1x32xf32>
    %c3_169 = arith.constant 3 : index
    %c0_170 = arith.constant 0 : index
    %228 = vector.load %arg15[%c3_169, %c0_170] : memref<4x32xf32, #tpu.memory_space<vmem>>, vector<1x32xf32>
    %cst_171 = arith.constant 9.99999974E-6 : f32
    %229 = vector.broadcast %cst_171 : f32 to vector<1x32xf32>
    %230 = arith.addf %228, %229 : vector<1x32xf32>
    %231 = math.rsqrt %230 : vector<1x32xf32>
    %232 = arith.mulf %227, %231 : vector<1x32xf32>
    %c0_172 = arith.constant 0 : index
    %c0_173 = arith.constant 0 : index
    %233 = vector.load %arg15[%c0_172, %c0_173] : memref<4x32xf32, #tpu.memory_space<vmem>>, vector<1x32xf32>
    %234 = arith.mulf %232, %233 : vector<1x32xf32>
    %c1_174 = arith.constant 1 : index
    %c0_175 = arith.constant 0 : index
    %235 = vector.load %arg15[%c1_174, %c0_175] : memref<4x32xf32, #tpu.memory_space<vmem>>, vector<1x32xf32>
    %236 = arith.addf %234, %235 : vector<1x32xf32>
    %237 = arith.mulf %236, %236 : vector<1x32xf32>
    %cst_176 = arith.constant dense<0.000000e+00> : vector<1xf32>
    %238 = vector.multi_reduction <add>, %237, %cst_176 [1] : vector<1x32xf32> to vector<1xf32>
    %239 = vector.shape_cast %238 : vector<1xf32> to vector<1x1xf32>
    %240 = math.sqrt %239 : vector<1x1xf32>
    %cst_177 = arith.constant 9.99999996E-13 : f32
    %241 = vector.broadcast %cst_177 : f32 to vector<1x1xf32>
    %242 = arith.maximumf %240, %241 : vector<1x1xf32>
    %243 = vector.broadcast %242 : vector<1x1xf32> to vector<1x32xf32>
    %244 = arith.divf %236, %243 : vector<1x32xf32>
    %c0_178 = arith.constant 0 : index
    %c0_179 = arith.constant 0 : index
    %c0_180 = arith.constant 0 : index
    %245 = vector.load %arg16[%c0_178, %c0_179, %c0_180] : memref<1x1x32xf32, #tpu.memory_space<vmem>>, vector<1x1x32xf32>
    %246 = vector.shape_cast %245 : vector<1x1x32xf32> to vector<1x32xf32>
    %247 = vector.shape_cast %244 : vector<1x32xf32> to vector<1x1x32xf32>
    tpu.vector_store %arg16[%c0_178, %c0_179, %c0_180], %247 {strides = array<i32>} : memref<1x1x32xf32, #tpu.memory_space<vmem>>, vector<1x1x32xf32>,
    return
  }
  func.func @transform_0(%arg0: i32) -> (i32, i32, i32) {
    %c0_i32 = arith.constant 0 : i32
    %c0_i32_0 = arith.constant 0 : i32
    %c0_i32_1 = arith.constant 0 : i32
    return %arg0, %c0_i32, %c0_i32_0 : i32, i32, i32
  }
  func.func @transform_1(%arg0: i32) -> (i32, i32) {
    %c0_i32 = arith.constant 0 : i32
    %c0_i32_0 = arith.constant 0 : i32
    %c0_i32_1 = arith.constant 0 : i32
    return %c0_i32, %c0_i32_0 : i32, i32
  }
  func.func @transform_2(%arg0: i32) -> (i32, i32) {
    %c0_i32 = arith.constant 0 : i32
    %c0_i32_0 = arith.constant 0 : i32
    %c0_i32_1 = arith.constant 0 : i32
    return %c0_i32, %c0_i32_0 : i32, i32
  }
  func.func @transform_3(%arg0: i32) -> (i32, i32) {
    %c0_i32 = arith.constant 0 : i32
    %c0_i32_0 = arith.constant 0 : i32
    %c0_i32_1 = arith.constant 0 : i32
    return %c0_i32, %c0_i32_0 : i32, i32
  }
  func.func @transform_4(%arg0: i32) -> (i32, i32, i32) {
    %c0_i32 = arith.constant 0 : i32
    %c0_i32_0 = arith.constant 0 : i32
    %c0_i32_1 = arith.constant 0 : i32
    %c0_i32_2 = arith.constant 0 : i32
    return %c0_i32, %c0_i32_0, %c0_i32_1 : i32, i32, i32
  }
  func.func @transform_5(%arg0: i32) -> (i32, i32) {
    %c0_i32 = arith.constant 0 : i32
    %c0_i32_0 = arith.constant 0 : i32
    %c0_i32_1 = arith.constant 0 : i32
    return %c0_i32, %c0_i32_0 : i32, i32
  }
  func.func @transform_6(%arg0: i32) -> (i32, i32) {
    %c0_i32 = arith.constant 0 : i32
    %c0_i32_0 = arith.constant 0 : i32
    %c0_i32_1 = arith.constant 0 : i32
    return %c0_i32, %c0_i32_0 : i32, i32
  }
  func.func @transform_7(%arg0: i32) -> (i32, i32) {
    %c0_i32 = arith.constant 0 : i32
    %c0_i32_0 = arith.constant 0 : i32
    %c0_i32_1 = arith.constant 0 : i32
    return %c0_i32, %c0_i32_0 : i32, i32
  }
  func.func @transform_8(%arg0: i32) -> (i32, i32) {
    %c0_i32 = arith.constant 0 : i32
    %c0_i32_0 = arith.constant 0 : i32
    %c0_i32_1 = arith.constant 0 : i32
    return %c0_i32, %c0_i32_0 : i32, i32
  }
  func.func @transform_9(%arg0: i32) -> (i32, i32) {
    %c0_i32 = arith.constant 0 : i32
    %c0_i32_0 = arith.constant 0 : i32
    %c0_i32_1 = arith.constant 0 : i32
    return %c0_i32, %c0_i32_0 : i32, i32
  }
  func.func @transform_10(%arg0: i32) -> (i32, i32) {
    %c0_i32 = arith.constant 0 : i32
    %c0_i32_0 = arith.constant 0 : i32
    %c0_i32_1 = arith.constant 0 : i32
    return %c0_i32, %c0_i32_0 : i32, i32
  }
  func.func @transform_11(%arg0: i32) -> (i32, i32) {
    %c0_i32 = arith.constant 0 : i32
    %c0_i32_0 = arith.constant 0 : i32
    %c0_i32_1 = arith.constant 0 : i32
    return %c0_i32, %c0_i32_0 : i32, i32
  }
  func.func @transform_12(%arg0: i32) -> (i32, i32) {
    %c0_i32 = arith.constant 0 : i32
    %c0_i32_0 = arith.constant 0 : i32
    %c0_i32_1 = arith.constant 0 : i32
    return %c0_i32, %c0_i32_0 : i32, i32
  }
  func.func @transform_13(%arg0: i32) -> (i32, i32) {
    %c0_i32 = arith.constant 0 : i32
    %c0_i32_0 = arith.constant 0 : i32
    %c0_i32_1 = arith.constant 0 : i32
    return %c0_i32, %c0_i32_0 : i32, i32
  }
  func.func @transform_14(%arg0: i32) -> (i32, i32) {
    %c0_i32 = arith.constant 0 : i32
    %c0_i32_0 = arith.constant 0 : i32
    %c0_i32_1 = arith.constant 0 : i32
    return %c0_i32, %c0_i32_0 : i32, i32
  }
  func.func @transform_15(%arg0: i32) -> (i32, i32, i32) {
    %c0_i32 = arith.constant 0 : i32
    %c0_i32_0 = arith.constant 0 : i32
    %c0_i32_1 = arith.constant 0 : i32
    return %arg0, %c0_i32, %c0_i32_0 : i32, i32, i32
  }
}

</mosaic_0001>

<llo_original>
// kernel: _lambda_.3
$region0: #{_lambda_.3}
  #allocation0 [shape = 'u32[]', space=smem, size = 0x4, offset = 0x4, fixed_abs, tag = 'smem constant byte address 0x4 - core index']
  #allocation1 [shape = 'u32[144,128]{1,0:T(1,128)}', space=vmem, size = 0x12000, scoped, tag = 'internal scratch']
  %s0 = inlined_call_operand.vmem [shape: bf16[2,2304,3], index: 0, kind: input, shape index: {}]
  %s1 = inlined_call_operand.vmem [shape: bf16[9,3,16], index: 1, kind: input, shape index: {}]
  %s2 = inlined_call_operand.vmem [shape: f32[2,16], index: 2, kind: input, shape index: {}]
  %s3 = inlined_call_operand.vmem [shape: bf16[2,256,16], index: 3, kind: output, shape index: {}]
  %s4 = sld [smem:[#allocation0]]
  $region45: #{_lambda_.3} parent=0
    _
  %s6 = ssub.s32 1, %s4
  %s7 = scalar_select 0, %s6, %s4
  loop: start=0, step=1, limit=4
  $region2: #{_lambda_.3} parent=0 // loop_pre_header
    _
  $region3: #{_lambda_.3} parent=0 // loop_header
    %s9 = sphi 0, %s13
    %p10 = scmp.ge.s32.totalorder %s9, 4
    %s19 = sphi 0, %s21
    %s22 = sphi 0, %s19
    %s23 = sphi 0, %s22
    %s39 = sphi 0, %s23
    %s43 = sphi 0, %s43
    %s45 = sphi 0, %s43
    %s46 = sphi 0, %s45
    %s60 = sphi 0, %s46
    %s64 = sphi 0, %s64
    %s66 = sphi 0, %s64
    %s67 = sphi 0, %s66
    %s81 = sphi 0, %s67
    %s87 = sphi 0, %s89
    %s90 = sphi 0, %s87
    %s91 = sphi 0, %s90
    %s107 = sphi 0, %s91
  $region4: #{_lambda_.3} parent=0 // loop_header_branch
    %12 = sbr.rel (%p10) target = $region8
  $region5: #{_lambda_.3} parent=0 // loop_body
    %s14 = ssub.s32 %s9, 1
    %s15 = ssub.s32 %s9, 2
    %s16 = sadd.s32 %s9, 1
    %s17 = ssub.s32 %s9, %s16
    %p18 = scmp.eq.s32.totalorder %s17, 0
    %s20 = sadd.s32 %s19, 1
    %s21 = scalar_select %p18, %s19, %s20
    %p24 = pneg %p18
    %p25 = scmp.eq.s32.totalorder %s9, 1
    %p26 = por %p24, %p25
    %p27 = scmp.ne.s32.totalorder %s19, %s22
    %p28 = scmp.eq.s32.totalorder %s9, 0
    %p29 = por %p27, %p28
    %p30 = scmp.ne.s32.totalorder %s19, %s22
    %p31 = scmp.eq.s32.totalorder %s14, 1
    %p32 = por %p30, %p31
    %p33 = scmp.ne.s32.totalorder %s22, %s23
    %p34 = scmp.eq.s32.totalorder %s14, 0
    %p35 = por %p33, %p34
    %p36 = scmp.ne.s32.totalorder %s22, %s23
    %p37 = scmp.eq.s32.totalorder %s15, 1
    %p38 = por %p36, %p37
    %p40 = scmp.ne.s32.totalorder %s23, %s39
    %p41 = scmp.eq.s32.totalorder %s15, 0
    %p42 = por %p40, %p41
    %s44 = sadd.s32 %s43, 1
    %p47 = scmp.eq.s32.totalorder %s9, 1
    %p48 = scmp.ne.s32.totalorder %s43, %s45
    %p49 = scmp.eq.s32.totalorder %s9, 0
    %p50 = por %p48, %p49
    %p51 = scmp.ne.s32.totalorder %s43, %s45
    %p52 = scmp.eq.s32.totalorder %s14, 1
    %p53 = por %p51, %p52
    %p54 = scmp.ne.s32.totalorder %s45, %s46
    %p55 = scmp.eq.s32.totalorder %s14, 0
    %p56 = por %p54, %p55
    %p57 = scmp.ne.s32.totalorder %s45, %s46
    %p58 = scmp.eq.s32.totalorder %s15, 1
    %p59 = por %p57, %p58
    %p61 = scmp.ne.s32.totalorder %s46, %s60
    %p62 = scmp.eq.s32.totalorder %s15, 0
    %p63 = por %p61, %p62
    %s65 = sadd.s32 %s64, 1
    %p68 = scmp.eq.s32.totalorder %s9, 1
    %p69 = scmp.ne.s32.totalorder %s64, %s66
    %p70 = scmp.eq.s32.totalorder %s9, 0
    %p71 = por %p69, %p70
    %p72 = scmp.ne.s32.totalorder %s64, %s66
    %p73 = scmp.eq.s32.totalorder %s14, 1
    %p74 = por %p72, %p73
    %p75 = scmp.ne.s32.totalorder %s66, %s67
    %p76 = scmp.eq.s32.totalorder %s14, 0
    %p77 = por %p75, %p76
    %p78 = scmp.ne.s32.totalorder %s66, %s67
    %p79 = scmp.eq.s32.totalorder %s15, 1
    %p80 = por %p78, %p79
    %p82 = scmp.ne.s32.totalorder %s67, %s81
    %p83 = scmp.eq.s32.totalorder %s15, 0
    %p84 = por %p82, %p83
    %s85 = ssub.s32 %s9, %s16
    %p86 = scmp.eq.s32.totalorder %s85, 0
    %s88 = sadd.s32 %s87, 1
    %s89 = scalar_select %p86, %s87, %s88
    %p92 = pneg %p86
    %p93 = scmp.eq.s32.totalorder %s9, 1
    %p94 = por %p92, %p93
    %p95 = scmp.ne.s32.totalorder %s87, %s90
    %p96 = scmp.eq.s32.totalorder %s9, 0
    %p97 = por %p95, %p96
    %p98 = scmp.ne.s32.totalorder %s87, %s90
    %p99 = scmp.eq.s32.totalorder %s14, 1
    %p100 = por %p98, %p99
    %p101 = scmp.ne.s32.totalorder %s90, %s91
    %p102 = scmp.eq.s32.totalorder %s14, 0
    %p103 = por %p101, %p102
    %p104 = scmp.ne.s32.totalorder %s90, %s91
    %p105 = scmp.eq.s32.totalorder %s15, 1
    %p106 = por %p104, %p105
    %p108 = scmp.ne.s32.totalorder %s91, %s107
    %p109 = scmp.eq.s32.totalorder %s15, 0
    %p110 = por %p108, %p109
    %p111 = scmp.le.s32.totalorder 1, %s9
    %p112 = scmp.lt.s32.totalorder %s9, 3
    %p113 = pnand %p111, %p112
    %p114 = pneg %p113
    // Predicated region
    $region9: #{_lambda_.3} parent=5 // pred_check
      _
    $region10: #{_lambda_.3} parent=5 // pred_check_branch
      %116 = sbr.rel (%p113) target = $region12
    $region11: #{_lambda_.3} parent=5 // pred_region
      %s117 = ssub.s32 %s9, 1
      // Predicated region
      $region13: #{_lambda_.3} parent=11 // pred_check
        %p118 = pneg %p56
      $region14: #{_lambda_.3} parent=11 // pred_check_branch
        %120 = sbr.rel (%p118) target = $region16
      $region15: #{_lambda_.3} parent=11 // pred_region
        _
      $region16: #{_lambda_.3} parent=11 // pred_fallthru
        _
      // Predicated region
      $region17: #{_lambda_.3} parent=11 // pred_check
        %p121 = pneg %p77
      $region18: #{_lambda_.3} parent=11 // pred_check_branch
        %123 = sbr.rel (%p121) target = $region20
      $region19: #{_lambda_.3} parent=11 // pred_region
        _
      $region20: #{_lambda_.3} parent=11 // pred_fallthru
        _
    $region12: #{_lambda_.3} parent=5 // pred_fallthru
      _
    %p124 = scmp.lt.s32.totalorder %s9, 2
    // Predicated region
    $region21: #{_lambda_.3} parent=5 // pred_check
      %p125 = pneg %p124
    $region22: #{_lambda_.3} parent=5 // pred_check_branch
      %127 = sbr.rel (%p125) target = $region24
    $region23: #{_lambda_.3} parent=5 // pred_region
      // Predicated region
      $region25: #{_lambda_.3} parent=23 // pred_check
        %p128 = pneg %p29
      $region26: #{_lambda_.3} parent=23 // pred_check_branch
        %130 = sbr.rel (%p128) target = $region28
      $region27: #{_lambda_.3} parent=23 // pred_region
        %p131 = scmp.lt.s32.totalorder %s9, 1
        %s132 = scalar_select %p131, %s9, 1
        %s133 = smul.addr %s132, 288
        %s134 = smul.addr %s133, 4
        %s135 = scalar_lea.vmem %s0, %s134
      $region28: #{_lambda_.3} parent=23 // pred_fallthru
        _
    $region24: #{_lambda_.3} parent=5 // pred_fallthru
      _
    %p136 = scmp.le.s32.totalorder 1, %s9
    %p137 = scmp.lt.s32.totalorder %s9, 3
    %p138 = pnand %p136, %p137
    %p139 = pneg %p138
    // Predicated region
    $region29: #{_lambda_.3} parent=5 // pred_check
      _
    $region30: #{_lambda_.3} parent=5 // pred_check_branch
      %141 = sbr.rel (%p138) target = $region32
    $region31: #{_lambda_.3} parent=5 // pred_region
      %s142 = ssub.s32 %s9, 1
      %p143 = scmp.lt.s32.totalorder %s14, 1
      %s144 = scalar_select %p143, %s14, 1
      %s145 = smul.addr %s144, 288
      %s146 = smul.addr %s145, 4
      %s147 = scalar_lea.vmem %s0, %s146
      %p148 = pneg %p35
      %p149 = pneg %p32
      %p150 = pneg %p56
      %p151 = pneg %p53
      %p152 = pneg %p77
      %p153 = pneg %p74
      %p154 = pneg %p103
      %p155 = pneg %p100
      %p156 = scmp.lt.s32.totalorder %s14, 1
      %s157 = scalar_select %p156, %s14, 1
      %s158 = smul.addr %s157, 32
      %s159 = smul.addr %s158, 4
      %s160 = scalar_lea.vmem %s3, %s159
      %p161 = scmp.lt.s32.totalorder %s14, 1
      %s162 = scalar_select %p161, %s14, 1
      %s163 = smul.addr %s162, 288
      %s164 = smul.addr %s163, 4
      %s165 = scalar_lea.vmem %s0, %s164
      %p166 = scmp.lt.s32.totalorder %s14, 1
      %s167 = scalar_select %p166, %s14, 1
      %s168 = smul.addr %s167, 32
      %s169 = smul.addr %s168, 4
      %s170 = scalar_lea.vmem %s3, %s169
      %v172 = vld [vmem:[%s165] sm:$0xf]
      %v173 = vld [vmem:[%s165 + $0x4] sm:$0xf]
      %v174 = vld [vmem:[%s165 + $0x8] sm:$0xf]
      %v175 = vld [vmem:[%s165 + $0xc] sm:$0xf]
      %v176 = vld [vmem:[%s165 + $0x10] sm:$0xf]
      %v177 = vld [vmem:[%s165 + $0x14] sm:$0xf]
      %v178 = vld [vmem:[%s165 + $0x18] sm:$0xf]
      %v179 = vld [vmem:[%s165 + $0x1c] sm:$0xf]
      %v180 = vld [vmem:[%s165 + $0x20] sm:$0xf]
      %v181 = vld [vmem:[%s165 + $0x24] sm:$0xf]
      %v182 = vld [vmem:[%s165 + $0x28] sm:$0xf]
      %v183 = vld [vmem:[%s165 + $0x2c] sm:$0xf]
      %v184 = vld [vmem:[%s165 + $0x30] sm:$0xf]
      %v185 = vld [vmem:[%s165 + $0x34] sm:$0xf]
      %v186 = vld [vmem:[%s165 + $0x38] sm:$0xf]
      %v187 = vld [vmem:[%s165 + $0x3c] sm:$0xf]
      %v188 = vld [vmem:[%s165 + $0x40] sm:$0xf]
      %v189 = vld [vmem:[%s165 + $0x44] sm:$0xf]
      %v190 = vld [vmem:[%s165 + $0x48] sm:$0xf]
      %v191 = vld [vmem:[%s165 + $0x4c] sm:$0xf]
      %v192 = vld [vmem:[%s165 + $0x50] sm:$0xf]
      %v193 = vld [vmem:[%s165 + $0x54] sm:$0xf]
      %v194 = vld [vmem:[%s165 + $0x58] sm:$0xf]
      %v195 = vld [vmem:[%s165 + $0x5c] sm:$0xf]
      %v196 = vld [vmem:[%s165 + $0x60] sm:$0xf]
      %v197 = vld [vmem:[%s165 + $0x64] sm:$0xf]
      %v198 = vld [vmem:[%s165 + $0x68] sm:$0xf]
      %v199 = vld [vmem:[%s165 + $0x6c] sm:$0xf]
      %v200 = vld [vmem:[%s165 + $0x70] sm:$0xf]
      %v201 = vld [vmem:[%s165 + $0x74] sm:$0xf]
      %v202 = vld [vmem:[%s165 + $0x78] sm:$0xf]
      %v203 = vld [vmem:[%s165 + $0x7c] sm:$0xf]
      %v204 = vld [vmem:[%s1] sm:$0x3]
      %v205 = vld [vmem:[%s165 + $0x80] sm:$0xf]
      %v206 = vld [vmem:[%s165 + $0x84] sm:$0xf]
      %v207 = vld [vmem:[%s165 + $0x88] sm:$0xf]
      %v208 = vld [vmem:[%s165 + $0x8c] sm:$0xf]
      %v209 = vld [vmem:[%s165 + $0x90] sm:$0xf]
      %v210 = vld [vmem:[%s165 + $0x94] sm:$0xf]
      %v211 = vld [vmem:[%s165 + $0x98] sm:$0xf]
      %v212 = vld [vmem:[%s165 + $0x9c] sm:$0xf]
      %v213 = vld [vmem:[%s165 + $0xa0] sm:$0xf]
      %v214 = vld [vmem:[%s165 + $0xa4] sm:$0xf]
      %v215 = vld [vmem:[%s165 + $0xa8] sm:$0xf]
      %v216 = vld [vmem:[%s165 + $0xac] sm:$0xf]
      %v217 = vld [vmem:[%s165 + $0xb0] sm:$0xf]
      %v218 = vld [vmem:[%s165 + $0xb4] sm:$0xf]
      %v219 = vld [vmem:[%s165 + $0xb8] sm:$0xf]
      %v220 = vld [vmem:[%s165 + $0xbc] sm:$0xf]
      %v221 = vld [vmem:[%s165 + $0xc0] sm:$0xf]
      %v222 = vld [vmem:[%s165 + $0xc4] sm:$0xf]
      %v223 = vld [vmem:[%s165 + $0xc8] sm:$0xf]
      %v224 = vld [vmem:[%s165 + $0xcc] sm:$0xf]
      %v225 = vld [vmem:[%s165 + $0xd0] sm:$0xf]
      %v226 = vld [vmem:[%s165 + $0xd4] sm:$0xf]
      %v227 = vld [vmem:[%s165 + $0xd8] sm:$0xf]
      %v228 = vld [vmem:[%s165 + $0xdc] sm:$0xf]
      %v229 = vld [vmem:[%s165 + $0xe0] sm:$0xf]
      %v230 = vld [vmem:[%s165 + $0xe4] sm:$0xf]
      %v231 = vld [vmem:[%s165 + $0xe8] sm:$0xf]
      %v232 = vld [vmem:[%s165 + $0xec] sm:$0xf]
      %v233 = vld [vmem:[%s165 + $0xf0] sm:$0xf]
      %v234 = vld [vmem:[%s165 + $0xf4] sm:$0xf]
      %v235 = vld [vmem:[%s165 + $0xf8] sm:$0xf]
      %v236 = vld [vmem:[%s165 + $0xfc] sm:$0xf]
      %s237 = scalar_lea.vmem %s1, 2
      %v238 = vld [vmem:[%s237] sm:$0x3]
      %v271 = vunpack.c.l.b16 %v205
      %v272 = vunpack.c.l.b16 %v206
      %v273 = vunpack.c.l.b16 %v207
      %v274 = vunpack.c.l.b16 %v208
      %v275 = vunpack.c.l.b16 %v209
      %v276 = vunpack.c.l.b16 %v210
      %v277 = vunpack.c.l.b16 %v211
      %v278 = vunpack.c.l.b16 %v212
      %v279 = vunpack.c.l.b16 %v213
      %v280 = vunpack.c.l.b16 %v214
      %v281 = vunpack.c.l.b16 %v215
      %v282 = vunpack.c.l.b16 %v216
      %v283 = vunpack.c.l.b16 %v217
      %v284 = vunpack.c.l.b16 %v218
      %v285 = vunpack.c.l.b16 %v219
      %v286 = vunpack.c.l.b16 %v220
      %v287 = vunpack.c.l.b16 %v221
      %v288 = vunpack.c.l.b16 %v222
      %v289 = vunpack.c.l.b16 %v223
      %v290 = vunpack.c.l.b16 %v224
      %v291 = vunpack.c.l.b16 %v225
      %v292 = vunpack.c.l.b16 %v226
      %v293 = vunpack.c.l.b16 %v227
      %v294 = vunpack.c.l.b16 %v228
      %v295 = vunpack.c.l.b16 %v229
      %v296 = vunpack.c.l.b16 %v230
      %v297 = vunpack.c.l.b16 %v231
      %v298 = vunpack.c.l.b16 %v232
      %v299 = vunpack.c.l.b16 %v233
      %v300 = vunpack.c.l.b16 %v234
      %v301 = vunpack.c.l.b16 %v235
      %v302 = vunpack.c.l.b16 %v236
      %v303 = vpack.c.b16 %v272, %v271
      %v304 = vpack.c.b16 %v274, %v273
      %v305 = vpack.c.b16 %v276, %v275
      %v306 = vpack.c.b16 %v278, %v277
      %v307 = vpack.c.b16 %v280, %v279
      %v308 = vpack.c.b16 %v282, %v281
      %v309 = vpack.c.b16 %v284, %v283
      %v310 = vpack.c.b16 %v286, %v285
      %v311 = vpack.c.b16 %v288, %v287
      %v312 = vpack.c.b16 %v290, %v289
      %v313 = vpack.c.b16 %v292, %v291
      %v314 = vpack.c.b16 %v294, %v293
      %v315 = vpack.c.b16 %v296, %v295
      %v316 = vpack.c.b16 %v298, %v297
      %v317 = vpack.c.b16 %v300, %v299
      %v318 = vpack.c.b16 %v302, %v301
      %vm319 = vcmask 23552
      %v321 = vsel %vm319, %v303, 0
      %v324 = vsel %vm319, %v304, 0
      %v327 = vsel %vm319, %v305, 0
      %v330 = vsel %vm319, %v306, 0
      %v333 = vsel %vm319, %v307, 0
      %v336 = vsel %vm319, %v308, 0
      %v339 = vsel %vm319, %v309, 0
      %v342 = vsel %vm319, %v310, 0
      %v345 = vsel %vm319, %v311, 0
      %v348 = vsel %vm319, %v312, 0
      %v351 = vsel %vm319, %v313, 0
      %v354 = vsel %vm319, %v314, 0
      %v357 = vsel %vm319, %v315, 0
      %v360 = vsel %vm319, %v316, 0
      %v363 = vsel %vm319, %v317, 0
      %v366 = vsel %vm319, %v318, 0
      %vm368 = vcmask 1040384
      %vm369 = vcmask 1041408
      %v370 = vsel %vm368, 4294967295, 65535
      %v371 = vsel %vm369, %v370, 0
      %v373 = vand.u32 %v238, %v371
      %375 = vmatprep.subr.bf16.mxu0 0
      %376 = vmatpush1.bf16.msra.mxu0 0
      %377 = vmatprep.subr.bf16.mxu0 0
      %378 = vmatpush1.bf16.msra.mxu0 0
      %379 = vmatprep.subr.bf16.mxu0 0
      %380 = vmatpush1.bf16.msra.mxu0 0
      %381 = vmatprep.subr.bf16.mxu0 0
      %382 = vmatpush1.bf16.msra.mxu0 0
      %383 = vmatprep.subr.bf16.mxu0 0
      %384 = vmatpush1.bf16.msra.mxu0 0
      %385 = vmatprep.subr.bf16.mxu0 0
      %386 = vmatpush1.bf16.msra.mxu0 0
      %387 = vmatprep.subr.bf16.mxu0 0
      %388 = vmatpush1.bf16.msra.mxu0 0
      %389 = vmatprep.subr.bf16.mxu0 0
      %390 = vmatpush1.bf16.msra.mxu0 %v373
      %391 = vmatprep.subr.bf16.mxu0 0
      %392 = vmatpush2.bf16.msra.mxu0 0
      %393 = vmatprep.subr.bf16.mxu0 0
      %394 = vmatpush2.bf16.msra.mxu0 0
      %395 = vmatprep.subr.bf16.mxu0 0
      %396 = vmatpush2.bf16.msra.mxu0 0
      %397 = vmatprep.subr.bf16.mxu0 0
      %398 = vmatpush2.bf16.msra.mxu0 0
      %399 = vmatprep.subr.bf16.mxu0 0
      %400 = vmatpush2.bf16.msra.mxu0 0
      %401 = vmatprep.subr.bf16.mxu0 0
      %402 = vmatpush2.bf16.msra.mxu0 0
      %403 = vmatprep.subr.bf16.mxu0 0
      %404 = vmatpush2.bf16.msra.mxu0 0
      %405 = vmatprep.subr.bf16.mxu0 0
      %406 = vmatpush2.bf16.msra.mxu0 0
      %407 = vmatprep.mubr.bf16.mxu0 0
      %408 = vmatmul.mubr.bf16.gmra.mxu0 %v321
      %v409 = vpop.f32.mrf.mxu0
      %v410 = vadd.f32 0.0, %v409
      %v411 = vpop.f32.mrf.mxu0
      %v412 = vpop.f32.mrf.mxu0
      %v413 = vadd.f32 0.0, %v412
      %v414 = vpop.f32.mrf.mxu0
      %415 = vmatprep.mubr.bf16.mxu0 0
      %416 = vmatmul.mubr.bf16.gmra.mxu0 %v324
      %v417 = vpop.f32.mrf.mxu0
      %v418 = vadd.f32 0.0, %v417
      %v419 = vpop.f32.mrf.mxu0
      %v420 = vpop.f32.mrf.mxu0
      %v421 = vadd.f32 0.0, %v420
      %v422 = vpop.f32.mrf.mxu0
      %423 = vmatprep.mubr.bf16.mxu0 0
      %424 = vmatmul.mubr.bf16.gmra.mxu0 %v327
      %v425 = vpop.f32.mrf.mxu0
      %v426 = vadd.f32 0.0, %v425
      %v427 = vpop.f32.mrf.mxu0
      %v428 = vpop.f32.mrf.mxu0
      %v429 = vadd.f32 0.0, %v428
      %v430 = vpop.f32.mrf.mxu0
      %431 = vmatprep.mubr.bf16.mxu0 0
      %432 = vmatmul.mubr.bf16.gmra.mxu0 %v330
      %v433 = vpop.f32.mrf.mxu0
      %v434 = vadd.f32 0.0, %v433
      %v435 = vpop.f32.mrf.mxu0
      %v436 = vpop.f32.mrf.mxu0
      %v437 = vadd.f32 0.0, %v436
      %v438 = vpop.f32.mrf.mxu0
      %439 = vmatprep.mubr.bf16.mxu0 0
      %440 = vmatmul.mubr.bf16.gmra.mxu0 %v333
      %v441 = vpop.f32.mrf.mxu0
      %v442 = vadd.f32 0.0, %v441
      %v443 = vpop.f32.mrf.mxu0
      %v444 = vpop.f32.mrf.mxu0
      %v445 = vadd.f32 0.0, %v444
      %v446 = vpop.f32.mrf.mxu0
      %447 = vmatprep.mubr.bf16.mxu0 0
      %448 = vmatmul.mubr.bf16.gmra.mxu0 %v336
      %v449 = vpop.f32.mrf.mxu0
      %v450 = vadd.f32 0.0, %v449
      %v451 = vpop.f32.mrf.mxu0
      %v452 = vpop.f32.mrf.mxu0
      %v453 = vadd.f32 0.0, %v452
      %v454 = vpop.f32.mrf.mxu0
      %455 = vmatprep.mubr.bf16.mxu0 0
      %456 = vmatmul.mubr.bf16.gmra.mxu0 %v339
      %v457 = vpop.f32.mrf.mxu0
      %v458 = vadd.f32 0.0, %v457
      %v459 = vpop.f32.mrf.mxu0
      %v460 = vpop.f32.mrf.mxu0
      %v461 = vadd.f32 0.0, %v460
      %v462 = vpop.f32.mrf.mxu0
      %463 = vmatprep.mubr.bf16.mxu0 0
      %464 = vmatmul.mubr.bf16.gmra.mxu0 %v342
      %v465 = vpop.f32.mrf.mxu0
      %v466 = vadd.f32 0.0, %v465
      %v467 = vpop.f32.mrf.mxu0
      %v468 = vpop.f32.mrf.mxu0
      %v469 = vadd.f32 0.0, %v468
      %v470 = vpop.f32.mrf.mxu0
      %471 = vmatprep.mubr.bf16.mxu0 0
      %472 = vmatmul.mubr.bf16.gmra.mxu0 %v345
      %v473 = vpop.f32.mrf.mxu0
      %v474 = vadd.f32 0.0, %v473
      %v475 = vpop.f32.mrf.mxu0
      %v476 = vpop.f32.mrf.mxu0
      %v477 = vadd.f32 0.0, %v476
      %v478 = vpop.f32.mrf.mxu0
      %479 = vmatprep.mubr.bf16.mxu0 0
      %480 = vmatmul.mubr.bf16.gmra.mxu0 %v348
      %v481 = vpop.f32.mrf.mxu0
      %v482 = vadd.f32 0.0, %v481
      %v483 = vpop.f32.mrf.mxu0
      %v484 = vpop.f32.mrf.mxu0
      %v485 = vadd.f32 0.0, %v484
      %v486 = vpop.f32.mrf.mxu0
      %487 = vmatprep.mubr.bf16.mxu0 0
      %488 = vmatmul.mubr.bf16.gmra.mxu0 %v351
      %v489 = vpop.f32.mrf.mxu0
      %v490 = vadd.f32 0.0, %v489
      %v491 = vpop.f32.mrf.mxu0
      %v492 = vpop.f32.mrf.mxu0
      %v493 = vadd.f32 0.0, %v492
      %v494 = vpop.f32.mrf.mxu0
      %495 = vmatprep.mubr.bf16.mxu0 0
      %496 = vmatmul.mubr.bf16.gmra.mxu0 %v354
      %v497 = vpop.f32.mrf.mxu0
      %v498 = vadd.f32 0.0, %v497
      %v499 = vpop.f32.mrf.mxu0
      %v500 = vpop.f32.mrf.mxu0
      %v501 = vadd.f32 0.0, %v500
      %v502 = vpop.f32.mrf.mxu0
      %503 = vmatprep.mubr.bf16.mxu0 0
      %504 = vmatmul.mubr.bf16.gmra.mxu0 %v357
      %v505 = vpop.f32.mrf.mxu0
      %v506 = vadd.f32 0.0, %v505
      %v507 = vpop.f32.mrf.mxu0
      %v508 = vpop.f32.mrf.mxu0
      %v509 = vadd.f32 0.0, %v508
      %v510 = vpop.f32.mrf.mxu0
      %511 = vmatprep.mubr.bf16.mxu0 0
      %512 = vmatmul.mubr.bf16.gmra.mxu0 %v360
      %v513 = vpop.f32.mrf.mxu0
      %v514 = vadd.f32 0.0, %v513
      %v515 = vpop.f32.mrf.mxu0
      %v516 = vpop.f32.mrf.mxu0
      %v517 = vadd.f32 0.0, %v516
      %v518 = vpop.f32.mrf.mxu0
      %519 = vmatprep.mubr.bf16.mxu0 0
      %520 = vmatmul.mubr.bf16.gmra.mxu0 %v363
      %v521 = vpop.f32.mrf.mxu0
      %v522 = vadd.f32 0.0, %v521
      %v523 = vpop.f32.mrf.mxu0
      %v524 = vpop.f32.mrf.mxu0
      %v525 = vadd.f32 0.0, %v524
      %v526 = vpop.f32.mrf.mxu0
      %527 = vmatprep.mubr.bf16.mxu0 0
      %528 = vmatmul.mubr.bf16.gmra.mxu0 %v366
      %v529 = vpop.f32.mrf.mxu0
      %v530 = vadd.f32 0.0, %v529
      %v531 = vpop.f32.mrf.mxu0
      %v532 = vpop.f32.mrf.mxu0
      %v533 = vadd.f32 0.0, %v532
      %v534 = vpop.f32.mrf.mxu0
      %535 = vdwg.mxu0
      %v568 = vunpack.c.l.b16 %v172
      %v569 = vunpack.c.l.b16 %v173
      %v570 = vunpack.c.l.b16 %v174
      %v571 = vunpack.c.l.b16 %v175
      %v572 = vunpack.c.l.b16 %v176
      %v573 = vunpack.c.l.b16 %v177
      %v574 = vunpack.c.l.b16 %v178
      %v575 = vunpack.c.l.b16 %v179
      %v576 = vunpack.c.l.b16 %v180
      %v577 = vunpack.c.l.b16 %v181
      %v578 = vunpack.c.l.b16 %v182
      %v579 = vunpack.c.l.b16 %v183
      %v580 = vunpack.c.l.b16 %v184
      %v581 = vunpack.c.l.b16 %v185
      %v582 = vunpack.c.l.b16 %v186
      %v583 = vunpack.c.l.b16 %v187
      %v584 = vunpack.c.l.b16 %v188
      %v585 = vunpack.c.l.b16 %v189
      %v586 = vunpack.c.l.b16 %v190
      %v587 = vunpack.c.l.b16 %v191
      %v588 = vunpack.c.l.b16 %v192
      %v589 = vunpack.c.l.b16 %v193
      %v590 = vunpack.c.l.b16 %v194
      %v591 = vunpack.c.l.b16 %v195
      %v592 = vunpack.c.l.b16 %v196
      %v593 = vunpack.c.l.b16 %v197
      %v594 = vunpack.c.l.b16 %v198
      %v595 = vunpack.c.l.b16 %v199
      %v596 = vunpack.c.l.b16 %v200
      %v597 = vunpack.c.l.b16 %v201
      %v598 = vunpack.c.l.b16 %v202
      %v599 = vunpack.c.l.b16 %v203
      %v600 = vpack.c.b16 %v569, %v568
      %v601 = vpack.c.b16 %v571, %v570
      %v602 = vpack.c.b16 %v573, %v572
      %v603 = vpack.c.b16 %v575, %v574
      %v604 = vpack.c.b16 %v577, %v576
      %v605 = vpack.c.b16 %v579, %v578
      %v606 = vpack.c.b16 %v581, %v580
      %v607 = vpack.c.b16 %v583, %v582
      %v608 = vpack.c.b16 %v585, %v584
      %v609 = vpack.c.b16 %v587, %v586
      %v610 = vpack.c.b16 %v589, %v588
      %v611 = vpack.c.b16 %v591, %v590
      %v612 = vpack.c.b16 %v593, %v592
      %v613 = vpack.c.b16 %v595, %v594
      %v614 = vpack.c.b16 %v597, %v596
      %v615 = vpack.c.b16 %v599, %v598
      %v617 = vsel %vm319, %v600, 0
      %v620 = vsel %vm319, %v601, 0
      %v623 = vsel %vm319, %v602, 0
      %v626 = vsel %vm319, %v603, 0
      %v629 = vsel %vm319, %v604, 0
      %v632 = vsel %vm319, %v605, 0
      %v635 = vsel %vm319, %v606, 0
      %v638 = vsel %vm319, %v607, 0
      %v641 = vsel %vm319, %v608, 0
      %v644 = vsel %vm319, %v609, 0
      %v647 = vsel %vm319, %v610, 0
      %v650 = vsel %vm319, %v611, 0
      %v653 = vsel %vm319, %v612, 0
      %v656 = vsel %vm319, %v613, 0
      %v659 = vsel %vm319, %v614, 0
      %v662 = vsel %vm319, %v615, 0
      %v665 = vand.u32 %v204, %v371
      %667 = vmatprep.subr.bf16.mxu0 0
      %668 = vmatpush1.bf16.msra.mxu0 0
      %669 = vmatprep.subr.bf16.mxu0 0
      %670 = vmatpush1.bf16.msra.mxu0 0
      %671 = vmatprep.subr.bf16.mxu0 0
      %672 = vmatpush1.bf16.msra.mxu0 0
      %673 = vmatprep.subr.bf16.mxu0 0
      %674 = vmatpush1.bf16.msra.mxu0 0
      %675 = vmatprep.subr.bf16.mxu0 0
      %676 = vmatpush1.bf16.msra.mxu0 0
      %677 = vmatprep.subr.bf16.mxu0 0
      %678 = vmatpush1.bf16.msra.mxu0 0
      %679 = vmatprep.subr.bf16.mxu0 0
      %680 = vmatpush1.bf16.msra.mxu0 0
      %681 = vmatprep.subr.bf16.mxu0 0
      %682 = vmatpush1.bf16.msra.mxu0 %v665
      %683 = vmatprep.subr.bf16.mxu0 0
      %684 = vmatpush2.bf16.msra.mxu0 0
      %685 = vmatprep.subr.bf16.mxu0 0
      %686 = vmatpush2.bf16.msra.mxu0 0
      %687 = vmatprep.subr.bf16.mxu0 0
      %688 = vmatpush2.bf16.msra.mxu0 0
      %689 = vmatprep.subr.bf16.mxu0 0
      %690 = vmatpush2.bf16.msra.mxu0 0
      %691 = vmatprep.subr.bf16.mxu0 0
      %692 = vmatpush2.bf16.msra.mxu0 0
      %693 = vmatprep.subr.bf16.mxu0 0
      %694 = vmatpush2.bf16.msra.mxu0 0
      %695 = vmatprep.subr.bf16.mxu0 0
      %696 = vmatpush2.bf16.msra.mxu0 0
      %697 = vmatprep.subr.bf16.mxu0 0
      %698 = vmatpush2.bf16.msra.mxu0 0
      %699 = vmatprep.mubr.bf16.mxu0 0
      %700 = vmatmul.mubr.bf16.gmra.mxu0 %v617
      %v701 = vpop.f32.mrf.mxu0
      %v702 = vadd.f32 %v410, %v701
      %v703 = vpop.f32.mrf.mxu0
      %v704 = vpop.f32.mrf.mxu0
      %v705 = vadd.f32 %v413, %v704
      %v706 = vpop.f32.mrf.mxu0
      %707 = vmatprep.mubr.bf16.mxu0 0
      %708 = vmatmul.mubr.bf16.gmra.mxu0 %v620
      %v709 = vpop.f32.mrf.mxu0
      %v710 = vadd.f32 %v418, %v709
      %v711 = vpop.f32.mrf.mxu0
      %v712 = vpop.f32.mrf.mxu0
      %v713 = vadd.f32 %v421, %v712
      %v714 = vpop.f32.mrf.mxu0
      %715 = vmatprep.mubr.bf16.mxu0 0
      %716 = vmatmul.mubr.bf16.gmra.mxu0 %v623
      %v717 = vpop.f32.mrf.mxu0
      %v718 = vadd.f32 %v426, %v717
      %v719 = vpop.f32.mrf.mxu0
      %v720 = vpop.f32.mrf.mxu0
      %v721 = vadd.f32 %v429, %v720
      %v722 = vpop.f32.mrf.mxu0
      %723 = vmatprep.mubr.bf16.mxu0 0
      %724 = vmatmul.mubr.bf16.gmra.mxu0 %v626
      %v725 = vpop.f32.mrf.mxu0
      %v726 = vadd.f32 %v434, %v725
      %v727 = vpop.f32.mrf.mxu0
      %v728 = vpop.f32.mrf.mxu0
      %v729 = vadd.f32 %v437, %v728
      %v730 = vpop.f32.mrf.mxu0
      %731 = vmatprep.mubr.bf16.mxu0 0
      %732 = vmatmul.mubr.bf16.gmra.mxu0 %v629
      %v733 = vpop.f32.mrf.mxu0
      %v734 = vadd.f32 %v442, %v733
      %v735 = vpop.f32.mrf.mxu0
      %v736 = vpop.f32.mrf.mxu0
      %v737 = vadd.f32 %v445, %v736
      %v738 = vpop.f32.mrf.mxu0
      %739 = vmatprep.mubr.bf16.mxu0 0
      %740 = vmatmul.mubr.bf16.gmra.mxu0 %v632
      %v741 = vpop.f32.mrf.mxu0
      %v742 = vadd.f32 %v450, %v741
      %v743 = vpop.f32.mrf.mxu0
      %v744 = vpop.f32.mrf.mxu0
      %v745 = vadd.f32 %v453, %v744
      %v746 = vpop.f32.mrf.mxu0
      %747 = vmatprep.mubr.bf16.mxu0 0
      %748 = vmatmul.mubr.bf16.gmra.mxu0 %v635
      %v749 = vpop.f32.mrf.mxu0
      %v750 = vadd.f32 %v458, %v749
      %v751 = vpop.f32.mrf.mxu0
      %v752 = vpop.f32.mrf.mxu0
      %v753 = vadd.f32 %v461, %v752
      %v754 = vpop.f32.mrf.mxu0
      %755 = vmatprep.mubr.bf16.mxu0 0
      %756 = vmatmul.mubr.bf16.gmra.mxu0 %v638
      %v757 = vpop.f32.mrf.mxu0
      %v758 = vadd.f32 %v466, %v757
      %v759 = vpop.f32.mrf.mxu0
      %v760 = vpop.f32.mrf.mxu0
      %v761 = vadd.f32 %v469, %v760
      %v762 = vpop.f32.mrf.mxu0
      %763 = vmatprep.mubr.bf16.mxu0 0
      %764 = vmatmul.mubr.bf16.gmra.mxu0 %v641
      %v765 = vpop.f32.mrf.mxu0
      %v766 = vadd.f32 %v474, %v765
      %v767 = vpop.f32.mrf.mxu0
      %v768 = vpop.f32.mrf.mxu0
      %v769 = vadd.f32 %v477, %v768
      %v770 = vpop.f32.mrf.mxu0
      %771 = vmatprep.mubr.bf16.mxu0 0
      %772 = vmatmul.mubr.bf16.gmra.mxu0 %v644
      %v773 = vpop.f32.mrf.mxu0
      %v774 = vadd.f32 %v482, %v773
      %v775 = vpop.f32.mrf.mxu0
      %v776 = vpop.f32.mrf.mxu0
      %v777 = vadd.f32 %v485, %v776
      %v778 = vpop.f32.mrf.mxu0
      %779 = vmatprep.mubr.bf16.mxu0 0
      %780 = vmatmul.mubr.bf16.gmra.mxu0 %v647
      %v781 = vpop.f32.mrf.mxu0
      %v782 = vadd.f32 %v490, %v781
      %v783 = vpop.f32.mrf.mxu0
      %v784 = vpop.f32.mrf.mxu0
      %v785 = vadd.f32 %v493, %v784
      %v786 = vpop.f32.mrf.mxu0
      %787 = vmatprep.mubr.bf16.mxu0 0
      %788 = vmatmul.mubr.bf16.gmra.mxu0 %v650
      %v789 = vpop.f32.mrf.mxu0
      %v790 = vadd.f32 %v498, %v789
      %v791 = vpop.f32.mrf.mxu0
      %v792 = vpop.f32.mrf.mxu0
      %v793 = vadd.f32 %v501, %v792
      %v794 = vpop.f32.mrf.mxu0
      %795 = vmatprep.mubr.bf16.mxu0 0
      %796 = vmatmul.mubr.bf16.gmra.mxu0 %v653
      %v797 = vpop.f32.mrf.mxu0
      %v798 = vadd.f32 %v506, %v797
      %v799 = vpop.f32.mrf.mxu0
      %v800 = vpop.f32.mrf.mxu0
      %v801 = vadd.f32 %v509, %v800
      %v802 = vpop.f32.mrf.mxu0
      %803 = vmatprep.mubr.bf16.mxu0 0
      %804 = vmatmul.mubr.bf16.gmra.mxu0 %v656
      %v805 = vpop.f32.mrf.mxu0
      %v806 = vadd.f32 %v514, %v805
      %v807 = vpop.f32.mrf.mxu0
      %v808 = vpop.f32.mrf.mxu0
      %v809 = vadd.f32 %v517, %v808
      %v810 = vpop.f32.mrf.mxu0
      %811 = vmatprep.mubr.bf16.mxu0 0
      %812 = vmatmul.mubr.bf16.gmra.mxu0 %v659
      %v813 = vpop.f32.mrf.mxu0
      %v814 = vadd.f32 %v522, %v813
      %v815 = vpop.f32.mrf.mxu0
      %v816 = vpop.f32.mrf.mxu0
      %v817 = vadd.f32 %v525, %v816
      %v818 = vpop.f32.mrf.mxu0
      %819 = vmatprep.mubr.bf16.mxu0 0
      %820 = vmatmul.mubr.bf16.gmra.mxu0 %v662
      %v821 = vpop.f32.mrf.mxu0
      %v822 = vadd.f32 %v530, %v821
      %v823 = vpop.f32.mrf.mxu0
      %v824 = vpop.f32.mrf.mxu0
      %v825 = vadd.f32 %v533, %v824
      %v826 = vpop.f32.mrf.mxu0
      %827 = vdwg.mxu0
      %v828 = vld [vmem:[%s165 + $0x100] sm:$0xf]
      %v829 = vld [vmem:[%s165 + $0x104] sm:$0xf]
      %v830 = vld [vmem:[%s165 + $0x108] sm:$0xf]
      %v831 = vld [vmem:[%s165 + $0x10c] sm:$0xf]
      %v832 = vld [vmem:[%s165 + $0x110] sm:$0xf]
      %v833 = vld [vmem:[%s165 + $0x114] sm:$0xf]
      %v834 = vld [vmem:[%s165 + $0x118] sm:$0xf]
      %v835 = vld [vmem:[%s165 + $0x11c] sm:$0xf]
      %v836 = vld [vmem:[%s165 + $0x120] sm:$0xf]
      %v837 = vld [vmem:[%s165 + $0x124] sm:$0xf]
      %v838 = vld [vmem:[%s165 + $0x128] sm:$0xf]
      %v839 = vld [vmem:[%s165 + $0x12c] sm:$0xf]
      %v840 = vld [vmem:[%s165 + $0x130] sm:$0xf]
      %v841 = vld [vmem:[%s165 + $0x134] sm:$0xf]
      %v842 = vld [vmem:[%s165 + $0x138] sm:$0xf]
      %v843 = vld [vmem:[%s165 + $0x13c] sm:$0xf]
      %v844 = vld [vmem:[%s165 + $0x140] sm:$0xf]
      %v845 = vld [vmem:[%s165 + $0x144] sm:$0xf]
      %v846 = vld [vmem:[%s165 + $0x148] sm:$0xf]
      %v847 = vld [vmem:[%s165 + $0x14c] sm:$0xf]
      %v848 = vld [vmem:[%s165 + $0x150] sm:$0xf]
      %v849 = vld [vmem:[%s165 + $0x154] sm:$0xf]
      %v850 = vld [vmem:[%s165 + $0x158] sm:$0xf]
      %v851 = vld [vmem:[%s165 + $0x15c] sm:$0xf]
      %v852 = vld [vmem:[%s165 + $0x160] sm:$0xf]
      %v853 = vld [vmem:[%s165 + $0x164] sm:$0xf]
      %v854 = vld [vmem:[%s165 + $0x168] sm:$0xf]
      %v855 = vld [vmem:[%s165 + $0x16c] sm:$0xf]
      %v856 = vld [vmem:[%s165 + $0x170] sm:$0xf]
      %v857 = vld [vmem:[%s165 + $0x174] sm:$0xf]
      %v858 = vld [vmem:[%s165 + $0x178] sm:$0xf]
      %v859 = vld [vmem:[%s165 + $0x17c] sm:$0xf]
      %s860 = scalar_lea.vmem %s1, 4
      %v861 = vld [vmem:[%s860] sm:$0x3]
      %v894 = vunpack.c.l.b16 %v828
      %v895 = vunpack.c.l.b16 %v829
      %v896 = vunpack.c.l.b16 %v830
      %v897 = vunpack.c.l.b16 %v831
      %v898 = vunpack.c.l.b16 %v832
      %v899 = vunpack.c.l.b16 %v833
      %v900 = vunpack.c.l.b16 %v834
      %v901 = vunpack.c.l.b16 %v835
      %v902 = vunpack.c.l.b16 %v836
      %v903 = vunpack.c.l.b16 %v837
      %v904 = vunpack.c.l.b16 %v838
      %v905 = vunpack.c.l.b16 %v839
      %v906 = vunpack.c.l.b16 %v840
      %v907 = vunpack.c.l.b16 %v841
      %v908 = vunpack.c.l.b16 %v842
      %v909 = vunpack.c.l.b16 %v843
      %v910 = vunpack.c.l.b16 %v844
      %v911 = vunpack.c.l.b16 %v845
      %v912 = vunpack.c.l.b16 %v846
      %v913 = vunpack.c.l.b16 %v847
      %v914 = vunpack.c.l.b16 %v848
      %v915 = vunpack.c.l.b16 %v849
      %v916 = vunpack.c.l.b16 %v850
      %v917 = vunpack.c.l.b16 %v851
      %v918 = vunpack.c.l.b16 %v852
      %v919 = vunpack.c.l.b16 %v853
      %v920 = vunpack.c.l.b16 %v854
      %v921 = vunpack.c.l.b16 %v855
      %v922 = vunpack.c.l.b16 %v856
      %v923 = vunpack.c.l.b16 %v857
      %v924 = vunpack.c.l.b16 %v858
      %v925 = vunpack.c.l.b16 %v859
      %v926 = vpack.c.b16 %v895, %v894
      %v927 = vpack.c.b16 %v897, %v896
      %v928 = vpack.c.b16 %v899, %v898
      %v929 = vpack.c.b16 %v901, %v900
      %v930 = vpack.c.b16 %v903, %v902
      %v931 = vpack.c.b16 %v905, %v904
      %v932 = vpack.c.b16 %v907, %v906
      %v933 = vpack.c.b16 %v909, %v908
      %v934 = vpack.c.b16 %v911, %v910
      %v935 = vpack.c.b16 %v913, %v912
      %v936 = vpack.c.b16 %v915, %v914
      %v937 = vpack.c.b16 %v917, %v916
      %v938 = vpack.c.b16 %v919, %v918
      %v939 = vpack.c.b16 %v921, %v920
      %v940 = vpack.c.b16 %v923, %v922
      %v941 = vpack.c.b16 %v925, %v924
      %v943 = vsel %vm319, %v926, 0
      %v946 = vsel %vm319, %v927, 0
      %v949 = vsel %vm319, %v928, 0
      %v952 = vsel %vm319, %v929, 0
      %v955 = vsel %vm319, %v930, 0
      %v958 = vsel %vm319, %v931, 0
      %v961 = vsel %vm319, %v932, 0
      %v964 = vsel %vm319, %v933, 0
      %v967 = vsel %vm319, %v934, 0
      %v970 = vsel %vm319, %v935, 0
      %v973 = vsel %vm319, %v936, 0
      %v976 = vsel %vm319, %v937, 0
      %v979 = vsel %vm319, %v938, 0
      %v982 = vsel %vm319, %v939, 0
      %v985 = vsel %vm319, %v940, 0
      %v988 = vsel %vm319, %v941, 0
      %v991 = vand.u32 %v861, %v371
      %993 = vmatprep.subr.bf16.mxu0 0
      %994 = vmatpush1.bf16.msra.mxu0 0
      %995 = vmatprep.subr.bf16.mxu0 0
      %996 = vmatpush1.bf16.msra.mxu0 0
      %997 = vmatprep.subr.bf16.mxu0 0
      %998 = vmatpush1.bf16.msra.mxu0 0
      %999 = vmatprep.subr.bf16.mxu0 0
      %1000 = vmatpush1.bf16.msra.mxu0 0
      %1001 = vmatprep.subr.bf16.mxu0 0
      %1002 = vmatpush1.bf16.msra.mxu0 0
      %1003 = vmatprep.subr.bf16.mxu0 0
      %1004 = vmatpush1.bf16.msra.mxu0 0
      %1005 = vmatprep.subr.bf16.mxu0 0
      %1006 = vmatpush1.bf16.msra.mxu0 0
      %1007 = vmatprep.subr.bf16.mxu0 0
      %1008 = vmatpush1.bf16.msra.mxu0 %v991
      %1009 = vmatprep.subr.bf16.mxu0 0
      %1010 = vmatpush2.bf16.msra.mxu0 0
      %1011 = vmatprep.subr.bf16.mxu0 0
      %1012 = vmatpush2.bf16.msra.mxu0 0
      %1013 = vmatprep.subr.bf16.mxu0 0
      %1014 = vmatpush2.bf16.msra.mxu0 0
      %1015 = vmatprep.subr.bf16.mxu0 0
      %1016 = vmatpush2.bf16.msra.mxu0 0
      %1017 = vmatprep.subr.bf16.mxu0 0
      %1018 = vmatpush2.bf16.msra.mxu0 0
      %1019 = vmatprep.subr.bf16.mxu0 0
      %1020 = vmatpush2.bf16.msra.mxu0 0
      %1021 = vmatprep.subr.bf16.mxu0 0
      %1022 = vmatpush2.bf16.msra.mxu0 0
      %1023 = vmatprep.subr.bf16.mxu0 0
      %1024 = vmatpush2.bf16.msra.mxu0 0
      %1025 = vmatprep.mubr.bf16.mxu0 0
      %1026 = vmatmul.mubr.bf16.gmra.mxu0 %v943
      %v1027 = vpop.f32.mrf.mxu0
      %v1028 = vadd.f32 0.0, %v1027
      %v1029 = vpop.f32.mrf.mxu0
      %v1030 = vpop.f32.mrf.mxu0
      %v1031 = vadd.f32 0.0, %v1030
      %v1032 = vpop.f32.mrf.mxu0
      %1033 = vmatprep.mubr.bf16.mxu0 0
      %1034 = vmatmul.mubr.bf16.gmra.mxu0 %v946
      %v1035 = vpop.f32.mrf.mxu0
      %v1036 = vadd.f32 0.0, %v1035
      %v1037 = vpop.f32.mrf.mxu0
      %v1038 = vpop.f32.mrf.mxu0
      %v1039 = vadd.f32 0.0, %v1038
      %v1040 = vpop.f32.mrf.mxu0
      %1041 = vmatprep.mubr.bf16.mxu0 0
      %1042 = vmatmul.mubr.bf16.gmra.mxu0 %v949
      %v1043 = vpop.f32.mrf.mxu0
      %v1044 = vadd.f32 0.0, %v1043
      %v1045 = vpop.f32.mrf.mxu0
      %v1046 = vpop.f32.mrf.mxu0
      %v1047 = vadd.f32 0.0, %v1046
      %v1048 = vpop.f32.mrf.mxu0
      %1049 = vmatprep.mubr.bf16.mxu0 0
      %1050 = vmatmul.mubr.bf16.gmra.mxu0 %v952
      %v1051 = vpop.f32.mrf.mxu0
      %v1052 = vadd.f32 0.0, %v1051
      %v1053 = vpop.f32.mrf.mxu0
      %v1054 = vpop.f32.mrf.mxu0
      %v1055 = vadd.f32 0.0, %v1054
      %v1056 = vpop.f32.mrf.mxu0
      %1057 = vmatprep.mubr.bf16.mxu0 0
      %1058 = vmatmul.mubr.bf16.gmra.mxu0 %v955
      %v1059 = vpop.f32.mrf.mxu0
      %v1060 = vadd.f32 0.0, %v1059
      %v1061 = vpop.f32.mrf.mxu0
      %v1062 = vpop.f32.mrf.mxu0
      %v1063 = vadd.f32 0.0, %v1062
      %v1064 = vpop.f32.mrf.mxu0
      %1065 = vmatprep.mubr.bf16.mxu0 0
      %1066 = vmatmul.mubr.bf16.gmra.mxu0 %v958
      %v1067 = vpop.f32.mrf.mxu0
      %v1068 = vadd.f32 0.0, %v1067
      %v1069 = vpop.f32.mrf.mxu0
      %v1070 = vpop.f32.mrf.mxu0
      %v1071 = vadd.f32 0.0, %v1070
      %v1072 = vpop.f32.mrf.mxu0
      %1073 = vmatprep.mubr.bf16.mxu0 0
      %1074 = vmatmul.mubr.bf16.gmra.mxu0 %v961
      %v1075 = vpop.f32.mrf.mxu0
      %v1076 = vadd.f32 0.0, %v1075
      %v1077 = vpop.f32.mrf.mxu0
      %v1078 = vpop.f32.mrf.mxu0
      %v1079 = vadd.f32 0.0, %v1078
      %v1080 = vpop.f32.mrf.mxu0
      %1081 = vmatprep.mubr.bf16.mxu0 0
      %1082 = vmatmul.mubr.bf16.gmra.mxu0 %v964
      %v1083 = vpop.f32.mrf.mxu0
      %v1084 = vadd.f32 0.0, %v1083
      %v1085 = vpop.f32.mrf.mxu0
      %v1086 = vpop.f32.mrf.mxu0
      %v1087 = vadd.f32 0.0, %v1086
      %v1088 = vpop.f32.mrf.mxu0
      %1089 = vmatprep.mubr.bf16.mxu0 0
      %1090 = vmatmul.mubr.bf16.gmra.mxu0 %v967
      %v1091 = vpop.f32.mrf.mxu0
      %v1092 = vadd.f32 0.0, %v1091
      %v1093 = vpop.f32.mrf.mxu0
      %v1094 = vpop.f32.mrf.mxu0
      %v1095 = vadd.f32 0.0, %v1094
      %v1096 = vpop.f32.mrf.mxu0
      %1097 = vmatprep.mubr.bf16.mxu0 0
      %1098 = vmatmul.mubr.bf16.gmra.mxu0 %v970
      %v1099 = vpop.f32.mrf.mxu0
      %v1100 = vadd.f32 0.0, %v1099
      %v1101 = vpop.f32.mrf.mxu0
      %v1102 = vpop.f32.mrf.mxu0
      %v1103 = vadd.f32 0.0, %v1102
      %v1104 = vpop.f32.mrf.mxu0
      %1105 = vmatprep.mubr.bf16.mxu0 0
      %1106 = vmatmul.mubr.bf16.gmra.mxu0 %v973
      %v1107 = vpop.f32.mrf.mxu0
      %v1108 = vadd.f32 0.0, %v1107
      %v1109 = vpop.f32.mrf.mxu0
      %v1110 = vpop.f32.mrf.mxu0
      %v1111 = vadd.f32 0.0, %v1110
      %v1112 = vpop.f32.mrf.mxu0
      %1113 = vmatprep.mubr.bf16.mxu0 0
      %1114 = vmatmul.mubr.bf16.gmra.mxu0 %v976
      %v1115 = vpop.f32.mrf.mxu0
      %v1116 = vadd.f32 0.0, %v1115
      %v1117 = vpop.f32.mrf.mxu0
      %v1118 = vpop.f32.mrf.mxu0
      %v1119 = vadd.f32 0.0, %v1118
      %v1120 = vpop.f32.mrf.mxu0
      %1121 = vmatprep.mubr.bf16.mxu0 0
      %1122 = vmatmul.mubr.bf16.gmra.mxu0 %v979
      %v1123 = vpop.f32.mrf.mxu0
      %v1124 = vadd.f32 0.0, %v1123
      %v1125 = vpop.f32.mrf.mxu0
      %v1126 = vpop.f32.mrf.mxu0
      %v1127 = vadd.f32 0.0, %v1126
      %v1128 = vpop.f32.mrf.mxu0
      %1129 = vmatprep.mubr.bf16.mxu0 0
      %1130 = vmatmul.mubr.bf16.gmra.mxu0 %v982
      %v1131 = vpop.f32.mrf.mxu0
      %v1132 = vadd.f32 0.0, %v1131
      %v1133 = vpop.f32.mrf.mxu0
      %v1134 = vpop.f32.mrf.mxu0
      %v1135 = vadd.f32 0.0, %v1134
      %v1136 = vpop.f32.mrf.mxu0
      %1137 = vmatprep.mubr.bf16.mxu0 0
      %1138 = vmatmul.mubr.bf16.gmra.mxu0 %v985
      %v1139 = vpop.f32.mrf.mxu0
      %v1140 = vadd.f32 0.0, %v1139
      %v1141 = vpop.f32.mrf.mxu0
      %v1142 = vpop.f32.mrf.mxu0
      %v1143 = vadd.f32 0.0, %v1142
      %v1144 = vpop.f32.mrf.mxu0
      %1145 = vmatprep.mubr.bf16.mxu0 0
      %1146 = vmatmul.mubr.bf16.gmra.mxu0 %v988
      %v1147 = vpop.f32.mrf.mxu0
      %v1148 = vadd.f32 0.0, %v1147
      %v1149 = vpop.f32.mrf.mxu0
      %v1150 = vpop.f32.mrf.mxu0
      %v1151 = vadd.f32 0.0, %v1150
      %v1152 = vpop.f32.mrf.mxu0
      %1153 = vdwg.mxu0
      %v1154 = vadd.f32 %v702, %v1028
      %v1155 = vadd.f32 %v705, %v1031
      %v1156 = vadd.f32 %v710, %v1036
      %v1157 = vadd.f32 %v713, %v1039
      %v1158 = vadd.f32 %v718, %v1044
      %v1159 = vadd.f32 %v721, %v1047
      %v1160 = vadd.f32 %v726, %v1052
      %v1161 = vadd.f32 %v729, %v1055
      %v1162 = vadd.f32 %v734, %v1060
      %v1163 = vadd.f32 %v737, %v1063
      %v1164 = vadd.f32 %v742, %v1068
      %v1165 = vadd.f32 %v745, %v1071
      %v1166 = vadd.f32 %v750, %v1076
      %v1167 = vadd.f32 %v753, %v1079
      %v1168 = vadd.f32 %v758, %v1084
      %v1169 = vadd.f32 %v761, %v1087
      %v1170 = vadd.f32 %v766, %v1092
      %v1171 = vadd.f32 %v769, %v1095
      %v1172 = vadd.f32 %v774, %v1100
      %v1173 = vadd.f32 %v777, %v1103
      %v1174 = vadd.f32 %v782, %v1108
      %v1175 = vadd.f32 %v785, %v1111
      %v1176 = vadd.f32 %v790, %v1116
      %v1177 = vadd.f32 %v793, %v1119
      %v1178 = vadd.f32 %v798, %v1124
      %v1179 = vadd.f32 %v801, %v1127
      %v1180 = vadd.f32 %v806, %v1132
      %v1181 = vadd.f32 %v809, %v1135
      %v1182 = vadd.f32 %v814, %v1140
      %v1183 = vadd.f32 %v817, %v1143
      %v1184 = vadd.f32 %v822, %v1148
      %v1185 = vadd.f32 %v825, %v1151
      %v1186 = vld [vmem:[%s165 + $0x180] sm:$0xf]
      %v1187 = vld [vmem:[%s165 + $0x184] sm:$0xf]
      %v1188 = vld [vmem:[%s165 + $0x188] sm:$0xf]
      %v1189 = vld [vmem:[%s165 + $0x18c] sm:$0xf]
      %v1190 = vld [vmem:[%s165 + $0x190] sm:$0xf]
      %v1191 = vld [vmem:[%s165 + $0x194] sm:$0xf]
      %v1192 = vld [vmem:[%s165 + $0x198] sm:$0xf]
      %v1193 = vld [vmem:[%s165 + $0x19c] sm:$0xf]
      %v1194 = vld [vmem:[%s165 + $0x1a0] sm:$0xf]
      %v1195 = vld [vmem:[%s165 + $0x1a4] sm:$0xf]
      %v1196 = vld [vmem:[%s165 + $0x1a8] sm:$0xf]
      %v1197 = vld [vmem:[%s165 + $0x1ac] sm:$0xf]
      %v1198 = vld [vmem:[%s165 + $0x1b0] sm:$0xf]
      %v1199 = vld [vmem:[%s165 + $0x1b4] sm:$0xf]
      %v1200 = vld [vmem:[%s165 + $0x1b8] sm:$0xf]
      %v1201 = vld [vmem:[%s165 + $0x1bc] sm:$0xf]
      %v1202 = vld [vmem:[%s165 + $0x1c0] sm:$0xf]
      %v1203 = vld [vmem:[%s165 + $0x1c4] sm:$0xf]
      %v1204 = vld [vmem:[%s165 + $0x1c8] sm:$0xf]
      %v1205 = vld [vmem:[%s165 + $0x1cc] sm:$0xf]
      %v1206 = vld [vmem:[%s165 + $0x1d0] sm:$0xf]
      %v1207 = vld [vmem:[%s165 + $0x1d4] sm:$0xf]
      %v1208 = vld [vmem:[%s165 + $0x1d8] sm:$0xf]
      %v1209 = vld [vmem:[%s165 + $0x1dc] sm:$0xf]
      %v1210 = vld [vmem:[%s165 + $0x1e0] sm:$0xf]
      %v1211 = vld [vmem:[%s165 + $0x1e4] sm:$0xf]
      %v1212 = vld [vmem:[%s165 + $0x1e8] sm:$0xf]
      %v1213 = vld [vmem:[%s165 + $0x1ec] sm:$0xf]
      %v1214 = vld [vmem:[%s165 + $0x1f0] sm:$0xf]
      %v1215 = vld [vmem:[%s165 + $0x1f4] sm:$0xf]
      %v1216 = vld [vmem:[%s165 + $0x1f8] sm:$0xf]
      %v1217 = vld [vmem:[%s165 + $0x1fc] sm:$0xf]
      %s1218 = scalar_lea.vmem %s1, 6
      %v1219 = vld [vmem:[%s1218] sm:$0x3]
      %v1252 = vunpack.c.l.b16 %v1186
      %v1253 = vunpack.c.l.b16 %v1187
      %v1254 = vunpack.c.l.b16 %v1188
      %v1255 = vunpack.c.l.b16 %v1189
      %v1256 = vunpack.c.l.b16 %v1190
      %v1257 = vunpack.c.l.b16 %v1191
      %v1258 = vunpack.c.l.b16 %v1192
      %v1259 = vunpack.c.l.b16 %v1193
      %v1260 = vunpack.c.l.b16 %v1194
      %v1261 = vunpack.c.l.b16 %v1195
      %v1262 = vunpack.c.l.b16 %v1196
      %v1263 = vunpack.c.l.b16 %v1197
      %v1264 = vunpack.c.l.b16 %v1198
      %v1265 = vunpack.c.l.b16 %v1199
      %v1266 = vunpack.c.l.b16 %v1200
      %v1267 = vunpack.c.l.b16 %v1201
      %v1268 = vunpack.c.l.b16 %v1202
      %v1269 = vunpack.c.l.b16 %v1203
      %v1270 = vunpack.c.l.b16 %v1204
      %v1271 = vunpack.c.l.b16 %v1205
      %v1272 = vunpack.c.l.b16 %v1206
      %v1273 = vunpack.c.l.b16 %v1207
      %v1274 = vunpack.c.l.b16 %v1208
      %v1275 = vunpack.c.l.b16 %v1209
      %v1276 = vunpack.c.l.b16 %v1210
      %v1277 = vunpack.c.l.b16 %v1211
      %v1278 = vunpack.c.l.b16 %v1212
      %v1279 = vunpack.c.l.b16 %v1213
      %v1280 = vunpack.c.l.b16 %v1214
      %v1281 = vunpack.c.l.b16 %v1215
      %v1282 = vunpack.c.l.b16 %v1216
      %v1283 = vunpack.c.l.b16 %v1217
      %v1284 = vpack.c.b16 %v1253, %v1252
      %v1285 = vpack.c.b16 %v1255, %v1254
      %v1286 = vpack.c.b16 %v1257, %v1256
      %v1287 = vpack.c.b16 %v1259, %v1258
      %v1288 = vpack.c.b16 %v1261, %v1260
      %v1289 = vpack.c.b16 %v1263, %v1262
      %v1290 = vpack.c.b16 %v1265, %v1264
      %v1291 = vpack.c.b16 %v1267, %v1266
      %v1292 = vpack.c.b16 %v1269, %v1268
      %v1293 = vpack.c.b16 %v1271, %v1270
      %v1294 = vpack.c.b16 %v1273, %v1272
      %v1295 = vpack.c.b16 %v1275, %v1274
      %v1296 = vpack.c.b16 %v1277, %v1276
      %v1297 = vpack.c.b16 %v1279, %v1278
      %v1298 = vpack.c.b16 %v1281, %v1280
      %v1299 = vpack.c.b16 %v1283, %v1282
      %v1301 = vsel %vm319, %v1284, 0
      %v1304 = vsel %vm319, %v1285, 0
      %v1307 = vsel %vm319, %v1286, 0
      %v1310 = vsel %vm319, %v1287, 0
      %v1313 = vsel %vm319, %v1288, 0
      %v1316 = vsel %vm319, %v1289, 0
      %v1319 = vsel %vm319, %v1290, 0
      %v1322 = vsel %vm319, %v1291, 0
      %v1325 = vsel %vm319, %v1292, 0
      %v1328 = vsel %vm319, %v1293, 0
      %v1331 = vsel %vm319, %v1294, 0
      %v1334 = vsel %vm319, %v1295, 0
      %v1337 = vsel %vm319, %v1296, 0
      %v1340 = vsel %vm319, %v1297, 0
      %v1343 = vsel %vm319, %v1298, 0
      %v1346 = vsel %vm319, %v1299, 0
      %v1349 = vand.u32 %v1219, %v371
      %1351 = vmatprep.subr.bf16.mxu0 0
      %1352 = vmatpush1.bf16.msra.mxu0 0
      %1353 = vmatprep.subr.bf16.mxu0 0
      %1354 = vmatpush1.bf16.msra.mxu0 0
      %1355 = vmatprep.subr.bf16.mxu0 0
      %1356 = vmatpush1.bf16.msra.mxu0 0
      %1357 = vmatprep.subr.bf16.mxu0 0
      %1358 = vmatpush1.bf16.msra.mxu0 0
      %1359 = vmatprep.subr.bf16.mxu0 0
      %1360 = vmatpush1.bf16.msra.mxu0 0
      %1361 = vmatprep.subr.bf16.mxu0 0
      %1362 = vmatpush1.bf16.msra.mxu0 0
      %1363 = vmatprep.subr.bf16.mxu0 0
      %1364 = vmatpush1.bf16.msra.mxu0 0
      %1365 = vmatprep.subr.bf16.mxu0 0
      %1366 = vmatpush1.bf16.msra.mxu0 %v1349
      %1367 = vmatprep.subr.bf16.mxu0 0
      %1368 = vmatpush2.bf16.msra.mxu0 0
      %1369 = vmatprep.subr.bf16.mxu0 0
      %1370 = vmatpush2.bf16.msra.mxu0 0
      %1371 = vmatprep.subr.bf16.mxu0 0
      %1372 = vmatpush2.bf16.msra.mxu0 0
      %1373 = vmatprep.subr.bf16.mxu0 0
      %1374 = vmatpush2.bf16.msra.mxu0 0
      %1375 = vmatprep.subr.bf16.mxu0 0
      %1376 = vmatpush2.bf16.msra.mxu0 0
      %1377 = vmatprep.subr.bf16.mxu0 0
      %1378 = vmatpush2.bf16.msra.mxu0 0
      %1379 = vmatprep.subr.bf16.mxu0 0
      %1380 = vmatpush2.bf16.msra.mxu0 0
      %1381 = vmatprep.subr.bf16.mxu0 0
      %1382 = vmatpush2.bf16.msra.mxu0 0
      %1383 = vmatprep.mubr.bf16.mxu0 0
      %1384 = vmatmul.mubr.bf16.gmra.mxu0 %v1301
      %v1385 = vpop.f32.mrf.mxu0
      %v1386 = vadd.f32 0.0, %v1385
      %v1387 = vpop.f32.mrf.mxu0
      %v1388 = vpop.f32.mrf.mxu0
      %v1389 = vadd.f32 0.0, %v1388
      %v1390 = vpop.f32.mrf.mxu0
      %1391 = vmatprep.mubr.bf16.mxu0 0
      %1392 = vmatmul.mubr.bf16.gmra.mxu0 %v1304
      %v1393 = vpop.f32.mrf.mxu0
      %v1394 = vadd.f32 0.0, %v1393
      %v1395 = vpop.f32.mrf.mxu0
      %v1396 = vpop.f32.mrf.mxu0
      %v1397 = vadd.f32 0.0, %v1396
      %v1398 = vpop.f32.mrf.mxu0
      %1399 = vmatprep.mubr.bf16.mxu0 0
      %1400 = vmatmul.mubr.bf16.gmra.mxu0 %v1307
      %v1401 = vpop.f32.mrf.mxu0
      %v1402 = vadd.f32 0.0, %v1401
      %v1403 = vpop.f32.mrf.mxu0
      %v1404 = vpop.f32.mrf.mxu0
      %v1405 = vadd.f32 0.0, %v1404
      %v1406 = vpop.f32.mrf.mxu0
      %1407 = vmatprep.mubr.bf16.mxu0 0
      %1408 = vmatmul.mubr.bf16.gmra.mxu0 %v1310
      %v1409 = vpop.f32.mrf.mxu0
      %v1410 = vadd.f32 0.0, %v1409
      %v1411 = vpop.f32.mrf.mxu0
      %v1412 = vpop.f32.mrf.mxu0
      %v1413 = vadd.f32 0.0, %v1412
      %v1414 = vpop.f32.mrf.mxu0
      %1415 = vmatprep.mubr.bf16.mxu0 0
      %1416 = vmatmul.mubr.bf16.gmra.mxu0 %v1313
      %v1417 = vpop.f32.mrf.mxu0
      %v1418 = vadd.f32 0.0, %v1417
      %v1419 = vpop.f32.mrf.mxu0
      %v1420 = vpop.f32.mrf.mxu0
      %v1421 = vadd.f32 0.0, %v1420
      %v1422 = vpop.f32.mrf.mxu0
      %1423 = vmatprep.mubr.bf16.mxu0 0
      %1424 = vmatmul.mubr.bf16.gmra.mxu0 %v1316
      %v1425 = vpop.f32.mrf.mxu0
      %v1426 = vadd.f32 0.0, %v1425
      %v1427 = vpop.f32.mrf.mxu0
      %v1428 = vpop.f32.mrf.mxu0
      %v1429 = vadd.f32 0.0, %v1428
      %v1430 = vpop.f32.mrf.mxu0
      %1431 = vmatprep.mubr.bf16.mxu0 0
      %1432 = vmatmul.mubr.bf16.gmra.mxu0 %v1319
      %v1433 = vpop.f32.mrf.mxu0
      %v1434 = vadd.f32 0.0, %v1433
      %v1435 = vpop.f32.mrf.mxu0
      %v1436 = vpop.f32.mrf.mxu0
      %v1437 = vadd.f32 0.0, %v1436
      %v1438 = vpop.f32.mrf.mxu0
      %1439 = vmatprep.mubr.bf16.mxu0 0
      %1440 = vmatmul.mubr.bf16.gmra.mxu0 %v1322
      %v1441 = vpop.f32.mrf.mxu0
      %v1442 = vadd.f32 0.0, %v1441
      %v1443 = vpop.f32.mrf.mxu0
      %v1444 = vpop.f32.mrf.mxu0
      %v1445 = vadd.f32 0.0, %v1444
      %v1446 = vpop.f32.mrf.mxu0
      %1447 = vmatprep.mubr.bf16.mxu0 0
      %1448 = vmatmul.mubr.bf16.gmra.mxu0 %v1325
      %v1449 = vpop.f32.mrf.mxu0
      %v1450 = vadd.f32 0.0, %v1449
      %v1451 = vpop.f32.mrf.mxu0
      %v1452 = vpop.f32.mrf.mxu0
      %v1453 = vadd.f32 0.0, %v1452
      %v1454 = vpop.f32.mrf.mxu0
      %1455 = vmatprep.mubr.bf16.mxu0 0
      %1456 = vmatmul.mubr.bf16.gmra.mxu0 %v1328
      %v1457 = vpop.f32.mrf.mxu0
      %v1458 = vadd.f32 0.0, %v1457
      %v1459 = vpop.f32.mrf.mxu0
      %v1460 = vpop.f32.mrf.mxu0
      %v1461 = vadd.f32 0.0, %v1460
      %v1462 = vpop.f32.mrf.mxu0
      %1463 = vmatprep.mubr.bf16.mxu0 0
      %1464 = vmatmul.mubr.bf16.gmra.mxu0 %v1331
      %v1465 = vpop.f32.mrf.mxu0
      %v1466 = vadd.f32 0.0, %v1465
      %v1467 = vpop.f32.mrf.mxu0
      %v1468 = vpop.f32.mrf.mxu0
      %v1469 = vadd.f32 0.0, %v1468
      %v1470 = vpop.f32.mrf.mxu0
      %1471 = vmatprep.mubr.bf16.mxu0 0
      %1472 = vmatmul.mubr.bf16.gmra.mxu0 %v1334
      %v1473 = vpop.f32.mrf.mxu0
      %v1474 = vadd.f32 0.0, %v1473
      %v1475 = vpop.f32.mrf.mxu0
      %v1476 = vpop.f32.mrf.mxu0
      %v1477 = vadd.f32 0.0, %v1476
      %v1478 = vpop.f32.mrf.mxu0
      %1479 = vmatprep.mubr.bf16.mxu0 0
      %1480 = vmatmul.mubr.bf16.gmra.mxu0 %v1337
      %v1481 = vpop.f32.mrf.mxu0
      %v1482 = vadd.f32 0.0, %v1481
      %v1483 = vpop.f32.mrf.mxu0
      %v1484 = vpop.f32.mrf.mxu0
      %v1485 = vadd.f32 0.0, %v1484
      %v1486 = vpop.f32.mrf.mxu0
      %1487 = vmatprep.mubr.bf16.mxu0 0
      %1488 = vmatmul.mubr.bf16.gmra.mxu0 %v1340
      %v1489 = vpop.f32.mrf.mxu0
      %v1490 = vadd.f32 0.0, %v1489
      %v1491 = vpop.f32.mrf.mxu0
      %v1492 = vpop.f32.mrf.mxu0
      %v1493 = vadd.f32 0.0, %v1492
      %v1494 = vpop.f32.mrf.mxu0
      %1495 = vmatprep.mubr.bf16.mxu0 0
      %1496 = vmatmul.mubr.bf16.gmra.mxu0 %v1343
      %v1497 = vpop.f32.mrf.mxu0
      %v1498 = vadd.f32 0.0, %v1497
      %v1499 = vpop.f32.mrf.mxu0
      %v1500 = vpop.f32.mrf.mxu0
      %v1501 = vadd.f32 0.0, %v1500
      %v1502 = vpop.f32.mrf.mxu0
      %1503 = vmatprep.mubr.bf16.mxu0 0
      %1504 = vmatmul.mubr.bf16.gmra.mxu0 %v1346
      %v1505 = vpop.f32.mrf.mxu0
      %v1506 = vadd.f32 0.0, %v1505
      %v1507 = vpop.f32.mrf.mxu0
      %v1508 = vpop.f32.mrf.mxu0
      %v1509 = vadd.f32 0.0, %v1508
      %v1510 = vpop.f32.mrf.mxu0
      %1511 = vdwg.mxu0
      %v1512 = vadd.f32 %v1154, %v1386
      %v1513 = vadd.f32 %v1155, %v1389
      %v1514 = vadd.f32 %v1156, %v1394
      %v1515 = vadd.f32 %v1157, %v1397
      %v1516 = vadd.f32 %v1158, %v1402
      %v1517 = vadd.f32 %v1159, %v1405
      %v1518 = vadd.f32 %v1160, %v1410
      %v1519 = vadd.f32 %v1161, %v1413
      %v1520 = vadd.f32 %v1162, %v1418
      %v1521 = vadd.f32 %v1163, %v1421
      %v1522 = vadd.f32 %v1164, %v1426
      %v1523 = vadd.f32 %v1165, %v1429
      %v1524 = vadd.f32 %v1166, %v1434
      %v1525 = vadd.f32 %v1167, %v1437
      %v1526 = vadd.f32 %v1168, %v1442
      %v1527 = vadd.f32 %v1169, %v1445
      %v1528 = vadd.f32 %v1170, %v1450
      %v1529 = vadd.f32 %v1171, %v1453
      %v1530 = vadd.f32 %v1172, %v1458
      %v1531 = vadd.f32 %v1173, %v1461
      %v1532 = vadd.f32 %v1174, %v1466
      %v1533 = vadd.f32 %v1175, %v1469
      %v1534 = vadd.f32 %v1176, %v1474
      %v1535 = vadd.f32 %v1177, %v1477
      %v1536 = vadd.f32 %v1178, %v1482
      %v1537 = vadd.f32 %v1179, %v1485
      %v1538 = vadd.f32 %v1180, %v1490
      %v1539 = vadd.f32 %v1181, %v1493
      %v1540 = vadd.f32 %v1182, %v1498
      %v1541 = vadd.f32 %v1183, %v1501
      %v1542 = vadd.f32 %v1184, %v1506
      %v1543 = vadd.f32 %v1185, %v1509
      %v1544 = vld [vmem:[%s165 + $0x200] sm:$0xf]
      %v1545 = vld [vmem:[%s165 + $0x204] sm:$0xf]
      %v1546 = vld [vmem:[%s165 + $0x208] sm:$0xf]
      %v1547 = vld [vmem:[%s165 + $0x20c] sm:$0xf]
      %v1548 = vld [vmem:[%s165 + $0x210] sm:$0xf]
      %v1549 = vld [vmem:[%s165 + $0x214] sm:$0xf]
      %v1550 = vld [vmem:[%s165 + $0x218] sm:$0xf]
      %v1551 = vld [vmem:[%s165 + $0x21c] sm:$0xf]
      %v1552 = vld [vmem:[%s165 + $0x220] sm:$0xf]
      %v1553 = vld [vmem:[%s165 + $0x224] sm:$0xf]
      %v1554 = vld [vmem:[%s165 + $0x228] sm:$0xf]
      %v1555 = vld [vmem:[%s165 + $0x22c] sm:$0xf]
      %v1556 = vld [vmem:[%s165 + $0x230] sm:$0xf]
      %v1557 = vld [vmem:[%s165 + $0x234] sm:$0xf]
      %v1558 = vld [vmem:[%s165 + $0x238] sm:$0xf]
      %v1559 = vld [vmem:[%s165 + $0x23c] sm:$0xf]
      %v1560 = vld [vmem:[%s165 + $0x240] sm:$0xf]
      %v1561 = vld [vmem:[%s165 + $0x244] sm:$0xf]
      %v1562 = vld [vmem:[%s165 + $0x248] sm:$0xf]
      %v1563 = vld [vmem:[%s165 + $0x24c] sm:$0xf]
      %v1564 = vld [vmem:[%s165 + $0x250] sm:$0xf]
      %v1565 = vld [vmem:[%s165 + $0x254] sm:$0xf]
      %v1566 = vld [vmem:[%s165 + $0x258] sm:$0xf]
      %v1567 = vld [vmem:[%s165 + $0x25c] sm:$0xf]
      %v1568 = vld [vmem:[%s165 + $0x260] sm:$0xf]
      %v1569 = vld [vmem:[%s165 + $0x264] sm:$0xf]
      %v1570 = vld [vmem:[%s165 + $0x268] sm:$0xf]
      %v1571 = vld [vmem:[%s165 + $0x26c] sm:$0xf]
      %v1572 = vld [vmem:[%s165 + $0x270] sm:$0xf]
      %v1573 = vld [vmem:[%s165 + $0x274] sm:$0xf]
      %v1574 = vld [vmem:[%s165 + $0x278] sm:$0xf]
      %v1575 = vld [vmem:[%s165 + $0x27c] sm:$0xf]
      %s1576 = scalar_lea.vmem %s1, 8
      %v1577 = vld [vmem:[%s1576] sm:$0x3]
      %v1610 = vunpack.c.l.b16 %v1544
      %v1611 = vunpack.c.l.b16 %v1545
      %v1612 = vunpack.c.l.b16 %v1546
      %v1613 = vunpack.c.l.b16 %v1547
      %v1614 = vunpack.c.l.b16 %v1548
      %v1615 = vunpack.c.l.b16 %v1549
      %v1616 = vunpack.c.l.b16 %v1550
      %v1617 = vunpack.c.l.b16 %v1551
      %v1618 = vunpack.c.l.b16 %v1552
      %v1619 = vunpack.c.l.b16 %v1553
      %v1620 = vunpack.c.l.b16 %v1554
      %v1621 = vunpack.c.l.b16 %v1555
      %v1622 = vunpack.c.l.b16 %v1556
      %v1623 = vunpack.c.l.b16 %v1557
      %v1624 = vunpack.c.l.b16 %v1558
      %v1625 = vunpack.c.l.b16 %v1559
      %v1626 = vunpack.c.l.b16 %v1560
      %v1627 = vunpack.c.l.b16 %v1561
      %v1628 = vunpack.c.l.b16 %v1562
      %v1629 = vunpack.c.l.b16 %v1563
      %v1630 = vunpack.c.l.b16 %v1564
      %v1631 = vunpack.c.l.b16 %v1565
      %v1632 = vunpack.c.l.b16 %v1566
      %v1633 = vunpack.c.l.b16 %v1567
      %v1634 = vunpack.c.l.b16 %v1568
      %v1635 = vunpack.c.l.b16 %v1569
      %v1636 = vunpack.c.l.b16 %v1570
      %v1637 = vunpack.c.l.b16 %v1571
      %v1638 = vunpack.c.l.b16 %v1572
      %v1639 = vunpack.c.l.b16 %v1573
      %v1640 = vunpack.c.l.b16 %v1574
      %v1641 = vunpack.c.l.b16 %v1575
      %v1642 = vpack.c.b16 %v1611, %v1610
      %v1643 = vpack.c.b16 %v1613, %v1612
      %v1644 = vpack.c.b16 %v1615, %v1614
      %v1645 = vpack.c.b16 %v1617, %v1616
      %v1646 = vpack.c.b16 %v1619, %v1618
      %v1647 = vpack.c.b16 %v1621, %v1620
      %v1648 = vpack.c.b16 %v1623, %v1622
      %v1649 = vpack.c.b16 %v1625, %v1624
      %v1650 = vpack.c.b16 %v1627, %v1626
      %v1651 = vpack.c.b16 %v1629, %v1628
      %v1652 = vpack.c.b16 %v1631, %v1630
      %v1653 = vpack.c.b16 %v1633, %v1632
      %v1654 = vpack.c.b16 %v1635, %v1634
      %v1655 = vpack.c.b16 %v1637, %v1636
      %v1656 = vpack.c.b16 %v1639, %v1638
      %v1657 = vpack.c.b16 %v1641, %v1640
      %v1659 = vsel %vm319, %v1642, 0
      %v1662 = vsel %vm319, %v1643, 0
      %v1665 = vsel %vm319, %v1644, 0
      %v1668 = vsel %vm319, %v1645, 0
      %v1671 = vsel %vm319, %v1646, 0
      %v1674 = vsel %vm319, %v1647, 0
      %v1677 = vsel %vm319, %v1648, 0
      %v1680 = vsel %vm319, %v1649, 0
      %v1683 = vsel %vm319, %v1650, 0
      %v1686 = vsel %vm319, %v1651, 0
      %v1689 = vsel %vm319, %v1652, 0
      %v1692 = vsel %vm319, %v1653, 0
      %v1695 = vsel %vm319, %v1654, 0
      %v1698 = vsel %vm319, %v1655, 0
      %v1701 = vsel %vm319, %v1656, 0
      %v1704 = vsel %vm319, %v1657, 0
      %v1707 = vand.u32 %v1577, %v371
      %1709 = vmatprep.subr.bf16.mxu0 0
      %1710 = vmatpush1.bf16.msra.mxu0 0
      %1711 = vmatprep.subr.bf16.mxu0 0
      %1712 = vmatpush1.bf16.msra.mxu0 0
      %1713 = vmatprep.subr.bf16.mxu0 0
      %1714 = vmatpush1.bf16.msra.mxu0 0
      %1715 = vmatprep.subr.bf16.mxu0 0
      %1716 = vmatpush1.bf16.msra.mxu0 0
      %1717 = vmatprep.subr.bf16.mxu0 0
      %1718 = vmatpush1.bf16.msra.mxu0 0
      %1719 = vmatprep.subr.bf16.mxu0 0
      %1720 = vmatpush1.bf16.msra.mxu0 0
      %1721 = vmatprep.subr.bf16.mxu0 0
      %1722 = vmatpush1.bf16.msra.mxu0 0
      %1723 = vmatprep.subr.bf16.mxu0 0
      %1724 = vmatpush1.bf16.msra.mxu0 %v1707
      %1725 = vmatprep.subr.bf16.mxu0 0
      %1726 = vmatpush2.bf16.msra.mxu0 0
      %1727 = vmatprep.subr.bf16.mxu0 0
      %1728 = vmatpush2.bf16.msra.mxu0 0
      %1729 = vmatprep.subr.bf16.mxu0 0
      %1730 = vmatpush2.bf16.msra.mxu0 0
      %1731 = vmatprep.subr.bf16.mxu0 0
      %1732 = vmatpush2.bf16.msra.mxu0 0
      %1733 = vmatprep.subr.bf16.mxu0 0
      %1734 = vmatpush2.bf16.msra.mxu0 0
      %1735 = vmatprep.subr.bf16.mxu0 0
      %1736 = vmatpush2.bf16.msra.mxu0 0
      %1737 = vmatprep.subr.bf16.mxu0 0
      %1738 = vmatpush2.bf16.msra.mxu0 0
      %1739 = vmatprep.subr.bf16.mxu0 0
      %1740 = vmatpush2.bf16.msra.mxu0 0
      %1741 = vmatprep.mubr.bf16.mxu0 0
      %1742 = vmatmul.mubr.bf16.gmra.mxu0 %v1659
      %v1743 = vpop.f32.mrf.mxu0
      %v1744 = vadd.f32 0.0, %v1743
      %v1745 = vpop.f32.mrf.mxu0
      %v1746 = vpop.f32.mrf.mxu0
      %v1747 = vadd.f32 0.0, %v1746
      %v1748 = vpop.f32.mrf.mxu0
      %1749 = vmatprep.mubr.bf16.mxu0 0
      %1750 = vmatmul.mubr.bf16.gmra.mxu0 %v1662
      %v1751 = vpop.f32.mrf.mxu0
      %v1752 = vadd.f32 0.0, %v1751
      %v1753 = vpop.f32.mrf.mxu0
      %v1754 = vpop.f32.mrf.mxu0
      %v1755 = vadd.f32 0.0, %v1754
      %v1756 = vpop.f32.mrf.mxu0
      %1757 = vmatprep.mubr.bf16.mxu0 0
      %1758 = vmatmul.mubr.bf16.gmra.mxu0 %v1665
      %v1759 = vpop.f32.mrf.mxu0
      %v1760 = vadd.f32 0.0, %v1759
      %v1761 = vpop.f32.mrf.mxu0
      %v1762 = vpop.f32.mrf.mxu0
      %v1763 = vadd.f32 0.0, %v1762
      %v1764 = vpop.f32.mrf.mxu0
      %1765 = vmatprep.mubr.bf16.mxu0 0
      %1766 = vmatmul.mubr.bf16.gmra.mxu0 %v1668
      %v1767 = vpop.f32.mrf.mxu0
      %v1768 = vadd.f32 0.0, %v1767
      %v1769 = vpop.f32.mrf.mxu0
      %v1770 = vpop.f32.mrf.mxu0
      %v1771 = vadd.f32 0.0, %v1770
      %v1772 = vpop.f32.mrf.mxu0
      %1773 = vmatprep.mubr.bf16.mxu0 0
      %1774 = vmatmul.mubr.bf16.gmra.mxu0 %v1671
      %v1775 = vpop.f32.mrf.mxu0
      %v1776 = vadd.f32 0.0, %v1775
      %v1777 = vpop.f32.mrf.mxu0
      %v1778 = vpop.f32.mrf.mxu0
      %v1779 = vadd.f32 0.0, %v1778
      %v1780 = vpop.f32.mrf.mxu0
      %1781 = vmatprep.mubr.bf16.mxu0 0
      %1782 = vmatmul.mubr.bf16.gmra.mxu0 %v1674
      %v1783 = vpop.f32.mrf.mxu0
      %v1784 = vadd.f32 0.0, %v1783
      %v1785 = vpop.f32.mrf.mxu0
      %v1786 = vpop.f32.mrf.mxu0
      %v1787 = vadd.f32 0.0, %v1786
      %v1788 = vpop.f32.mrf.mxu0
      %1789 = vmatprep.mubr.bf16.mxu0 0
      %1790 = vmatmul.mubr.bf16.gmra.mxu0 %v1677
      %v1791 = vpop.f32.mrf.mxu0
      %v1792 = vadd.f32 0.0, %v1791
      %v1793 = vpop.f32.mrf.mxu0
      %v1794 = vpop.f32.mrf.mxu0
      %v1795 = vadd.f32 0.0, %v1794
      %v1796 = vpop.f32.mrf.mxu0
      %1797 = vmatprep.mubr.bf16.mxu0 0
      %1798 = vmatmul.mubr.bf16.gmra.mxu0 %v1680
      %v1799 = vpop.f32.mrf.mxu0
      %v1800 = vadd.f32 0.0, %v1799
      %v1801 = vpop.f32.mrf.mxu0
      %v1802 = vpop.f32.mrf.mxu0
      %v1803 = vadd.f32 0.0, %v1802
      %v1804 = vpop.f32.mrf.mxu0
      %1805 = vmatprep.mubr.bf16.mxu0 0
      %1806 = vmatmul.mubr.bf16.gmra.mxu0 %v1683
      %v1807 = vpop.f32.mrf.mxu0
      %v1808 = vadd.f32 0.0, %v1807
      %v1809 = vpop.f32.mrf.mxu0
      %v1810 = vpop.f32.mrf.mxu0
      %v1811 = vadd.f32 0.0, %v1810
      %v1812 = vpop.f32.mrf.mxu0
      %1813 = vmatprep.mubr.bf16.mxu0 0
      %1814 = vmatmul.mubr.bf16.gmra.mxu0 %v1686
      %v1815 = vpop.f32.mrf.mxu0
      %v1816 = vadd.f32 0.0, %v1815
      %v1817 = vpop.f32.mrf.mxu0
      %v1818 = vpop.f32.mrf.mxu0
      %v1819 = vadd.f32 0.0, %v1818
      %v1820 = vpop.f32.mrf.mxu0
      %1821 = vmatprep.mubr.bf16.mxu0 0
      %1822 = vmatmul.mubr.bf16.gmra.mxu0 %v1689
      %v1823 = vpop.f32.mrf.mxu0
      %v1824 = vadd.f32 0.0, %v1823
      %v1825 = vpop.f32.mrf.mxu0
      %v1826 = vpop.f32.mrf.mxu0
      %v1827 = vadd.f32 0.0, %v1826
      %v1828 = vpop.f32.mrf.mxu0
      %1829 = vmatprep.mubr.bf16.mxu0 0
      %1830 = vmatmul.mubr.bf16.gmra.mxu0 %v1692
      %v1831 = vpop.f32.mrf.mxu0
      %v1832 = vadd.f32 0.0, %v1831
      %v1833 = vpop.f32.mrf.mxu0
      %v1834 = vpop.f32.mrf.mxu0
      %v1835 = vadd.f32 0.0, %v1834
      %v1836 = vpop.f32.mrf.mxu0
      %1837 = vmatprep.mubr.bf16.mxu0 0
      %1838 = vmatmul.mubr.bf16.gmra.mxu0 %v1695
      %v1839 = vpop.f32.mrf.mxu0
      %v1840 = vadd.f32 0.0, %v1839
      %v1841 = vpop.f32.mrf.mxu0
      %v1842 = vpop.f32.mrf.mxu0
      %v1843 = vadd.f32 0.0, %v1842
      %v1844 = vpop.f32.mrf.mxu0
      %1845 = vmatprep.mubr.bf16.mxu0 0
      %1846 = vmatmul.mubr.bf16.gmra.mxu0 %v1698
      %v1847 = vpop.f32.mrf.mxu0
      %v1848 = vadd.f32 0.0, %v1847
      %v1849 = vpop.f32.mrf.mxu0
      %v1850 = vpop.f32.mrf.mxu0
      %v1851 = vadd.f32 0.0, %v1850
      %v1852 = vpop.f32.mrf.mxu0
      %1853 = vmatprep.mubr.bf16.mxu0 0
      %1854 = vmatmul.mubr.bf16.gmra.mxu0 %v1701
      %v1855 = vpop.f32.mrf.mxu0
      %v1856 = vadd.f32 0.0, %v1855
      %v1857 = vpop.f32.mrf.mxu0
      %v1858 = vpop.f32.mrf.mxu0
      %v1859 = vadd.f32 0.0, %v1858
      %v1860 = vpop.f32.mrf.mxu0
      %1861 = vmatprep.mubr.bf16.mxu0 0
      %1862 = vmatmul.mubr.bf16.gmra.mxu0 %v1704
      %v1863 = vpop.f32.mrf.mxu0
      %v1864 = vadd.f32 0.0, %v1863
      %v1865 = vpop.f32.mrf.mxu0
      %v1866 = vpop.f32.mrf.mxu0
      %v1867 = vadd.f32 0.0, %v1866
      %v1868 = vpop.f32.mrf.mxu0
      %1869 = vdwg.mxu0
      %v1870 = vadd.f32 %v1512, %v1744
      %v1871 = vadd.f32 %v1513, %v1747
      %v1872 = vadd.f32 %v1514, %v1752
      %v1873 = vadd.f32 %v1515, %v1755
      %v1874 = vadd.f32 %v1516, %v1760
      %v1875 = vadd.f32 %v1517, %v1763
      %v1876 = vadd.f32 %v1518, %v1768
      %v1877 = vadd.f32 %v1519, %v1771
      %v1878 = vadd.f32 %v1520, %v1776
      %v1879 = vadd.f32 %v1521, %v1779
      %v1880 = vadd.f32 %v1522, %v1784
      %v1881 = vadd.f32 %v1523, %v1787
      %v1882 = vadd.f32 %v1524, %v1792
      %v1883 = vadd.f32 %v1525, %v1795
      %v1884 = vadd.f32 %v1526, %v1800
      %v1885 = vadd.f32 %v1527, %v1803
      %v1886 = vadd.f32 %v1528, %v1808
      %v1887 = vadd.f32 %v1529, %v1811
      %v1888 = vadd.f32 %v1530, %v1816
      %v1889 = vadd.f32 %v1531, %v1819
      %v1890 = vadd.f32 %v1532, %v1824
      %v1891 = vadd.f32 %v1533, %v1827
      %v1892 = vadd.f32 %v1534, %v1832
      %v1893 = vadd.f32 %v1535, %v1835
      %v1894 = vadd.f32 %v1536, %v1840
      %v1895 = vadd.f32 %v1537, %v1843
      %v1896 = vadd.f32 %v1538, %v1848
      %v1897 = vadd.f32 %v1539, %v1851
      %v1898 = vadd.f32 %v1540, %v1856
      %v1899 = vadd.f32 %v1541, %v1859
      %v1900 = vadd.f32 %v1542, %v1864
      %v1901 = vadd.f32 %v1543, %v1867
      %v1902 = vld [vmem:[%s165 + $0x280] sm:$0xf]
      %v1903 = vld [vmem:[%s165 + $0x284] sm:$0xf]
      %v1904 = vld [vmem:[%s165 + $0x288] sm:$0xf]
      %v1905 = vld [vmem:[%s165 + $0x28c] sm:$0xf]
      %v1906 = vld [vmem:[%s165 + $0x290] sm:$0xf]
      %v1907 = vld [vmem:[%s165 + $0x294] sm:$0xf]
      %v1908 = vld [vmem:[%s165 + $0x298] sm:$0xf]
      %v1909 = vld [vmem:[%s165 + $0x29c] sm:$0xf]
      %v1910 = vld [vmem:[%s165 + $0x2a0] sm:$0xf]
      %v1911 = vld [vmem:[%s165 + $0x2a4] sm:$0xf]
      %v1912 = vld [vmem:[%s165 + $0x2a8] sm:$0xf]
      %v1913 = vld [vmem:[%s165 + $0x2ac] sm:$0xf]
      %v1914 = vld [vmem:[%s165 + $0x2b0] sm:$0xf]
      %v1915 = vld [vmem:[%s165 + $0x2b4] sm:$0xf]
      %v1916 = vld [vmem:[%s165 + $0x2b8] sm:$0xf]
      %v1917 = vld [vmem:[%s165 + $0x2bc] sm:$0xf]
      %v1918 = vld [vmem:[%s165 + $0x2c0] sm:$0xf]
      %v1919 = vld [vmem:[%s165 + $0x2c4] sm:$0xf]
      %v1920 = vld [vmem:[%s165 + $0x2c8] sm:$0xf]
      %v1921 = vld [vmem:[%s165 + $0x2cc] sm:$0xf]
      %v1922 = vld [vmem:[%s165 + $0x2d0] sm:$0xf]
      %v1923 = vld [vmem:[%s165 + $0x2d4] sm:$0xf]
      %v1924 = vld [vmem:[%s165 + $0x2d8] sm:$0xf]
      %v1925 = vld [vmem:[%s165 + $0x2dc] sm:$0xf]
      %v1926 = vld [vmem:[%s165 + $0x2e0] sm:$0xf]
      %v1927 = vld [vmem:[%s165 + $0x2e4] sm:$0xf]
      %v1928 = vld [vmem:[%s165 + $0x2e8] sm:$0xf]
      %v1929 = vld [vmem:[%s165 + $0x2ec] sm:$0xf]
      %v1930 = vld [vmem:[%s165 + $0x2f0] sm:$0xf]
      %v1931 = vld [vmem:[%s165 + $0x2f4] sm:$0xf]
      %v1932 = vld [vmem:[%s165 + $0x2f8] sm:$0xf]
      %v1933 = vld [vmem:[%s165 + $0x2fc] sm:$0xf]
      %s1934 = scalar_lea.vmem %s1, 10
      %v1935 = vld [vmem:[%s1934] sm:$0x3]
      %v1968 = vunpack.c.l.b16 %v1902
      %v1969 = vunpack.c.l.b16 %v1903
      %v1970 = vunpack.c.l.b16 %v1904
      %v1971 = vunpack.c.l.b16 %v1905
      %v1972 = vunpack.c.l.b16 %v1906
      %v1973 = vunpack.c.l.b16 %v1907
      %v1974 = vunpack.c.l.b16 %v1908
      %v1975 = vunpack.c.l.b16 %v1909
      %v1976 = vunpack.c.l.b16 %v1910
      %v1977 = vunpack.c.l.b16 %v1911
      %v1978 = vunpack.c.l.b16 %v1912
      %v1979 = vunpack.c.l.b16 %v1913
      %v1980 = vunpack.c.l.b16 %v1914
      %v1981 = vunpack.c.l.b16 %v1915
      %v1982 = vunpack.c.l.b16 %v1916
      %v1983 = vunpack.c.l.b16 %v1917
      %v1984 = vunpack.c.l.b16 %v1918
      %v1985 = vunpack.c.l.b16 %v1919
      %v1986 = vunpack.c.l.b16 %v1920
      %v1987 = vunpack.c.l.b16 %v1921
      %v1988 = vunpack.c.l.b16 %v1922
      %v1989 = vunpack.c.l.b16 %v1923
      %v1990 = vunpack.c.l.b16 %v1924
      %v1991 = vunpack.c.l.b16 %v1925
      %v1992 = vunpack.c.l.b16 %v1926
      %v1993 = vunpack.c.l.b16 %v1927
      %v1994 = vunpack.c.l.b16 %v1928
      %v1995 = vunpack.c.l.b16 %v1929
      %v1996 = vunpack.c.l.b16 %v1930
      %v1997 = vunpack.c.l.b16 %v1931
      %v1998 = vunpack.c.l.b16 %v1932
      %v1999 = vunpack.c.l.b16 %v1933
      %v2000 = vpack.c.b16 %v1969, %v1968
      %v2001 = vpack.c.b16 %v1971, %v1970
      %v2002 = vpack.c.b16 %v1973, %v1972
      %v2003 = vpack.c.b16 %v1975, %v1974
      %v2004 = vpack.c.b16 %v1977, %v1976
      %v2005 = vpack.c.b16 %v1979, %v1978
      %v2006 = vpack.c.b16 %v1981, %v1980
      %v2007 = vpack.c.b16 %v1983, %v1982
      %v2008 = vpack.c.b16 %v1985, %v1984
      %v2009 = vpack.c.b16 %v1987, %v1986
      %v2010 = vpack.c.b16 %v1989, %v1988
      %v2011 = vpack.c.b16 %v1991, %v1990
      %v2012 = vpack.c.b16 %v1993, %v1992
      %v2013 = vpack.c.b16 %v1995, %v1994
      %v2014 = vpack.c.b16 %v1997, %v1996
      %v2015 = vpack.c.b16 %v1999, %v1998
      %v2017 = vsel %vm319, %v2000, 0
      %v2020 = vsel %vm319, %v2001, 0
      %v2023 = vsel %vm319, %v2002, 0
      %v2026 = vsel %vm319, %v2003, 0
      %v2029 = vsel %vm319, %v2004, 0
      %v2032 = vsel %vm319, %v2005, 0
      %v2035 = vsel %vm319, %v2006, 0
      %v2038 = vsel %vm319, %v2007, 0
      %v2041 = vsel %vm319, %v2008, 0
      %v2044 = vsel %vm319, %v2009, 0
      %v2047 = vsel %vm319, %v2010, 0
      %v2050 = vsel %vm319, %v2011, 0
      %v2053 = vsel %vm319, %v2012, 0
      %v2056 = vsel %vm319, %v2013, 0
      %v2059 = vsel %vm319, %v2014, 0
      %v2062 = vsel %vm319, %v2015, 0
      %v2065 = vand.u32 %v1935, %v371
      %2067 = vmatprep.subr.bf16.mxu0 0
      %2068 = vmatpush1.bf16.msra.mxu0 0
      %2069 = vmatprep.subr.bf16.mxu0 0
      %2070 = vmatpush1.bf16.msra.mxu0 0
      %2071 = vmatprep.subr.bf16.mxu0 0
      %2072 = vmatpush1.bf16.msra.mxu0 0
      %2073 = vmatprep.subr.bf16.mxu0 0
      %2074 = vmatpush1.bf16.msra.mxu0 0
      %2075 = vmatprep.subr.bf16.mxu0 0
      %2076 = vmatpush1.bf16.msra.mxu0 0
      %2077 = vmatprep.subr.bf16.mxu0 0
      %2078 = vmatpush1.bf16.msra.mxu0 0
      %2079 = vmatprep.subr.bf16.mxu0 0
      %2080 = vmatpush1.bf16.msra.mxu0 0
      %2081 = vmatprep.subr.bf16.mxu0 0
      %2082 = vmatpush1.bf16.msra.mxu0 %v2065
      %2083 = vmatprep.subr.bf16.mxu0 0
      %2084 = vmatpush2.bf16.msra.mxu0 0
      %2085 = vmatprep.subr.bf16.mxu0 0
      %2086 = vmatpush2.bf16.msra.mxu0 0
      %2087 = vmatprep.subr.bf16.mxu0 0
      %2088 = vmatpush2.bf16.msra.mxu0 0
      %2089 = vmatprep.subr.bf16.mxu0 0
      %2090 = vmatpush2.bf16.msra.mxu0 0
      %2091 = vmatprep.subr.bf16.mxu0 0
      %2092 = vmatpush2.bf16.msra.mxu0 0
      %2093 = vmatprep.subr.bf16.mxu0 0
      %2094 = vmatpush2.bf16.msra.mxu0 0
      %2095 = vmatprep.subr.bf16.mxu0 0
      %2096 = vmatpush2.bf16.msra.mxu0 0
      %2097 = vmatprep.subr.bf16.mxu0 0
      %2098 = vmatpush2.bf16.msra.mxu0 0
      %2099 = vmatprep.mubr.bf16.mxu0 0
      %2100 = vmatmul.mubr.bf16.gmra.mxu0 %v2017
      %v2101 = vpop.f32.mrf.mxu0
      %v2102 = vadd.f32 0.0, %v2101
      %v2103 = vpop.f32.mrf.mxu0
      %v2104 = vpop.f32.mrf.mxu0
      %v2105 = vadd.f32 0.0, %v2104
      %v2106 = vpop.f32.mrf.mxu0
      %2107 = vmatprep.mubr.bf16.mxu0 0
      %2108 = vmatmul.mubr.bf16.gmra.mxu0 %v2020
      %v2109 = vpop.f32.mrf.mxu0
      %v2110 = vadd.f32 0.0, %v2109
      %v2111 = vpop.f32.mrf.mxu0
      %v2112 = vpop.f32.mrf.mxu0
      %v2113 = vadd.f32 0.0, %v2112
      %v2114 = vpop.f32.mrf.mxu0
      %2115 = vmatprep.mubr.bf16.mxu0 0
      %2116 = vmatmul.mubr.bf16.gmra.mxu0 %v2023
      %v2117 = vpop.f32.mrf.mxu0
      %v2118 = vadd.f32 0.0, %v2117
      %v2119 = vpop.f32.mrf.mxu0
      %v2120 = vpop.f32.mrf.mxu0
      %v2121 = vadd.f32 0.0, %v2120
      %v2122 = vpop.f32.mrf.mxu0
      %2123 = vmatprep.mubr.bf16.mxu0 0
      %2124 = vmatmul.mubr.bf16.gmra.mxu0 %v2026
      %v2125 = vpop.f32.mrf.mxu0
      %v2126 = vadd.f32 0.0, %v2125
      %v2127 = vpop.f32.mrf.mxu0
      %v2128 = vpop.f32.mrf.mxu0
      %v2129 = vadd.f32 0.0, %v2128
      %v2130 = vpop.f32.mrf.mxu0
      %2131 = vmatprep.mubr.bf16.mxu0 0
      %2132 = vmatmul.mubr.bf16.gmra.mxu0 %v2029
      %v2133 = vpop.f32.mrf.mxu0
      %v2134 = vadd.f32 0.0, %v2133
      %v2135 = vpop.f32.mrf.mxu0
      %v2136 = vpop.f32.mrf.mxu0
      %v2137 = vadd.f32 0.0, %v2136
      %v2138 = vpop.f32.mrf.mxu0
      %2139 = vmatprep.mubr.bf16.mxu0 0
      %2140 = vmatmul.mubr.bf16.gmra.mxu0 %v2032
      %v2141 = vpop.f32.mrf.mxu0
      %v2142 = vadd.f32 0.0, %v2141
      %v2143 = vpop.f32.mrf.mxu0
      %v2144 = vpop.f32.mrf.mxu0
      %v2145 = vadd.f32 0.0, %v2144
      %v2146 = vpop.f32.mrf.mxu0
      %2147 = vmatprep.mubr.bf16.mxu0 0
      %2148 = vmatmul.mubr.bf16.gmra.mxu0 %v2035
      %v2149 = vpop.f32.mrf.mxu0
      %v2150 = vadd.f32 0.0, %v2149
      %v2151 = vpop.f32.mrf.mxu0
      %v2152 = vpop.f32.mrf.mxu0
      %v2153 = vadd.f32 0.0, %v2152
      %v2154 = vpop.f32.mrf.mxu0
      %2155 = vmatprep.mubr.bf16.mxu0 0
      %2156 = vmatmul.mubr.bf16.gmra.mxu0 %v2038
      %v2157 = vpop.f32.mrf.mxu0
      %v2158 = vadd.f32 0.0, %v2157
      %v2159 = vpop.f32.mrf.mxu0
      %v2160 = vpop.f32.mrf.mxu0
      %v2161 = vadd.f32 0.0, %v2160
      %v2162 = vpop.f32.mrf.mxu0
      %2163 = vmatprep.mubr.bf16.mxu0 0
      %2164 = vmatmul.mubr.bf16.gmra.mxu0 %v2041
      %v2165 = vpop.f32.mrf.mxu0
      %v2166 = vadd.f32 0.0, %v2165
      %v2167 = vpop.f32.mrf.mxu0
      %v2168 = vpop.f32.mrf.mxu0
      %v2169 = vadd.f32 0.0, %v2168
      %v2170 = vpop.f32.mrf.mxu0
      %2171 = vmatprep.mubr.bf16.mxu0 0
      %2172 = vmatmul.mubr.bf16.gmra.mxu0 %v2044
      %v2173 = vpop.f32.mrf.mxu0
      %v2174 = vadd.f32 0.0, %v2173
      %v2175 = vpop.f32.mrf.mxu0
      %v2176 = vpop.f32.mrf.mxu0
      %v2177 = vadd.f32 0.0, %v2176
      %v2178 = vpop.f32.mrf.mxu0
      %2179 = vmatprep.mubr.bf16.mxu0 0
      %2180 = vmatmul.mubr.bf16.gmra.mxu0 %v2047
      %v2181 = vpop.f32.mrf.mxu0
      %v2182 = vadd.f32 0.0, %v2181
      %v2183 = vpop.f32.mrf.mxu0
      %v2184 = vpop.f32.mrf.mxu0
      %v2185 = vadd.f32 0.0, %v2184
      %v2186 = vpop.f32.mrf.mxu0
      %2187 = vmatprep.mubr.bf16.mxu0 0
      %2188 = vmatmul.mubr.bf16.gmra.mxu0 %v2050
      %v2189 = vpop.f32.mrf.mxu0
      %v2190 = vadd.f32 0.0, %v2189
      %v2191 = vpop.f32.mrf.mxu0
      %v2192 = vpop.f32.mrf.mxu0
      %v2193 = vadd.f32 0.0, %v2192
      %v2194 = vpop.f32.mrf.mxu0
      %2195 = vmatprep.mubr.bf16.mxu0 0
      %2196 = vmatmul.mubr.bf16.gmra.mxu0 %v2053
      %v2197 = vpop.f32.mrf.mxu0
      %v2198 = vadd.f32 0.0, %v2197
      %v2199 = vpop.f32.mrf.mxu0
      %v2200 = vpop.f32.mrf.mxu0
      %v2201 = vadd.f32 0.0, %v2200
      %v2202 = vpop.f32.mrf.mxu0
      %2203 = vmatprep.mubr.bf16.mxu0 0
      %2204 = vmatmul.mubr.bf16.gmra.mxu0 %v2056
      %v2205 = vpop.f32.mrf.mxu0
      %v2206 = vadd.f32 0.0, %v2205
      %v2207 = vpop.f32.mrf.mxu0
      %v2208 = vpop.f32.mrf.mxu0
      %v2209 = vadd.f32 0.0, %v2208
      %v2210 = vpop.f32.mrf.mxu0
      %2211 = vmatprep.mubr.bf16.mxu0 0
      %2212 = vmatmul.mubr.bf16.gmra.mxu0 %v2059
      %v2213 = vpop.f32.mrf.mxu0
      %v2214 = vadd.f32 0.0, %v2213
      %v2215 = vpop.f32.mrf.mxu0
      %v2216 = vpop.f32.mrf.mxu0
      %v2217 = vadd.f32 0.0, %v2216
      %v2218 = vpop.f32.mrf.mxu0
      %2219 = vmatprep.mubr.bf16.mxu0 0
      %2220 = vmatmul.mubr.bf16.gmra.mxu0 %v2062
      %v2221 = vpop.f32.mrf.mxu0
      %v2222 = vadd.f32 0.0, %v2221
      %v2223 = vpop.f32.mrf.mxu0
      %v2224 = vpop.f32.mrf.mxu0
      %v2225 = vadd.f32 0.0, %v2224
      %v2226 = vpop.f32.mrf.mxu0
      %2227 = vdwg.mxu0
      %v2228 = vadd.f32 %v1870, %v2102
      %v2229 = vadd.f32 %v1871, %v2105
      %v2230 = vadd.f32 %v1872, %v2110
      %v2231 = vadd.f32 %v1873, %v2113
      %v2232 = vadd.f32 %v1874, %v2118
      %v2233 = vadd.f32 %v1875, %v2121
      %v2234 = vadd.f32 %v1876, %v2126
      %v2235 = vadd.f32 %v1877, %v2129
      %v2236 = vadd.f32 %v1878, %v2134
      %v2237 = vadd.f32 %v1879, %v2137
      %v2238 = vadd.f32 %v1880, %v2142
      %v2239 = vadd.f32 %v1881, %v2145
      %v2240 = vadd.f32 %v1882, %v2150
      %v2241 = vadd.f32 %v1883, %v2153
      %v2242 = vadd.f32 %v1884, %v2158
      %v2243 = vadd.f32 %v1885, %v2161
      %v2244 = vadd.f32 %v1886, %v2166
      %v2245 = vadd.f32 %v1887, %v2169
      %v2246 = vadd.f32 %v1888, %v2174
      %v2247 = vadd.f32 %v1889, %v2177
      %v2248 = vadd.f32 %v1890, %v2182
      %v2249 = vadd.f32 %v1891, %v2185
      %v2250 = vadd.f32 %v1892, %v2190
      %v2251 = vadd.f32 %v1893, %v2193
      %v2252 = vadd.f32 %v1894, %v2198
      %v2253 = vadd.f32 %v1895, %v2201
      %v2254 = vadd.f32 %v1896, %v2206
      %v2255 = vadd.f32 %v1897, %v2209
      %v2256 = vadd.f32 %v1898, %v2214
      %v2257 = vadd.f32 %v1899, %v2217
      %v2258 = vadd.f32 %v1900, %v2222
      %v2259 = vadd.f32 %v1901, %v2225
      %v2260 = vld [vmem:[%s165 + $0x300] sm:$0xf]
      %v2261 = vld [vmem:[%s165 + $0x304] sm:$0xf]
      %v2262 = vld [vmem:[%s165 + $0x308] sm:$0xf]
      %v2263 = vld [vmem:[%s165 + $0x30c] sm:$0xf]
      %v2264 = vld [vmem:[%s165 + $0x310] sm:$0xf]
      %v2265 = vld [vmem:[%s165 + $0x314] sm:$0xf]
      %v2266 = vld [vmem:[%s165 + $0x318] sm:$0xf]
      %v2267 = vld [vmem:[%s165 + $0x31c] sm:$0xf]
      %v2268 = vld [vmem:[%s165 + $0x320] sm:$0xf]
      %v2269 = vld [vmem:[%s165 + $0x324] sm:$0xf]
      %v2270 = vld [vmem:[%s165 + $0x328] sm:$0xf]
      %v2271 = vld [vmem:[%s165 + $0x32c] sm:$0xf]
      %v2272 = vld [vmem:[%s165 + $0x330] sm:$0xf]
      %v2273 = vld [vmem:[%s165 + $0x334] sm:$0xf]
      %v2274 = vld [vmem:[%s165 + $0x338] sm:$0xf]
      %v2275 = vld [vmem:[%s165 + $0x33c] sm:$0xf]
      %v2276 = vld [vmem:[%s165 + $0x340] sm:$0xf]
      %v2277 = vld [vmem:[%s165 + $0x344] sm:$0xf]
      %v2278 = vld [vmem:[%s165 + $0x348] sm:$0xf]
      %v2279 = vld [vmem:[%s165 + $0x34c] sm:$0xf]
      %v2280 = vld [vmem:[%s165 + $0x350] sm:$0xf]
      %v2281 = vld [vmem:[%s165 + $0x354] sm:$0xf]
      %v2282 = vld [vmem:[%s165 + $0x358] sm:$0xf]
      %v2283 = vld [vmem:[%s165 + $0x35c] sm:$0xf]
      %v2284 = vld [vmem:[%s165 + $0x360] sm:$0xf]
      %v2285 = vld [vmem:[%s165 + $0x364] sm:$0xf]
      %v2286 = vld [vmem:[%s165 + $0x368] sm:$0xf]
      %v2287 = vld [vmem:[%s165 + $0x36c] sm:$0xf]
      %v2288 = vld [vmem:[%s165 + $0x370] sm:$0xf]
      %v2289 = vld [vmem:[%s165 + $0x374] sm:$0xf]
      %v2290 = vld [vmem:[%s165 + $0x378] sm:$0xf]
      %v2291 = vld [vmem:[%s165 + $0x37c] sm:$0xf]
      %s2292 = scalar_lea.vmem %s1, 12
      %v2293 = vld [vmem:[%s2292] sm:$0x3]
      %v2326 = vunpack.c.l.b16 %v2260
      %v2327 = vunpack.c.l.b16 %v2261
      %v2328 = vunpack.c.l.b16 %v2262
      %v2329 = vunpack.c.l.b16 %v2263
      %v2330 = vunpack.c.l.b16 %v2264
      %v2331 = vunpack.c.l.b16 %v2265
      %v2332 = vunpack.c.l.b16 %v2266
      %v2333 = vunpack.c.l.b16 %v2267
      %v2334 = vunpack.c.l.b16 %v2268
      %v2335 = vunpack.c.l.b16 %v2269
      %v2336 = vunpack.c.l.b16 %v2270
      %v2337 = vunpack.c.l.b16 %v2271
      %v2338 = vunpack.c.l.b16 %v2272
      %v2339 = vunpack.c.l.b16 %v2273
      %v2340 = vunpack.c.l.b16 %v2274
      %v2341 = vunpack.c.l.b16 %v2275
      %v2342 = vunpack.c.l.b16 %v2276
      %v2343 = vunpack.c.l.b16 %v2277
      %v2344 = vunpack.c.l.b16 %v2278
      %v2345 = vunpack.c.l.b16 %v2279
      %v2346 = vunpack.c.l.b16 %v2280
      %v2347 = vunpack.c.l.b16 %v2281
      %v2348 = vunpack.c.l.b16 %v2282
      %v2349 = vunpack.c.l.b16 %v2283
      %v2350 = vunpack.c.l.b16 %v2284
      %v2351 = vunpack.c.l.b16 %v2285
      %v2352 = vunpack.c.l.b16 %v2286
      %v2353 = vunpack.c.l.b16 %v2287
      %v2354 = vunpack.c.l.b16 %v2288
      %v2355 = vunpack.c.l.b16 %v2289
      %v2356 = vunpack.c.l.b16 %v2290
      %v2357 = vunpack.c.l.b16 %v2291
      %v2358 = vpack.c.b16 %v2327, %v2326
      %v2359 = vpack.c.b16 %v2329, %v2328
      %v2360 = vpack.c.b16 %v2331, %v2330
      %v2361 = vpack.c.b16 %v2333, %v2332
      %v2362 = vpack.c.b16 %v2335, %v2334
      %v2363 = vpack.c.b16 %v2337, %v2336
      %v2364 = vpack.c.b16 %v2339, %v2338
      %v2365 = vpack.c.b16 %v2341, %v2340
      %v2366 = vpack.c.b16 %v2343, %v2342
      %v2367 = vpack.c.b16 %v2345, %v2344
      %v2368 = vpack.c.b16 %v2347, %v2346
      %v2369 = vpack.c.b16 %v2349, %v2348
      %v2370 = vpack.c.b16 %v2351, %v2350
      %v2371 = vpack.c.b16 %v2353, %v2352
      %v2372 = vpack.c.b16 %v2355, %v2354
      %v2373 = vpack.c.b16 %v2357, %v2356
      %v2375 = vsel %vm319, %v2358, 0
      %v2378 = vsel %vm319, %v2359, 0
      %v2381 = vsel %vm319, %v2360, 0
      %v2384 = vsel %vm319, %v2361, 0
      %v2387 = vsel %vm319, %v2362, 0
      %v2390 = vsel %vm319, %v2363, 0
      %v2393 = vsel %vm319, %v2364, 0
      %v2396 = vsel %vm319, %v2365, 0
      %v2399 = vsel %vm319, %v2366, 0
      %v2402 = vsel %vm319, %v2367, 0
      %v2405 = vsel %vm319, %v2368, 0
      %v2408 = vsel %vm319, %v2369, 0
      %v2411 = vsel %vm319, %v2370, 0
      %v2414 = vsel %vm319, %v2371, 0
      %v2417 = vsel %vm319, %v2372, 0
      %v2420 = vsel %vm319, %v2373, 0
      %v2423 = vand.u32 %v2293, %v371
      %2425 = vmatprep.subr.bf16.mxu0 0
      %2426 = vmatpush1.bf16.msra.mxu0 0
      %2427 = vmatprep.subr.bf16.mxu0 0
      %2428 = vmatpush1.bf16.msra.mxu0 0
      %2429 = vmatprep.subr.bf16.mxu0 0
      %2430 = vmatpush1.bf16.msra.mxu0 0
      %2431 = vmatprep.subr.bf16.mxu0 0
      %2432 = vmatpush1.bf16.msra.mxu0 0
      %2433 = vmatprep.subr.bf16.mxu0 0
      %2434 = vmatpush1.bf16.msra.mxu0 0
      %2435 = vmatprep.subr.bf16.mxu0 0
      %2436 = vmatpush1.bf16.msra.mxu0 0
      %2437 = vmatprep.subr.bf16.mxu0 0
      %2438 = vmatpush1.bf16.msra.mxu0 0
      %2439 = vmatprep.subr.bf16.mxu0 0
      %2440 = vmatpush1.bf16.msra.mxu0 %v2423
      %2441 = vmatprep.subr.bf16.mxu0 0
      %2442 = vmatpush2.bf16.msra.mxu0 0
      %2443 = vmatprep.subr.bf16.mxu0 0
      %2444 = vmatpush2.bf16.msra.mxu0 0
      %2445 = vmatprep.subr.bf16.mxu0 0
      %2446 = vmatpush2.bf16.msra.mxu0 0
      %2447 = vmatprep.subr.bf16.mxu0 0
      %2448 = vmatpush2.bf16.msra.mxu0 0
      %2449 = vmatprep.subr.bf16.mxu0 0
      %2450 = vmatpush2.bf16.msra.mxu0 0
      %2451 = vmatprep.subr.bf16.mxu0 0
      %2452 = vmatpush2.bf16.msra.mxu0 0
      %2453 = vmatprep.subr.bf16.mxu0 0
      %2454 = vmatpush2.bf16.msra.mxu0 0
      %2455 = vmatprep.subr.bf16.mxu0 0
      %2456 = vmatpush2.bf16.msra.mxu0 0
      %2457 = vmatprep.mubr.bf16.mxu0 0
      %2458 = vmatmul.mubr.bf16.gmra.mxu0 %v2375
      %v2459 = vpop.f32.mrf.mxu0
      %v2460 = vadd.f32 0.0, %v2459
      %v2461 = vpop.f32.mrf.mxu0
      %v2462 = vpop.f32.mrf.mxu0
      %v2463 = vadd.f32 0.0, %v2462
      %v2464 = vpop.f32.mrf.mxu0
      %2465 = vmatprep.mubr.bf16.mxu0 0
      %2466 = vmatmul.mubr.bf16.gmra.mxu0 %v2378
      %v2467 = vpop.f32.mrf.mxu0
      %v2468 = vadd.f32 0.0, %v2467
      %v2469 = vpop.f32.mrf.mxu0
      %v2470 = vpop.f32.mrf.mxu0
      %v2471 = vadd.f32 0.0, %v2470
      %v2472 = vpop.f32.mrf.mxu0
      %2473 = vmatprep.mubr.bf16.mxu0 0
      %2474 = vmatmul.mubr.bf16.gmra.mxu0 %v2381
      %v2475 = vpop.f32.mrf.mxu0
      %v2476 = vadd.f32 0.0, %v2475
      %v2477 = vpop.f32.mrf.mxu0
      %v2478 = vpop.f32.mrf.mxu0
      %v2479 = vadd.f32 0.0, %v2478
      %v2480 = vpop.f32.mrf.mxu0
      %2481 = vmatprep.mubr.bf16.mxu0 0
      %2482 = vmatmul.mubr.bf16.gmra.mxu0 %v2384
      %v2483 = vpop.f32.mrf.mxu0
      %v2484 = vadd.f32 0.0, %v2483
      %v2485 = vpop.f32.mrf.mxu0
      %v2486 = vpop.f32.mrf.mxu0
      %v2487 = vadd.f32 0.0, %v2486
      %v2488 = vpop.f32.mrf.mxu0
      %2489 = vmatprep.mubr.bf16.mxu0 0
      %2490 = vmatmul.mubr.bf16.gmra.mxu0 %v2387
      %v2491 = vpop.f32.mrf.mxu0
      %v2492 = vadd.f32 0.0, %v2491
      %v2493 = vpop.f32.mrf.mxu0
      %v2494 = vpop.f32.mrf.mxu0
      %v2495 = vadd.f32 0.0, %v2494
      %v2496 = vpop.f32.mrf.mxu0
      %2497 = vmatprep.mubr.bf16.mxu0 0
      %2498 = vmatmul.mubr.bf16.gmra.mxu0 %v2390
      %v2499 = vpop.f32.mrf.mxu0
      %v2500 = vadd.f32 0.0, %v2499
      %v2501 = vpop.f32.mrf.mxu0
      %v2502 = vpop.f32.mrf.mxu0
      %v2503 = vadd.f32 0.0, %v2502
      %v2504 = vpop.f32.mrf.mxu0
      %2505 = vmatprep.mubr.bf16.mxu0 0
      %2506 = vmatmul.mubr.bf16.gmra.mxu0 %v2393
      %v2507 = vpop.f32.mrf.mxu0
      %v2508 = vadd.f32 0.0, %v2507
      %v2509 = vpop.f32.mrf.mxu0
      %v2510 = vpop.f32.mrf.mxu0
      %v2511 = vadd.f32 0.0, %v2510
      %v2512 = vpop.f32.mrf.mxu0
      %2513 = vmatprep.mubr.bf16.mxu0 0
      %2514 = vmatmul.mubr.bf16.gmra.mxu0 %v2396
      %v2515 = vpop.f32.mrf.mxu0
      %v2516 = vadd.f32 0.0, %v2515
      %v2517 = vpop.f32.mrf.mxu0
      %v2518 = vpop.f32.mrf.mxu0
      %v2519 = vadd.f32 0.0, %v2518
      %v2520 = vpop.f32.mrf.mxu0
      %2521 = vmatprep.mubr.bf16.mxu0 0
      %2522 = vmatmul.mubr.bf16.gmra.mxu0 %v2399
      %v2523 = vpop.f32.mrf.mxu0
      %v2524 = vadd.f32 0.0, %v2523
      %v2525 = vpop.f32.mrf.mxu0
      %v2526 = vpop.f32.mrf.mxu0
      %v2527 = vadd.f32 0.0, %v2526
      %v2528 = vpop.f32.mrf.mxu0
      %2529 = vmatprep.mubr.bf16.mxu0 0
      %2530 = vmatmul.mubr.bf16.gmra.mxu0 %v2402
      %v2531 = vpop.f32.mrf.mxu0
      %v2532 = vadd.f32 0.0, %v2531
      %v2533 = vpop.f32.mrf.mxu0
      %v2534 = vpop.f32.mrf.mxu0
      %v2535 = vadd.f32 0.0, %v2534
      %v2536 = vpop.f32.mrf.mxu0
      %2537 = vmatprep.mubr.bf16.mxu0 0
      %2538 = vmatmul.mubr.bf16.gmra.mxu0 %v2405
      %v2539 = vpop.f32.mrf.mxu0
      %v2540 = vadd.f32 0.0, %v2539
      %v2541 = vpop.f32.mrf.mxu0
      %v2542 = vpop.f32.mrf.mxu0
      %v2543 = vadd.f32 0.0, %v2542
      %v2544 = vpop.f32.mrf.mxu0
      %2545 = vmatprep.mubr.bf16.mxu0 0
      %2546 = vmatmul.mubr.bf16.gmra.mxu0 %v2408
      %v2547 = vpop.f32.mrf.mxu0
      %v2548 = vadd.f32 0.0, %v2547
      %v2549 = vpop.f32.mrf.mxu0
      %v2550 = vpop.f32.mrf.mxu0
      %v2551 = vadd.f32 0.0, %v2550
      %v2552 = vpop.f32.mrf.mxu0
      %2553 = vmatprep.mubr.bf16.mxu0 0
      %2554 = vmatmul.mubr.bf16.gmra.mxu0 %v2411
      %v2555 = vpop.f32.mrf.mxu0
      %v2556 = vadd.f32 0.0, %v2555
      %v2557 = vpop.f32.mrf.mxu0
      %v2558 = vpop.f32.mrf.mxu0
      %v2559 = vadd.f32 0.0, %v2558
      %v2560 = vpop.f32.mrf.mxu0
      %2561 = vmatprep.mubr.bf16.mxu0 0
      %2562 = vmatmul.mubr.bf16.gmra.mxu0 %v2414
      %v2563 = vpop.f32.mrf.mxu0
      %v2564 = vadd.f32 0.0, %v2563
      %v2565 = vpop.f32.mrf.mxu0
      %v2566 = vpop.f32.mrf.mxu0
      %v2567 = vadd.f32 0.0, %v2566
      %v2568 = vpop.f32.mrf.mxu0
      %2569 = vmatprep.mubr.bf16.mxu0 0
      %2570 = vmatmul.mubr.bf16.gmra.mxu0 %v2417
      %v2571 = vpop.f32.mrf.mxu0
      %v2572 = vadd.f32 0.0, %v2571
      %v2573 = vpop.f32.mrf.mxu0
      %v2574 = vpop.f32.mrf.mxu0
      %v2575 = vadd.f32 0.0, %v2574
      %v2576 = vpop.f32.mrf.mxu0
      %2577 = vmatprep.mubr.bf16.mxu0 0
      %2578 = vmatmul.mubr.bf16.gmra.mxu0 %v2420
      %v2579 = vpop.f32.mrf.mxu0
      %v2580 = vadd.f32 0.0, %v2579
      %v2581 = vpop.f32.mrf.mxu0
      %v2582 = vpop.f32.mrf.mxu0
      %v2583 = vadd.f32 0.0, %v2582
      %v2584 = vpop.f32.mrf.mxu0
      %2585 = vdwg.mxu0
      %v2586 = vadd.f32 %v2228, %v2460
      %v2587 = vadd.f32 %v2229, %v2463
      %v2588 = vadd.f32 %v2230, %v2468
      %v2589 = vadd.f32 %v2231, %v2471
      %v2590 = vadd.f32 %v2232, %v2476
      %v2591 = vadd.f32 %v2233, %v2479
      %v2592 = vadd.f32 %v2234, %v2484
      %v2593 = vadd.f32 %v2235, %v2487
      %v2594 = vadd.f32 %v2236, %v2492
      %v2595 = vadd.f32 %v2237, %v2495
      %v2596 = vadd.f32 %v2238, %v2500
      %v2597 = vadd.f32 %v2239, %v2503
      %v2598 = vadd.f32 %v2240, %v2508
      %v2599 = vadd.f32 %v2241, %v2511
      %v2600 = vadd.f32 %v2242, %v2516
      %v2601 = vadd.f32 %v2243, %v2519
      %v2602 = vadd.f32 %v2244, %v2524
      %v2603 = vadd.f32 %v2245, %v2527
      %v2604 = vadd.f32 %v2246, %v2532
      %v2605 = vadd.f32 %v2247, %v2535
      %v2606 = vadd.f32 %v2248, %v2540
      %v2607 = vadd.f32 %v2249, %v2543
      %v2608 = vadd.f32 %v2250, %v2548
      %v2609 = vadd.f32 %v2251, %v2551
      %v2610 = vadd.f32 %v2252, %v2556
      %v2611 = vadd.f32 %v2253, %v2559
      %v2612 = vadd.f32 %v2254, %v2564
      %v2613 = vadd.f32 %v2255, %v2567
      %v2614 = vadd.f32 %v2256, %v2572
      %v2615 = vadd.f32 %v2257, %v2575
      %v2616 = vadd.f32 %v2258, %v2580
      %v2617 = vadd.f32 %v2259, %v2583
      %v2618 = vld [vmem:[%s165 + $0x380] sm:$0xf]
      %v2619 = vld [vmem:[%s165 + $0x384] sm:$0xf]
      %v2620 = vld [vmem:[%s165 + $0x388] sm:$0xf]
      %v2621 = vld [vmem:[%s165 + $0x38c] sm:$0xf]
      %v2622 = vld [vmem:[%s165 + $0x390] sm:$0xf]
      %v2623 = vld [vmem:[%s165 + $0x394] sm:$0xf]
      %v2624 = vld [vmem:[%s165 + $0x398] sm:$0xf]
      %v2625 = vld [vmem:[%s165 + $0x39c] sm:$0xf]
      %v2626 = vld [vmem:[%s165 + $0x3a0] sm:$0xf]
      %v2627 = vld [vmem:[%s165 + $0x3a4] sm:$0xf]
      %v2628 = vld [vmem:[%s165 + $0x3a8] sm:$0xf]
      %v2629 = vld [vmem:[%s165 + $0x3ac] sm:$0xf]
      %v2630 = vld [vmem:[%s165 + $0x3b0] sm:$0xf]
      %v2631 = vld [vmem:[%s165 + $0x3b4] sm:$0xf]
      %v2632 = vld [vmem:[%s165 + $0x3b8] sm:$0xf]
      %v2633 = vld [vmem:[%s165 + $0x3bc] sm:$0xf]
      %v2634 = vld [vmem:[%s165 + $0x3c0] sm:$0xf]
      %v2635 = vld [vmem:[%s165 + $0x3c4] sm:$0xf]
      %v2636 = vld [vmem:[%s165 + $0x3c8] sm:$0xf]
      %v2637 = vld [vmem:[%s165 + $0x3cc] sm:$0xf]
      %v2638 = vld [vmem:[%s165 + $0x3d0] sm:$0xf]
      %v2639 = vld [vmem:[%s165 + $0x3d4] sm:$0xf]
      %v2640 = vld [vmem:[%s165 + $0x3d8] sm:$0xf]
      %v2641 = vld [vmem:[%s165 + $0x3dc] sm:$0xf]
      %v2642 = vld [vmem:[%s165 + $0x3e0] sm:$0xf]
      %v2643 = vld [vmem:[%s165 + $0x3e4] sm:$0xf]
      %v2644 = vld [vmem:[%s165 + $0x3e8] sm:$0xf]
      %v2645 = vld [vmem:[%s165 + $0x3ec] sm:$0xf]
      %v2646 = vld [vmem:[%s165 + $0x3f0] sm:$0xf]
      %v2647 = vld [vmem:[%s165 + $0x3f4] sm:$0xf]
      %v2648 = vld [vmem:[%s165 + $0x3f8] sm:$0xf]
      %v2649 = vld [vmem:[%s165 + $0x3fc] sm:$0xf]
      %s2650 = scalar_lea.vmem %s1, 14
      %v2651 = vld [vmem:[%s2650] sm:$0x3]
      %v2684 = vunpack.c.l.b16 %v2618
      %v2685 = vunpack.c.l.b16 %v2619
      %v2686 = vunpack.c.l.b16 %v2620
      %v2687 = vunpack.c.l.b16 %v2621
      %v2688 = vunpack.c.l.b16 %v2622
      %v2689 = vunpack.c.l.b16 %v2623
      %v2690 = vunpack.c.l.b16 %v2624
      %v2691 = vunpack.c.l.b16 %v2625
      %v2692 = vunpack.c.l.b16 %v2626
      %v2693 = vunpack.c.l.b16 %v2627
      %v2694 = vunpack.c.l.b16 %v2628
      %v2695 = vunpack.c.l.b16 %v2629
      %v2696 = vunpack.c.l.b16 %v2630
      %v2697 = vunpack.c.l.b16 %v2631
      %v2698 = vunpack.c.l.b16 %v2632
      %v2699 = vunpack.c.l.b16 %v2633
      %v2700 = vunpack.c.l.b16 %v2634
      %v2701 = vunpack.c.l.b16 %v2635
      %v2702 = vunpack.c.l.b16 %v2636
      %v2703 = vunpack.c.l.b16 %v2637
      %v2704 = vunpack.c.l.b16 %v2638
      %v2705 = vunpack.c.l.b16 %v2639
      %v2706 = vunpack.c.l.b16 %v2640
      %v2707 = vunpack.c.l.b16 %v2641
      %v2708 = vunpack.c.l.b16 %v2642
      %v2709 = vunpack.c.l.b16 %v2643
      %v2710 = vunpack.c.l.b16 %v2644
      %v2711 = vunpack.c.l.b16 %v2645
      %v2712 = vunpack.c.l.b16 %v2646
      %v2713 = vunpack.c.l.b16 %v2647
      %v2714 = vunpack.c.l.b16 %v2648
      %v2715 = vunpack.c.l.b16 %v2649
      %v2716 = vpack.c.b16 %v2685, %v2684
      %v2717 = vpack.c.b16 %v2687, %v2686
      %v2718 = vpack.c.b16 %v2689, %v2688
      %v2719 = vpack.c.b16 %v2691, %v2690
      %v2720 = vpack.c.b16 %v2693, %v2692
      %v2721 = vpack.c.b16 %v2695, %v2694
      %v2722 = vpack.c.b16 %v2697, %v2696
      %v2723 = vpack.c.b16 %v2699, %v2698
      %v2724 = vpack.c.b16 %v2701, %v2700
      %v2725 = vpack.c.b16 %v2703, %v2702
      %v2726 = vpack.c.b16 %v2705, %v2704
      %v2727 = vpack.c.b16 %v2707, %v2706
      %v2728 = vpack.c.b16 %v2709, %v2708
      %v2729 = vpack.c.b16 %v2711, %v2710
      %v2730 = vpack.c.b16 %v2713, %v2712
      %v2731 = vpack.c.b16 %v2715, %v2714
      %v2733 = vsel %vm319, %v2716, 0
      %v2736 = vsel %vm319, %v2717, 0
      %v2739 = vsel %vm319, %v2718, 0
      %v2742 = vsel %vm319, %v2719, 0
      %v2745 = vsel %vm319, %v2720, 0
      %v2748 = vsel %vm319, %v2721, 0
      %v2751 = vsel %vm319, %v2722, 0
      %v2754 = vsel %vm319, %v2723, 0
      %v2757 = vsel %vm319, %v2724, 0
      %v2760 = vsel %vm319, %v2725, 0
      %v2763 = vsel %vm319, %v2726, 0
      %v2766 = vsel %vm319, %v2727, 0
      %v2769 = vsel %vm319, %v2728, 0
      %v2772 = vsel %vm319, %v2729, 0
      %v2775 = vsel %vm319, %v2730, 0
      %v2778 = vsel %vm319, %v2731, 0
      %v2781 = vand.u32 %v2651, %v371
      %2783 = vmatprep.subr.bf16.mxu0 0
      %2784 = vmatpush1.bf16.msra.mxu0 0
      %2785 = vmatprep.subr.bf16.mxu0 0
      %2786 = vmatpush1.bf16.msra.mxu0 0
      %2787 = vmatprep.subr.bf16.mxu0 0
      %2788 = vmatpush1.bf16.msra.mxu0 0
      %2789 = vmatprep.subr.bf16.mxu0 0
      %2790 = vmatpush1.bf16.msra.mxu0 0
      %2791 = vmatprep.subr.bf16.mxu0 0
      %2792 = vmatpush1.bf16.msra.mxu0 0
      %2793 = vmatprep.subr.bf16.mxu0 0
      %2794 = vmatpush1.bf16.msra.mxu0 0
      %2795 = vmatprep.subr.bf16.mxu0 0
      %2796 = vmatpush1.bf16.msra.mxu0 0
      %2797 = vmatprep.subr.bf16.mxu0 0
      %2798 = vmatpush1.bf16.msra.mxu0 %v2781
      %2799 = vmatprep.subr.bf16.mxu0 0
      %2800 = vmatpush2.bf16.msra.mxu0 0
      %2801 = vmatprep.subr.bf16.mxu0 0
      %2802 = vmatpush2.bf16.msra.mxu0 0
      %2803 = vmatprep.subr.bf16.mxu0 0
      %2804 = vmatpush2.bf16.msra.mxu0 0
      %2805 = vmatprep.subr.bf16.mxu0 0
      %2806 = vmatpush2.bf16.msra.mxu0 0
      %2807 = vmatprep.subr.bf16.mxu0 0
      %2808 = vmatpush2.bf16.msra.mxu0 0
      %2809 = vmatprep.subr.bf16.mxu0 0
      %2810 = vmatpush2.bf16.msra.mxu0 0
      %2811 = vmatprep.subr.bf16.mxu0 0
      %2812 = vmatpush2.bf16.msra.mxu0 0
      %2813 = vmatprep.subr.bf16.mxu0 0
      %2814 = vmatpush2.bf16.msra.mxu0 0
      %2815 = vmatprep.mubr.bf16.mxu0 0
      %2816 = vmatmul.mubr.bf16.gmra.mxu0 %v2733
      %v2817 = vpop.f32.mrf.mxu0
      %v2818 = vadd.f32 0.0, %v2817
      %v2819 = vpop.f32.mrf.mxu0
      %v2820 = vpop.f32.mrf.mxu0
      %v2821 = vadd.f32 0.0, %v2820
      %v2822 = vpop.f32.mrf.mxu0
      %2823 = vmatprep.mubr.bf16.mxu0 0
      %2824 = vmatmul.mubr.bf16.gmra.mxu0 %v2736
      %v2825 = vpop.f32.mrf.mxu0
      %v2826 = vadd.f32 0.0, %v2825
      %v2827 = vpop.f32.mrf.mxu0
      %v2828 = vpop.f32.mrf.mxu0
      %v2829 = vadd.f32 0.0, %v2828
      %v2830 = vpop.f32.mrf.mxu0
      %2831 = vmatprep.mubr.bf16.mxu0 0
      %2832 = vmatmul.mubr.bf16.gmra.mxu0 %v2739
      %v2833 = vpop.f32.mrf.mxu0
      %v2834 = vadd.f32 0.0, %v2833
      %v2835 = vpop.f32.mrf.mxu0
      %v2836 = vpop.f32.mrf.mxu0
      %v2837 = vadd.f32 0.0, %v2836
      %v2838 = vpop.f32.mrf.mxu0
      %2839 = vmatprep.mubr.bf16.mxu0 0
      %2840 = vmatmul.mubr.bf16.gmra.mxu0 %v2742
      %v2841 = vpop.f32.mrf.mxu0
      %v2842 = vadd.f32 0.0, %v2841
      %v2843 = vpop.f32.mrf.mxu0
      %v2844 = vpop.f32.mrf.mxu0
      %v2845 = vadd.f32 0.0, %v2844
      %v2846 = vpop.f32.mrf.mxu0
      %2847 = vmatprep.mubr.bf16.mxu0 0
      %2848 = vmatmul.mubr.bf16.gmra.mxu0 %v2745
      %v2849 = vpop.f32.mrf.mxu0
      %v2850 = vadd.f32 0.0, %v2849
      %v2851 = vpop.f32.mrf.mxu0
      %v2852 = vpop.f32.mrf.mxu0
      %v2853 = vadd.f32 0.0, %v2852
      %v2854 = vpop.f32.mrf.mxu0
      %2855 = vmatprep.mubr.bf16.mxu0 0
      %2856 = vmatmul.mubr.bf16.gmra.mxu0 %v2748
      %v2857 = vpop.f32.mrf.mxu0
      %v2858 = vadd.f32 0.0, %v2857
      %v2859 = vpop.f32.mrf.mxu0
      %v2860 = vpop.f32.mrf.mxu0
      %v2861 = vadd.f32 0.0, %v2860
      %v2862 = vpop.f32.mrf.mxu0
      %2863 = vmatprep.mubr.bf16.mxu0 0
      %2864 = vmatmul.mubr.bf16.gmra.mxu0 %v2751
      %v2865 = vpop.f32.mrf.mxu0
      %v2866 = vadd.f32 0.0, %v2865
      %v2867 = vpop.f32.mrf.mxu0
      %v2868 = vpop.f32.mrf.mxu0
      %v2869 = vadd.f32 0.0, %v2868
      %v2870 = vpop.f32.mrf.mxu0
      %2871 = vmatprep.mubr.bf16.mxu0 0
      %2872 = vmatmul.mubr.bf16.gmra.mxu0 %v2754
      %v2873 = vpop.f32.mrf.mxu0
      %v2874 = vadd.f32 0.0, %v2873
      %v2875 = vpop.f32.mrf.mxu0
      %v2876 = vpop.f32.mrf.mxu0
      %v2877 = vadd.f32 0.0, %v2876
      %v2878 = vpop.f32.mrf.mxu0
      %2879 = vmatprep.mubr.bf16.mxu0 0
      %2880 = vmatmul.mubr.bf16.gmra.mxu0 %v2757
      %v2881 = vpop.f32.mrf.mxu0
      %v2882 = vadd.f32 0.0, %v2881
      %v2883 = vpop.f32.mrf.mxu0
      %v2884 = vpop.f32.mrf.mxu0
      %v2885 = vadd.f32 0.0, %v2884
      %v2886 = vpop.f32.mrf.mxu0
      %2887 = vmatprep.mubr.bf16.mxu0 0
      %2888 = vmatmul.mubr.bf16.gmra.mxu0 %v2760
      %v2889 = vpop.f32.mrf.mxu0
      %v2890 = vadd.f32 0.0, %v2889
      %v2891 = vpop.f32.mrf.mxu0
      %v2892 = vpop.f32.mrf.mxu0
      %v2893 = vadd.f32 0.0, %v2892
      %v2894 = vpop.f32.mrf.mxu0
      %2895 = vmatprep.mubr.bf16.mxu0 0
      %2896 = vmatmul.mubr.bf16.gmra.mxu0 %v2763
      %v2897 = vpop.f32.mrf.mxu0
      %v2898 = vadd.f32 0.0, %v2897
      %v2899 = vpop.f32.mrf.mxu0
      %v2900 = vpop.f32.mrf.mxu0
      %v2901 = vadd.f32 0.0, %v2900
      %v2902 = vpop.f32.mrf.mxu0
      %2903 = vmatprep.mubr.bf16.mxu0 0
      %2904 = vmatmul.mubr.bf16.gmra.mxu0 %v2766
      %v2905 = vpop.f32.mrf.mxu0
      %v2906 = vadd.f32 0.0, %v2905
      %v2907 = vpop.f32.mrf.mxu0
      %v2908 = vpop.f32.mrf.mxu0
      %v2909 = vadd.f32 0.0, %v2908
      %v2910 = vpop.f32.mrf.mxu0
      %2911 = vmatprep.mubr.bf16.mxu0 0
      %2912 = vmatmul.mubr.bf16.gmra.mxu0 %v2769
      %v2913 = vpop.f32.mrf.mxu0
      %v2914 = vadd.f32 0.0, %v2913
      %v2915 = vpop.f32.mrf.mxu0
      %v2916 = vpop.f32.mrf.mxu0
      %v2917 = vadd.f32 0.0, %v2916
      %v2918 = vpop.f32.mrf.mxu0
      %2919 = vmatprep.mubr.bf16.mxu0 0
      %2920 = vmatmul.mubr.bf16.gmra.mxu0 %v2772
      %v2921 = vpop.f32.mrf.mxu0
      %v2922 = vadd.f32 0.0, %v2921
      %v2923 = vpop.f32.mrf.mxu0
      %v2924 = vpop.f32.mrf.mxu0
      %v2925 = vadd.f32 0.0, %v2924
      %v2926 = vpop.f32.mrf.mxu0
      %2927 = vmatprep.mubr.bf16.mxu0 0
      %2928 = vmatmul.mubr.bf16.gmra.mxu0 %v2775
      %v2929 = vpop.f32.mrf.mxu0
      %v2930 = vadd.f32 0.0, %v2929
      %v2931 = vpop.f32.mrf.mxu0
      %v2932 = vpop.f32.mrf.mxu0
      %v2933 = vadd.f32 0.0, %v2932
      %v2934 = vpop.f32.mrf.mxu0
      %2935 = vmatprep.mubr.bf16.mxu0 0
      %2936 = vmatmul.mubr.bf16.gmra.mxu0 %v2778
      %v2937 = vpop.f32.mrf.mxu0
      %v2938 = vadd.f32 0.0, %v2937
      %v2939 = vpop.f32.mrf.mxu0
      %v2940 = vpop.f32.mrf.mxu0
      %v2941 = vadd.f32 0.0, %v2940
      %v2942 = vpop.f32.mrf.mxu0
      %2943 = vdwg.mxu0
      %v2944 = vadd.f32 %v2586, %v2818
      %v2945 = vadd.f32 %v2587, %v2821
      %v2946 = vadd.f32 %v2588, %v2826
      %v2947 = vadd.f32 %v2589, %v2829
      %v2948 = vadd.f32 %v2590, %v2834
      %v2949 = vadd.f32 %v2591, %v2837
      %v2950 = vadd.f32 %v2592, %v2842
      %v2951 = vadd.f32 %v2593, %v2845
      %v2952 = vadd.f32 %v2594, %v2850
      %v2953 = vadd.f32 %v2595, %v2853
      %v2954 = vadd.f32 %v2596, %v2858
      %v2955 = vadd.f32 %v2597, %v2861
      %v2956 = vadd.f32 %v2598, %v2866
      %v2957 = vadd.f32 %v2599, %v2869
      %v2958 = vadd.f32 %v2600, %v2874
      %v2959 = vadd.f32 %v2601, %v2877
      %v2960 = vadd.f32 %v2602, %v2882
      %v2961 = vadd.f32 %v2603, %v2885
      %v2962 = vadd.f32 %v2604, %v2890
      %v2963 = vadd.f32 %v2605, %v2893
      %v2964 = vadd.f32 %v2606, %v2898
      %v2965 = vadd.f32 %v2607, %v2901
      %v2966 = vadd.f32 %v2608, %v2906
      %v2967 = vadd.f32 %v2609, %v2909
      %v2968 = vadd.f32 %v2610, %v2914
      %v2969 = vadd.f32 %v2611, %v2917
      %v2970 = vadd.f32 %v2612, %v2922
      %v2971 = vadd.f32 %v2613, %v2925
      %v2972 = vadd.f32 %v2614, %v2930
      %v2973 = vadd.f32 %v2615, %v2933
      %v2974 = vadd.f32 %v2616, %v2938
      %v2975 = vadd.f32 %v2617, %v2941
      %v2976 = vld [vmem:[%s165 + $0x400] sm:$0xf]
      %v2977 = vld [vmem:[%s165 + $0x404] sm:$0xf]
      %v2978 = vld [vmem:[%s165 + $0x408] sm:$0xf]
      %v2979 = vld [vmem:[%s165 + $0x40c] sm:$0xf]
      %v2980 = vld [vmem:[%s165 + $0x410] sm:$0xf]
      %v2981 = vld [vmem:[%s165 + $0x414] sm:$0xf]
      %v2982 = vld [vmem:[%s165 + $0x418] sm:$0xf]
      %v2983 = vld [vmem:[%s165 + $0x41c] sm:$0xf]
      %v2984 = vld [vmem:[%s165 + $0x420] sm:$0xf]
      %v2985 = vld [vmem:[%s165 + $0x424] sm:$0xf]
      %v2986 = vld [vmem:[%s165 + $0x428] sm:$0xf]
      %v2987 = vld [vmem:[%s165 + $0x42c] sm:$0xf]
      %v2988 = vld [vmem:[%s165 + $0x430] sm:$0xf]
      %v2989 = vld [vmem:[%s165 + $0x434] sm:$0xf]
      %v2990 = vld [vmem:[%s165 + $0x438] sm:$0xf]
      %v2991 = vld [vmem:[%s165 + $0x43c] sm:$0xf]
      %v2992 = vld [vmem:[%s165 + $0x440] sm:$0xf]
      %v2993 = vld [vmem:[%s165 + $0x444] sm:$0xf]
      %v2994 = vld [vmem:[%s165 + $0x448] sm:$0xf]
      %v2995 = vld [vmem:[%s165 + $0x44c] sm:$0xf]
      %v2996 = vld [vmem:[%s165 + $0x450] sm:$0xf]
      %v2997 = vld [vmem:[%s165 + $0x454] sm:$0xf]
      %v2998 = vld [vmem:[%s165 + $0x458] sm:$0xf]
      %v2999 = vld [vmem:[%s165 + $0x45c] sm:$0xf]
      %v3000 = vld [vmem:[%s165 + $0x460] sm:$0xf]
      %v3001 = vld [vmem:[%s165 + $0x464] sm:$0xf]
      %v3002 = vld [vmem:[%s165 + $0x468] sm:$0xf]
      %v3003 = vld [vmem:[%s165 + $0x46c] sm:$0xf]
      %v3004 = vld [vmem:[%s165 + $0x470] sm:$0xf]
      %v3005 = vld [vmem:[%s165 + $0x474] sm:$0xf]
      %v3006 = vld [vmem:[%s165 + $0x478] sm:$0xf]
      %v3007 = vld [vmem:[%s165 + $0x47c] sm:$0xf]
      %s3008 = scalar_lea.vmem %s1, 16
      %v3009 = vld [vmem:[%s3008] sm:$0x3]
      %v3042 = vunpack.c.l.b16 %v2976
      %v3043 = vunpack.c.l.b16 %v2977
      %v3044 = vunpack.c.l.b16 %v2978
      %v3045 = vunpack.c.l.b16 %v2979
      %v3046 = vunpack.c.l.b16 %v2980
      %v3047 = vunpack.c.l.b16 %v2981
      %v3048 = vunpack.c.l.b16 %v2982
      %v3049 = vunpack.c.l.b16 %v2983
      %v3050 = vunpack.c.l.b16 %v2984
      %v3051 = vunpack.c.l.b16 %v2985
      %v3052 = vunpack.c.l.b16 %v2986
      %v3053 = vunpack.c.l.b16 %v2987
      %v3054 = vunpack.c.l.b16 %v2988
      %v3055 = vunpack.c.l.b16 %v2989
      %v3056 = vunpack.c.l.b16 %v2990
      %v3057 = vunpack.c.l.b16 %v2991
      %v3058 = vunpack.c.l.b16 %v2992
      %v3059 = vunpack.c.l.b16 %v2993
      %v3060 = vunpack.c.l.b16 %v2994
      %v3061 = vunpack.c.l.b16 %v2995
      %v3062 = vunpack.c.l.b16 %v2996
      %v3063 = vunpack.c.l.b16 %v2997
      %v3064 = vunpack.c.l.b16 %v2998
      %v3065 = vunpack.c.l.b16 %v2999
      %v3066 = vunpack.c.l.b16 %v3000
      %v3067 = vunpack.c.l.b16 %v3001
      %v3068 = vunpack.c.l.b16 %v3002
      %v3069 = vunpack.c.l.b16 %v3003
      %v3070 = vunpack.c.l.b16 %v3004
      %v3071 = vunpack.c.l.b16 %v3005
      %v3072 = vunpack.c.l.b16 %v3006
      %v3073 = vunpack.c.l.b16 %v3007
      %v3074 = vpack.c.b16 %v3043, %v3042
      %v3075 = vpack.c.b16 %v3045, %v3044
      %v3076 = vpack.c.b16 %v3047, %v3046
      %v3077 = vpack.c.b16 %v3049, %v3048
      %v3078 = vpack.c.b16 %v3051, %v3050
      %v3079 = vpack.c.b16 %v3053, %v3052
      %v3080 = vpack.c.b16 %v3055, %v3054
      %v3081 = vpack.c.b16 %v3057, %v3056
      %v3082 = vpack.c.b16 %v3059, %v3058
      %v3083 = vpack.c.b16 %v3061, %v3060
      %v3084 = vpack.c.b16 %v3063, %v3062
      %v3085 = vpack.c.b16 %v3065, %v3064
      %v3086 = vpack.c.b16 %v3067, %v3066
      %v3087 = vpack.c.b16 %v3069, %v3068
      %v3088 = vpack.c.b16 %v3071, %v3070
      %v3089 = vpack.c.b16 %v3073, %v3072
      %v3091 = vsel %vm319, %v3074, 0
      %v3094 = vsel %vm319, %v3075, 0
      %v3097 = vsel %vm319, %v3076, 0
      %v3100 = vsel %vm319, %v3077, 0
      %v3103 = vsel %vm319, %v3078, 0
      %v3106 = vsel %vm319, %v3079, 0
      %v3109 = vsel %vm319, %v3080, 0
      %v3112 = vsel %vm319, %v3081, 0
      %v3115 = vsel %vm319, %v3082, 0
      %v3118 = vsel %vm319, %v3083, 0
      %v3121 = vsel %vm319, %v3084, 0
      %v3124 = vsel %vm319, %v3085, 0
      %v3127 = vsel %vm319, %v3086, 0
      %v3130 = vsel %vm319, %v3087, 0
      %v3133 = vsel %vm319, %v3088, 0
      %v3136 = vsel %vm319, %v3089, 0
      %v3139 = vand.u32 %v3009, %v371
      %3141 = vmatprep.subr.bf16.mxu0 0
      %3142 = vmatpush1.bf16.msra.mxu0 0
      %3143 = vmatprep.subr.bf16.mxu0 0
      %3144 = vmatpush1.bf16.msra.mxu0 0
      %3145 = vmatprep.subr.bf16.mxu0 0
      %3146 = vmatpush1.bf16.msra.mxu0 0
      %3147 = vmatprep.subr.bf16.mxu0 0
      %3148 = vmatpush1.bf16.msra.mxu0 0
      %3149 = vmatprep.subr.bf16.mxu0 0
      %3150 = vmatpush1.bf16.msra.mxu0 0
      %3151 = vmatprep.subr.bf16.mxu0 0
      %3152 = vmatpush1.bf16.msra.mxu0 0
      %3153 = vmatprep.subr.bf16.mxu0 0
      %3154 = vmatpush1.bf16.msra.mxu0 0
      %3155 = vmatprep.subr.bf16.mxu0 0
      %3156 = vmatpush1.bf16.msra.mxu0 %v3139
      %3157 = vmatprep.subr.bf16.mxu0 0
      %3158 = vmatpush2.bf16.msra.mxu0 0
      %3159 = vmatprep.subr.bf16.mxu0 0
      %3160 = vmatpush2.bf16.msra.mxu0 0
      %3161 = vmatprep.subr.bf16.mxu0 0
      %3162 = vmatpush2.bf16.msra.mxu0 0
      %3163 = vmatprep.subr.bf16.mxu0 0
      %3164 = vmatpush2.bf16.msra.mxu0 0
      %3165 = vmatprep.subr.bf16.mxu0 0
      %3166 = vmatpush2.bf16.msra.mxu0 0
      %3167 = vmatprep.subr.bf16.mxu0 0
      %3168 = vmatpush2.bf16.msra.mxu0 0
      %3169 = vmatprep.subr.bf16.mxu0 0
      %3170 = vmatpush2.bf16.msra.mxu0 0
      %3171 = vmatprep.subr.bf16.mxu0 0
      %3172 = vmatpush2.bf16.msra.mxu0 0
      %3173 = vmatprep.mubr.bf16.mxu0 0
      %3174 = vmatmul.mubr.bf16.gmra.mxu0 %v3091
      %v3175 = vpop.f32.mrf.mxu0
      %v3176 = vadd.f32 0.0, %v3175
      %v3177 = vpop.f32.mrf.mxu0
      %v3178 = vpop.f32.mrf.mxu0
      %v3179 = vadd.f32 0.0, %v3178
      %v3180 = vpop.f32.mrf.mxu0
      %3181 = vmatprep.mubr.bf16.mxu0 0
      %3182 = vmatmul.mubr.bf16.gmra.mxu0 %v3094
      %v3183 = vpop.f32.mrf.mxu0
      %v3184 = vadd.f32 0.0, %v3183
      %v3185 = vpop.f32.mrf.mxu0
      %v3186 = vpop.f32.mrf.mxu0
      %v3187 = vadd.f32 0.0, %v3186
      %v3188 = vpop.f32.mrf.mxu0
      %3189 = vmatprep.mubr.bf16.mxu0 0
      %3190 = vmatmul.mubr.bf16.gmra.mxu0 %v3097
      %v3191 = vpop.f32.mrf.mxu0
      %v3192 = vadd.f32 0.0, %v3191
      %v3193 = vpop.f32.mrf.mxu0
      %v3194 = vpop.f32.mrf.mxu0
      %v3195 = vadd.f32 0.0, %v3194
      %v3196 = vpop.f32.mrf.mxu0
      %3197 = vmatprep.mubr.bf16.mxu0 0
      %3198 = vmatmul.mubr.bf16.gmra.mxu0 %v3100
      %v3199 = vpop.f32.mrf.mxu0
      %v3200 = vadd.f32 0.0, %v3199
      %v3201 = vpop.f32.mrf.mxu0
      %v3202 = vpop.f32.mrf.mxu0
      %v3203 = vadd.f32 0.0, %v3202
      %v3204 = vpop.f32.mrf.mxu0
      %3205 = vmatprep.mubr.bf16.mxu0 0
      %3206 = vmatmul.mubr.bf16.gmra.mxu0 %v3103
      %v3207 = vpop.f32.mrf.mxu0
      %v3208 = vadd.f32 0.0, %v3207
      %v3209 = vpop.f32.mrf.mxu0
      %v3210 = vpop.f32.mrf.mxu0
      %v3211 = vadd.f32 0.0, %v3210
      %v3212 = vpop.f32.mrf.mxu0
      %3213 = vmatprep.mubr.bf16.mxu0 0
      %3214 = vmatmul.mubr.bf16.gmra.mxu0 %v3106
      %v3215 = vpop.f32.mrf.mxu0
      %v3216 = vadd.f32 0.0, %v3215
      %v3217 = vpop.f32.mrf.mxu0
      %v3218 = vpop.f32.mrf.mxu0
      %v3219 = vadd.f32 0.0, %v3218
      %v3220 = vpop.f32.mrf.mxu0
      %3221 = vmatprep.mubr.bf16.mxu0 0
      %3222 = vmatmul.mubr.bf16.gmra.mxu0 %v3109
      %v3223 = vpop.f32.mrf.mxu0
      %v3224 = vadd.f32 0.0, %v3223
      %v3225 = vpop.f32.mrf.mxu0
      %v3226 = vpop.f32.mrf.mxu0
      %v3227 = vadd.f32 0.0, %v3226
      %v3228 = vpop.f32.mrf.mxu0
      %3229 = vmatprep.mubr.bf16.mxu0 0
      %3230 = vmatmul.mubr.bf16.gmra.mxu0 %v3112
      %v3231 = vpop.f32.mrf.mxu0
      %v3232 = vadd.f32 0.0, %v3231
      %v3233 = vpop.f32.mrf.mxu0
      %v3234 = vpop.f32.mrf.mxu0
      %v3235 = vadd.f32 0.0, %v3234
      %v3236 = vpop.f32.mrf.mxu0
      %3237 = vmatprep.mubr.bf16.mxu0 0
      %3238 = vmatmul.mubr.bf16.gmra.mxu0 %v3115
      %v3239 = vpop.f32.mrf.mxu0
      %v3240 = vadd.f32 0.0, %v3239
      %v3241 = vpop.f32.mrf.mxu0
      %v3242 = vpop.f32.mrf.mxu0
      %v3243 = vadd.f32 0.0, %v3242
      %v3244 = vpop.f32.mrf.mxu0
      %3245 = vmatprep.mubr.bf16.mxu0 0
      %3246 = vmatmul.mubr.bf16.gmra.mxu0 %v3118
      %v3247 = vpop.f32.mrf.mxu0
      %v3248 = vadd.f32 0.0, %v3247
      %v3249 = vpop.f32.mrf.mxu0
      %v3250 = vpop.f32.mrf.mxu0
      %v3251 = vadd.f32 0.0, %v3250
      %v3252 = vpop.f32.mrf.mxu0
      %3253 = vmatprep.mubr.bf16.mxu0 0
      %3254 = vmatmul.mubr.bf16.gmra.mxu0 %v3121
      %v3255 = vpop.f32.mrf.mxu0
      %v3256 = vadd.f32 0.0, %v3255
      %v3257 = vpop.f32.mrf.mxu0
      %v3258 = vpop.f32.mrf.mxu0
      %v3259 = vadd.f32 0.0, %v3258
      %v3260 = vpop.f32.mrf.mxu0
      %3261 = vmatprep.mubr.bf16.mxu0 0
      %3262 = vmatmul.mubr.bf16.gmra.mxu0 %v3124
      %v3263 = vpop.f32.mrf.mxu0
      %v3264 = vadd.f32 0.0, %v3263
      %v3265 = vpop.f32.mrf.mxu0
      %v3266 = vpop.f32.mrf.mxu0
      %v3267 = vadd.f32 0.0, %v3266
      %v3268 = vpop.f32.mrf.mxu0
      %3269 = vmatprep.mubr.bf16.mxu0 0
      %3270 = vmatmul.mubr.bf16.gmra.mxu0 %v3127
      %v3271 = vpop.f32.mrf.mxu0
      %v3272 = vadd.f32 0.0, %v3271
      %v3273 = vpop.f32.mrf.mxu0
      %v3274 = vpop.f32.mrf.mxu0
      %v3275 = vadd.f32 0.0, %v3274
      %v3276 = vpop.f32.mrf.mxu0
      %3277 = vmatprep.mubr.bf16.mxu0 0
      %3278 = vmatmul.mubr.bf16.gmra.mxu0 %v3130
      %v3279 = vpop.f32.mrf.mxu0
      %v3280 = vadd.f32 0.0, %v3279
      %v3281 = vpop.f32.mrf.mxu0
      %v3282 = vpop.f32.mrf.mxu0
      %v3283 = vadd.f32 0.0, %v3282
      %v3284 = vpop.f32.mrf.mxu0
      %3285 = vmatprep.mubr.bf16.mxu0 0
      %3286 = vmatmul.mubr.bf16.gmra.mxu0 %v3133
      %v3287 = vpop.f32.mrf.mxu0
      %v3288 = vadd.f32 0.0, %v3287
      %v3289 = vpop.f32.mrf.mxu0
      %v3290 = vpop.f32.mrf.mxu0
      %v3291 = vadd.f32 0.0, %v3290
      %v3292 = vpop.f32.mrf.mxu0
      %3293 = vmatprep.mubr.bf16.mxu0 0
      %3294 = vmatmul.mubr.bf16.gmra.mxu0 %v3136
      %v3295 = vpop.f32.mrf.mxu0
      %v3296 = vadd.f32 0.0, %v3295
      %v3297 = vpop.f32.mrf.mxu0
      %v3298 = vpop.f32.mrf.mxu0
      %v3299 = vadd.f32 0.0, %v3298
      %v3300 = vpop.f32.mrf.mxu0
      %3301 = vdwg.mxu0
      %v3302 = vadd.f32 %v2944, %v3176
      %v3303 = vadd.f32 %v2945, %v3179
      %v3304 = vadd.f32 %v2946, %v3184
      %v3305 = vadd.f32 %v2947, %v3187
      %v3306 = vadd.f32 %v2948, %v3192
      %v3307 = vadd.f32 %v2949, %v3195
      %v3308 = vadd.f32 %v2950, %v3200
      %v3309 = vadd.f32 %v2951, %v3203
      %v3310 = vadd.f32 %v2952, %v3208
      %v3311 = vadd.f32 %v2953, %v3211
      %v3312 = vadd.f32 %v2954, %v3216
      %v3313 = vadd.f32 %v2955, %v3219
      %v3314 = vadd.f32 %v2956, %v3224
      %v3315 = vadd.f32 %v2957, %v3227
      %v3316 = vadd.f32 %v2958, %v3232
      %v3317 = vadd.f32 %v2959, %v3235
      %v3318 = vadd.f32 %v2960, %v3240
      %v3319 = vadd.f32 %v2961, %v3243
      %v3320 = vadd.f32 %v2962, %v3248
      %v3321 = vadd.f32 %v2963, %v3251
      %v3322 = vadd.f32 %v2964, %v3256
      %v3323 = vadd.f32 %v2965, %v3259
      %v3324 = vadd.f32 %v2966, %v3264
      %v3325 = vadd.f32 %v2967, %v3267
      %v3326 = vadd.f32 %v2968, %v3272
      %v3327 = vadd.f32 %v2969, %v3275
      %v3328 = vadd.f32 %v2970, %v3280
      %v3329 = vadd.f32 %v2971, %v3283
      %v3330 = vadd.f32 %v2972, %v3288
      %v3331 = vadd.f32 %v2973, %v3291
      %v3332 = vadd.f32 %v2974, %v3296
      %v3333 = vadd.f32 %v2975, %v3299
      %v3334 = vld [vmem:[%s2] sm:$0x1]
      %v3335 = vlaneseq
      %v3336 = vshrl.u32 %v3335, 7
      %v3337 = vsub.s32 0, %v3336
      %v3338 = vrot.slane %v3334, %v3337
      %v3339 = vmul.f32 %v3302, %v3338
      %v3340 = vmul.f32 %v3303, %v3338
      %v3341 = vmul.f32 %v3304, %v3338
      %v3342 = vmul.f32 %v3305, %v3338
      %v3343 = vmul.f32 %v3306, %v3338
      %v3344 = vmul.f32 %v3307, %v3338
      %v3345 = vmul.f32 %v3308, %v3338
      %v3346 = vmul.f32 %v3309, %v3338
      %v3347 = vmul.f32 %v3310, %v3338
      %v3348 = vmul.f32 %v3311, %v3338
      %v3349 = vmul.f32 %v3312, %v3338
      %v3350 = vmul.f32 %v3313, %v3338
      %v3351 = vmul.f32 %v3314, %v3338
      %v3352 = vmul.f32 %v3315, %v3338
      %v3353 = vmul.f32 %v3316, %v3338
      %v3354 = vmul.f32 %v3317, %v3338
      %v3355 = vmul.f32 %v3318, %v3338
      %v3356 = vmul.f32 %v3319, %v3338
      %v3357 = vmul.f32 %v3320, %v3338
      %v3358 = vmul.f32 %v3321, %v3338
      %v3359 = vmul.f32 %v3322, %v3338
      %v3360 = vmul.f32 %v3323, %v3338
      %v3361 = vmul.f32 %v3324, %v3338
      %v3362 = vmul.f32 %v3325, %v3338
      %v3363 = vmul.f32 %v3326, %v3338
      %v3364 = vmul.f32 %v3327, %v3338
      %v3365 = vmul.f32 %v3328, %v3338
      %v3366 = vmul.f32 %v3329, %v3338
      %v3367 = vmul.f32 %v3330, %v3338
      %v3368 = vmul.f32 %v3331, %v3338
      %v3369 = vmul.f32 %v3332, %v3338
      %v3370 = vmul.f32 %v3333, %v3338
      %v3371 = vld [vmem:[%s2 + $0x1] sm:$0x1]
      %v3372 = vlaneseq
      %v3373 = vshrl.u32 %v3372, 7
      %v3374 = vsub.s32 0, %v3373
      %v3375 = vrot.slane %v3371, %v3374
      %v3376 = vadd.f32 %v3339, %v3375
      %v3377 = vadd.f32 %v3340, %v3375
      %v3378 = vadd.f32 %v3341, %v3375
      %v3379 = vadd.f32 %v3342, %v3375
      %v3380 = vadd.f32 %v3343, %v3375
      %v3381 = vadd.f32 %v3344, %v3375
      %v3382 = vadd.f32 %v3345, %v3375
      %v3383 = vadd.f32 %v3346, %v3375
      %v3384 = vadd.f32 %v3347, %v3375
      %v3385 = vadd.f32 %v3348, %v3375
      %v3386 = vadd.f32 %v3349, %v3375
      %v3387 = vadd.f32 %v3350, %v3375
      %v3388 = vadd.f32 %v3351, %v3375
      %v3389 = vadd.f32 %v3352, %v3375
      %v3390 = vadd.f32 %v3353, %v3375
      %v3391 = vadd.f32 %v3354, %v3375
      %v3392 = vadd.f32 %v3355, %v3375
      %v3393 = vadd.f32 %v3356, %v3375
      %v3394 = vadd.f32 %v3357, %v3375
      %v3395 = vadd.f32 %v3358, %v3375
      %v3396 = vadd.f32 %v3359, %v3375
      %v3397 = vadd.f32 %v3360, %v3375
      %v3398 = vadd.f32 %v3361, %v3375
      %v3399 = vadd.f32 %v3362, %v3375
      %v3400 = vadd.f32 %v3363, %v3375
      %v3401 = vadd.f32 %v3364, %v3375
      %v3402 = vadd.f32 %v3365, %v3375
      %v3403 = vadd.f32 %v3366, %v3375
      %v3404 = vadd.f32 %v3367, %v3375
      %v3405 = vadd.f32 %v3368, %v3375
      %v3406 = vadd.f32 %v3369, %v3375
      %v3407 = vadd.f32 %v3370, %v3375
      %v3408 = vmax.f32 %v3376, 0.0
      %v3409 = vmax.f32 %v3377, 0.0
      %v3410 = vmax.f32 %v3378, 0.0
      %v3411 = vmax.f32 %v3379, 0.0
      %v3412 = vmax.f32 %v3380, 0.0
      %v3413 = vmax.f32 %v3381, 0.0
      %v3414 = vmax.f32 %v3382, 0.0
      %v3415 = vmax.f32 %v3383, 0.0
      %v3416 = vmax.f32 %v3384, 0.0
      %v3417 = vmax.f32 %v3385, 0.0
      %v3418 = vmax.f32 %v3386, 0.0
      %v3419 = vmax.f32 %v3387, 0.0
      %v3420 = vmax.f32 %v3388, 0.0
      %v3421 = vmax.f32 %v3389, 0.0
      %v3422 = vmax.f32 %v3390, 0.0
      %v3423 = vmax.f32 %v3391, 0.0
      %v3424 = vmax.f32 %v3392, 0.0
      %v3425 = vmax.f32 %v3393, 0.0
      %v3426 = vmax.f32 %v3394, 0.0
      %v3427 = vmax.f32 %v3395, 0.0
      %v3428 = vmax.f32 %v3396, 0.0
      %v3429 = vmax.f32 %v3397, 0.0
      %v3430 = vmax.f32 %v3398, 0.0
      %v3431 = vmax.f32 %v3399, 0.0
      %v3432 = vmax.f32 %v3400, 0.0
      %v3433 = vmax.f32 %v3401, 0.0
      %v3434 = vmax.f32 %v3402, 0.0
      %v3435 = vmax.f32 %v3403, 0.0
      %v3436 = vmax.f32 %v3404, 0.0
      %v3437 = vmax.f32 %v3405, 0.0
      %v3438 = vmax.f32 %v3406, 0.0
      %v3439 = vmax.f32 %v3407, 0.0
      %v3440 = vpack.c.bf16 %v3409, %v3408
      %v3441 = vpack.c.bf16 %v3411, %v3410
      %v3442 = vpack.c.bf16 %v3413, %v3412
      %v3443 = vpack.c.bf16 %v3415, %v3414
      %v3444 = vpack.c.bf16 %v3417, %v3416
      %v3445 = vpack.c.bf16 %v3419, %v3418
      %v3446 = vpack.c.bf16 %v3421, %v3420
      %v3447 = vpack.c.bf16 %v3423, %v3422
      %v3448 = vpack.c.bf16 %v3425, %v3424
      %v3449 = vpack.c.bf16 %v3427, %v3426
      %v3450 = vpack.c.bf16 %v3429, %v3428
      %v3451 = vpack.c.bf16 %v3431, %v3430
      %v3452 = vpack.c.bf16 %v3433, %v3432
      %v3453 = vpack.c.bf16 %v3435, %v3434
      %v3454 = vpack.c.bf16 %v3437, %v3436
      %v3455 = vpack.c.bf16 %v3439, %v3438
      %v3472 = vunpack.c.l.b16 %v3440
      %v3473 = vunpack.c.h.b16 %v3440
      %v3474 = vunpack.c.l.b16 %v3441
      %v3475 = vunpack.c.h.b16 %v3441
      %v3476 = vunpack.c.l.b16 %v3442
      %v3477 = vunpack.c.h.b16 %v3442
      %v3478 = vunpack.c.l.b16 %v3443
      %v3479 = vunpack.c.h.b16 %v3443
      %v3480 = vunpack.c.l.b16 %v3444
      %v3481 = vunpack.c.h.b16 %v3444
      %v3482 = vunpack.c.l.b16 %v3445
      %v3483 = vunpack.c.h.b16 %v3445
      %v3484 = vunpack.c.l.b16 %v3446
      %v3485 = vunpack.c.h.b16 %v3446
      %v3486 = vunpack.c.l.b16 %v3447
      %v3487 = vunpack.c.h.b16 %v3447
      %v3488 = vunpack.c.l.b16 %v3448
      %v3489 = vunpack.c.h.b16 %v3448
      %v3490 = vunpack.c.l.b16 %v3449
      %v3491 = vunpack.c.h.b16 %v3449
      %v3492 = vunpack.c.l.b16 %v3450
      %v3493 = vunpack.c.h.b16 %v3450
      %v3494 = vunpack.c.l.b16 %v3451
      %v3495 = vunpack.c.h.b16 %v3451
      %v3496 = vunpack.c.l.b16 %v3452
      %v3497 = vunpack.c.h.b16 %v3452
      %v3498 = vunpack.c.l.b16 %v3453
      %v3499 = vunpack.c.h.b16 %v3453
      %v3500 = vunpack.c.l.b16 %v3454
      %v3501 = vunpack.c.h.b16 %v3454
      %v3502 = vunpack.c.l.b16 %v3455
      %v3503 = vunpack.c.h.b16 %v3455
      %v3504 = vpack.c.b16 %v3472, %v3472
      %v3505 = vpack.c.b16 %v3473, %v3473
      %v3506 = vpack.c.b16 %v3474, %v3474
      %v3507 = vpack.c.b16 %v3475, %v3475
      %v3508 = vpack.c.b16 %v3476, %v3476
      %v3509 = vpack.c.b16 %v3477, %v3477
      %v3510 = vpack.c.b16 %v3478, %v3478
      %v3511 = vpack.c.b16 %v3479, %v3479
      %v3512 = vpack.c.b16 %v3480, %v3480
      %v3513 = vpack.c.b16 %v3481, %v3481
      %v3514 = vpack.c.b16 %v3482, %v3482
      %v3515 = vpack.c.b16 %v3483, %v3483
      %v3516 = vpack.c.b16 %v3484, %v3484
      %v3517 = vpack.c.b16 %v3485, %v3485
      %v3518 = vpack.c.b16 %v3486, %v3486
      %v3519 = vpack.c.b16 %v3487, %v3487
      %v3520 = vpack.c.b16 %v3488, %v3488
      %v3521 = vpack.c.b16 %v3489, %v3489
      %v3522 = vpack.c.b16 %v3490, %v3490
      %v3523 = vpack.c.b16 %v3491, %v3491
      %v3524 = vpack.c.b16 %v3492, %v3492
      %v3525 = vpack.c.b16 %v3493, %v3493
      %v3526 = vpack.c.b16 %v3494, %v3494
      %v3527 = vpack.c.b16 %v3495, %v3495
      %v3528 = vpack.c.b16 %v3496, %v3496
      %v3529 = vpack.c.b16 %v3497, %v3497
      %v3530 = vpack.c.b16 %v3498, %v3498
      %v3531 = vpack.c.b16 %v3499, %v3499
      %v3532 = vpack.c.b16 %v3500, %v3500
      %v3533 = vpack.c.b16 %v3501, %v3501
      %v3534 = vpack.c.b16 %v3502, %v3502
      %v3535 = vpack.c.b16 %v3503, %v3503
      %vm3568 = vcmask 125952
      %3569 = vst.msk [vmem:[%s170] sm:$0xf] %vm3568, %v3504
      %3570 = vst.msk [vmem:[%s170 + $0x4] sm:$0xf] %vm3568, %v3505
      %3571 = vst.msk [vmem:[%s170 + $0x8] sm:$0xf] %vm3568, %v3506
      %3572 = vst.msk [vmem:[%s170 + $0xc] sm:$0xf] %vm3568, %v3507
      %3573 = vst.msk [vmem:[%s170 + $0x10] sm:$0xf] %vm3568, %v3508
      %3574 = vst.msk [vmem:[%s170 + $0x14] sm:$0xf] %vm3568, %v3509
      %3575 = vst.msk [vmem:[%s170 + $0x18] sm:$0xf] %vm3568, %v3510
      %3576 = vst.msk [vmem:[%s170 + $0x1c] sm:$0xf] %vm3568, %v3511
      %3577 = vst.msk [vmem:[%s170 + $0x20] sm:$0xf] %vm3568, %v3512
      %3578 = vst.msk [vmem:[%s170 + $0x24] sm:$0xf] %vm3568, %v3513
      %3579 = vst.msk [vmem:[%s170 + $0x28] sm:$0xf] %vm3568, %v3514
      %3580 = vst.msk [vmem:[%s170 + $0x2c] sm:$0xf] %vm3568, %v3515
      %3581 = vst.msk [vmem:[%s170 + $0x30] sm:$0xf] %vm3568, %v3516
      %3582 = vst.msk [vmem:[%s170 + $0x34] sm:$0xf] %vm3568, %v3517
      %3583 = vst.msk [vmem:[%s170 + $0x38] sm:$0xf] %vm3568, %v3518
      %3584 = vst.msk [vmem:[%s170 + $0x3c] sm:$0xf] %vm3568, %v3519
      %3585 = vst.msk [vmem:[%s170 + $0x40] sm:$0xf] %vm3568, %v3520
      %3586 = vst.msk [vmem:[%s170 + $0x44] sm:$0xf] %vm3568, %v3521
      %3587 = vst.msk [vmem:[%s170 + $0x48] sm:$0xf] %vm3568, %v3522
      %3588 = vst.msk [vmem:[%s170 + $0x4c] sm:$0xf] %vm3568, %v3523
      %3589 = vst.msk [vmem:[%s170 + $0x50] sm:$0xf] %vm3568, %v3524
      %3590 = vst.msk [vmem:[%s170 + $0x54] sm:$0xf] %vm3568, %v3525
      %3591 = vst.msk [vmem:[%s170 + $0x58] sm:$0xf] %vm3568, %v3526
      %3592 = vst.msk [vmem:[%s170 + $0x5c] sm:$0xf] %vm3568, %v3527
      %3593 = vst.msk [vmem:[%s170 + $0x60] sm:$0xf] %vm3568, %v3528
      %3594 = vst.msk [vmem:[%s170 + $0x64] sm:$0xf] %vm3568, %v3529
      %3595 = vst.msk [vmem:[%s170 + $0x68] sm:$0xf] %vm3568, %v3530
      %3596 = vst.msk [vmem:[%s170 + $0x6c] sm:$0xf] %vm3568, %v3531
      %3597 = vst.msk [vmem:[%s170 + $0x70] sm:$0xf] %vm3568, %v3532
      %3598 = vst.msk [vmem:[%s170 + $0x74] sm:$0xf] %vm3568, %v3533
      %3599 = vst.msk [vmem:[%s170 + $0x78] sm:$0xf] %vm3568, %v3534
      %3600 = vst.msk [vmem:[%s170 + $0x7c] sm:$0xf] %vm3568, %v3535
      %p3601 = scmp.lt.s32.totalorder %s14, 1
      %s3602 = scalar_select %p3601, %s14, 1
      %s3603 = smul.addr %s3602, 32
      %s3604 = smul.addr %s3603, 4
      %s3605 = scalar_lea.vmem %s3, %s3604
      // Predicated region
      $region33: #{_lambda_.3} parent=31 // pred_check
        %p3606 = pneg %p100
      $region34: #{_lambda_.3} parent=31 // pred_check_branch
        %3608 = sbr.rel (%p3606) target = $region36
      $region35: #{_lambda_.3} parent=31 // pred_region
        _
      $region36: #{_lambda_.3} parent=31 // pred_fallthru
        _
    $region32: #{_lambda_.3} parent=5 // pred_fallthru
      _
    %p3609 = scmp.le.s32.totalorder 2, %s9
    // Predicated region
    $region37: #{_lambda_.3} parent=5 // pred_check
      %p3610 = pneg %p3609
    $region38: #{_lambda_.3} parent=5 // pred_check_branch
      %3612 = sbr.rel (%p3610) target = $region40
    $region39: #{_lambda_.3} parent=5 // pred_region
      %s3613 = ssub.s32 %s9, 2
      // Predicated region
      $region41: #{_lambda_.3} parent=39 // pred_check
        %p3614 = pneg %p106
      $region42: #{_lambda_.3} parent=39 // pred_check_branch
        %3616 = sbr.rel (%p3614) target = $region44
      $region43: #{_lambda_.3} parent=39 // pred_region
        %p3617 = scmp.lt.s32.totalorder %s15, 1
        %s3618 = scalar_select %p3617, %s15, 1
        %s3619 = smul.addr %s3618, 32
        %s3620 = smul.addr %s3619, 4
        %s3621 = scalar_lea.vmem %s3, %s3620
      $region44: #{_lambda_.3} parent=39 // pred_fallthru
        _
    $region40: #{_lambda_.3} parent=5 // pred_fallthru
      _
  $region6: #{_lambda_.3} parent=0 // loop_footer
    %s13 = sadd.s32 1, %s9
  $region7: #{_lambda_.3} parent=0 // loop_footer_branch
    %8 = sbr.rel target = $region3
  $region8: #{_lambda_.3} parent=0 // loop_exit
    _

// kernel: _lambda_.4
$region0: #{_lambda_.4}
  #allocation0 [shape = 'u32[]', space=smem, size = 0x4, offset = 0x4, fixed_abs, tag = 'smem constant byte address 0x4 - core index']
  #allocation1 [shape = 'u32[144,128]{1,0:T(1,128)}', space=vmem, size = 0x12000, scoped, tag = 'internal scratch']
  %s0 = inlined_call_operand.vmem [shape: bf16[2,576,16], index: 0, kind: input, shape index: {}]
  %s1 = inlined_call_operand.vmem [shape: f32[576,1], index: 1, kind: input, shape index: {}]
  %s2 = inlined_call_operand.vmem [shape: bf16[16,16], index: 2, kind: input, shape index: {}]
  %s3 = inlined_call_operand.vmem [shape: f32[2,16], index: 3, kind: input, shape index: {}, may-alias: {3,5,11,13}]
  %s4 = inlined_call_operand.vmem [shape: bf16[9,16,16], index: 4, kind: input, shape index: {}]
  %s5 = inlined_call_operand.vmem [shape: f32[2,16], index: 5, kind: input, shape index: {}, may-alias: {3,5,11,13}]
  %s6 = inlined_call_operand.vmem [shape: bf16[16,4], index: 6, kind: input, shape index: {}]
  %s7 = inlined_call_operand.vmem [shape: f32[1,4], index: 7, kind: input, shape index: {}]
  %s8 = inlined_call_operand.vmem [shape: bf16[4,16], index: 8, kind: input, shape index: {}]
  %s9 = inlined_call_operand.vmem [shape: f32[1,16], index: 9, kind: input, shape index: {}]
  %s10 = inlined_call_operand.vmem [shape: bf16[16,16], index: 10, kind: input, shape index: {}]
  %s11 = inlined_call_operand.vmem [shape: f32[2,16], index: 11, kind: input, shape index: {}, may-alias: {3,5,11,13}]
  %s12 = inlined_call_operand.vmem [shape: bf16[16,16], index: 12, kind: input, shape index: {}]
  %s13 = inlined_call_operand.vmem [shape: f32[2,16], index: 13, kind: input, shape index: {}, may-alias: {3,5,11,13}]
  %s14 = inlined_call_operand.vmem [shape: bf16[2,64,16], index: 14, kind: output, shape index: {}]
  %s15 = sld [smem:[#allocation0]]
  $region89: #{_lambda_.4} parent=0
    _
  %s17 = ssub.s32 1, %s15
  %s18 = scalar_select 0, %s17, %s15
  loop: start=0, step=1, limit=4
  $region2: #{_lambda_.4} parent=0 // loop_pre_header
    _
  $region3: #{_lambda_.4} parent=0 // loop_header
    %s20 = sphi 0, %s24
    %p21 = scmp.ge.s32.totalorder %s20, 4
    %s30 = sphi 0, %s32
    %s33 = sphi 0, %s30
    %s34 = sphi 0, %s33
    %s50 = sphi 0, %s34
    %s54 = sphi 0, %s54
    %s56 = sphi 0, %s54
    %s57 = sphi 0, %s56
    %s71 = sphi 0, %s57
    %s75 = sphi 0, %s75
    %s77 = sphi 0, %s75
    %s78 = sphi 0, %s77
    %s92 = sphi 0, %s78
    %s96 = sphi 0, %s96
    %s98 = sphi 0, %s96
    %s99 = sphi 0, %s98
    %s113 = sphi 0, %s99
    %s117 = sphi 0, %s117
    %s119 = sphi 0, %s117
    %s120 = sphi 0, %s119
    %s134 = sphi 0, %s120
    %s138 = sphi 0, %s138
    %s140 = sphi 0, %s138
    %s141 = sphi 0, %s140
    %s155 = sphi 0, %s141
    %s159 = sphi 0, %s159
    %s161 = sphi 0, %s159
    %s162 = sphi 0, %s161
    %s176 = sphi 0, %s162
    %s180 = sphi 0, %s180
    %s182 = sphi 0, %s180
    %s183 = sphi 0, %s182
    %s197 = sphi 0, %s183
    %s201 = sphi 0, %s201
    %s203 = sphi 0, %s201
    %s204 = sphi 0, %s203
    %s218 = sphi 0, %s204
    %s222 = sphi 0, %s222
    %s224 = sphi 0, %s222
    %s225 = sphi 0, %s224
    %s239 = sphi 0, %s225
    %s243 = sphi 0, %s243
    %s245 = sphi 0, %s243
    %s246 = sphi 0, %s245
    %s260 = sphi 0, %s246
    %s264 = sphi 0, %s264
    %s266 = sphi 0, %s264
    %s267 = sphi 0, %s266
    %s281 = sphi 0, %s267
    %s285 = sphi 0, %s285
    %s287 = sphi 0, %s285
    %s288 = sphi 0, %s287
    %s302 = sphi 0, %s288
    %s306 = sphi 0, %s306
    %s308 = sphi 0, %s306
    %s309 = sphi 0, %s308
    %s323 = sphi 0, %s309
    %s329 = sphi 0, %s331
    %s332 = sphi 0, %s329
    %s333 = sphi 0, %s332
    %s349 = sphi 0, %s333
  $region4: #{_lambda_.4} parent=0 // loop_header_branch
    %23 = sbr.rel (%p21) target = $region8
  $region5: #{_lambda_.4} parent=0 // loop_body
    %s25 = ssub.s32 %s20, 1
    %s26 = ssub.s32 %s20, 2
    %s27 = sadd.s32 %s20, 1
    %s28 = ssub.s32 %s20, %s27
    %p29 = scmp.eq.s32.totalorder %s28, 0
    %s31 = sadd.s32 %s30, 1
    %s32 = scalar_select %p29, %s30, %s31
    %p35 = pneg %p29
    %p36 = scmp.eq.s32.totalorder %s20, 1
    %p37 = por %p35, %p36
    %p38 = scmp.ne.s32.totalorder %s30, %s33
    %p39 = scmp.eq.s32.totalorder %s20, 0
    %p40 = por %p38, %p39
    %p41 = scmp.ne.s32.totalorder %s30, %s33
    %p42 = scmp.eq.s32.totalorder %s25, 1
    %p43 = por %p41, %p42
    %p44 = scmp.ne.s32.totalorder %s33, %s34
    %p45 = scmp.eq.s32.totalorder %s25, 0
    %p46 = por %p44, %p45
    %p47 = scmp.ne.s32.totalorder %s33, %s34
    %p48 = scmp.eq.s32.totalorder %s26, 1
    %p49 = por %p47, %p48
    %p51 = scmp.ne.s32.totalorder %s34, %s50
    %p52 = scmp.eq.s32.totalorder %s26, 0
    %p53 = por %p51, %p52
    %s55 = sadd.s32 %s54, 1
    %p58 = scmp.eq.s32.totalorder %s20, 1
    %p59 = scmp.ne.s32.totalorder %s54, %s56
    %p60 = scmp.eq.s32.totalorder %s20, 0
    %p61 = por %p59, %p60
    %p62 = scmp.ne.s32.totalorder %s54, %s56
    %p63 = scmp.eq.s32.totalorder %s25, 1
    %p64 = por %p62, %p63
    %p65 = scmp.ne.s32.totalorder %s56, %s57
    %p66 = scmp.eq.s32.totalorder %s25, 0
    %p67 = por %p65, %p66
    %p68 = scmp.ne.s32.totalorder %s56, %s57
    %p69 = scmp.eq.s32.totalorder %s26, 1
    %p70 = por %p68, %p69
    %p72 = scmp.ne.s32.totalorder %s57, %s71
    %p73 = scmp.eq.s32.totalorder %s26, 0
    %p74 = por %p72, %p73
    %s76 = sadd.s32 %s75, 1
    %p79 = scmp.eq.s32.totalorder %s20, 1
    %p80 = scmp.ne.s32.totalorder %s75, %s77
    %p81 = scmp.eq.s32.totalorder %s20, 0
    %p82 = por %p80, %p81
    %p83 = scmp.ne.s32.totalorder %s75, %s77
    %p84 = scmp.eq.s32.totalorder %s25, 1
    %p85 = por %p83, %p84
    %p86 = scmp.ne.s32.totalorder %s77, %s78
    %p87 = scmp.eq.s32.totalorder %s25, 0
    %p88 = por %p86, %p87
    %p89 = scmp.ne.s32.totalorder %s77, %s78
    %p90 = scmp.eq.s32.totalorder %s26, 1
    %p91 = por %p89, %p90
    %p93 = scmp.ne.s32.totalorder %s78, %s92
    %p94 = scmp.eq.s32.totalorder %s26, 0
    %p95 = por %p93, %p94
    %s97 = sadd.s32 %s96, 1
    %p100 = scmp.eq.s32.totalorder %s20, 1
    %p101 = scmp.ne.s32.totalorder %s96, %s98
    %p102 = scmp.eq.s32.totalorder %s20, 0
    %p103 = por %p101, %p102
    %p104 = scmp.ne.s32.totalorder %s96, %s98
    %p105 = scmp.eq.s32.totalorder %s25, 1
    %p106 = por %p104, %p105
    %p107 = scmp.ne.s32.totalorder %s98, %s99
    %p108 = scmp.eq.s32.totalorder %s25, 0
    %p109 = por %p107, %p108
    %p110 = scmp.ne.s32.totalorder %s98, %s99
    %p111 = scmp.eq.s32.totalorder %s26, 1
    %p112 = por %p110, %p111
    %p114 = scmp.ne.s32.totalorder %s99, %s113
    %p115 = scmp.eq.s32.totalorder %s26, 0
    %p116 = por %p114, %p115
    %s118 = sadd.s32 %s117, 1
    %p121 = scmp.eq.s32.totalorder %s20, 1
    %p122 = scmp.ne.s32.totalorder %s117, %s119
    %p123 = scmp.eq.s32.totalorder %s20, 0
    %p124 = por %p122, %p123
    %p125 = scmp.ne.s32.totalorder %s117, %s119
    %p126 = scmp.eq.s32.totalorder %s25, 1
    %p127 = por %p125, %p126
    %p128 = scmp.ne.s32.totalorder %s119, %s120
    %p129 = scmp.eq.s32.totalorder %s25, 0
    %p130 = por %p128, %p129
    %p131 = scmp.ne.s32.totalorder %s119, %s120
    %p132 = scmp.eq.s32.totalorder %s26, 1
    %p133 = por %p131, %p132
    %p135 = scmp.ne.s32.totalorder %s120, %s134
    %p136 = scmp.eq.s32.totalorder %s26, 0
    %p137 = por %p135, %p136
    %s139 = sadd.s32 %s138, 1
    %p142 = scmp.eq.s32.totalorder %s20, 1
    %p143 = scmp.ne.s32.totalorder %s138, %s140
    %p144 = scmp.eq.s32.totalorder %s20, 0
    %p145 = por %p143, %p144
    %p146 = scmp.ne.s32.totalorder %s138, %s140
    %p147 = scmp.eq.s32.totalorder %s25, 1
    %p148 = por %p146, %p147
    %p149 = scmp.ne.s32.totalorder %s140, %s141
    %p150 = scmp.eq.s32.totalorder %s25, 0
    %p151 = por %p149, %p150
    %p152 = scmp.ne.s32.totalorder %s140, %s141
    %p153 = scmp.eq.s32.totalorder %s26, 1
    %p154 = por %p152, %p153
    %p156 = scmp.ne.s32.totalorder %s141, %s155
    %p157 = scmp.eq.s32.totalorder %s26, 0
    %p158 = por %p156, %p157
    %s160 = sadd.s32 %s159, 1
    %p163 = scmp.eq.s32.totalorder %s20, 1
    %p164 = scmp.ne.s32.totalorder %s159, %s161
    %p165 = scmp.eq.s32.totalorder %s20, 0
    %p166 = por %p164, %p165
    %p167 = scmp.ne.s32.totalorder %s159, %s161
    %p168 = scmp.eq.s32.totalorder %s25, 1
    %p169 = por %p167, %p168
    %p170 = scmp.ne.s32.totalorder %s161, %s162
    %p171 = scmp.eq.s32.totalorder %s25, 0
    %p172 = por %p170, %p171
    %p173 = scmp.ne.s32.totalorder %s161, %s162
    %p174 = scmp.eq.s32.totalorder %s26, 1
    %p175 = por %p173, %p174
    %p177 = scmp.ne.s32.totalorder %s162, %s176
    %p178 = scmp.eq.s32.totalorder %s26, 0
    %p179 = por %p177, %p178
    %s181 = sadd.s32 %s180, 1
    %p184 = scmp.eq.s32.totalorder %s20, 1
    %p185 = scmp.ne.s32.totalorder %s180, %s182
    %p186 = scmp.eq.s32.totalorder %s20, 0
    %p187 = por %p185, %p186
    %p188 = scmp.ne.s32.totalorder %s180, %s182
    %p189 = scmp.eq.s32.totalorder %s25, 1
    %p190 = por %p188, %p189
    %p191 = scmp.ne.s32.totalorder %s182, %s183
    %p192 = scmp.eq.s32.totalorder %s25, 0
    %p193 = por %p191, %p192
    %p194 = scmp.ne.s32.totalorder %s182, %s183
    %p195 = scmp.eq.s32.totalorder %s26, 1
    %p196 = por %p194, %p195
    %p198 = scmp.ne.s32.totalorder %s183, %s197
    %p199 = scmp.eq.s32.totalorder %s26, 0
    %p200 = por %p198, %p199
    %s202 = sadd.s32 %s201, 1
    %p205 = scmp.eq.s32.totalorder %s20, 1
    %p206 = scmp.ne.s32.totalorder %s201, %s203
    %p207 = scmp.eq.s32.totalorder %s20, 0
    %p208 = por %p206, %p207
    %p209 = scmp.ne.s32.totalorder %s201, %s203
    %p210 = scmp.eq.s32.totalorder %s25, 1
    %p211 = por %p209, %p210
    %p212 = scmp.ne.s32.totalorder %s203, %s204
    %p213 = scmp.eq.s32.totalorder %s25, 0
    %p214 = por %p212, %p213
    %p215 = scmp.ne.s32.totalorder %s203, %s204
    %p216 = scmp.eq.s32.totalorder %s26, 1
    %p217 = por %p215, %p216
    %p219 = scmp.ne.s32.totalorder %s204, %s218
    %p220 = scmp.eq.s32.totalorder %s26, 0
    %p221 = por %p219, %p220
    %s223 = sadd.s32 %s222, 1
    %p226 = scmp.eq.s32.totalorder %s20, 1
    %p227 = scmp.ne.s32.totalorder %s222, %s224
    %p228 = scmp.eq.s32.totalorder %s20, 0
    %p229 = por %p227, %p228
    %p230 = scmp.ne.s32.totalorder %s222, %s224
    %p231 = scmp.eq.s32.totalorder %s25, 1
    %p232 = por %p230, %p231
    %p233 = scmp.ne.s32.totalorder %s224, %s225
    %p234 = scmp.eq.s32.totalorder %s25, 0
    %p235 = por %p233, %p234
    %p236 = scmp.ne.s32.totalorder %s224, %s225
    %p237 = scmp.eq.s32.totalorder %s26, 1
    %p238 = por %p236, %p237
    %p240 = scmp.ne.s32.totalorder %s225, %s239
    %p241 = scmp.eq.s32.totalorder %s26, 0
    %p242 = por %p240, %p241
    %s244 = sadd.s32 %s243, 1
    %p247 = scmp.eq.s32.totalorder %s20, 1
    %p248 = scmp.ne.s32.totalorder %s243, %s245
    %p249 = scmp.eq.s32.totalorder %s20, 0
    %p250 = por %p248, %p249
    %p251 = scmp.ne.s32.totalorder %s243, %s245
    %p252 = scmp.eq.s32.totalorder %s25, 1
    %p253 = por %p251, %p252
    %p254 = scmp.ne.s32.totalorder %s245, %s246
    %p255 = scmp.eq.s32.totalorder %s25, 0
    %p256 = por %p254, %p255
    %p257 = scmp.ne.s32.totalorder %s245, %s246
    %p258 = scmp.eq.s32.totalorder %s26, 1
    %p259 = por %p257, %p258
    %p261 = scmp.ne.s32.totalorder %s246, %s260
    %p262 = scmp.eq.s32.totalorder %s26, 0
    %p263 = por %p261, %p262
    %s265 = sadd.s32 %s264, 1
    %p268 = scmp.eq.s32.totalorder %s20, 1
    %p269 = scmp.ne.s32.totalorder %s264, %s266
    %p270 = scmp.eq.s32.totalorder %s20, 0
    %p271 = por %p269, %p270
    %p272 = scmp.ne.s32.totalorder %s264, %s266
    %p273 = scmp.eq.s32.totalorder %s25, 1
    %p274 = por %p272, %p273
    %p275 = scmp.ne.s32.totalorder %s266, %s267
    %p276 = scmp.eq.s32.totalorder %s25, 0
    %p277 = por %p275, %p276
    %p278 = scmp.ne.s32.totalorder %s266, %s267
    %p279 = scmp.eq.s32.totalorder %s26, 1
    %p280 = por %p278, %p279
    %p282 = scmp.ne.s32.totalorder %s267, %s281
    %p283 = scmp.eq.s32.totalorder %s26, 0
    %p284 = por %p282, %p283
    %s286 = sadd.s32 %s285, 1
    %p289 = scmp.eq.s32.totalorder %s20, 1
    %p290 = scmp.ne.s32.totalorder %s285, %s287
    %p291 = scmp.eq.s32.totalorder %s20, 0
    %p292 = por %p290, %p291
    %p293 = scmp.ne.s32.totalorder %s285, %s287
    %p294 = scmp.eq.s32.totalorder %s25, 1
    %p295 = por %p293, %p294
    %p296 = scmp.ne.s32.totalorder %s287, %s288
    %p297 = scmp.eq.s32.totalorder %s25, 0
    %p298 = por %p296, %p297
    %p299 = scmp.ne.s32.totalorder %s287, %s288
    %p300 = scmp.eq.s32.totalorder %s26, 1
    %p301 = por %p299, %p300
    %p303 = scmp.ne.s32.totalorder %s288, %s302
    %p304 = scmp.eq.s32.totalorder %s26, 0
    %p305 = por %p303, %p304
    %s307 = sadd.s32 %s306, 1
    %p310 = scmp.eq.s32.totalorder %s20, 1
    %p311 = scmp.ne.s32.totalorder %s306, %s308
    %p312 = scmp.eq.s32.totalorder %s20, 0
    %p313 = por %p311, %p312
    %p314 = scmp.ne.s32.totalorder %s306, %s308
    %p315 = scmp.eq.s32.totalorder %s25, 1
    %p316 = por %p314, %p315
    %p317 = scmp.ne.s32.totalorder %s308, %s309
    %p318 = scmp.eq.s32.totalorder %s25, 0
    %p319 = por %p317, %p318
    %p320 = scmp.ne.s32.totalorder %s308, %s309
    %p321 = scmp.eq.s32.totalorder %s26, 1
    %p322 = por %p320, %p321
    %p324 = scmp.ne.s32.totalorder %s309, %s323
    %p325 = scmp.eq.s32.totalorder %s26, 0
    %p326 = por %p324, %p325
    %s327 = ssub.s32 %s20, %s27
    %p328 = scmp.eq.s32.totalorder %s327, 0
    %s330 = sadd.s32 %s329, 1
    %s331 = scalar_select %p328, %s329, %s330
    %p334 = pneg %p328
    %p335 = scmp.eq.s32.totalorder %s20, 1
    %p336 = por %p334, %p335
    %p337 = scmp.ne.s32.totalorder %s329, %s332
    %p338 = scmp.eq.s32.totalorder %s20, 0
    %p339 = por %p337, %p338
    %p340 = scmp.ne.s32.totalorder %s329, %s332
    %p341 = scmp.eq.s32.totalorder %s25, 1
    %p342 = por %p340, %p341
    %p343 = scmp.ne.s32.totalorder %s332, %s333
    %p344 = scmp.eq.s32.totalorder %s25, 0
    %p345 = por %p343, %p344
    %p346 = scmp.ne.s32.totalorder %s332, %s333
    %p347 = scmp.eq.s32.totalorder %s26, 1
    %p348 = por %p346, %p347
    %p350 = scmp.ne.s32.totalorder %s333, %s349
    %p351 = scmp.eq.s32.totalorder %s26, 0
    %p352 = por %p350, %p351
    %p353 = scmp.le.s32.totalorder 1, %s20
    %p354 = scmp.lt.s32.totalorder %s20, 3
    %p355 = pnand %p353, %p354
    %p356 = pneg %p355
    // Predicated region
    $region9: #{_lambda_.4} parent=5 // pred_check
      _
    $region10: #{_lambda_.4} parent=5 // pred_check_branch
      %358 = sbr.rel (%p355) target = $region12
    $region11: #{_lambda_.4} parent=5 // pred_region
      %s359 = ssub.s32 %s20, 1
      // Predicated region
      $region13: #{_lambda_.4} parent=11 // pred_check
        %p360 = pneg %p67
      $region14: #{_lambda_.4} parent=11 // pred_check_branch
        %362 = sbr.rel (%p360) target = $region16
      $region15: #{_lambda_.4} parent=11 // pred_region
        _
      $region16: #{_lambda_.4} parent=11 // pred_fallthru
        _
      // Predicated region
      $region17: #{_lambda_.4} parent=11 // pred_check
        %p363 = pneg %p88
      $region18: #{_lambda_.4} parent=11 // pred_check_branch
        %365 = sbr.rel (%p363) target = $region20
      $region19: #{_lambda_.4} parent=11 // pred_region
        _
      $region20: #{_lambda_.4} parent=11 // pred_fallthru
        _
      // Predicated region
      $region21: #{_lambda_.4} parent=11 // pred_check
        %p366 = pneg %p109
      $region22: #{_lambda_.4} parent=11 // pred_check_branch
        %368 = sbr.rel (%p366) target = $region24
      $region23: #{_lambda_.4} parent=11 // pred_region
        _
      $region24: #{_lambda_.4} parent=11 // pred_fallthru
        _
      // Predicated region
      $region25: #{_lambda_.4} parent=11 // pred_check
        %p369 = pneg %p130
      $region26: #{_lambda_.4} parent=11 // pred_check_branch
        %371 = sbr.rel (%p369) target = $region28
      $region27: #{_lambda_.4} parent=11 // pred_region
        _
      $region28: #{_lambda_.4} parent=11 // pred_fallthru
        _
      // Predicated region
      $region29: #{_lambda_.4} parent=11 // pred_check
        %p372 = pneg %p151
      $region30: #{_lambda_.4} parent=11 // pred_check_branch
        %374 = sbr.rel (%p372) target = $region32
      $region31: #{_lambda_.4} parent=11 // pred_region
        _
      $region32: #{_lambda_.4} parent=11 // pred_fallthru
        _
      // Predicated region
      $region33: #{_lambda_.4} parent=11 // pred_check
        %p375 = pneg %p172
      $region34: #{_lambda_.4} parent=11 // pred_check_branch
        %377 = sbr.rel (%p375) target = $region36
      $region35: #{_lambda_.4} parent=11 // pred_region
        _
      $region36: #{_lambda_.4} parent=11 // pred_fallthru
        _
      // Predicated region
      $region37: #{_lambda_.4} parent=11 // pred_check
        %p378 = pneg %p193
      $region38: #{_lambda_.4} parent=11 // pred_check_branch
        %380 = sbr.rel (%p378) target = $region40
      $region39: #{_lambda_.4} parent=11 // pred_region
        _
      $region40: #{_lambda_.4} parent=11 // pred_fallthru
        _
      // Predicated region
      $region41: #{_lambda_.4} parent=11 // pred_check
        %p381 = pneg %p214
      $region42: #{_lambda_.4} parent=11 // pred_check_branch
        %383 = sbr.rel (%p381) target = $region44
      $region43: #{_lambda_.4} parent=11 // pred_region
        _
      $region44: #{_lambda_.4} parent=11 // pred_fallthru
        _
      // Predicated region
      $region45: #{_lambda_.4} parent=11 // pred_check
        %p384 = pneg %p235
      $region46: #{_lambda_.4} parent=11 // pred_check_branch
        %386 = sbr.rel (%p384) target = $region48
      $region47: #{_lambda_.4} parent=11 // pred_region
        _
      $region48: #{_lambda_.4} parent=11 // pred_fallthru
        _
      // Predicated region
      $region49: #{_lambda_.4} parent=11 // pred_check
        %p387 = pneg %p256
      $region50: #{_lambda_.4} parent=11 // pred_check_branch
        %389 = sbr.rel (%p387) target = $region52
      $region51: #{_lambda_.4} parent=11 // pred_region
        _
      $region52: #{_lambda_.4} parent=11 // pred_fallthru
        _
      // Predicated region
      $region53: #{_lambda_.4} parent=11 // pred_check
        %p390 = pneg %p277
      $region54: #{_lambda_.4} parent=11 // pred_check_branch
        %392 = sbr.rel (%p390) target = $region56
      $region55: #{_lambda_.4} parent=11 // pred_region
        _
      $region56: #{_lambda_.4} parent=11 // pred_fallthru
        _
      // Predicated region
      $region57: #{_lambda_.4} parent=11 // pred_check
        %p393 = pneg %p298
      $region58: #{_lambda_.4} parent=11 // pred_check_branch
        %395 = sbr.rel (%p393) target = $region60
      $region59: #{_lambda_.4} parent=11 // pred_region
        _
      $region60: #{_lambda_.4} parent=11 // pred_fallthru
        _
      // Predicated region
      $region61: #{_lambda_.4} parent=11 // pred_check
        %p396 = pneg %p319
      $region62: #{_lambda_.4} parent=11 // pred_check_branch
        %398 = sbr.rel (%p396) target = $region64
      $region63: #{_lambda_.4} parent=11 // pred_region
        _
      $region64: #{_lambda_.4} parent=11 // pred_fallthru
        _
    $region12: #{_lambda_.4} parent=5 // pred_fallthru
      _
    %p399 = scmp.lt.s32.totalorder %s20, 2
    // Predicated region
    $region65: #{_lambda_.4} parent=5 // pred_check
      %p400 = pneg %p399
    $region66: #{_lambda_.4} parent=5 // pred_check_branch
      %402 = sbr.rel (%p400) target = $region68
    $region67: #{_lambda_.4} parent=5 // pred_region
      // Predicated region
      $region69: #{_lambda_.4} parent=67 // pred_check
        %p403 = pneg %p40
      $region70: #{_lambda_.4} parent=67 // pred_check_branch
        %405 = sbr.rel (%p403) target = $region72
      $region71: #{_lambda_.4} parent=67 // pred_region
        %p406 = scmp.lt.s32.totalorder %s20, 1
        %s407 = scalar_select %p406, %s20, 1
        %s408 = smul.addr %s407, 72
        %s409 = smul.addr %s408, 4
        %s410 = scalar_lea.vmem %s0, %s409
      $region72: #{_lambda_.4} parent=67 // pred_fallthru
        _
    $region68: #{_lambda_.4} parent=5 // pred_fallthru
      _
    %p411 = scmp.le.s32.totalorder 1, %s20
    %p412 = scmp.lt.s32.totalorder %s20, 3
    %p413 = pnand %p411, %p412
    %p414 = pneg %p413
    // Predicated region
    $region73: #{_lambda_.4} parent=5 // pred_check
      _
    $region74: #{_lambda_.4} parent=5 // pred_check_branch
      %416 = sbr.rel (%p413) target = $region76
    $region75: #{_lambda_.4} parent=5 // pred_region
      %s417 = ssub.s32 %s20, 1
      %p418 = scmp.lt.s32.totalorder %s25, 1
      %s419 = scalar_select %p418, %s25, 1
      %s420 = smul.addr %s419, 72
      %s421 = smul.addr %s420, 4
      %s422 = scalar_lea.vmem %s0, %s421
      %p423 = pneg %p46
      %p424 = pneg %p43
      %p425 = pneg %p67
      %p426 = pneg %p64
      %p427 = pneg %p88
      %p428 = pneg %p85
      %p429 = pneg %p109
      %p430 = pneg %p106
      %p431 = pneg %p130
      %p432 = pneg %p127
      %p433 = pneg %p151
      %p434 = pneg %p148
      %p435 = pneg %p172
      %p436 = pneg %p169
      %p437 = pneg %p193
      %p438 = pneg %p190
      %p439 = pneg %p214
      %p440 = pneg %p211
      %p441 = pneg %p235
      %p442 = pneg %p232
      %p443 = pneg %p256
      %p444 = pneg %p253
      %p445 = pneg %p277
      %p446 = pneg %p274
      %p447 = pneg %p298
      %p448 = pneg %p295
      %p449 = pneg %p319
      %p450 = pneg %p316
      %p451 = pneg %p345
      %p452 = pneg %p342
      %p453 = scmp.lt.s32.totalorder %s25, 1
      %s454 = scalar_select %p453, %s25, 1
      %s455 = smul.addr %s454, 8
      %s456 = smul.addr %s455, 4
      %s457 = scalar_lea.vmem %s14, %s456
      %p458 = scmp.lt.s32.totalorder %s25, 1
      %s459 = scalar_select %p458, %s25, 1
      %s460 = smul.addr %s459, 72
      %s461 = smul.addr %s460, 4
      %s462 = scalar_lea.vmem %s0, %s461
      %p463 = scmp.lt.s32.totalorder %s25, 1
      %s464 = scalar_select %p463, %s25, 1
      %s465 = smul.addr %s464, 8
      %s466 = smul.addr %s465, 4
      %s467 = scalar_lea.vmem %s14, %s466
      %v469 = vld [vmem:[%s462] sm:$0xf]
      %v470 = vld [vmem:[%s462 + $0x4] sm:$0xf]
      %v471 = vld [vmem:[%s462 + $0x8] sm:$0xf]
      %v472 = vld [vmem:[%s462 + $0xc] sm:$0xf]
      %v473 = vld [vmem:[%s462 + $0x10] sm:$0xf]
      %v474 = vld [vmem:[%s462 + $0x14] sm:$0xf]
      %v475 = vld [vmem:[%s462 + $0x18] sm:$0xf]
      %v476 = vld [vmem:[%s462 + $0x1c] sm:$0xf]
      %v477 = vld [vmem:[%s2] sm:$0xf]
      %v478 = vld [vmem:[%s2 + $0x4] sm:$0xf]
      %v487 = vunpack.c.l.b16 %v469
      %v488 = vunpack.c.l.b16 %v470
      %v489 = vunpack.c.l.b16 %v471
      %v490 = vunpack.c.l.b16 %v472
      %v491 = vunpack.c.l.b16 %v473
      %v492 = vunpack.c.l.b16 %v474
      %v493 = vunpack.c.l.b16 %v475
      %v494 = vunpack.c.l.b16 %v476
      %v495 = vpack.c.b16 %v488, %v487
      %v496 = vpack.c.b16 %v490, %v489
      %v497 = vpack.c.b16 %v492, %v491
      %v498 = vpack.c.b16 %v494, %v493
      %v501 = vunpack.c.l.b16 %v477
      %v502 = vunpack.c.l.b16 %v478
      %v503 = vpack.c.b16 %v502, %v501
      %vm505 = vcmask 130048
      %v507 = vsel %vm505, %v495, 0
      %v510 = vsel %vm505, %v496, 0
      %v513 = vsel %vm505, %v497, 0
      %v516 = vsel %vm505, %v498, 0
      %518 = vmatprep.subr.bf16.mxu0 0
      %519 = vmatpush1.bf16.msra.mxu0 0
      %520 = vmatprep.subr.bf16.mxu0 0
      %521 = vmatpush1.bf16.msra.mxu0 0
      %522 = vmatprep.subr.bf16.mxu0 0
      %523 = vmatpush1.bf16.msra.mxu0 0
      %524 = vmatprep.subr.bf16.mxu0 0
      %525 = vmatpush1.bf16.msra.mxu0 0
      %526 = vmatprep.subr.bf16.mxu0 0
      %527 = vmatpush1.bf16.msra.mxu0 0
      %528 = vmatprep.subr.bf16.mxu0 0
      %529 = vmatpush1.bf16.msra.mxu0 0
      %530 = vmatprep.subr.bf16.mxu0 0
      %531 = vmatpush1.bf16.msra.mxu0 0
      %532 = vmatprep.subr.bf16.mxu0 0
      %533 = vmatpush1.bf16.msra.mxu0 %v503
      %534 = vmatprep.subr.bf16.mxu0 0
      %535 = vmatpush2.bf16.msra.mxu0 0
      %536 = vmatprep.subr.bf16.mxu0 0
      %537 = vmatpush2.bf16.msra.mxu0 0
      %538 = vmatprep.subr.bf16.mxu0 0
      %539 = vmatpush2.bf16.msra.mxu0 0
      %540 = vmatprep.subr.bf16.mxu0 0
      %541 = vmatpush2.bf16.msra.mxu0 0
      %542 = vmatprep.subr.bf16.mxu0 0
      %543 = vmatpush2.bf16.msra.mxu0 0
      %544 = vmatprep.subr.bf16.mxu0 0
      %545 = vmatpush2.bf16.msra.mxu0 0
      %546 = vmatprep.subr.bf16.mxu0 0
      %547 = vmatpush2.bf16.msra.mxu0 0
      %548 = vmatprep.subr.bf16.mxu0 0
      %549 = vmatpush2.bf16.msra.mxu0 0
      %550 = vmatprep.mubr.bf16.mxu0 0
      %551 = vmatmul.mubr.bf16.gmra.mxu0 %v507
      %v552 = vpop.f32.mrf.mxu0
      %v553 = vadd.f32 0.0, %v552
      %v554 = vpop.f32.mrf.mxu0
      %v555 = vpop.f32.mrf.mxu0
      %v556 = vadd.f32 0.0, %v555
      %v557 = vpop.f32.mrf.mxu0
      %558 = vmatprep.mubr.bf16.mxu0 0
      %559 = vmatmul.mubr.bf16.gmra.mxu0 %v510
      %v560 = vpop.f32.mrf.mxu0
      %v561 = vadd.f32 0.0, %v560
      %v562 = vpop.f32.mrf.mxu0
      %v563 = vpop.f32.mrf.mxu0
      %v564 = vadd.f32 0.0, %v563
      %v565 = vpop.f32.mrf.mxu0
      %566 = vmatprep.mubr.bf16.mxu0 0
      %567 = vmatmul.mubr.bf16.gmra.mxu0 %v513
      %v568 = vpop.f32.mrf.mxu0
      %v569 = vadd.f32 0.0, %v568
      %v570 = vpop.f32.mrf.mxu0
      %v571 = vpop.f32.mrf.mxu0
      %v572 = vadd.f32 0.0, %v571
      %v573 = vpop.f32.mrf.mxu0
      %574 = vmatprep.mubr.bf16.mxu0 0
      %575 = vmatmul.mubr.bf16.gmra.mxu0 %v516
      %v576 = vpop.f32.mrf.mxu0
      %v577 = vadd.f32 0.0, %v576
      %v578 = vpop.f32.mrf.mxu0
      %v579 = vpop.f32.mrf.mxu0
      %v580 = vadd.f32 0.0, %v579
      %v581 = vpop.f32.mrf.mxu0
      %582 = vdwg.mxu0
      %v583 = vld [vmem:[%s3] sm:$0x1]
      %v584 = vlaneseq
      %v585 = vshrl.u32 %v584, 7
      %v586 = vsub.s32 0, %v585
      %v587 = vrot.slane %v583, %v586
      %v588 = vmul.f32 %v553, %v587
      %v589 = vmul.f32 %v556, %v587
      %v590 = vmul.f32 %v561, %v587
      %v591 = vmul.f32 %v564, %v587
      %v592 = vmul.f32 %v569, %v587
      %v593 = vmul.f32 %v572, %v587
      %v594 = vmul.f32 %v577, %v587
      %v595 = vmul.f32 %v580, %v587
      %v596 = vld [vmem:[%s3 + $0x1] sm:$0x1]
      %v597 = vlaneseq
      %v598 = vshrl.u32 %v597, 7
      %v599 = vsub.s32 0, %v598
      %v600 = vrot.slane %v596, %v599
      %v601 = vadd.f32 %v588, %v600
      %v602 = vadd.f32 %v589, %v600
      %v603 = vadd.f32 %v590, %v600
      %v604 = vadd.f32 %v591, %v600
      %v605 = vadd.f32 %v592, %v600
      %v606 = vadd.f32 %v593, %v600
      %v607 = vadd.f32 %v594, %v600
      %v608 = vadd.f32 %v595, %v600
      %v609 = vmax.f32 %v601, 0.0
      %v610 = vmax.f32 %v602, 0.0
      %v611 = vmax.f32 %v603, 0.0
      %v612 = vmax.f32 %v604, 0.0
      %v613 = vmax.f32 %v605, 0.0
      %v614 = vmax.f32 %v606, 0.0
      %v615 = vmax.f32 %v607, 0.0
      %v616 = vmax.f32 %v608, 0.0
      %v617 = vld [vmem:[%s1] sm:$0xff]
      %v618 = vld [vmem:[%s1 + $0x8] sm:$0xff]
      %v619 = vld [vmem:[%s1 + $0x10] sm:$0xff]
      %v620 = vld [vmem:[%s1 + $0x18] sm:$0xff]
      %v621 = vld [vmem:[%s1 + $0x20] sm:$0xff]
      %v622 = vld [vmem:[%s1 + $0x28] sm:$0xff]
      %v623 = vld [vmem:[%s1 + $0x30] sm:$0xff]
      %v624 = vld [vmem:[%s1 + $0x38] sm:$0xff]
      %626 = vset.pattern.permute.xlu0 0
      %627 = vperm.xlu0 %626, %v617
      %v628 = vpop.permute.xlu0 %627
      %631 = vset.pattern.permute.xlu0 0
      %632 = vperm.xlu0 %631, %v618
      %v633 = vpop.permute.xlu0 %632
      %636 = vset.pattern.permute.xlu0 0
      %637 = vperm.xlu0 %636, %v619
      %v638 = vpop.permute.xlu0 %637
      %641 = vset.pattern.permute.xlu0 0
      %642 = vperm.xlu0 %641, %v620
      %v643 = vpop.permute.xlu0 %642
      %646 = vset.pattern.permute.xlu0 0
      %647 = vperm.xlu0 %646, %v621
      %v648 = vpop.permute.xlu0 %647
      %651 = vset.pattern.permute.xlu0 0
      %652 = vperm.xlu0 %651, %v622
      %v653 = vpop.permute.xlu0 %652
      %656 = vset.pattern.permute.xlu0 0
      %657 = vperm.xlu0 %656, %v623
      %v658 = vpop.permute.xlu0 %657
      %661 = vset.pattern.permute.xlu0 0
      %662 = vperm.xlu0 %661, %v624
      %v663 = vpop.permute.xlu0 %662
      %v665 = vmul.f32 %v609, %v628
      %v666 = vmul.f32 %v610, %v633
      %v667 = vmul.f32 %v611, %v638
      %v668 = vmul.f32 %v612, %v643
      %v669 = vmul.f32 %v613, %v648
      %v670 = vmul.f32 %v614, %v653
      %v671 = vmul.f32 %v615, %v658
      %v672 = vmul.f32 %v616, %v663
      %v673 = vpack.c.bf16 %v666, %v665
      %v674 = vpack.c.bf16 %v668, %v667
      %v675 = vpack.c.bf16 %v670, %v669
      %v676 = vpack.c.bf16 %v672, %v671
      %v677 = vld [vmem:[%s4] sm:$0xf]
      %v678 = vld [vmem:[%s4 + $0x4] sm:$0xf]
      %v679 = vld [vmem:[%s462 + $0x20] sm:$0xf]
      %v680 = vld [vmem:[%s462 + $0x24] sm:$0xf]
      %v681 = vld [vmem:[%s462 + $0x28] sm:$0xf]
      %v682 = vld [vmem:[%s462 + $0x2c] sm:$0xf]
      %v683 = vld [vmem:[%s462 + $0x30] sm:$0xf]
      %v684 = vld [vmem:[%s462 + $0x34] sm:$0xf]
      %v685 = vld [vmem:[%s462 + $0x38] sm:$0xf]
      %v686 = vld [vmem:[%s462 + $0x3c] sm:$0xf]
      %v695 = vunpack.c.l.b16 %v679
      %v696 = vunpack.c.l.b16 %v680
      %v697 = vunpack.c.l.b16 %v681
      %v698 = vunpack.c.l.b16 %v682
      %v699 = vunpack.c.l.b16 %v683
      %v700 = vunpack.c.l.b16 %v684
      %v701 = vunpack.c.l.b16 %v685
      %v702 = vunpack.c.l.b16 %v686
      %v703 = vpack.c.b16 %v696, %v695
      %v704 = vpack.c.b16 %v698, %v697
      %v705 = vpack.c.b16 %v700, %v699
      %v706 = vpack.c.b16 %v702, %v701
      %v708 = vsel %vm505, %v703, 0
      %v711 = vsel %vm505, %v704, 0
      %v714 = vsel %vm505, %v705, 0
      %v717 = vsel %vm505, %v706, 0
      %719 = vmatprep.subr.bf16.mxu0 0
      %720 = vmatpush1.bf16.msra.mxu0 0
      %721 = vmatprep.subr.bf16.mxu0 0
      %722 = vmatpush1.bf16.msra.mxu0 0
      %723 = vmatprep.subr.bf16.mxu0 0
      %724 = vmatpush1.bf16.msra.mxu0 0
      %725 = vmatprep.subr.bf16.mxu0 0
      %726 = vmatpush1.bf16.msra.mxu0 0
      %727 = vmatprep.subr.bf16.mxu0 0
      %728 = vmatpush1.bf16.msra.mxu0 0
      %729 = vmatprep.subr.bf16.mxu0 0
      %730 = vmatpush1.bf16.msra.mxu0 0
      %731 = vmatprep.subr.bf16.mxu0 0
      %732 = vmatpush1.bf16.msra.mxu0 0
      %733 = vmatprep.subr.bf16.mxu0 0
      %734 = vmatpush1.bf16.msra.mxu0 %v503
      %735 = vmatprep.subr.bf16.mxu0 0
      %736 = vmatpush2.bf16.msra.mxu0 0
      %737 = vmatprep.subr.bf16.mxu0 0
      %738 = vmatpush2.bf16.msra.mxu0 0
      %739 = vmatprep.subr.bf16.mxu0 0
      %740 = vmatpush2.bf16.msra.mxu0 0
      %741 = vmatprep.subr.bf16.mxu0 0
      %742 = vmatpush2.bf16.msra.mxu0 0
      %743 = vmatprep.subr.bf16.mxu0 0
      %744 = vmatpush2.bf16.msra.mxu0 0
      %745 = vmatprep.subr.bf16.mxu0 0
      %746 = vmatpush2.bf16.msra.mxu0 0
      %747 = vmatprep.subr.bf16.mxu0 0
      %748 = vmatpush2.bf16.msra.mxu0 0
      %749 = vmatprep.subr.bf16.mxu0 0
      %750 = vmatpush2.bf16.msra.mxu0 0
      %751 = vmatprep.mubr.bf16.mxu0 0
      %752 = vmatmul.mubr.bf16.gmra.mxu0 %v708
      %v753 = vpop.f32.mrf.mxu0
      %v754 = vadd.f32 0.0, %v753
      %v755 = vpop.f32.mrf.mxu0
      %v756 = vpop.f32.mrf.mxu0
      %v757 = vadd.f32 0.0, %v756
      %v758 = vpop.f32.mrf.mxu0
      %759 = vmatprep.mubr.bf16.mxu0 0
      %760 = vmatmul.mubr.bf16.gmra.mxu0 %v711
      %v761 = vpop.f32.mrf.mxu0
      %v762 = vadd.f32 0.0, %v761
      %v763 = vpop.f32.mrf.mxu0
      %v764 = vpop.f32.mrf.mxu0
      %v765 = vadd.f32 0.0, %v764
      %v766 = vpop.f32.mrf.mxu0
      %767 = vmatprep.mubr.bf16.mxu0 0
      %768 = vmatmul.mubr.bf16.gmra.mxu0 %v714
      %v769 = vpop.f32.mrf.mxu0
      %v770 = vadd.f32 0.0, %v769
      %v771 = vpop.f32.mrf.mxu0
      %v772 = vpop.f32.mrf.mxu0
      %v773 = vadd.f32 0.0, %v772
      %v774 = vpop.f32.mrf.mxu0
      %775 = vmatprep.mubr.bf16.mxu0 0
      %776 = vmatmul.mubr.bf16.gmra.mxu0 %v717
      %v777 = vpop.f32.mrf.mxu0
      %v778 = vadd.f32 0.0, %v777
      %v779 = vpop.f32.mrf.mxu0
      %v780 = vpop.f32.mrf.mxu0
      %v781 = vadd.f32 0.0, %v780
      %v782 = vpop.f32.mrf.mxu0
      %783 = vdwg.mxu0
      %v784 = vmul.f32 %v754, %v587
      %v785 = vmul.f32 %v757, %v587
      %v786 = vmul.f32 %v762, %v587
      %v787 = vmul.f32 %v765, %v587
      %v788 = vmul.f32 %v770, %v587
      %v789 = vmul.f32 %v773, %v587
      %v790 = vmul.f32 %v778, %v587
      %v791 = vmul.f32 %v781, %v587
      %v792 = vadd.f32 %v784, %v600
      %v793 = vadd.f32 %v785, %v600
      %v794 = vadd.f32 %v786, %v600
      %v795 = vadd.f32 %v787, %v600
      %v796 = vadd.f32 %v788, %v600
      %v797 = vadd.f32 %v789, %v600
      %v798 = vadd.f32 %v790, %v600
      %v799 = vadd.f32 %v791, %v600
      %v800 = vmax.f32 %v792, 0.0
      %v801 = vmax.f32 %v793, 0.0
      %v802 = vmax.f32 %v794, 0.0
      %v803 = vmax.f32 %v795, 0.0
      %v804 = vmax.f32 %v796, 0.0
      %v805 = vmax.f32 %v797, 0.0
      %v806 = vmax.f32 %v798, 0.0
      %v807 = vmax.f32 %v799, 0.0
      %v808 = vld [vmem:[%s1 + $0x40] sm:$0xff]
      %v809 = vld [vmem:[%s1 + $0x48] sm:$0xff]
      %v810 = vld [vmem:[%s1 + $0x50] sm:$0xff]
      %v811 = vld [vmem:[%s1 + $0x58] sm:$0xff]
      %v812 = vld [vmem:[%s1 + $0x60] sm:$0xff]
      %v813 = vld [vmem:[%s1 + $0x68] sm:$0xff]
      %v814 = vld [vmem:[%s1 + $0x70] sm:$0xff]
      %v815 = vld [vmem:[%s1 + $0x78] sm:$0xff]
      %817 = vset.pattern.permute.xlu0 0
      %818 = vperm.xlu0 %817, %v808
      %v819 = vpop.permute.xlu0 %818
      %822 = vset.pattern.permute.xlu0 0
      %823 = vperm.xlu0 %822, %v809
      %v824 = vpop.permute.xlu0 %823
      %827 = vset.pattern.permute.xlu0 0
      %828 = vperm.xlu0 %827, %v810
      %v829 = vpop.permute.xlu0 %828
      %832 = vset.pattern.permute.xlu0 0
      %833 = vperm.xlu0 %832, %v811
      %v834 = vpop.permute.xlu0 %833
      %837 = vset.pattern.permute.xlu0 0
      %838 = vperm.xlu0 %837, %v812
      %v839 = vpop.permute.xlu0 %838
      %842 = vset.pattern.permute.xlu0 0
      %843 = vperm.xlu0 %842, %v813
      %v844 = vpop.permute.xlu0 %843
      %847 = vset.pattern.permute.xlu0 0
      %848 = vperm.xlu0 %847, %v814
      %v849 = vpop.permute.xlu0 %848
      %852 = vset.pattern.permute.xlu0 0
      %853 = vperm.xlu0 %852, %v815
      %v854 = vpop.permute.xlu0 %853
      %v856 = vmul.f32 %v800, %v819
      %v857 = vmul.f32 %v801, %v824
      %v858 = vmul.f32 %v802, %v829
      %v859 = vmul.f32 %v803, %v834
      %v860 = vmul.f32 %v804, %v839
      %v861 = vmul.f32 %v805, %v844
      %v862 = vmul.f32 %v806, %v849
      %v863 = vmul.f32 %v807, %v854
      %v864 = vpack.c.bf16 %v857, %v856
      %v865 = vpack.c.bf16 %v859, %v858
      %v866 = vpack.c.bf16 %v861, %v860
      %v867 = vpack.c.bf16 %v863, %v862
      %s868 = scalar_lea.vmem %s4, 8
      %v869 = vld [vmem:[%s868] sm:$0xf]
      %v870 = vld [vmem:[%s868 + $0x4] sm:$0xf]
      %v873 = vunpack.c.l.b16 %v869
      %v874 = vunpack.c.l.b16 %v870
      %v875 = vpack.c.b16 %v874, %v873
      %v878 = vsel %vm505, %v864, 0
      %v881 = vsel %vm505, %v865, 0
      %v884 = vsel %vm505, %v866, 0
      %v887 = vsel %vm505, %v867, 0
      %889 = vmatprep.subr.bf16.mxu0 0
      %890 = vmatpush1.bf16.msra.mxu0 0
      %891 = vmatprep.subr.bf16.mxu0 0
      %892 = vmatpush1.bf16.msra.mxu0 0
      %893 = vmatprep.subr.bf16.mxu0 0
      %894 = vmatpush1.bf16.msra.mxu0 0
      %895 = vmatprep.subr.bf16.mxu0 0
      %896 = vmatpush1.bf16.msra.mxu0 0
      %897 = vmatprep.subr.bf16.mxu0 0
      %898 = vmatpush1.bf16.msra.mxu0 0
      %899 = vmatprep.subr.bf16.mxu0 0
      %900 = vmatpush1.bf16.msra.mxu0 0
      %901 = vmatprep.subr.bf16.mxu0 0
      %902 = vmatpush1.bf16.msra.mxu0 0
      %903 = vmatprep.subr.bf16.mxu0 0
      %904 = vmatpush1.bf16.msra.mxu0 %v875
      %905 = vmatprep.subr.bf16.mxu0 0
      %906 = vmatpush2.bf16.msra.mxu0 0
      %907 = vmatprep.subr.bf16.mxu0 0
      %908 = vmatpush2.bf16.msra.mxu0 0
      %909 = vmatprep.subr.bf16.mxu0 0
      %910 = vmatpush2.bf16.msra.mxu0 0
      %911 = vmatprep.subr.bf16.mxu0 0
      %912 = vmatpush2.bf16.msra.mxu0 0
      %913 = vmatprep.subr.bf16.mxu0 0
      %914 = vmatpush2.bf16.msra.mxu0 0
      %915 = vmatprep.subr.bf16.mxu0 0
      %916 = vmatpush2.bf16.msra.mxu0 0
      %917 = vmatprep.subr.bf16.mxu0 0
      %918 = vmatpush2.bf16.msra.mxu0 0
      %919 = vmatprep.subr.bf16.mxu0 0
      %920 = vmatpush2.bf16.msra.mxu0 0
      %921 = vmatprep.mubr.bf16.mxu0 0
      %922 = vmatmul.mubr.bf16.gmra.mxu0 %v878
      %v923 = vpop.f32.mrf.mxu0
      %v924 = vadd.f32 0.0, %v923
      %v925 = vpop.f32.mrf.mxu0
      %v926 = vpop.f32.mrf.mxu0
      %v927 = vadd.f32 0.0, %v926
      %v928 = vpop.f32.mrf.mxu0
      %929 = vmatprep.mubr.bf16.mxu0 0
      %930 = vmatmul.mubr.bf16.gmra.mxu0 %v881
      %v931 = vpop.f32.mrf.mxu0
      %v932 = vadd.f32 0.0, %v931
      %v933 = vpop.f32.mrf.mxu0
      %v934 = vpop.f32.mrf.mxu0
      %v935 = vadd.f32 0.0, %v934
      %v936 = vpop.f32.mrf.mxu0
      %937 = vmatprep.mubr.bf16.mxu0 0
      %938 = vmatmul.mubr.bf16.gmra.mxu0 %v884
      %v939 = vpop.f32.mrf.mxu0
      %v940 = vadd.f32 0.0, %v939
      %v941 = vpop.f32.mrf.mxu0
      %v942 = vpop.f32.mrf.mxu0
      %v943 = vadd.f32 0.0, %v942
      %v944 = vpop.f32.mrf.mxu0
      %945 = vmatprep.mubr.bf16.mxu0 0
      %946 = vmatmul.mubr.bf16.gmra.mxu0 %v887
      %v947 = vpop.f32.mrf.mxu0
      %v948 = vadd.f32 0.0, %v947
      %v949 = vpop.f32.mrf.mxu0
      %v950 = vpop.f32.mrf.mxu0
      %v951 = vadd.f32 0.0, %v950
      %v952 = vpop.f32.mrf.mxu0
      %953 = vdwg.mxu0
      %v956 = vunpack.c.l.b16 %v677
      %v957 = vunpack.c.l.b16 %v678
      %v958 = vpack.c.b16 %v957, %v956
      %v961 = vsel %vm505, %v673, 0
      %v964 = vsel %vm505, %v674, 0
      %v967 = vsel %vm505, %v675, 0
      %v970 = vsel %vm505, %v676, 0
      %972 = vmatprep.subr.bf16.mxu0 0
      %973 = vmatpush1.bf16.msra.mxu0 0
      %974 = vmatprep.subr.bf16.mxu0 0
      %975 = vmatpush1.bf16.msra.mxu0 0
      %976 = vmatprep.subr.bf16.mxu0 0
      %977 = vmatpush1.bf16.msra.mxu0 0
      %978 = vmatprep.subr.bf16.mxu0 0
      %979 = vmatpush1.bf16.msra.mxu0 0
      %980 = vmatprep.subr.bf16.mxu0 0
      %981 = vmatpush1.bf16.msra.mxu0 0
      %982 = vmatprep.subr.bf16.mxu0 0
      %983 = vmatpush1.bf16.msra.mxu0 0
      %984 = vmatprep.subr.bf16.mxu0 0
      %985 = vmatpush1.bf16.msra.mxu0 0
      %986 = vmatprep.subr.bf16.mxu0 0
      %987 = vmatpush1.bf16.msra.mxu0 %v958
      %988 = vmatprep.subr.bf16.mxu0 0
      %989 = vmatpush2.bf16.msra.mxu0 0
      %990 = vmatprep.subr.bf16.mxu0 0
      %991 = vmatpush2.bf16.msra.mxu0 0
      %992 = vmatprep.subr.bf16.mxu0 0
      %993 = vmatpush2.bf16.msra.mxu0 0
      %994 = vmatprep.subr.bf16.mxu0 0
      %995 = vmatpush2.bf16.msra.mxu0 0
      %996 = vmatprep.subr.bf16.mxu0 0
      %997 = vmatpush2.bf16.msra.mxu0 0
      %998 = vmatprep.subr.bf16.mxu0 0
      %999 = vmatpush2.bf16.msra.mxu0 0
      %1000 = vmatprep.subr.bf16.mxu0 0
      %1001 = vmatpush2.bf16.msra.mxu0 0
      %1002 = vmatprep.subr.bf16.mxu0 0
      %1003 = vmatpush2.bf16.msra.mxu0 0
      %1004 = vmatprep.mubr.bf16.mxu0 0
      %1005 = vmatmul.mubr.bf16.gmra.mxu0 %v961
      %v1006 = vpop.f32.mrf.mxu0
      %v1007 = vadd.f32 %v924, %v1006
      %v1008 = vpop.f32.mrf.mxu0
      %v1009 = vpop.f32.mrf.mxu0
      %v1010 = vadd.f32 %v927, %v1009
      %v1011 = vpop.f32.mrf.mxu0
      %1012 = vmatprep.mubr.bf16.mxu0 0
      %1013 = vmatmul.mubr.bf16.gmra.mxu0 %v964
      %v1014 = vpop.f32.mrf.mxu0
      %v1015 = vadd.f32 %v932, %v1014
      %v1016 = vpop.f32.mrf.mxu0
      %v1017 = vpop.f32.mrf.mxu0
      %v1018 = vadd.f32 %v935, %v1017
      %v1019 = vpop.f32.mrf.mxu0
      %1020 = vmatprep.mubr.bf16.mxu0 0
      %1021 = vmatmul.mubr.bf16.gmra.mxu0 %v967
      %v1022 = vpop.f32.mrf.mxu0
      %v1023 = vadd.f32 %v940, %v1022
      %v1024 = vpop.f32.mrf.mxu0
      %v1025 = vpop.f32.mrf.mxu0
      %v1026 = vadd.f32 %v943, %v1025
      %v1027 = vpop.f32.mrf.mxu0
      %1028 = vmatprep.mubr.bf16.mxu0 0
      %1029 = vmatmul.mubr.bf16.gmra.mxu0 %v970
      %v1030 = vpop.f32.mrf.mxu0
      %v1031 = vadd.f32 %v948, %v1030
      %v1032 = vpop.f32.mrf.mxu0
      %v1033 = vpop.f32.mrf.mxu0
      %v1034 = vadd.f32 %v951, %v1033
      %v1035 = vpop.f32.mrf.mxu0
      %1036 = vdwg.mxu0
      %v1037 = vld [vmem:[%s462 + $0x40] sm:$0xf]
      %v1038 = vld [vmem:[%s462 + $0x44] sm:$0xf]
      %v1039 = vld [vmem:[%s462 + $0x48] sm:$0xf]
      %v1040 = vld [vmem:[%s462 + $0x4c] sm:$0xf]
      %v1041 = vld [vmem:[%s462 + $0x50] sm:$0xf]
      %v1042 = vld [vmem:[%s462 + $0x54] sm:$0xf]
      %v1043 = vld [vmem:[%s462 + $0x58] sm:$0xf]
      %v1044 = vld [vmem:[%s462 + $0x5c] sm:$0xf]
      %v1053 = vunpack.c.l.b16 %v1037
      %v1054 = vunpack.c.l.b16 %v1038
      %v1055 = vunpack.c.l.b16 %v1039
      %v1056 = vunpack.c.l.b16 %v1040
      %v1057 = vunpack.c.l.b16 %v1041
      %v1058 = vunpack.c.l.b16 %v1042
      %v1059 = vunpack.c.l.b16 %v1043
      %v1060 = vunpack.c.l.b16 %v1044
      %v1061 = vpack.c.b16 %v1054, %v1053
      %v1062 = vpack.c.b16 %v1056, %v1055
      %v1063 = vpack.c.b16 %v1058, %v1057
      %v1064 = vpack.c.b16 %v1060, %v1059
      %v1066 = vsel %vm505, %v1061, 0
      %v1069 = vsel %vm505, %v1062, 0
      %v1072 = vsel %vm505, %v1063, 0
      %v1075 = vsel %vm505, %v1064, 0
      %1077 = vmatprep.subr.bf16.mxu0 0
      %1078 = vmatpush1.bf16.msra.mxu0 0
      %1079 = vmatprep.subr.bf16.mxu0 0
      %1080 = vmatpush1.bf16.msra.mxu0 0
      %1081 = vmatprep.subr.bf16.mxu0 0
      %1082 = vmatpush1.bf16.msra.mxu0 0
      %1083 = vmatprep.subr.bf16.mxu0 0
      %1084 = vmatpush1.bf16.msra.mxu0 0
      %1085 = vmatprep.subr.bf16.mxu0 0
      %1086 = vmatpush1.bf16.msra.mxu0 0
      %1087 = vmatprep.subr.bf16.mxu0 0
      %1088 = vmatpush1.bf16.msra.mxu0 0
      %1089 = vmatprep.subr.bf16.mxu0 0
      %1090 = vmatpush1.bf16.msra.mxu0 0
      %1091 = vmatprep.subr.bf16.mxu0 0
      %1092 = vmatpush1.bf16.msra.mxu0 %v503
      %1093 = vmatprep.subr.bf16.mxu0 0
      %1094 = vmatpush2.bf16.msra.mxu0 0
      %1095 = vmatprep.subr.bf16.mxu0 0
      %1096 = vmatpush2.bf16.msra.mxu0 0
      %1097 = vmatprep.subr.bf16.mxu0 0
      %1098 = vmatpush2.bf16.msra.mxu0 0
      %1099 = vmatprep.subr.bf16.mxu0 0
      %1100 = vmatpush2.bf16.msra.mxu0 0
      %1101 = vmatprep.subr.bf16.mxu0 0
      %1102 = vmatpush2.bf16.msra.mxu0 0
      %1103 = vmatprep.subr.bf16.mxu0 0
      %1104 = vmatpush2.bf16.msra.mxu0 0
      %1105 = vmatprep.subr.bf16.mxu0 0
      %1106 = vmatpush2.bf16.msra.mxu0 0
      %1107 = vmatprep.subr.bf16.mxu0 0
      %1108 = vmatpush2.bf16.msra.mxu0 0
      %1109 = vmatprep.mubr.bf16.mxu0 0
      %1110 = vmatmul.mubr.bf16.gmra.mxu0 %v1066
      %v1111 = vpop.f32.mrf.mxu0
      %v1112 = vadd.f32 0.0, %v1111
      %v1113 = vpop.f32.mrf.mxu0
      %v1114 = vpop.f32.mrf.mxu0
      %v1115 = vadd.f32 0.0, %v1114
      %v1116 = vpop.f32.mrf.mxu0
      %1117 = vmatprep.mubr.bf16.mxu0 0
      %1118 = vmatmul.mubr.bf16.gmra.mxu0 %v1069
      %v1119 = vpop.f32.mrf.mxu0
      %v1120 = vadd.f32 0.0, %v1119
      %v1121 = vpop.f32.mrf.mxu0
      %v1122 = vpop.f32.mrf.mxu0
      %v1123 = vadd.f32 0.0, %v1122
      %v1124 = vpop.f32.mrf.mxu0
      %1125 = vmatprep.mubr.bf16.mxu0 0
      %1126 = vmatmul.mubr.bf16.gmra.mxu0 %v1072
      %v1127 = vpop.f32.mrf.mxu0
      %v1128 = vadd.f32 0.0, %v1127
      %v1129 = vpop.f32.mrf.mxu0
      %v1130 = vpop.f32.mrf.mxu0
      %v1131 = vadd.f32 0.0, %v1130
      %v1132 = vpop.f32.mrf.mxu0
      %1133 = vmatprep.mubr.bf16.mxu0 0
      %1134 = vmatmul.mubr.bf16.gmra.mxu0 %v1075
      %v1135 = vpop.f32.mrf.mxu0
      %v1136 = vadd.f32 0.0, %v1135
      %v1137 = vpop.f32.mrf.mxu0
      %v1138 = vpop.f32.mrf.mxu0
      %v1139 = vadd.f32 0.0, %v1138
      %v1140 = vpop.f32.mrf.mxu0
      %1141 = vdwg.mxu0
      %v1142 = vmul.f32 %v1112, %v587
      %v1143 = vmul.f32 %v1115, %v587
      %v1144 = vmul.f32 %v1120, %v587
      %v1145 = vmul.f32 %v1123, %v587
      %v1146 = vmul.f32 %v1128, %v587
      %v1147 = vmul.f32 %v1131, %v587
      %v1148 = vmul.f32 %v1136, %v587
      %v1149 = vmul.f32 %v1139, %v587
      %v1150 = vadd.f32 %v1142, %v600
      %v1151 = vadd.f32 %v1143, %v600
      %v1152 = vadd.f32 %v1144, %v600
      %v1153 = vadd.f32 %v1145, %v600
      %v1154 = vadd.f32 %v1146, %v600
      %v1155 = vadd.f32 %v1147, %v600
      %v1156 = vadd.f32 %v1148, %v600
      %v1157 = vadd.f32 %v1149, %v600
      %v1158 = vmax.f32 %v1150, 0.0
      %v1159 = vmax.f32 %v1151, 0.0
      %v1160 = vmax.f32 %v1152, 0.0
      %v1161 = vmax.f32 %v1153, 0.0
      %v1162 = vmax.f32 %v1154, 0.0
      %v1163 = vmax.f32 %v1155, 0.0
      %v1164 = vmax.f32 %v1156, 0.0
      %v1165 = vmax.f32 %v1157, 0.0
      %v1166 = vld [vmem:[%s1 + $0x80] sm:$0xff]
      %v1167 = vld [vmem:[%s1 + $0x88] sm:$0xff]
      %v1168 = vld [vmem:[%s1 + $0x90] sm:$0xff]
      %v1169 = vld [vmem:[%s1 + $0x98] sm:$0xff]
      %v1170 = vld [vmem:[%s1 + $0xa0] sm:$0xff]
      %v1171 = vld [vmem:[%s1 + $0xa8] sm:$0xff]
      %v1172 = vld [vmem:[%s1 + $0xb0] sm:$0xff]
      %v1173 = vld [vmem:[%s1 + $0xb8] sm:$0xff]
      %1175 = vset.pattern.permute.xlu0 0
      %1176 = vperm.xlu0 %1175, %v1166
      %v1177 = vpop.permute.xlu0 %1176
      %1180 = vset.pattern.permute.xlu0 0
      %1181 = vperm.xlu0 %1180, %v1167
      %v1182 = vpop.permute.xlu0 %1181
      %1185 = vset.pattern.permute.xlu0 0
      %1186 = vperm.xlu0 %1185, %v1168
      %v1187 = vpop.permute.xlu0 %1186
      %1190 = vset.pattern.permute.xlu0 0
      %1191 = vperm.xlu0 %1190, %v1169
      %v1192 = vpop.permute.xlu0 %1191
      %1195 = vset.pattern.permute.xlu0 0
      %1196 = vperm.xlu0 %1195, %v1170
      %v1197 = vpop.permute.xlu0 %1196
      %1200 = vset.pattern.permute.xlu0 0
      %1201 = vperm.xlu0 %1200, %v1171
      %v1202 = vpop.permute.xlu0 %1201
      %1205 = vset.pattern.permute.xlu0 0
      %1206 = vperm.xlu0 %1205, %v1172
      %v1207 = vpop.permute.xlu0 %1206
      %1210 = vset.pattern.permute.xlu0 0
      %1211 = vperm.xlu0 %1210, %v1173
      %v1212 = vpop.permute.xlu0 %1211
      %v1214 = vmul.f32 %v1158, %v1177
      %v1215 = vmul.f32 %v1159, %v1182
      %v1216 = vmul.f32 %v1160, %v1187
      %v1217 = vmul.f32 %v1161, %v1192
      %v1218 = vmul.f32 %v1162, %v1197
      %v1219 = vmul.f32 %v1163, %v1202
      %v1220 = vmul.f32 %v1164, %v1207
      %v1221 = vmul.f32 %v1165, %v1212
      %v1222 = vpack.c.bf16 %v1215, %v1214
      %v1223 = vpack.c.bf16 %v1217, %v1216
      %v1224 = vpack.c.bf16 %v1219, %v1218
      %v1225 = vpack.c.bf16 %v1221, %v1220
      %s1226 = scalar_lea.vmem %s4, 16
      %v1227 = vld [vmem:[%s1226] sm:$0xf]
      %v1228 = vld [vmem:[%s1226 + $0x4] sm:$0xf]
      %v1231 = vunpack.c.l.b16 %v1227
      %v1232 = vunpack.c.l.b16 %v1228
      %v1233 = vpack.c.b16 %v1232, %v1231
      %v1236 = vsel %vm505, %v1222, 0
      %v1239 = vsel %vm505, %v1223, 0
      %v1242 = vsel %vm505, %v1224, 0
      %v1245 = vsel %vm505, %v1225, 0
      %1247 = vmatprep.subr.bf16.mxu0 0
      %1248 = vmatpush1.bf16.msra.mxu0 0
      %1249 = vmatprep.subr.bf16.mxu0 0
      %1250 = vmatpush1.bf16.msra.mxu0 0
      %1251 = vmatprep.subr.bf16.mxu0 0
      %1252 = vmatpush1.bf16.msra.mxu0 0
      %1253 = vmatprep.subr.bf16.mxu0 0
      %1254 = vmatpush1.bf16.msra.mxu0 0
      %1255 = vmatprep.subr.bf16.mxu0 0
      %1256 = vmatpush1.bf16.msra.mxu0 0
      %1257 = vmatprep.subr.bf16.mxu0 0
      %1258 = vmatpush1.bf16.msra.mxu0 0
      %1259 = vmatprep.subr.bf16.mxu0 0
      %1260 = vmatpush1.bf16.msra.mxu0 0
      %1261 = vmatprep.subr.bf16.mxu0 0
      %1262 = vmatpush1.bf16.msra.mxu0 %v1233
      %1263 = vmatprep.subr.bf16.mxu0 0
      %1264 = vmatpush2.bf16.msra.mxu0 0
      %1265 = vmatprep.subr.bf16.mxu0 0
      %1266 = vmatpush2.bf16.msra.mxu0 0
      %1267 = vmatprep.subr.bf16.mxu0 0
      %1268 = vmatpush2.bf16.msra.mxu0 0
      %1269 = vmatprep.subr.bf16.mxu0 0
      %1270 = vmatpush2.bf16.msra.mxu0 0
      %1271 = vmatprep.subr.bf16.mxu0 0
      %1272 = vmatpush2.bf16.msra.mxu0 0
      %1273 = vmatprep.subr.bf16.mxu0 0
      %1274 = vmatpush2.bf16.msra.mxu0 0
      %1275 = vmatprep.subr.bf16.mxu0 0
      %1276 = vmatpush2.bf16.msra.mxu0 0
      %1277 = vmatprep.subr.bf16.mxu0 0
      %1278 = vmatpush2.bf16.msra.mxu0 0
      %1279 = vmatprep.mubr.bf16.mxu0 0
      %1280 = vmatmul.mubr.bf16.gmra.mxu0 %v1236
      %v1281 = vpop.f32.mrf.mxu0
      %v1282 = vadd.f32 0.0, %v1281
      %v1283 = vpop.f32.mrf.mxu0
      %v1284 = vpop.f32.mrf.mxu0
      %v1285 = vadd.f32 0.0, %v1284
      %v1286 = vpop.f32.mrf.mxu0
      %1287 = vmatprep.mubr.bf16.mxu0 0
      %1288 = vmatmul.mubr.bf16.gmra.mxu0 %v1239
      %v1289 = vpop.f32.mrf.mxu0
      %v1290 = vadd.f32 0.0, %v1289
      %v1291 = vpop.f32.mrf.mxu0
      %v1292 = vpop.f32.mrf.mxu0
      %v1293 = vadd.f32 0.0, %v1292
      %v1294 = vpop.f32.mrf.mxu0
      %1295 = vmatprep.mubr.bf16.mxu0 0
      %1296 = vmatmul.mubr.bf16.gmra.mxu0 %v1242
      %v1297 = vpop.f32.mrf.mxu0
      %v1298 = vadd.f32 0.0, %v1297
      %v1299 = vpop.f32.mrf.mxu0
      %v1300 = vpop.f32.mrf.mxu0
      %v1301 = vadd.f32 0.0, %v1300
      %v1302 = vpop.f32.mrf.mxu0
      %1303 = vmatprep.mubr.bf16.mxu0 0
      %1304 = vmatmul.mubr.bf16.gmra.mxu0 %v1245
      %v1305 = vpop.f32.mrf.mxu0
      %v1306 = vadd.f32 0.0, %v1305
      %v1307 = vpop.f32.mrf.mxu0
      %v1308 = vpop.f32.mrf.mxu0
      %v1309 = vadd.f32 0.0, %v1308
      %v1310 = vpop.f32.mrf.mxu0
      %1311 = vdwg.mxu0
      %v1312 = vadd.f32 %v1007, %v1282
      %v1313 = vadd.f32 %v1010, %v1285
      %v1314 = vadd.f32 %v1015, %v1290
      %v1315 = vadd.f32 %v1018, %v1293
      %v1316 = vadd.f32 %v1023, %v1298
      %v1317 = vadd.f32 %v1026, %v1301
      %v1318 = vadd.f32 %v1031, %v1306
      %v1319 = vadd.f32 %v1034, %v1309
      %v1320 = vld [vmem:[%s462 + $0x60] sm:$0xf]
      %v1321 = vld [vmem:[%s462 + $0x64] sm:$0xf]
      %v1322 = vld [vmem:[%s462 + $0x68] sm:$0xf]
      %v1323 = vld [vmem:[%s462 + $0x6c] sm:$0xf]
      %v1324 = vld [vmem:[%s462 + $0x70] sm:$0xf]
      %v1325 = vld [vmem:[%s462 + $0x74] sm:$0xf]
      %v1326 = vld [vmem:[%s462 + $0x78] sm:$0xf]
      %v1327 = vld [vmem:[%s462 + $0x7c] sm:$0xf]
      %v1336 = vunpack.c.l.b16 %v1320
      %v1337 = vunpack.c.l.b16 %v1321
      %v1338 = vunpack.c.l.b16 %v1322
      %v1339 = vunpack.c.l.b16 %v1323
      %v1340 = vunpack.c.l.b16 %v1324
      %v1341 = vunpack.c.l.b16 %v1325
      %v1342 = vunpack.c.l.b16 %v1326
      %v1343 = vunpack.c.l.b16 %v1327
      %v1344 = vpack.c.b16 %v1337, %v1336
      %v1345 = vpack.c.b16 %v1339, %v1338
      %v1346 = vpack.c.b16 %v1341, %v1340
      %v1347 = vpack.c.b16 %v1343, %v1342
      %v1349 = vsel %vm505, %v1344, 0
      %v1352 = vsel %vm505, %v1345, 0
      %v1355 = vsel %vm505, %v1346, 0
      %v1358 = vsel %vm505, %v1347, 0
      %1360 = vmatprep.subr.bf16.mxu0 0
      %1361 = vmatpush1.bf16.msra.mxu0 0
      %1362 = vmatprep.subr.bf16.mxu0 0
      %1363 = vmatpush1.bf16.msra.mxu0 0
      %1364 = vmatprep.subr.bf16.mxu0 0
      %1365 = vmatpush1.bf16.msra.mxu0 0
      %1366 = vmatprep.subr.bf16.mxu0 0
      %1367 = vmatpush1.bf16.msra.mxu0 0
      %1368 = vmatprep.subr.bf16.mxu0 0
      %1369 = vmatpush1.bf16.msra.mxu0 0
      %1370 = vmatprep.subr.bf16.mxu0 0
      %1371 = vmatpush1.bf16.msra.mxu0 0
      %1372 = vmatprep.subr.bf16.mxu0 0
      %1373 = vmatpush1.bf16.msra.mxu0 0
      %1374 = vmatprep.subr.bf16.mxu0 0
      %1375 = vmatpush1.bf16.msra.mxu0 %v503
      %1376 = vmatprep.subr.bf16.mxu0 0
      %1377 = vmatpush2.bf16.msra.mxu0 0
      %1378 = vmatprep.subr.bf16.mxu0 0
      %1379 = vmatpush2.bf16.msra.mxu0 0
      %1380 = vmatprep.subr.bf16.mxu0 0
      %1381 = vmatpush2.bf16.msra.mxu0 0
      %1382 = vmatprep.subr.bf16.mxu0 0
      %1383 = vmatpush2.bf16.msra.mxu0 0
      %1384 = vmatprep.subr.bf16.mxu0 0
      %1385 = vmatpush2.bf16.msra.mxu0 0
      %1386 = vmatprep.subr.bf16.mxu0 0
      %1387 = vmatpush2.bf16.msra.mxu0 0
      %1388 = vmatprep.subr.bf16.mxu0 0
      %1389 = vmatpush2.bf16.msra.mxu0 0
      %1390 = vmatprep.subr.bf16.mxu0 0
      %1391 = vmatpush2.bf16.msra.mxu0 0
      %1392 = vmatprep.mubr.bf16.mxu0 0
      %1393 = vmatmul.mubr.bf16.gmra.mxu0 %v1349
      %v1394 = vpop.f32.mrf.mxu0
      %v1395 = vadd.f32 0.0, %v1394
      %v1396 = vpop.f32.mrf.mxu0
      %v1397 = vpop.f32.mrf.mxu0
      %v1398 = vadd.f32 0.0, %v1397
      %v1399 = vpop.f32.mrf.mxu0
      %1400 = vmatprep.mubr.bf16.mxu0 0
      %1401 = vmatmul.mubr.bf16.gmra.mxu0 %v1352
      %v1402 = vpop.f32.mrf.mxu0
      %v1403 = vadd.f32 0.0, %v1402
      %v1404 = vpop.f32.mrf.mxu0
      %v1405 = vpop.f32.mrf.mxu0
      %v1406 = vadd.f32 0.0, %v1405
      %v1407 = vpop.f32.mrf.mxu0
      %1408 = vmatprep.mubr.bf16.mxu0 0
      %1409 = vmatmul.mubr.bf16.gmra.mxu0 %v1355
      %v1410 = vpop.f32.mrf.mxu0
      %v1411 = vadd.f32 0.0, %v1410
      %v1412 = vpop.f32.mrf.mxu0
      %v1413 = vpop.f32.mrf.mxu0
      %v1414 = vadd.f32 0.0, %v1413
      %v1415 = vpop.f32.mrf.mxu0
      %1416 = vmatprep.mubr.bf16.mxu0 0
      %1417 = vmatmul.mubr.bf16.gmra.mxu0 %v1358
      %v1418 = vpop.f32.mrf.mxu0
      %v1419 = vadd.f32 0.0, %v1418
      %v1420 = vpop.f32.mrf.mxu0
      %v1421 = vpop.f32.mrf.mxu0
      %v1422 = vadd.f32 0.0, %v1421
      %v1423 = vpop.f32.mrf.mxu0
      %1424 = vdwg.mxu0
      %v1425 = vmul.f32 %v1395, %v587
      %v1426 = vmul.f32 %v1398, %v587
      %v1427 = vmul.f32 %v1403, %v587
      %v1428 = vmul.f32 %v1406, %v587
      %v1429 = vmul.f32 %v1411, %v587
      %v1430 = vmul.f32 %v1414, %v587
      %v1431 = vmul.f32 %v1419, %v587
      %v1432 = vmul.f32 %v1422, %v587
      %v1433 = vadd.f32 %v1425, %v600
      %v1434 = vadd.f32 %v1426, %v600
      %v1435 = vadd.f32 %v1427, %v600
      %v1436 = vadd.f32 %v1428, %v600
      %v1437 = vadd.f32 %v1429, %v600
      %v1438 = vadd.f32 %v1430, %v600
      %v1439 = vadd.f32 %v1431, %v600
      %v1440 = vadd.f32 %v1432, %v600
      %v1441 = vmax.f32 %v1433, 0.0
      %v1442 = vmax.f32 %v1434, 0.0
      %v1443 = vmax.f32 %v1435, 0.0
      %v1444 = vmax.f32 %v1436, 0.0
      %v1445 = vmax.f32 %v1437, 0.0
      %v1446 = vmax.f32 %v1438, 0.0
      %v1447 = vmax.f32 %v1439, 0.0
      %v1448 = vmax.f32 %v1440, 0.0
      %v1449 = vld [vmem:[%s1 + $0xc0] sm:$0xff]
      %v1450 = vld [vmem:[%s1 + $0xc8] sm:$0xff]
      %v1451 = vld [vmem:[%s1 + $0xd0] sm:$0xff]
      %v1452 = vld [vmem:[%s1 + $0xd8] sm:$0xff]
      %v1453 = vld [vmem:[%s1 + $0xe0] sm:$0xff]
      %v1454 = vld [vmem:[%s1 + $0xe8] sm:$0xff]
      %v1455 = vld [vmem:[%s1 + $0xf0] sm:$0xff]
      %v1456 = vld [vmem:[%s1 + $0xf8] sm:$0xff]
      %1458 = vset.pattern.permute.xlu0 0
      %1459 = vperm.xlu0 %1458, %v1449
      %v1460 = vpop.permute.xlu0 %1459
      %1463 = vset.pattern.permute.xlu0 0
      %1464 = vperm.xlu0 %1463, %v1450
      %v1465 = vpop.permute.xlu0 %1464
      %1468 = vset.pattern.permute.xlu0 0
      %1469 = vperm.xlu0 %1468, %v1451
      %v1470 = vpop.permute.xlu0 %1469
      %1473 = vset.pattern.permute.xlu0 0
      %1474 = vperm.xlu0 %1473, %v1452
      %v1475 = vpop.permute.xlu0 %1474
      %1478 = vset.pattern.permute.xlu0 0
      %1479 = vperm.xlu0 %1478, %v1453
      %v1480 = vpop.permute.xlu0 %1479
      %1483 = vset.pattern.permute.xlu0 0
      %1484 = vperm.xlu0 %1483, %v1454
      %v1485 = vpop.permute.xlu0 %1484
      %1488 = vset.pattern.permute.xlu0 0
      %1489 = vperm.xlu0 %1488, %v1455
      %v1490 = vpop.permute.xlu0 %1489
      %1493 = vset.pattern.permute.xlu0 0
      %1494 = vperm.xlu0 %1493, %v1456
      %v1495 = vpop.permute.xlu0 %1494
      %v1497 = vmul.f32 %v1441, %v1460
      %v1498 = vmul.f32 %v1442, %v1465
      %v1499 = vmul.f32 %v1443, %v1470
      %v1500 = vmul.f32 %v1444, %v1475
      %v1501 = vmul.f32 %v1445, %v1480
      %v1502 = vmul.f32 %v1446, %v1485
      %v1503 = vmul.f32 %v1447, %v1490
      %v1504 = vmul.f32 %v1448, %v1495
      %v1505 = vpack.c.bf16 %v1498, %v1497
      %v1506 = vpack.c.bf16 %v1500, %v1499
      %v1507 = vpack.c.bf16 %v1502, %v1501
      %v1508 = vpack.c.bf16 %v1504, %v1503
      %s1509 = scalar_lea.vmem %s4, 24
      %v1510 = vld [vmem:[%s1509] sm:$0xf]
      %v1511 = vld [vmem:[%s1509 + $0x4] sm:$0xf]
      %v1514 = vunpack.c.l.b16 %v1510
      %v1515 = vunpack.c.l.b16 %v1511
      %v1516 = vpack.c.b16 %v1515, %v1514
      %v1519 = vsel %vm505, %v1505, 0
      %v1522 = vsel %vm505, %v1506, 0
      %v1525 = vsel %vm505, %v1507, 0
      %v1528 = vsel %vm505, %v1508, 0
      %1530 = vmatprep.subr.bf16.mxu0 0
      %1531 = vmatpush1.bf16.msra.mxu0 0
      %1532 = vmatprep.subr.bf16.mxu0 0
      %1533 = vmatpush1.bf16.msra.mxu0 0
      %1534 = vmatprep.subr.bf16.mxu0 0
      %1535 = vmatpush1.bf16.msra.mxu0 0
      %1536 = vmatprep.subr.bf16.mxu0 0
      %1537 = vmatpush1.bf16.msra.mxu0 0
      %1538 = vmatprep.subr.bf16.mxu0 0
      %1539 = vmatpush1.bf16.msra.mxu0 0
      %1540 = vmatprep.subr.bf16.mxu0 0
      %1541 = vmatpush1.bf16.msra.mxu0 0
      %1542 = vmatprep.subr.bf16.mxu0 0
      %1543 = vmatpush1.bf16.msra.mxu0 0
      %1544 = vmatprep.subr.bf16.mxu0 0
      %1545 = vmatpush1.bf16.msra.mxu0 %v1516
      %1546 = vmatprep.subr.bf16.mxu0 0
      %1547 = vmatpush2.bf16.msra.mxu0 0
      %1548 = vmatprep.subr.bf16.mxu0 0
      %1549 = vmatpush2.bf16.msra.mxu0 0
      %1550 = vmatprep.subr.bf16.mxu0 0
      %1551 = vmatpush2.bf16.msra.mxu0 0
      %1552 = vmatprep.subr.bf16.mxu0 0
      %1553 = vmatpush2.bf16.msra.mxu0 0
      %1554 = vmatprep.subr.bf16.mxu0 0
      %1555 = vmatpush2.bf16.msra.mxu0 0
      %1556 = vmatprep.subr.bf16.mxu0 0
      %1557 = vmatpush2.bf16.msra.mxu0 0
      %1558 = vmatprep.subr.bf16.mxu0 0
      %1559 = vmatpush2.bf16.msra.mxu0 0
      %1560 = vmatprep.subr.bf16.mxu0 0
      %1561 = vmatpush2.bf16.msra.mxu0 0
      %1562 = vmatprep.mubr.bf16.mxu0 0
      %1563 = vmatmul.mubr.bf16.gmra.mxu0 %v1519
      %v1564 = vpop.f32.mrf.mxu0
      %v1565 = vadd.f32 0.0, %v1564
      %v1566 = vpop.f32.mrf.mxu0
      %v1567 = vpop.f32.mrf.mxu0
      %v1568 = vadd.f32 0.0, %v1567
      %v1569 = vpop.f32.mrf.mxu0
      %1570 = vmatprep.mubr.bf16.mxu0 0
      %1571 = vmatmul.mubr.bf16.gmra.mxu0 %v1522
      %v1572 = vpop.f32.mrf.mxu0
      %v1573 = vadd.f32 0.0, %v1572
      %v1574 = vpop.f32.mrf.mxu0
      %v1575 = vpop.f32.mrf.mxu0
      %v1576 = vadd.f32 0.0, %v1575
      %v1577 = vpop.f32.mrf.mxu0
      %1578 = vmatprep.mubr.bf16.mxu0 0
      %1579 = vmatmul.mubr.bf16.gmra.mxu0 %v1525
      %v1580 = vpop.f32.mrf.mxu0
      %v1581 = vadd.f32 0.0, %v1580
      %v1582 = vpop.f32.mrf.mxu0
      %v1583 = vpop.f32.mrf.mxu0
      %v1584 = vadd.f32 0.0, %v1583
      %v1585 = vpop.f32.mrf.mxu0
      %1586 = vmatprep.mubr.bf16.mxu0 0
      %1587 = vmatmul.mubr.bf16.gmra.mxu0 %v1528
      %v1588 = vpop.f32.mrf.mxu0
      %v1589 = vadd.f32 0.0, %v1588
      %v1590 = vpop.f32.mrf.mxu0
      %v1591 = vpop.f32.mrf.mxu0
      %v1592 = vadd.f32 0.0, %v1591
      %v1593 = vpop.f32.mrf.mxu0
      %1594 = vdwg.mxu0
      %v1595 = vadd.f32 %v1312, %v1565
      %v1596 = vadd.f32 %v1313, %v1568
      %v1597 = vadd.f32 %v1314, %v1573
      %v1598 = vadd.f32 %v1315, %v1576
      %v1599 = vadd.f32 %v1316, %v1581
      %v1600 = vadd.f32 %v1317, %v1584
      %v1601 = vadd.f32 %v1318, %v1589
      %v1602 = vadd.f32 %v1319, %v1592
      %v1603 = vld [vmem:[%s462 + $0x80] sm:$0xf]
      %v1604 = vld [vmem:[%s462 + $0x84] sm:$0xf]
      %v1605 = vld [vmem:[%s462 + $0x88] sm:$0xf]
      %v1606 = vld [vmem:[%s462 + $0x8c] sm:$0xf]
      %v1607 = vld [vmem:[%s462 + $0x90] sm:$0xf]
      %v1608 = vld [vmem:[%s462 + $0x94] sm:$0xf]
      %v1609 = vld [vmem:[%s462 + $0x98] sm:$0xf]
      %v1610 = vld [vmem:[%s462 + $0x9c] sm:$0xf]
      %v1619 = vunpack.c.l.b16 %v1603
      %v1620 = vunpack.c.l.b16 %v1604
      %v1621 = vunpack.c.l.b16 %v1605
      %v1622 = vunpack.c.l.b16 %v1606
      %v1623 = vunpack.c.l.b16 %v1607
      %v1624 = vunpack.c.l.b16 %v1608
      %v1625 = vunpack.c.l.b16 %v1609
      %v1626 = vunpack.c.l.b16 %v1610
      %v1627 = vpack.c.b16 %v1620, %v1619
      %v1628 = vpack.c.b16 %v1622, %v1621
      %v1629 = vpack.c.b16 %v1624, %v1623
      %v1630 = vpack.c.b16 %v1626, %v1625
      %v1632 = vsel %vm505, %v1627, 0
      %v1635 = vsel %vm505, %v1628, 0
      %v1638 = vsel %vm505, %v1629, 0
      %v1641 = vsel %vm505, %v1630, 0
      %1643 = vmatprep.subr.bf16.mxu0 0
      %1644 = vmatpush1.bf16.msra.mxu0 0
      %1645 = vmatprep.subr.bf16.mxu0 0
      %1646 = vmatpush1.bf16.msra.mxu0 0
      %1647 = vmatprep.subr.bf16.mxu0 0
      %1648 = vmatpush1.bf16.msra.mxu0 0
      %1649 = vmatprep.subr.bf16.mxu0 0
      %1650 = vmatpush1.bf16.msra.mxu0 0
      %1651 = vmatprep.subr.bf16.mxu0 0
      %1652 = vmatpush1.bf16.msra.mxu0 0
      %1653 = vmatprep.subr.bf16.mxu0 0
      %1654 = vmatpush1.bf16.msra.mxu0 0
      %1655 = vmatprep.subr.bf16.mxu0 0
      %1656 = vmatpush1.bf16.msra.mxu0 0
      %1657 = vmatprep.subr.bf16.mxu0 0
      %1658 = vmatpush1.bf16.msra.mxu0 %v503
      %1659 = vmatprep.subr.bf16.mxu0 0
      %1660 = vmatpush2.bf16.msra.mxu0 0
      %1661 = vmatprep.subr.bf16.mxu0 0
      %1662 = vmatpush2.bf16.msra.mxu0 0
      %1663 = vmatprep.subr.bf16.mxu0 0
      %1664 = vmatpush2.bf16.msra.mxu0 0
      %1665 = vmatprep.subr.bf16.mxu0 0
      %1666 = vmatpush2.bf16.msra.mxu0 0
      %1667 = vmatprep.subr.bf16.mxu0 0
      %1668 = vmatpush2.bf16.msra.mxu0 0
      %1669 = vmatprep.subr.bf16.mxu0 0
      %1670 = vmatpush2.bf16.msra.mxu0 0
      %1671 = vmatprep.subr.bf16.mxu0 0
      %1672 = vmatpush2.bf16.msra.mxu0 0
      %1673 = vmatprep.subr.bf16.mxu0 0
      %1674 = vmatpush2.bf16.msra.mxu0 0
      %1675 = vmatprep.mubr.bf16.mxu0 0
      %1676 = vmatmul.mubr.bf16.gmra.mxu0 %v1632
      %v1677 = vpop.f32.mrf.mxu0
      %v1678 = vadd.f32 0.0, %v1677
      %v1679 = vpop.f32.mrf.mxu0
      %v1680 = vpop.f32.mrf.mxu0
      %v1681 = vadd.f32 0.0, %v1680
      %v1682 = vpop.f32.mrf.mxu0
      %1683 = vmatprep.mubr.bf16.mxu0 0
      %1684 = vmatmul.mubr.bf16.gmra.mxu0 %v1635
      %v1685 = vpop.f32.mrf.mxu0
      %v1686 = vadd.f32 0.0, %v1685
      %v1687 = vpop.f32.mrf.mxu0
      %v1688 = vpop.f32.mrf.mxu0
      %v1689 = vadd.f32 0.0, %v1688
      %v1690 = vpop.f32.mrf.mxu0
      %1691 = vmatprep.mubr.bf16.mxu0 0
      %1692 = vmatmul.mubr.bf16.gmra.mxu0 %v1638
      %v1693 = vpop.f32.mrf.mxu0
      %v1694 = vadd.f32 0.0, %v1693
      %v1695 = vpop.f32.mrf.mxu0
      %v1696 = vpop.f32.mrf.mxu0
      %v1697 = vadd.f32 0.0, %v1696
      %v1698 = vpop.f32.mrf.mxu0
      %1699 = vmatprep.mubr.bf16.mxu0 0
      %1700 = vmatmul.mubr.bf16.gmra.mxu0 %v1641
      %v1701 = vpop.f32.mrf.mxu0
      %v1702 = vadd.f32 0.0, %v1701
      %v1703 = vpop.f32.mrf.mxu0
      %v1704 = vpop.f32.mrf.mxu0
      %v1705 = vadd.f32 0.0, %v1704
      %v1706 = vpop.f32.mrf.mxu0
      %1707 = vdwg.mxu0
      %v1708 = vmul.f32 %v1678, %v587
      %v1709 = vmul.f32 %v1681, %v587
      %v1710 = vmul.f32 %v1686, %v587
      %v1711 = vmul.f32 %v1689, %v587
      %v1712 = vmul.f32 %v1694, %v587
      %v1713 = vmul.f32 %v1697, %v587
      %v1714 = vmul.f32 %v1702, %v587
      %v1715 = vmul.f32 %v1705, %v587
      %v1716 = vadd.f32 %v1708, %v600
      %v1717 = vadd.f32 %v1709, %v600
      %v1718 = vadd.f32 %v1710, %v600
      %v1719 = vadd.f32 %v1711, %v600
      %v1720 = vadd.f32 %v1712, %v600
      %v1721 = vadd.f32 %v1713, %v600
      %v1722 = vadd.f32 %v1714, %v600
      %v1723 = vadd.f32 %v1715, %v600
      %v1724 = vmax.f32 %v1716, 0.0
      %v1725 = vmax.f32 %v1717, 0.0
      %v1726 = vmax.f32 %v1718, 0.0
      %v1727 = vmax.f32 %v1719, 0.0
      %v1728 = vmax.f32 %v1720, 0.0
      %v1729 = vmax.f32 %v1721, 0.0
      %v1730 = vmax.f32 %v1722, 0.0
      %v1731 = vmax.f32 %v1723, 0.0
      %v1732 = vpack.c.bf16 %v1725, %v1724
      %v1733 = vpack.c.bf16 %v1727, %v1726
      %v1734 = vpack.c.bf16 %v1729, %v1728
      %v1735 = vpack.c.bf16 %v1731, %v1730
      %s1736 = scalar_lea.vmem %s4, 32
      %v1737 = vld [vmem:[%s1736] sm:$0xf]
      %v1738 = vld [vmem:[%s1736 + $0x4] sm:$0xf]
      %v1741 = vunpack.c.l.b16 %v1737
      %v1742 = vunpack.c.l.b16 %v1738
      %v1743 = vpack.c.b16 %v1742, %v1741
      %v1746 = vsel %vm505, %v1732, 0
      %v1749 = vsel %vm505, %v1733, 0
      %v1752 = vsel %vm505, %v1734, 0
      %v1755 = vsel %vm505, %v1735, 0
      %1757 = vmatprep.subr.bf16.mxu0 0
      %1758 = vmatpush1.bf16.msra.mxu0 0
      %1759 = vmatprep.subr.bf16.mxu0 0
      %1760 = vmatpush1.bf16.msra.mxu0 0
      %1761 = vmatprep.subr.bf16.mxu0 0
      %1762 = vmatpush1.bf16.msra.mxu0 0
      %1763 = vmatprep.subr.bf16.mxu0 0
      %1764 = vmatpush1.bf16.msra.mxu0 0
      %1765 = vmatprep.subr.bf16.mxu0 0
      %1766 = vmatpush1.bf16.msra.mxu0 0
      %1767 = vmatprep.subr.bf16.mxu0 0
      %1768 = vmatpush1.bf16.msra.mxu0 0
      %1769 = vmatprep.subr.bf16.mxu0 0
      %1770 = vmatpush1.bf16.msra.mxu0 0
      %1771 = vmatprep.subr.bf16.mxu0 0
      %1772 = vmatpush1.bf16.msra.mxu0 %v1743
      %1773 = vmatprep.subr.bf16.mxu0 0
      %1774 = vmatpush2.bf16.msra.mxu0 0
      %1775 = vmatprep.subr.bf16.mxu0 0
      %1776 = vmatpush2.bf16.msra.mxu0 0
      %1777 = vmatprep.subr.bf16.mxu0 0
      %1778 = vmatpush2.bf16.msra.mxu0 0
      %1779 = vmatprep.subr.bf16.mxu0 0
      %1780 = vmatpush2.bf16.msra.mxu0 0
      %1781 = vmatprep.subr.bf16.mxu0 0
      %1782 = vmatpush2.bf16.msra.mxu0 0
      %1783 = vmatprep.subr.bf16.mxu0 0
      %1784 = vmatpush2.bf16.msra.mxu0 0
      %1785 = vmatprep.subr.bf16.mxu0 0
      %1786 = vmatpush2.bf16.msra.mxu0 0
      %1787 = vmatprep.subr.bf16.mxu0 0
      %1788 = vmatpush2.bf16.msra.mxu0 0
      %1789 = vmatprep.mubr.bf16.mxu0 0
      %1790 = vmatmul.mubr.bf16.gmra.mxu0 %v1746
      %v1791 = vpop.f32.mrf.mxu0
      %v1792 = vadd.f32 0.0, %v1791
      %v1793 = vpop.f32.mrf.mxu0
      %v1794 = vpop.f32.mrf.mxu0
      %v1795 = vadd.f32 0.0, %v1794
      %v1796 = vpop.f32.mrf.mxu0
      %1797 = vmatprep.mubr.bf16.mxu0 0
      %1798 = vmatmul.mubr.bf16.gmra.mxu0 %v1749
      %v1799 = vpop.f32.mrf.mxu0
      %v1800 = vadd.f32 0.0, %v1799
      %v1801 = vpop.f32.mrf.mxu0
      %v1802 = vpop.f32.mrf.mxu0
      %v1803 = vadd.f32 0.0, %v1802
      %v1804 = vpop.f32.mrf.mxu0
      %1805 = vmatprep.mubr.bf16.mxu0 0
      %1806 = vmatmul.mubr.bf16.gmra.mxu0 %v1752
      %v1807 = vpop.f32.mrf.mxu0
      %v1808 = vadd.f32 0.0, %v1807
      %v1809 = vpop.f32.mrf.mxu0
      %v1810 = vpop.f32.mrf.mxu0
      %v1811 = vadd.f32 0.0, %v1810
      %v1812 = vpop.f32.mrf.mxu0
      %1813 = vmatprep.mubr.bf16.mxu0 0
      %1814 = vmatmul.mubr.bf16.gmra.mxu0 %v1755
      %v1815 = vpop.f32.mrf.mxu0
      %v1816 = vadd.f32 0.0, %v1815
      %v1817 = vpop.f32.mrf.mxu0
      %v1818 = vpop.f32.mrf.mxu0
      %v1819 = vadd.f32 0.0, %v1818
      %v1820 = vpop.f32.mrf.mxu0
      %1821 = vdwg.mxu0
      %v1822 = vadd.f32 %v1595, %v1792
      %v1823 = vadd.f32 %v1596, %v1795
      %v1824 = vadd.f32 %v1597, %v1800
      %v1825 = vadd.f32 %v1598, %v1803
      %v1826 = vadd.f32 %v1599, %v1808
      %v1827 = vadd.f32 %v1600, %v1811
      %v1828 = vadd.f32 %v1601, %v1816
      %v1829 = vadd.f32 %v1602, %v1819
      %v1830 = vld [vmem:[%s462 + $0xa0] sm:$0xf]
      %v1831 = vld [vmem:[%s462 + $0xa4] sm:$0xf]
      %v1832 = vld [vmem:[%s462 + $0xa8] sm:$0xf]
      %v1833 = vld [vmem:[%s462 + $0xac] sm:$0xf]
      %v1834 = vld [vmem:[%s462 + $0xb0] sm:$0xf]
      %v1835 = vld [vmem:[%s462 + $0xb4] sm:$0xf]
      %v1836 = vld [vmem:[%s462 + $0xb8] sm:$0xf]
      %v1837 = vld [vmem:[%s462 + $0xbc] sm:$0xf]
      %v1846 = vunpack.c.l.b16 %v1830
      %v1847 = vunpack.c.l.b16 %v1831
      %v1848 = vunpack.c.l.b16 %v1832
      %v1849 = vunpack.c.l.b16 %v1833
      %v1850 = vunpack.c.l.b16 %v1834
      %v1851 = vunpack.c.l.b16 %v1835
      %v1852 = vunpack.c.l.b16 %v1836
      %v1853 = vunpack.c.l.b16 %v1837
      %v1854 = vpack.c.b16 %v1847, %v1846
      %v1855 = vpack.c.b16 %v1849, %v1848
      %v1856 = vpack.c.b16 %v1851, %v1850
      %v1857 = vpack.c.b16 %v1853, %v1852
      %v1859 = vsel %vm505, %v1854, 0
      %v1862 = vsel %vm505, %v1855, 0
      %v1865 = vsel %vm505, %v1856, 0
      %v1868 = vsel %vm505, %v1857, 0
      %1870 = vmatprep.subr.bf16.mxu0 0
      %1871 = vmatpush1.bf16.msra.mxu0 0
      %1872 = vmatprep.subr.bf16.mxu0 0
      %1873 = vmatpush1.bf16.msra.mxu0 0
      %1874 = vmatprep.subr.bf16.mxu0 0
      %1875 = vmatpush1.bf16.msra.mxu0 0
      %1876 = vmatprep.subr.bf16.mxu0 0
      %1877 = vmatpush1.bf16.msra.mxu0 0
      %1878 = vmatprep.subr.bf16.mxu0 0
      %1879 = vmatpush1.bf16.msra.mxu0 0
      %1880 = vmatprep.subr.bf16.mxu0 0
      %1881 = vmatpush1.bf16.msra.mxu0 0
      %1882 = vmatprep.subr.bf16.mxu0 0
      %1883 = vmatpush1.bf16.msra.mxu0 0
      %1884 = vmatprep.subr.bf16.mxu0 0
      %1885 = vmatpush1.bf16.msra.mxu0 %v503
      %1886 = vmatprep.subr.bf16.mxu0 0
      %1887 = vmatpush2.bf16.msra.mxu0 0
      %1888 = vmatprep.subr.bf16.mxu0 0
      %1889 = vmatpush2.bf16.msra.mxu0 0
      %1890 = vmatprep.subr.bf16.mxu0 0
      %1891 = vmatpush2.bf16.msra.mxu0 0
      %1892 = vmatprep.subr.bf16.mxu0 0
      %1893 = vmatpush2.bf16.msra.mxu0 0
      %1894 = vmatprep.subr.bf16.mxu0 0
      %1895 = vmatpush2.bf16.msra.mxu0 0
      %1896 = vmatprep.subr.bf16.mxu0 0
      %1897 = vmatpush2.bf16.msra.mxu0 0
      %1898 = vmatprep.subr.bf16.mxu0 0
      %1899 = vmatpush2.bf16.msra.mxu0 0
      %1900 = vmatprep.subr.bf16.mxu0 0
      %1901 = vmatpush2.bf16.msra.mxu0 0
      %1902 = vmatprep.mubr.bf16.mxu0 0
      %1903 = vmatmul.mubr.bf16.gmra.mxu0 %v1859
      %v1904 = vpop.f32.mrf.mxu0
      %v1905 = vadd.f32 0.0, %v1904
      %v1906 = vpop.f32.mrf.mxu0
      %v1907 = vpop.f32.mrf.mxu0
      %v1908 = vadd.f32 0.0, %v1907
      %v1909 = vpop.f32.mrf.mxu0
      %1910 = vmatprep.mubr.bf16.mxu0 0
      %1911 = vmatmul.mubr.bf16.gmra.mxu0 %v1862
      %v1912 = vpop.f32.mrf.mxu0
      %v1913 = vadd.f32 0.0, %v1912
      %v1914 = vpop.f32.mrf.mxu0
      %v1915 = vpop.f32.mrf.mxu0
      %v1916 = vadd.f32 0.0, %v1915
      %v1917 = vpop.f32.mrf.mxu0
      %1918 = vmatprep.mubr.bf16.mxu0 0
      %1919 = vmatmul.mubr.bf16.gmra.mxu0 %v1865
      %v1920 = vpop.f32.mrf.mxu0
      %v1921 = vadd.f32 0.0, %v1920
      %v1922 = vpop.f32.mrf.mxu0
      %v1923 = vpop.f32.mrf.mxu0
      %v1924 = vadd.f32 0.0, %v1923
      %v1925 = vpop.f32.mrf.mxu0
      %1926 = vmatprep.mubr.bf16.mxu0 0
      %1927 = vmatmul.mubr.bf16.gmra.mxu0 %v1868
      %v1928 = vpop.f32.mrf.mxu0
      %v1929 = vadd.f32 0.0, %v1928
      %v1930 = vpop.f32.mrf.mxu0
      %v1931 = vpop.f32.mrf.mxu0
      %v1932 = vadd.f32 0.0, %v1931
      %v1933 = vpop.f32.mrf.mxu0
      %1934 = vdwg.mxu0
      %v1935 = vmul.f32 %v1905, %v587
      %v1936 = vmul.f32 %v1908, %v587
      %v1937 = vmul.f32 %v1913, %v587
      %v1938 = vmul.f32 %v1916, %v587
      %v1939 = vmul.f32 %v1921, %v587
      %v1940 = vmul.f32 %v1924, %v587
      %v1941 = vmul.f32 %v1929, %v587
      %v1942 = vmul.f32 %v1932, %v587
      %v1943 = vadd.f32 %v1935, %v600
      %v1944 = vadd.f32 %v1936, %v600
      %v1945 = vadd.f32 %v1937, %v600
      %v1946 = vadd.f32 %v1938, %v600
      %v1947 = vadd.f32 %v1939, %v600
      %v1948 = vadd.f32 %v1940, %v600
      %v1949 = vadd.f32 %v1941, %v600
      %v1950 = vadd.f32 %v1942, %v600
      %v1951 = vmax.f32 %v1943, 0.0
      %v1952 = vmax.f32 %v1944, 0.0
      %v1953 = vmax.f32 %v1945, 0.0
      %v1954 = vmax.f32 %v1946, 0.0
      %v1955 = vmax.f32 %v1947, 0.0
      %v1956 = vmax.f32 %v1948, 0.0
      %v1957 = vmax.f32 %v1949, 0.0
      %v1958 = vmax.f32 %v1950, 0.0
      %v1959 = vpack.c.bf16 %v1952, %v1951
      %v1960 = vpack.c.bf16 %v1954, %v1953
      %v1961 = vpack.c.bf16 %v1956, %v1955
      %v1962 = vpack.c.bf16 %v1958, %v1957
      %s1963 = scalar_lea.vmem %s4, 40
      %v1964 = vld [vmem:[%s1963] sm:$0xf]
      %v1965 = vld [vmem:[%s1963 + $0x4] sm:$0xf]
      %v1968 = vunpack.c.l.b16 %v1964
      %v1969 = vunpack.c.l.b16 %v1965
      %v1970 = vpack.c.b16 %v1969, %v1968
      %v1973 = vsel %vm505, %v1959, 0
      %v1976 = vsel %vm505, %v1960, 0
      %v1979 = vsel %vm505, %v1961, 0
      %v1982 = vsel %vm505, %v1962, 0
      %1984 = vmatprep.subr.bf16.mxu0 0
      %1985 = vmatpush1.bf16.msra.mxu0 0
      %1986 = vmatprep.subr.bf16.mxu0 0
      %1987 = vmatpush1.bf16.msra.mxu0 0
      %1988 = vmatprep.subr.bf16.mxu0 0
      %1989 = vmatpush1.bf16.msra.mxu0 0
      %1990 = vmatprep.subr.bf16.mxu0 0
      %1991 = vmatpush1.bf16.msra.mxu0 0
      %1992 = vmatprep.subr.bf16.mxu0 0
      %1993 = vmatpush1.bf16.msra.mxu0 0
      %1994 = vmatprep.subr.bf16.mxu0 0
      %1995 = vmatpush1.bf16.msra.mxu0 0
      %1996 = vmatprep.subr.bf16.mxu0 0
      %1997 = vmatpush1.bf16.msra.mxu0 0
      %1998 = vmatprep.subr.bf16.mxu0 0
      %1999 = vmatpush1.bf16.msra.mxu0 %v1970
      %2000 = vmatprep.subr.bf16.mxu0 0
      %2001 = vmatpush2.bf16.msra.mxu0 0
      %2002 = vmatprep.subr.bf16.mxu0 0
      %2003 = vmatpush2.bf16.msra.mxu0 0
      %2004 = vmatprep.subr.bf16.mxu0 0
      %2005 = vmatpush2.bf16.msra.mxu0 0
      %2006 = vmatprep.subr.bf16.mxu0 0
      %2007 = vmatpush2.bf16.msra.mxu0 0
      %2008 = vmatprep.subr.bf16.mxu0 0
      %2009 = vmatpush2.bf16.msra.mxu0 0
      %2010 = vmatprep.subr.bf16.mxu0 0
      %2011 = vmatpush2.bf16.msra.mxu0 0
      %2012 = vmatprep.subr.bf16.mxu0 0
      %2013 = vmatpush2.bf16.msra.mxu0 0
      %2014 = vmatprep.subr.bf16.mxu0 0
      %2015 = vmatpush2.bf16.msra.mxu0 0
      %2016 = vmatprep.mubr.bf16.mxu0 0
      %2017 = vmatmul.mubr.bf16.gmra.mxu0 %v1973
      %v2018 = vpop.f32.mrf.mxu0
      %v2019 = vadd.f32 0.0, %v2018
      %v2020 = vpop.f32.mrf.mxu0
      %v2021 = vpop.f32.mrf.mxu0
      %v2022 = vadd.f32 0.0, %v2021
      %v2023 = vpop.f32.mrf.mxu0
      %2024 = vmatprep.mubr.bf16.mxu0 0
      %2025 = vmatmul.mubr.bf16.gmra.mxu0 %v1976
      %v2026 = vpop.f32.mrf.mxu0
      %v2027 = vadd.f32 0.0, %v2026
      %v2028 = vpop.f32.mrf.mxu0
      %v2029 = vpop.f32.mrf.mxu0
      %v2030 = vadd.f32 0.0, %v2029
      %v2031 = vpop.f32.mrf.mxu0
      %2032 = vmatprep.mubr.bf16.mxu0 0
      %2033 = vmatmul.mubr.bf16.gmra.mxu0 %v1979
      %v2034 = vpop.f32.mrf.mxu0
      %v2035 = vadd.f32 0.0, %v2034
      %v2036 = vpop.f32.mrf.mxu0
      %v2037 = vpop.f32.mrf.mxu0
      %v2038 = vadd.f32 0.0, %v2037
      %v2039 = vpop.f32.mrf.mxu0
      %2040 = vmatprep.mubr.bf16.mxu0 0
      %2041 = vmatmul.mubr.bf16.gmra.mxu0 %v1982
      %v2042 = vpop.f32.mrf.mxu0
      %v2043 = vadd.f32 0.0, %v2042
      %v2044 = vpop.f32.mrf.mxu0
      %v2045 = vpop.f32.mrf.mxu0
      %v2046 = vadd.f32 0.0, %v2045
      %v2047 = vpop.f32.mrf.mxu0
      %2048 = vdwg.mxu0
      %v2049 = vadd.f32 %v1822, %v2019
      %v2050 = vadd.f32 %v1823, %v2022
      %v2051 = vadd.f32 %v1824, %v2027
      %v2052 = vadd.f32 %v1825, %v2030
      %v2053 = vadd.f32 %v1826, %v2035
      %v2054 = vadd.f32 %v1827, %v2038
      %v2055 = vadd.f32 %v1828, %v2043
      %v2056 = vadd.f32 %v1829, %v2046
      %v2057 = vld [vmem:[%s462 + $0xc0] sm:$0xf]
      %v2058 = vld [vmem:[%s462 + $0xc4] sm:$0xf]
      %v2059 = vld [vmem:[%s462 + $0xc8] sm:$0xf]
      %v2060 = vld [vmem:[%s462 + $0xcc] sm:$0xf]
      %v2061 = vld [vmem:[%s462 + $0xd0] sm:$0xf]
      %v2062 = vld [vmem:[%s462 + $0xd4] sm:$0xf]
      %v2063 = vld [vmem:[%s462 + $0xd8] sm:$0xf]
      %v2064 = vld [vmem:[%s462 + $0xdc] sm:$0xf]
      %v2073 = vunpack.c.l.b16 %v2057
      %v2074 = vunpack.c.l.b16 %v2058
      %v2075 = vunpack.c.l.b16 %v2059
      %v2076 = vunpack.c.l.b16 %v2060
      %v2077 = vunpack.c.l.b16 %v2061
      %v2078 = vunpack.c.l.b16 %v2062
      %v2079 = vunpack.c.l.b16 %v2063
      %v2080 = vunpack.c.l.b16 %v2064
      %v2081 = vpack.c.b16 %v2074, %v2073
      %v2082 = vpack.c.b16 %v2076, %v2075
      %v2083 = vpack.c.b16 %v2078, %v2077
      %v2084 = vpack.c.b16 %v2080, %v2079
      %v2086 = vsel %vm505, %v2081, 0
      %v2089 = vsel %vm505, %v2082, 0
      %v2092 = vsel %vm505, %v2083, 0
      %v2095 = vsel %vm505, %v2084, 0
      %2097 = vmatprep.subr.bf16.mxu0 0
      %2098 = vmatpush1.bf16.msra.mxu0 0
      %2099 = vmatprep.subr.bf16.mxu0 0
      %2100 = vmatpush1.bf16.msra.mxu0 0
      %2101 = vmatprep.subr.bf16.mxu0 0
      %2102 = vmatpush1.bf16.msra.mxu0 0
      %2103 = vmatprep.subr.bf16.mxu0 0
      %2104 = vmatpush1.bf16.msra.mxu0 0
      %2105 = vmatprep.subr.bf16.mxu0 0
      %2106 = vmatpush1.bf16.msra.mxu0 0
      %2107 = vmatprep.subr.bf16.mxu0 0
      %2108 = vmatpush1.bf16.msra.mxu0 0
      %2109 = vmatprep.subr.bf16.mxu0 0
      %2110 = vmatpush1.bf16.msra.mxu0 0
      %2111 = vmatprep.subr.bf16.mxu0 0
      %2112 = vmatpush1.bf16.msra.mxu0 %v503
      %2113 = vmatprep.subr.bf16.mxu0 0
      %2114 = vmatpush2.bf16.msra.mxu0 0
      %2115 = vmatprep.subr.bf16.mxu0 0
      %2116 = vmatpush2.bf16.msra.mxu0 0
      %2117 = vmatprep.subr.bf16.mxu0 0
      %2118 = vmatpush2.bf16.msra.mxu0 0
      %2119 = vmatprep.subr.bf16.mxu0 0
      %2120 = vmatpush2.bf16.msra.mxu0 0
      %2121 = vmatprep.subr.bf16.mxu0 0
      %2122 = vmatpush2.bf16.msra.mxu0 0
      %2123 = vmatprep.subr.bf16.mxu0 0
      %2124 = vmatpush2.bf16.msra.mxu0 0
      %2125 = vmatprep.subr.bf16.mxu0 0
      %2126 = vmatpush2.bf16.msra.mxu0 0
      %2127 = vmatprep.subr.bf16.mxu0 0
      %2128 = vmatpush2.bf16.msra.mxu0 0
      %2129 = vmatprep.mubr.bf16.mxu0 0
      %2130 = vmatmul.mubr.bf16.gmra.mxu0 %v2086
      %v2131 = vpop.f32.mrf.mxu0
      %v2132 = vadd.f32 0.0, %v2131
      %v2133 = vpop.f32.mrf.mxu0
      %v2134 = vpop.f32.mrf.mxu0
      %v2135 = vadd.f32 0.0, %v2134
      %v2136 = vpop.f32.mrf.mxu0
      %2137 = vmatprep.mubr.bf16.mxu0 0
      %2138 = vmatmul.mubr.bf16.gmra.mxu0 %v2089
      %v2139 = vpop.f32.mrf.mxu0
      %v2140 = vadd.f32 0.0, %v2139
      %v2141 = vpop.f32.mrf.mxu0
      %v2142 = vpop.f32.mrf.mxu0
      %v2143 = vadd.f32 0.0, %v2142
      %v2144 = vpop.f32.mrf.mxu0
      %2145 = vmatprep.mubr.bf16.mxu0 0
      %2146 = vmatmul.mubr.bf16.gmra.mxu0 %v2092
      %v2147 = vpop.f32.mrf.mxu0
      %v2148 = vadd.f32 0.0, %v2147
      %v2149 = vpop.f32.mrf.mxu0
      %v2150 = vpop.f32.mrf.mxu0
      %v2151 = vadd.f32 0.0, %v2150
      %v2152 = vpop.f32.mrf.mxu0
      %2153 = vmatprep.mubr.bf16.mxu0 0
      %2154 = vmatmul.mubr.bf16.gmra.mxu0 %v2095
      %v2155 = vpop.f32.mrf.mxu0
      %v2156 = vadd.f32 0.0, %v2155
      %v2157 = vpop.f32.mrf.mxu0
      %v2158 = vpop.f32.mrf.mxu0
      %v2159 = vadd.f32 0.0, %v2158
      %v2160 = vpop.f32.mrf.mxu0
      %2161 = vdwg.mxu0
      %v2162 = vmul.f32 %v2132, %v587
      %v2163 = vmul.f32 %v2135, %v587
      %v2164 = vmul.f32 %v2140, %v587
      %v2165 = vmul.f32 %v2143, %v587
      %v2166 = vmul.f32 %v2148, %v587
      %v2167 = vmul.f32 %v2151, %v587
      %v2168 = vmul.f32 %v2156, %v587
      %v2169 = vmul.f32 %v2159, %v587
      %v2170 = vadd.f32 %v2162, %v600
      %v2171 = vadd.f32 %v2163, %v600
      %v2172 = vadd.f32 %v2164, %v600
      %v2173 = vadd.f32 %v2165, %v600
      %v2174 = vadd.f32 %v2166, %v600
      %v2175 = vadd.f32 %v2167, %v600
      %v2176 = vadd.f32 %v2168, %v600
      %v2177 = vadd.f32 %v2169, %v600
      %v2178 = vmax.f32 %v2170, 0.0
      %v2179 = vmax.f32 %v2171, 0.0
      %v2180 = vmax.f32 %v2172, 0.0
      %v2181 = vmax.f32 %v2173, 0.0
      %v2182 = vmax.f32 %v2174, 0.0
      %v2183 = vmax.f32 %v2175, 0.0
      %v2184 = vmax.f32 %v2176, 0.0
      %v2185 = vmax.f32 %v2177, 0.0
      %v2186 = vld [vmem:[%s1 + $0x180] sm:$0xff]
      %v2187 = vld [vmem:[%s1 + $0x188] sm:$0xff]
      %v2188 = vld [vmem:[%s1 + $0x190] sm:$0xff]
      %v2189 = vld [vmem:[%s1 + $0x198] sm:$0xff]
      %v2190 = vld [vmem:[%s1 + $0x1a0] sm:$0xff]
      %v2191 = vld [vmem:[%s1 + $0x1a8] sm:$0xff]
      %v2192 = vld [vmem:[%s1 + $0x1b0] sm:$0xff]
      %v2193 = vld [vmem:[%s1 + $0x1b8] sm:$0xff]
      %2195 = vset.pattern.permute.xlu0 0
      %2196 = vperm.xlu0 %2195, %v2186
      %v2197 = vpop.permute.xlu0 %2196
      %2200 = vset.pattern.permute.xlu0 0
      %2201 = vperm.xlu0 %2200, %v2187
      %v2202 = vpop.permute.xlu0 %2201
      %2205 = vset.pattern.permute.xlu0 0
      %2206 = vperm.xlu0 %2205, %v2188
      %v2207 = vpop.permute.xlu0 %2206
      %2210 = vset.pattern.permute.xlu0 0
      %2211 = vperm.xlu0 %2210, %v2189
      %v2212 = vpop.permute.xlu0 %2211
      %2215 = vset.pattern.permute.xlu0 0
      %2216 = vperm.xlu0 %2215, %v2190
      %v2217 = vpop.permute.xlu0 %2216
      %2220 = vset.pattern.permute.xlu0 0
      %2221 = vperm.xlu0 %2220, %v2191
      %v2222 = vpop.permute.xlu0 %2221
      %2225 = vset.pattern.permute.xlu0 0
      %2226 = vperm.xlu0 %2225, %v2192
      %v2227 = vpop.permute.xlu0 %2226
      %2230 = vset.pattern.permute.xlu0 0
      %2231 = vperm.xlu0 %2230, %v2193
      %v2232 = vpop.permute.xlu0 %2231
      %v2234 = vmul.f32 %v2178, %v2197
      %v2235 = vmul.f32 %v2179, %v2202
      %v2236 = vmul.f32 %v2180, %v2207
      %v2237 = vmul.f32 %v2181, %v2212
      %v2238 = vmul.f32 %v2182, %v2217
      %v2239 = vmul.f32 %v2183, %v2222
      %v2240 = vmul.f32 %v2184, %v2227
      %v2241 = vmul.f32 %v2185, %v2232
      %v2242 = vpack.c.bf16 %v2235, %v2234
      %v2243 = vpack.c.bf16 %v2237, %v2236
      %v2244 = vpack.c.bf16 %v2239, %v2238
      %v2245 = vpack.c.bf16 %v2241, %v2240
      %s2246 = scalar_lea.vmem %s4, 48
      %v2247 = vld [vmem:[%s2246] sm:$0xf]
      %v2248 = vld [vmem:[%s2246 + $0x4] sm:$0xf]
      %v2251 = vunpack.c.l.b16 %v2247
      %v2252 = vunpack.c.l.b16 %v2248
      %v2253 = vpack.c.b16 %v2252, %v2251
      %v2256 = vsel %vm505, %v2242, 0
      %v2259 = vsel %vm505, %v2243, 0
      %v2262 = vsel %vm505, %v2244, 0
      %v2265 = vsel %vm505, %v2245, 0
      %2267 = vmatprep.subr.bf16.mxu0 0
      %2268 = vmatpush1.bf16.msra.mxu0 0
      %2269 = vmatprep.subr.bf16.mxu0 0
      %2270 = vmatpush1.bf16.msra.mxu0 0
      %2271 = vmatprep.subr.bf16.mxu0 0
      %2272 = vmatpush1.bf16.msra.mxu0 0
      %2273 = vmatprep.subr.bf16.mxu0 0
      %2274 = vmatpush1.bf16.msra.mxu0 0
      %2275 = vmatprep.subr.bf16.mxu0 0
      %2276 = vmatpush1.bf16.msra.mxu0 0
      %2277 = vmatprep.subr.bf16.mxu0 0
      %2278 = vmatpush1.bf16.msra.mxu0 0
      %2279 = vmatprep.subr.bf16.mxu0 0
      %2280 = vmatpush1.bf16.msra.mxu0 0
      %2281 = vmatprep.subr.bf16.mxu0 0
      %2282 = vmatpush1.bf16.msra.mxu0 %v2253
      %2283 = vmatprep.subr.bf16.mxu0 0
      %2284 = vmatpush2.bf16.msra.mxu0 0
      %2285 = vmatprep.subr.bf16.mxu0 0
      %2286 = vmatpush2.bf16.msra.mxu0 0
      %2287 = vmatprep.subr.bf16.mxu0 0
      %2288 = vmatpush2.bf16.msra.mxu0 0
      %2289 = vmatprep.subr.bf16.mxu0 0
      %2290 = vmatpush2.bf16.msra.mxu0 0
      %2291 = vmatprep.subr.bf16.mxu0 0
      %2292 = vmatpush2.bf16.msra.mxu0 0
      %2293 = vmatprep.subr.bf16.mxu0 0
      %2294 = vmatpush2.bf16.msra.mxu0 0
      %2295 = vmatprep.subr.bf16.mxu0 0
      %2296 = vmatpush2.bf16.msra.mxu0 0
      %2297 = vmatprep.subr.bf16.mxu0 0
      %2298 = vmatpush2.bf16.msra.mxu0 0
      %2299 = vmatprep.mubr.bf16.mxu0 0
      %2300 = vmatmul.mubr.bf16.gmra.mxu0 %v2256
      %v2301 = vpop.f32.mrf.mxu0
      %v2302 = vadd.f32 0.0, %v2301
      %v2303 = vpop.f32.mrf.mxu0
      %v2304 = vpop.f32.mrf.mxu0
      %v2305 = vadd.f32 0.0, %v2304
      %v2306 = vpop.f32.mrf.mxu0
      %2307 = vmatprep.mubr.bf16.mxu0 0
      %2308 = vmatmul.mubr.bf16.gmra.mxu0 %v2259
      %v2309 = vpop.f32.mrf.mxu0
      %v2310 = vadd.f32 0.0, %v2309
      %v2311 = vpop.f32.mrf.mxu0
      %v2312 = vpop.f32.mrf.mxu0
      %v2313 = vadd.f32 0.0, %v2312
      %v2314 = vpop.f32.mrf.mxu0
      %2315 = vmatprep.mubr.bf16.mxu0 0
      %2316 = vmatmul.mubr.bf16.gmra.mxu0 %v2262
      %v2317 = vpop.f32.mrf.mxu0
      %v2318 = vadd.f32 0.0, %v2317
      %v2319 = vpop.f32.mrf.mxu0
      %v2320 = vpop.f32.mrf.mxu0
      %v2321 = vadd.f32 0.0, %v2320
      %v2322 = vpop.f32.mrf.mxu0
      %2323 = vmatprep.mubr.bf16.mxu0 0
      %2324 = vmatmul.mubr.bf16.gmra.mxu0 %v2265
      %v2325 = vpop.f32.mrf.mxu0
      %v2326 = vadd.f32 0.0, %v2325
      %v2327 = vpop.f32.mrf.mxu0
      %v2328 = vpop.f32.mrf.mxu0
      %v2329 = vadd.f32 0.0, %v2328
      %v2330 = vpop.f32.mrf.mxu0
      %2331 = vdwg.mxu0
      %v2332 = vadd.f32 %v2049, %v2302
      %v2333 = vadd.f32 %v2050, %v2305
      %v2334 = vadd.f32 %v2051, %v2310
      %v2335 = vadd.f32 %v2052, %v2313
      %v2336 = vadd.f32 %v2053, %v2318
      %v2337 = vadd.f32 %v2054, %v2321
      %v2338 = vadd.f32 %v2055, %v2326
      %v2339 = vadd.f32 %v2056, %v2329
      %v2340 = vld [vmem:[%s462 + $0xe0] sm:$0xf]
      %v2341 = vld [vmem:[%s462 + $0xe4] sm:$0xf]
      %v2342 = vld [vmem:[%s462 + $0xe8] sm:$0xf]
      %v2343 = vld [vmem:[%s462 + $0xec] sm:$0xf]
      %v2344 = vld [vmem:[%s462 + $0xf0] sm:$0xf]
      %v2345 = vld [vmem:[%s462 + $0xf4] sm:$0xf]
      %v2346 = vld [vmem:[%s462 + $0xf8] sm:$0xf]
      %v2347 = vld [vmem:[%s462 + $0xfc] sm:$0xf]
      %v2356 = vunpack.c.l.b16 %v2340
      %v2357 = vunpack.c.l.b16 %v2341
      %v2358 = vunpack.c.l.b16 %v2342
      %v2359 = vunpack.c.l.b16 %v2343
      %v2360 = vunpack.c.l.b16 %v2344
      %v2361 = vunpack.c.l.b16 %v2345
      %v2362 = vunpack.c.l.b16 %v2346
      %v2363 = vunpack.c.l.b16 %v2347
      %v2364 = vpack.c.b16 %v2357, %v2356
      %v2365 = vpack.c.b16 %v2359, %v2358
      %v2366 = vpack.c.b16 %v2361, %v2360
      %v2367 = vpack.c.b16 %v2363, %v2362
      %v2369 = vsel %vm505, %v2364, 0
      %v2372 = vsel %vm505, %v2365, 0
      %v2375 = vsel %vm505, %v2366, 0
      %v2378 = vsel %vm505, %v2367, 0
      %2380 = vmatprep.subr.bf16.mxu0 0
      %2381 = vmatpush1.bf16.msra.mxu0 0
      %2382 = vmatprep.subr.bf16.mxu0 0
      %2383 = vmatpush1.bf16.msra.mxu0 0
      %2384 = vmatprep.subr.bf16.mxu0 0
      %2385 = vmatpush1.bf16.msra.mxu0 0
      %2386 = vmatprep.subr.bf16.mxu0 0
      %2387 = vmatpush1.bf16.msra.mxu0 0
      %2388 = vmatprep.subr.bf16.mxu0 0
      %2389 = vmatpush1.bf16.msra.mxu0 0
      %2390 = vmatprep.subr.bf16.mxu0 0
      %2391 = vmatpush1.bf16.msra.mxu0 0
      %2392 = vmatprep.subr.bf16.mxu0 0
      %2393 = vmatpush1.bf16.msra.mxu0 0
      %2394 = vmatprep.subr.bf16.mxu0 0
      %2395 = vmatpush1.bf16.msra.mxu0 %v503
      %2396 = vmatprep.subr.bf16.mxu0 0
      %2397 = vmatpush2.bf16.msra.mxu0 0
      %2398 = vmatprep.subr.bf16.mxu0 0
      %2399 = vmatpush2.bf16.msra.mxu0 0
      %2400 = vmatprep.subr.bf16.mxu0 0
      %2401 = vmatpush2.bf16.msra.mxu0 0
      %2402 = vmatprep.subr.bf16.mxu0 0
      %2403 = vmatpush2.bf16.msra.mxu0 0
      %2404 = vmatprep.subr.bf16.mxu0 0
      %2405 = vmatpush2.bf16.msra.mxu0 0
      %2406 = vmatprep.subr.bf16.mxu0 0
      %2407 = vmatpush2.bf16.msra.mxu0 0
      %2408 = vmatprep.subr.bf16.mxu0 0
      %2409 = vmatpush2.bf16.msra.mxu0 0
      %2410 = vmatprep.subr.bf16.mxu0 0
      %2411 = vmatpush2.bf16.msra.mxu0 0
      %2412 = vmatprep.mubr.bf16.mxu0 0
      %2413 = vmatmul.mubr.bf16.gmra.mxu0 %v2369
      %v2414 = vpop.f32.mrf.mxu0
      %v2415 = vadd.f32 0.0, %v2414
      %v2416 = vpop.f32.mrf.mxu0
      %v2417 = vpop.f32.mrf.mxu0
      %v2418 = vadd.f32 0.0, %v2417
      %v2419 = vpop.f32.mrf.mxu0
      %2420 = vmatprep.mubr.bf16.mxu0 0
      %2421 = vmatmul.mubr.bf16.gmra.mxu0 %v2372
      %v2422 = vpop.f32.mrf.mxu0
      %v2423 = vadd.f32 0.0, %v2422
      %v2424 = vpop.f32.mrf.mxu0
      %v2425 = vpop.f32.mrf.mxu0
      %v2426 = vadd.f32 0.0, %v2425
      %v2427 = vpop.f32.mrf.mxu0
      %2428 = vmatprep.mubr.bf16.mxu0 0
      %2429 = vmatmul.mubr.bf16.gmra.mxu0 %v2375
      %v2430 = vpop.f32.mrf.mxu0
      %v2431 = vadd.f32 0.0, %v2430
      %v2432 = vpop.f32.mrf.mxu0
      %v2433 = vpop.f32.mrf.mxu0
      %v2434 = vadd.f32 0.0, %v2433
      %v2435 = vpop.f32.mrf.mxu0
      %2436 = vmatprep.mubr.bf16.mxu0 0
      %2437 = vmatmul.mubr.bf16.gmra.mxu0 %v2378
      %v2438 = vpop.f32.mrf.mxu0
      %v2439 = vadd.f32 0.0, %v2438
      %v2440 = vpop.f32.mrf.mxu0
      %v2441 = vpop.f32.mrf.mxu0
      %v2442 = vadd.f32 0.0, %v2441
      %v2443 = vpop.f32.mrf.mxu0
      %2444 = vdwg.mxu0
      %v2445 = vmul.f32 %v2415, %v587
      %v2446 = vmul.f32 %v2418, %v587
      %v2447 = vmul.f32 %v2423, %v587
      %v2448 = vmul.f32 %v2426, %v587
      %v2449 = vmul.f32 %v2431, %v587
      %v2450 = vmul.f32 %v2434, %v587
      %v2451 = vmul.f32 %v2439, %v587
      %v2452 = vmul.f32 %v2442, %v587
      %v2453 = vadd.f32 %v2445, %v600
      %v2454 = vadd.f32 %v2446, %v600
      %v2455 = vadd.f32 %v2447, %v600
      %v2456 = vadd.f32 %v2448, %v600
      %v2457 = vadd.f32 %v2449, %v600
      %v2458 = vadd.f32 %v2450, %v600
      %v2459 = vadd.f32 %v2451, %v600
      %v2460 = vadd.f32 %v2452, %v600
      %v2461 = vmax.f32 %v2453, 0.0
      %v2462 = vmax.f32 %v2454, 0.0
      %v2463 = vmax.f32 %v2455, 0.0
      %v2464 = vmax.f32 %v2456, 0.0
      %v2465 = vmax.f32 %v2457, 0.0
      %v2466 = vmax.f32 %v2458, 0.0
      %v2467 = vmax.f32 %v2459, 0.0
      %v2468 = vmax.f32 %v2460, 0.0
      %v2469 = vpack.c.bf16 %v2462, %v2461
      %v2470 = vpack.c.bf16 %v2464, %v2463
      %v2471 = vpack.c.bf16 %v2466, %v2465
      %v2472 = vpack.c.bf16 %v2468, %v2467
      %s2473 = scalar_lea.vmem %s4, 56
      %v2474 = vld [vmem:[%s2473] sm:$0xf]
      %v2475 = vld [vmem:[%s2473 + $0x4] sm:$0xf]
      %v2478 = vunpack.c.l.b16 %v2474
      %v2479 = vunpack.c.l.b16 %v2475
      %v2480 = vpack.c.b16 %v2479, %v2478
      %v2483 = vsel %vm505, %v2469, 0
      %v2486 = vsel %vm505, %v2470, 0
      %v2489 = vsel %vm505, %v2471, 0
      %v2492 = vsel %vm505, %v2472, 0
      %2494 = vmatprep.subr.bf16.mxu0 0
      %2495 = vmatpush1.bf16.msra.mxu0 0
      %2496 = vmatprep.subr.bf16.mxu0 0
      %2497 = vmatpush1.bf16.msra.mxu0 0
      %2498 = vmatprep.subr.bf16.mxu0 0
      %2499 = vmatpush1.bf16.msra.mxu0 0
      %2500 = vmatprep.subr.bf16.mxu0 0
      %2501 = vmatpush1.bf16.msra.mxu0 0
      %2502 = vmatprep.subr.bf16.mxu0 0
      %2503 = vmatpush1.bf16.msra.mxu0 0
      %2504 = vmatprep.subr.bf16.mxu0 0
      %2505 = vmatpush1.bf16.msra.mxu0 0
      %2506 = vmatprep.subr.bf16.mxu0 0
      %2507 = vmatpush1.bf16.msra.mxu0 0
      %2508 = vmatprep.subr.bf16.mxu0 0
      %2509 = vmatpush1.bf16.msra.mxu0 %v2480
      %2510 = vmatprep.subr.bf16.mxu0 0
      %2511 = vmatpush2.bf16.msra.mxu0 0
      %2512 = vmatprep.subr.bf16.mxu0 0
      %2513 = vmatpush2.bf16.msra.mxu0 0
      %2514 = vmatprep.subr.bf16.mxu0 0
      %2515 = vmatpush2.bf16.msra.mxu0 0
      %2516 = vmatprep.subr.bf16.mxu0 0
      %2517 = vmatpush2.bf16.msra.mxu0 0
      %2518 = vmatprep.subr.bf16.mxu0 0
      %2519 = vmatpush2.bf16.msra.mxu0 0
      %2520 = vmatprep.subr.bf16.mxu0 0
      %2521 = vmatpush2.bf16.msra.mxu0 0
      %2522 = vmatprep.subr.bf16.mxu0 0
      %2523 = vmatpush2.bf16.msra.mxu0 0
      %2524 = vmatprep.subr.bf16.mxu0 0
      %2525 = vmatpush2.bf16.msra.mxu0 0
      %2526 = vmatprep.mubr.bf16.mxu0 0
      %2527 = vmatmul.mubr.bf16.gmra.mxu0 %v2483
      %v2528 = vpop.f32.mrf.mxu0
      %v2529 = vadd.f32 0.0, %v2528
      %v2530 = vpop.f32.mrf.mxu0
      %v2531 = vpop.f32.mrf.mxu0
      %v2532 = vadd.f32 0.0, %v2531
      %v2533 = vpop.f32.mrf.mxu0
      %2534 = vmatprep.mubr.bf16.mxu0 0
      %2535 = vmatmul.mubr.bf16.gmra.mxu0 %v2486
      %v2536 = vpop.f32.mrf.mxu0
      %v2537 = vadd.f32 0.0, %v2536
      %v2538 = vpop.f32.mrf.mxu0
      %v2539 = vpop.f32.mrf.mxu0
      %v2540 = vadd.f32 0.0, %v2539
      %v2541 = vpop.f32.mrf.mxu0
      %2542 = vmatprep.mubr.bf16.mxu0 0
      %2543 = vmatmul.mubr.bf16.gmra.mxu0 %v2489
      %v2544 = vpop.f32.mrf.mxu0
      %v2545 = vadd.f32 0.0, %v2544
      %v2546 = vpop.f32.mrf.mxu0
      %v2547 = vpop.f32.mrf.mxu0
      %v2548 = vadd.f32 0.0, %v2547
      %v2549 = vpop.f32.mrf.mxu0
      %2550 = vmatprep.mubr.bf16.mxu0 0
      %2551 = vmatmul.mubr.bf16.gmra.mxu0 %v2492
      %v2552 = vpop.f32.mrf.mxu0
      %v2553 = vadd.f32 0.0, %v2552
      %v2554 = vpop.f32.mrf.mxu0
      %v2555 = vpop.f32.mrf.mxu0
      %v2556 = vadd.f32 0.0, %v2555
      %v2557 = vpop.f32.mrf.mxu0
      %2558 = vdwg.mxu0
      %v2559 = vadd.f32 %v2332, %v2529
      %v2560 = vadd.f32 %v2333, %v2532
      %v2561 = vadd.f32 %v2334, %v2537
      %v2562 = vadd.f32 %v2335, %v2540
      %v2563 = vadd.f32 %v2336, %v2545
      %v2564 = vadd.f32 %v2337, %v2548
      %v2565 = vadd.f32 %v2338, %v2553
      %v2566 = vadd.f32 %v2339, %v2556
      %v2567 = vld [vmem:[%s462 + $0x100] sm:$0xf]
      %v2568 = vld [vmem:[%s462 + $0x104] sm:$0xf]
      %v2569 = vld [vmem:[%s462 + $0x108] sm:$0xf]
      %v2570 = vld [vmem:[%s462 + $0x10c] sm:$0xf]
      %v2571 = vld [vmem:[%s462 + $0x110] sm:$0xf]
      %v2572 = vld [vmem:[%s462 + $0x114] sm:$0xf]
      %v2573 = vld [vmem:[%s462 + $0x118] sm:$0xf]
      %v2574 = vld [vmem:[%s462 + $0x11c] sm:$0xf]
      %v2583 = vunpack.c.l.b16 %v2567
      %v2584 = vunpack.c.l.b16 %v2568
      %v2585 = vunpack.c.l.b16 %v2569
      %v2586 = vunpack.c.l.b16 %v2570
      %v2587 = vunpack.c.l.b16 %v2571
      %v2588 = vunpack.c.l.b16 %v2572
      %v2589 = vunpack.c.l.b16 %v2573
      %v2590 = vunpack.c.l.b16 %v2574
      %v2591 = vpack.c.b16 %v2584, %v2583
      %v2592 = vpack.c.b16 %v2586, %v2585
      %v2593 = vpack.c.b16 %v2588, %v2587
      %v2594 = vpack.c.b16 %v2590, %v2589
      %v2596 = vsel %vm505, %v2591, 0
      %v2599 = vsel %vm505, %v2592, 0
      %v2602 = vsel %vm505, %v2593, 0
      %v2605 = vsel %vm505, %v2594, 0
      %2607 = vmatprep.subr.bf16.mxu0 0
      %2608 = vmatpush1.bf16.msra.mxu0 0
      %2609 = vmatprep.subr.bf16.mxu0 0
      %2610 = vmatpush1.bf16.msra.mxu0 0
      %2611 = vmatprep.subr.bf16.mxu0 0
      %2612 = vmatpush1.bf16.msra.mxu0 0
      %2613 = vmatprep.subr.bf16.mxu0 0
      %2614 = vmatpush1.bf16.msra.mxu0 0
      %2615 = vmatprep.subr.bf16.mxu0 0
      %2616 = vmatpush1.bf16.msra.mxu0 0
      %2617 = vmatprep.subr.bf16.mxu0 0
      %2618 = vmatpush1.bf16.msra.mxu0 0
      %2619 = vmatprep.subr.bf16.mxu0 0
      %2620 = vmatpush1.bf16.msra.mxu0 0
      %2621 = vmatprep.subr.bf16.mxu0 0
      %2622 = vmatpush1.bf16.msra.mxu0 %v503
      %2623 = vmatprep.subr.bf16.mxu0 0
      %2624 = vmatpush2.bf16.msra.mxu0 0
      %2625 = vmatprep.subr.bf16.mxu0 0
      %2626 = vmatpush2.bf16.msra.mxu0 0
      %2627 = vmatprep.subr.bf16.mxu0 0
      %2628 = vmatpush2.bf16.msra.mxu0 0
      %2629 = vmatprep.subr.bf16.mxu0 0
      %2630 = vmatpush2.bf16.msra.mxu0 0
      %2631 = vmatprep.subr.bf16.mxu0 0
      %2632 = vmatpush2.bf16.msra.mxu0 0
      %2633 = vmatprep.subr.bf16.mxu0 0
      %2634 = vmatpush2.bf16.msra.mxu0 0
      %2635 = vmatprep.subr.bf16.mxu0 0
      %2636 = vmatpush2.bf16.msra.mxu0 0
      %2637 = vmatprep.subr.bf16.mxu0 0
      %2638 = vmatpush2.bf16.msra.mxu0 0
      %2639 = vmatprep.mubr.bf16.mxu0 0
      %2640 = vmatmul.mubr.bf16.gmra.mxu0 %v2596
      %v2641 = vpop.f32.mrf.mxu0
      %v2642 = vadd.f32 0.0, %v2641
      %v2643 = vpop.f32.mrf.mxu0
      %v2644 = vpop.f32.mrf.mxu0
      %v2645 = vadd.f32 0.0, %v2644
      %v2646 = vpop.f32.mrf.mxu0
      %2647 = vmatprep.mubr.bf16.mxu0 0
      %2648 = vmatmul.mubr.bf16.gmra.mxu0 %v2599
      %v2649 = vpop.f32.mrf.mxu0
      %v2650 = vadd.f32 0.0, %v2649
      %v2651 = vpop.f32.mrf.mxu0
      %v2652 = vpop.f32.mrf.mxu0
      %v2653 = vadd.f32 0.0, %v2652
      %v2654 = vpop.f32.mrf.mxu0
      %2655 = vmatprep.mubr.bf16.mxu0 0
      %2656 = vmatmul.mubr.bf16.gmra.mxu0 %v2602
      %v2657 = vpop.f32.mrf.mxu0
      %v2658 = vadd.f32 0.0, %v2657
      %v2659 = vpop.f32.mrf.mxu0
      %v2660 = vpop.f32.mrf.mxu0
      %v2661 = vadd.f32 0.0, %v2660
      %v2662 = vpop.f32.mrf.mxu0
      %2663 = vmatprep.mubr.bf16.mxu0 0
      %2664 = vmatmul.mubr.bf16.gmra.mxu0 %v2605
      %v2665 = vpop.f32.mrf.mxu0
      %v2666 = vadd.f32 0.0, %v2665
      %v2667 = vpop.f32.mrf.mxu0
      %v2668 = vpop.f32.mrf.mxu0
      %v2669 = vadd.f32 0.0, %v2668
      %v2670 = vpop.f32.mrf.mxu0
      %2671 = vdwg.mxu0
      %v2672 = vmul.f32 %v2642, %v587
      %v2673 = vmul.f32 %v2645, %v587
      %v2674 = vmul.f32 %v2650, %v587
      %v2675 = vmul.f32 %v2653, %v587
      %v2676 = vmul.f32 %v2658, %v587
      %v2677 = vmul.f32 %v2661, %v587
      %v2678 = vmul.f32 %v2666, %v587
      %v2679 = vmul.f32 %v2669, %v587
      %v2680 = vadd.f32 %v2672, %v600
      %v2681 = vadd.f32 %v2673, %v600
      %v2682 = vadd.f32 %v2674, %v600
      %v2683 = vadd.f32 %v2675, %v600
      %v2684 = vadd.f32 %v2676, %v600
      %v2685 = vadd.f32 %v2677, %v600
      %v2686 = vadd.f32 %v2678, %v600
      %v2687 = vadd.f32 %v2679, %v600
      %v2688 = vmax.f32 %v2680, 0.0
      %v2689 = vmax.f32 %v2681, 0.0
      %v2690 = vmax.f32 %v2682, 0.0
      %v2691 = vmax.f32 %v2683, 0.0
      %v2692 = vmax.f32 %v2684, 0.0
      %v2693 = vmax.f32 %v2685, 0.0
      %v2694 = vmax.f32 %v2686, 0.0
      %v2695 = vmax.f32 %v2687, 0.0
      %v2696 = vpack.c.bf16 %v2689, %v2688
      %v2697 = vpack.c.bf16 %v2691, %v2690
      %v2698 = vpack.c.bf16 %v2693, %v2692
      %v2699 = vpack.c.bf16 %v2695, %v2694
      %s2700 = scalar_lea.vmem %s4, 64
      %v2701 = vld [vmem:[%s2700] sm:$0xf]
      %v2702 = vld [vmem:[%s2700 + $0x4] sm:$0xf]
      %v2705 = vunpack.c.l.b16 %v2701
      %v2706 = vunpack.c.l.b16 %v2702
      %v2707 = vpack.c.b16 %v2706, %v2705
      %v2710 = vsel %vm505, %v2696, 0
      %v2713 = vsel %vm505, %v2697, 0
      %v2716 = vsel %vm505, %v2698, 0
      %v2719 = vsel %vm505, %v2699, 0
      %2721 = vmatprep.subr.bf16.mxu0 0
      %2722 = vmatpush1.bf16.msra.mxu0 0
      %2723 = vmatprep.subr.bf16.mxu0 0
      %2724 = vmatpush1.bf16.msra.mxu0 0
      %2725 = vmatprep.subr.bf16.mxu0 0
      %2726 = vmatpush1.bf16.msra.mxu0 0
      %2727 = vmatprep.subr.bf16.mxu0 0
      %2728 = vmatpush1.bf16.msra.mxu0 0
      %2729 = vmatprep.subr.bf16.mxu0 0
      %2730 = vmatpush1.bf16.msra.mxu0 0
      %2731 = vmatprep.subr.bf16.mxu0 0
      %2732 = vmatpush1.bf16.msra.mxu0 0
      %2733 = vmatprep.subr.bf16.mxu0 0
      %2734 = vmatpush1.bf16.msra.mxu0 0
      %2735 = vmatprep.subr.bf16.mxu0 0
      %2736 = vmatpush1.bf16.msra.mxu0 %v2707
      %2737 = vmatprep.subr.bf16.mxu0 0
      %2738 = vmatpush2.bf16.msra.mxu0 0
      %2739 = vmatprep.subr.bf16.mxu0 0
      %2740 = vmatpush2.bf16.msra.mxu0 0
      %2741 = vmatprep.subr.bf16.mxu0 0
      %2742 = vmatpush2.bf16.msra.mxu0 0
      %2743 = vmatprep.subr.bf16.mxu0 0
      %2744 = vmatpush2.bf16.msra.mxu0 0
      %2745 = vmatprep.subr.bf16.mxu0 0
      %2746 = vmatpush2.bf16.msra.mxu0 0
      %2747 = vmatprep.subr.bf16.mxu0 0
      %2748 = vmatpush2.bf16.msra.mxu0 0
      %2749 = vmatprep.subr.bf16.mxu0 0
      %2750 = vmatpush2.bf16.msra.mxu0 0
      %2751 = vmatprep.subr.bf16.mxu0 0
      %2752 = vmatpush2.bf16.msra.mxu0 0
      %2753 = vmatprep.mubr.bf16.mxu0 0
      %2754 = vmatmul.mubr.bf16.gmra.mxu0 %v2710
      %v2755 = vpop.f32.mrf.mxu0
      %v2756 = vadd.f32 0.0, %v2755
      %v2757 = vpop.f32.mrf.mxu0
      %v2758 = vpop.f32.mrf.mxu0
      %v2759 = vadd.f32 0.0, %v2758
      %v2760 = vpop.f32.mrf.mxu0
      %2761 = vmatprep.mubr.bf16.mxu0 0
      %2762 = vmatmul.mubr.bf16.gmra.mxu0 %v2713
      %v2763 = vpop.f32.mrf.mxu0
      %v2764 = vadd.f32 0.0, %v2763
      %v2765 = vpop.f32.mrf.mxu0
      %v2766 = vpop.f32.mrf.mxu0
      %v2767 = vadd.f32 0.0, %v2766
      %v2768 = vpop.f32.mrf.mxu0
      %2769 = vmatprep.mubr.bf16.mxu0 0
      %2770 = vmatmul.mubr.bf16.gmra.mxu0 %v2716
      %v2771 = vpop.f32.mrf.mxu0
      %v2772 = vadd.f32 0.0, %v2771
      %v2773 = vpop.f32.mrf.mxu0
      %v2774 = vpop.f32.mrf.mxu0
      %v2775 = vadd.f32 0.0, %v2774
      %v2776 = vpop.f32.mrf.mxu0
      %2777 = vmatprep.mubr.bf16.mxu0 0
      %2778 = vmatmul.mubr.bf16.gmra.mxu0 %v2719
      %v2779 = vpop.f32.mrf.mxu0
      %v2780 = vadd.f32 0.0, %v2779
      %v2781 = vpop.f32.mrf.mxu0
      %v2782 = vpop.f32.mrf.mxu0
      %v2783 = vadd.f32 0.0, %v2782
      %v2784 = vpop.f32.mrf.mxu0
      %2785 = vdwg.mxu0
      %v2786 = vadd.f32 %v2559, %v2756
      %v2787 = vadd.f32 %v2560, %v2759
      %v2788 = vadd.f32 %v2561, %v2764
      %v2789 = vadd.f32 %v2562, %v2767
      %v2790 = vadd.f32 %v2563, %v2772
      %v2791 = vadd.f32 %v2564, %v2775
      %v2792 = vadd.f32 %v2565, %v2780
      %v2793 = vadd.f32 %v2566, %v2783
      %v2794 = vld [vmem:[%s5] sm:$0x1]
      %v2795 = vlaneseq
      %v2796 = vshrl.u32 %v2795, 7
      %v2797 = vsub.s32 0, %v2796
      %v2798 = vrot.slane %v2794, %v2797
      %v2799 = vmul.f32 %v2786, %v2798
      %v2800 = vmul.f32 %v2787, %v2798
      %v2801 = vmul.f32 %v2788, %v2798
      %v2802 = vmul.f32 %v2789, %v2798
      %v2803 = vmul.f32 %v2790, %v2798
      %v2804 = vmul.f32 %v2791, %v2798
      %v2805 = vmul.f32 %v2792, %v2798
      %v2806 = vmul.f32 %v2793, %v2798
      %v2807 = vld [vmem:[%s5 + $0x1] sm:$0x1]
      %v2808 = vlaneseq
      %v2809 = vshrl.u32 %v2808, 7
      %v2810 = vsub.s32 0, %v2809
      %v2811 = vrot.slane %v2807, %v2810
      %v2812 = vadd.f32 %v2799, %v2811
      %v2813 = vadd.f32 %v2800, %v2811
      %v2814 = vadd.f32 %v2801, %v2811
      %v2815 = vadd.f32 %v2802, %v2811
      %v2816 = vadd.f32 %v2803, %v2811
      %v2817 = vadd.f32 %v2804, %v2811
      %v2818 = vadd.f32 %v2805, %v2811
      %v2819 = vadd.f32 %v2806, %v2811
      %v2820 = vmax.f32 %v2812, 0.0
      %v2821 = vmax.f32 %v2813, 0.0
      %v2822 = vmax.f32 %v2814, 0.0
      %v2823 = vmax.f32 %v2815, 0.0
      %v2824 = vmax.f32 %v2816, 0.0
      %v2825 = vmax.f32 %v2817, 0.0
      %v2826 = vmax.f32 %v2818, 0.0
      %v2827 = vmax.f32 %v2819, 0.0
      %v2828 = vsel %vm505, %v2820, 0.0
      %v2829 = vsel %vm505, %v2821, 0.0
      %v2830 = vadd.f32 %v2828, %v2829
      %v2831 = vsel %vm505, %v2822, 0.0
      %v2832 = vadd.f32 %v2830, %v2831
      %v2833 = vsel %vm505, %v2823, 0.0
      %v2834 = vadd.f32 %v2832, %v2833
      %v2835 = vsel %vm505, %v2824, 0.0
      %v2836 = vadd.f32 %v2834, %v2835
      %v2837 = vsel %vm505, %v2825, 0.0
      %v2838 = vadd.f32 %v2836, %v2837
      %v2839 = vsel %vm505, %v2826, 0.0
      %v2840 = vadd.f32 %v2838, %v2839
      %v2841 = vsel %vm505, %v2827, 0.0
      %v2842 = vadd.f32 %v2840, %v2841
      %v2843 = vrot.slane %v2842, 4
      %v2844 = vadd.f32 %v2842, %v2843
      %v2845 = vrot.slane %v2844, 2
      %v2846 = vadd.f32 %v2844, %v2845
      %v2847 = vrot.slane %v2846, 1
      %v2848 = vadd.f32 %v2846, %v2847
      %v2849 = vrcp.pop 64.0
      %v2850 = vmul.f32 %v2848, %v2849
      %v2851 = vpack.c.bf16 %v2850, %v2850
      %v2852 = vld [vmem:[%s6] sm:$0xf]
      %v2853 = vld [vmem:[%s6 + $0x4] sm:$0xf]
      %v2854 = vld [vmem:[%s7] sm:$0x1]
      %v2857 = vunpack.c.l.b16 %v2852
      %v2858 = vunpack.c.l.b16 %v2853
      %v2859 = vpack.c.b16 %v2858, %v2857
      %v2862 = vsel %vm505, %v2851, 0
      %2864 = vmatprep.subr.bf16.mxu0 0
      %2865 = vmatpush1.bf16.msra.mxu0 0
      %2866 = vmatprep.subr.bf16.mxu0 0
      %2867 = vmatpush1.bf16.msra.mxu0 0
      %2868 = vmatprep.subr.bf16.mxu0 0
      %2869 = vmatpush1.bf16.msra.mxu0 0
      %2870 = vmatprep.subr.bf16.mxu0 0
      %2871 = vmatpush1.bf16.msra.mxu0 0
      %2872 = vmatprep.subr.bf16.mxu0 0
      %2873 = vmatpush1.bf16.msra.mxu0 0
      %2874 = vmatprep.subr.bf16.mxu0 0
      %2875 = vmatpush1.bf16.msra.mxu0 0
      %2876 = vmatprep.subr.bf16.mxu0 0
      %2877 = vmatpush1.bf16.msra.mxu0 0
      %2878 = vmatprep.subr.bf16.mxu0 0
      %2879 = vmatpush1.bf16.msra.mxu0 %v2859
      %2880 = vmatprep.subr.bf16.mxu0 0
      %2881 = vmatpush2.bf16.msra.mxu0 0
      %2882 = vmatprep.subr.bf16.mxu0 0
      %2883 = vmatpush2.bf16.msra.mxu0 0
      %2884 = vmatprep.subr.bf16.mxu0 0
      %2885 = vmatpush2.bf16.msra.mxu0 0
      %2886 = vmatprep.subr.bf16.mxu0 0
      %2887 = vmatpush2.bf16.msra.mxu0 0
      %2888 = vmatprep.subr.bf16.mxu0 0
      %2889 = vmatpush2.bf16.msra.mxu0 0
      %2890 = vmatprep.subr.bf16.mxu0 0
      %2891 = vmatpush2.bf16.msra.mxu0 0
      %2892 = vmatprep.subr.bf16.mxu0 0
      %2893 = vmatpush2.bf16.msra.mxu0 0
      %2894 = vmatprep.subr.bf16.mxu0 0
      %2895 = vmatpush2.bf16.msra.mxu0 0
      %2896 = vmatprep.mubr.bf16.mxu0 0
      %2897 = vmatmul.mubr.bf16.gmra.mxu0 %v2862
      %v2898 = vpop.f32.mrf.mxu0
      %v2899 = vadd.f32 %v2854, %v2898
      %v2900 = vpop.f32.mrf.mxu0
      %v2901 = vpop.f32.mrf.mxu0
      %v2902 = vpop.f32.mrf.mxu0
      %2903 = vdwg.mxu0
      %v2904 = vmax.f32 %v2899, 0.0
      %v2905 = vpack.c.bf16 %v2904, %v2904
      %v2906 = vld [vmem:[%s8] sm:$0x3]
      %v2907 = vld [vmem:[%s9] sm:$0x1]
      %vm2908 = vcmask 31744
      %v2910 = vsel %vm2908, %v2905, 0
      %vm2912 = vcmask 1041408
      %v2914 = vsel %vm2912, %v2906, 0
      %2916 = vmatprep.subr.bf16.mxu0 0
      %2917 = vmatpush1.bf16.msra.mxu0 0
      %2918 = vmatprep.subr.bf16.mxu0 0
      %2919 = vmatpush1.bf16.msra.mxu0 0
      %2920 = vmatprep.subr.bf16.mxu0 0
      %2921 = vmatpush1.bf16.msra.mxu0 0
      %2922 = vmatprep.subr.bf16.mxu0 0
      %2923 = vmatpush1.bf16.msra.mxu0 0
      %2924 = vmatprep.subr.bf16.mxu0 0
      %2925 = vmatpush1.bf16.msra.mxu0 0
      %2926 = vmatprep.subr.bf16.mxu0 0
      %2927 = vmatpush1.bf16.msra.mxu0 0
      %2928 = vmatprep.subr.bf16.mxu0 0
      %2929 = vmatpush1.bf16.msra.mxu0 0
      %2930 = vmatprep.subr.bf16.mxu0 0
      %2931 = vmatpush1.bf16.msra.mxu0 %v2914
      %2932 = vmatprep.subr.bf16.mxu0 0
      %2933 = vmatpush2.bf16.msra.mxu0 0
      %2934 = vmatprep.subr.bf16.mxu0 0
      %2935 = vmatpush2.bf16.msra.mxu0 0
      %2936 = vmatprep.subr.bf16.mxu0 0
      %2937 = vmatpush2.bf16.msra.mxu0 0
      %2938 = vmatprep.subr.bf16.mxu0 0
      %2939 = vmatpush2.bf16.msra.mxu0 0
      %2940 = vmatprep.subr.bf16.mxu0 0
      %2941 = vmatpush2.bf16.msra.mxu0 0
      %2942 = vmatprep.subr.bf16.mxu0 0
      %2943 = vmatpush2.bf16.msra.mxu0 0
      %2944 = vmatprep.subr.bf16.mxu0 0
      %2945 = vmatpush2.bf16.msra.mxu0 0
      %2946 = vmatprep.subr.bf16.mxu0 0
      %2947 = vmatpush2.bf16.msra.mxu0 0
      %2948 = vmatprep.mubr.bf16.mxu0 0
      %2949 = vmatmul.mubr.bf16.gmra.mxu0 %v2910
      %v2950 = vpop.f32.mrf.mxu0
      %v2951 = vadd.f32 %v2907, %v2950
      %v2952 = vpop.f32.mrf.mxu0
      %v2953 = vpop.f32.mrf.mxu0
      %v2954 = vpop.f32.mrf.mxu0
      %2955 = vdwg.mxu0
      %v2956 = vxor.u32 %v2951, 2147483648
      %v2957 = vmul.f32 %v2956, 1.442695
      %v2958 = vpow.pop %v2957
      %v2959 = vadd.f32 %v2958, 1.0
      %v2960 = vrcp.pop %v2959
      %v2961 = vmul.f32 1.0, %v2960
      %v2962 = vlaneseq
      %v2963 = vshrl.u32 %v2962, 7
      %v2964 = vsub.s32 0, %v2963
      %v2965 = vrot.slane %v2961, %v2964
      %v2966 = vmul.f32 %v2820, %v2965
      %v2967 = vmul.f32 %v2821, %v2965
      %v2968 = vmul.f32 %v2822, %v2965
      %v2969 = vmul.f32 %v2823, %v2965
      %v2970 = vmul.f32 %v2824, %v2965
      %v2971 = vmul.f32 %v2825, %v2965
      %v2972 = vmul.f32 %v2826, %v2965
      %v2973 = vmul.f32 %v2827, %v2965
      %v2974 = vpack.c.bf16 %v2967, %v2966
      %v2975 = vpack.c.bf16 %v2969, %v2968
      %v2976 = vpack.c.bf16 %v2971, %v2970
      %v2977 = vpack.c.bf16 %v2973, %v2972
      %v2978 = vld [vmem:[%s10] sm:$0xf]
      %v2979 = vld [vmem:[%s10 + $0x4] sm:$0xf]
      %v2982 = vunpack.c.l.b16 %v2978
      %v2983 = vunpack.c.l.b16 %v2979
      %v2984 = vpack.c.b16 %v2983, %v2982
      %v2987 = vsel %vm505, %v2974, 0
      %v2990 = vsel %vm505, %v2975, 0
      %v2993 = vsel %vm505, %v2976, 0
      %v2996 = vsel %vm505, %v2977, 0
      %2998 = vmatprep.subr.bf16.mxu0 0
      %2999 = vmatpush1.bf16.msra.mxu0 0
      %3000 = vmatprep.subr.bf16.mxu0 0
      %3001 = vmatpush1.bf16.msra.mxu0 0
      %3002 = vmatprep.subr.bf16.mxu0 0
      %3003 = vmatpush1.bf16.msra.mxu0 0
      %3004 = vmatprep.subr.bf16.mxu0 0
      %3005 = vmatpush1.bf16.msra.mxu0 0
      %3006 = vmatprep.subr.bf16.mxu0 0
      %3007 = vmatpush1.bf16.msra.mxu0 0
      %3008 = vmatprep.subr.bf16.mxu0 0
      %3009 = vmatpush1.bf16.msra.mxu0 0
      %3010 = vmatprep.subr.bf16.mxu0 0
      %3011 = vmatpush1.bf16.msra.mxu0 0
      %3012 = vmatprep.subr.bf16.mxu0 0
      %3013 = vmatpush1.bf16.msra.mxu0 %v2984
      %3014 = vmatprep.subr.bf16.mxu0 0
      %3015 = vmatpush2.bf16.msra.mxu0 0
      %3016 = vmatprep.subr.bf16.mxu0 0
      %3017 = vmatpush2.bf16.msra.mxu0 0
      %3018 = vmatprep.subr.bf16.mxu0 0
      %3019 = vmatpush2.bf16.msra.mxu0 0
      %3020 = vmatprep.subr.bf16.mxu0 0
      %3021 = vmatpush2.bf16.msra.mxu0 0
      %3022 = vmatprep.subr.bf16.mxu0 0
      %3023 = vmatpush2.bf16.msra.mxu0 0
      %3024 = vmatprep.subr.bf16.mxu0 0
      %3025 = vmatpush2.bf16.msra.mxu0 0
      %3026 = vmatprep.subr.bf16.mxu0 0
      %3027 = vmatpush2.bf16.msra.mxu0 0
      %3028 = vmatprep.subr.bf16.mxu0 0
      %3029 = vmatpush2.bf16.msra.mxu0 0
      %3030 = vmatprep.mubr.bf16.mxu0 0
      %3031 = vmatmul.mubr.bf16.gmra.mxu0 %v2987
      %v3032 = vpop.f32.mrf.mxu0
      %v3033 = vadd.f32 0.0, %v3032
      %v3034 = vpop.f32.mrf.mxu0
      %v3035 = vpop.f32.mrf.mxu0
      %v3036 = vadd.f32 0.0, %v3035
      %v3037 = vpop.f32.mrf.mxu0
      %3038 = vmatprep.mubr.bf16.mxu0 0
      %3039 = vmatmul.mubr.bf16.gmra.mxu0 %v2990
      %v3040 = vpop.f32.mrf.mxu0
      %v3041 = vadd.f32 0.0, %v3040
      %v3042 = vpop.f32.mrf.mxu0
      %v3043 = vpop.f32.mrf.mxu0
      %v3044 = vadd.f32 0.0, %v3043
      %v3045 = vpop.f32.mrf.mxu0
      %3046 = vmatprep.mubr.bf16.mxu0 0
      %3047 = vmatmul.mubr.bf16.gmra.mxu0 %v2993
      %v3048 = vpop.f32.mrf.mxu0
      %v3049 = vadd.f32 0.0, %v3048
      %v3050 = vpop.f32.mrf.mxu0
      %v3051 = vpop.f32.mrf.mxu0
      %v3052 = vadd.f32 0.0, %v3051
      %v3053 = vpop.f32.mrf.mxu0
      %3054 = vmatprep.mubr.bf16.mxu0 0
      %3055 = vmatmul.mubr.bf16.gmra.mxu0 %v2996
      %v3056 = vpop.f32.mrf.mxu0
      %v3057 = vadd.f32 0.0, %v3056
      %v3058 = vpop.f32.mrf.mxu0
      %v3059 = vpop.f32.mrf.mxu0
      %v3060 = vadd.f32 0.0, %v3059
      %v3061 = vpop.f32.mrf.mxu0
      %3062 = vdwg.mxu0
      %v3063 = vld [vmem:[%s11] sm:$0x1]
      %v3064 = vlaneseq
      %v3065 = vshrl.u32 %v3064, 7
      %v3066 = vsub.s32 0, %v3065
      %v3067 = vrot.slane %v3063, %v3066
      %v3068 = vmul.f32 %v3033, %v3067
      %v3069 = vmul.f32 %v3036, %v3067
      %v3070 = vmul.f32 %v3041, %v3067
      %v3071 = vmul.f32 %v3044, %v3067
      %v3072 = vmul.f32 %v3049, %v3067
      %v3073 = vmul.f32 %v3052, %v3067
      %v3074 = vmul.f32 %v3057, %v3067
      %v3075 = vmul.f32 %v3060, %v3067
      %v3076 = vld [vmem:[%s11 + $0x1] sm:$0x1]
      %v3077 = vlaneseq
      %v3078 = vshrl.u32 %v3077, 7
      %v3079 = vsub.s32 0, %v3078
      %v3080 = vrot.slane %v3076, %v3079
      %v3081 = vadd.f32 %v3068, %v3080
      %v3082 = vadd.f32 %v3069, %v3080
      %v3083 = vadd.f32 %v3070, %v3080
      %v3084 = vadd.f32 %v3071, %v3080
      %v3085 = vadd.f32 %v3072, %v3080
      %v3086 = vadd.f32 %v3073, %v3080
      %v3087 = vadd.f32 %v3074, %v3080
      %v3088 = vadd.f32 %v3075, %v3080
      %v3089 = vld [vmem:[%s12] sm:$0xf]
      %v3090 = vld [vmem:[%s12 + $0x4] sm:$0xf]
      %v3093 = vunpack.c.l.b16 %v3089
      %v3094 = vunpack.c.l.b16 %v3090
      %v3095 = vpack.c.b16 %v3094, %v3093
      %3097 = vmatprep.subr.bf16.mxu0 0
      %3098 = vmatpush1.bf16.msra.mxu0 0
      %3099 = vmatprep.subr.bf16.mxu0 0
      %3100 = vmatpush1.bf16.msra.mxu0 0
      %3101 = vmatprep.subr.bf16.mxu0 0
      %3102 = vmatpush1.bf16.msra.mxu0 0
      %3103 = vmatprep.subr.bf16.mxu0 0
      %3104 = vmatpush1.bf16.msra.mxu0 0
      %3105 = vmatprep.subr.bf16.mxu0 0
      %3106 = vmatpush1.bf16.msra.mxu0 0
      %3107 = vmatprep.subr.bf16.mxu0 0
      %3108 = vmatpush1.bf16.msra.mxu0 0
      %3109 = vmatprep.subr.bf16.mxu0 0
      %3110 = vmatpush1.bf16.msra.mxu0 0
      %3111 = vmatprep.subr.bf16.mxu0 0
      %3112 = vmatpush1.bf16.msra.mxu0 %v3095
      %3113 = vmatprep.subr.bf16.mxu0 0
      %3114 = vmatpush2.bf16.msra.mxu0 0
      %3115 = vmatprep.subr.bf16.mxu0 0
      %3116 = vmatpush2.bf16.msra.mxu0 0
      %3117 = vmatprep.subr.bf16.mxu0 0
      %3118 = vmatpush2.bf16.msra.mxu0 0
      %3119 = vmatprep.subr.bf16.mxu0 0
      %3120 = vmatpush2.bf16.msra.mxu0 0
      %3121 = vmatprep.subr.bf16.mxu0 0
      %3122 = vmatpush2.bf16.msra.mxu0 0
      %3123 = vmatprep.subr.bf16.mxu0 0
      %3124 = vmatpush2.bf16.msra.mxu0 0
      %3125 = vmatprep.subr.bf16.mxu0 0
      %3126 = vmatpush2.bf16.msra.mxu0 0
      %3127 = vmatprep.subr.bf16.mxu0 0
      %3128 = vmatpush2.bf16.msra.mxu0 0
      %3129 = vmatprep.mubr.bf16.mxu0 0
      %3130 = vmatmul.mubr.bf16.gmra.mxu0 %v1632
      %v3131 = vpop.f32.mrf.mxu0
      %v3132 = vadd.f32 0.0, %v3131
      %v3133 = vpop.f32.mrf.mxu0
      %v3134 = vpop.f32.mrf.mxu0
      %v3135 = vadd.f32 0.0, %v3134
      %v3136 = vpop.f32.mrf.mxu0
      %3137 = vmatprep.mubr.bf16.mxu0 0
      %3138 = vmatmul.mubr.bf16.gmra.mxu0 %v1635
      %v3139 = vpop.f32.mrf.mxu0
      %v3140 = vadd.f32 0.0, %v3139
      %v3141 = vpop.f32.mrf.mxu0
      %v3142 = vpop.f32.mrf.mxu0
      %v3143 = vadd.f32 0.0, %v3142
      %v3144 = vpop.f32.mrf.mxu0
      %3145 = vmatprep.mubr.bf16.mxu0 0
      %3146 = vmatmul.mubr.bf16.gmra.mxu0 %v1638
      %v3147 = vpop.f32.mrf.mxu0
      %v3148 = vadd.f32 0.0, %v3147
      %v3149 = vpop.f32.mrf.mxu0
      %v3150 = vpop.f32.mrf.mxu0
      %v3151 = vadd.f32 0.0, %v3150
      %v3152 = vpop.f32.mrf.mxu0
      %3153 = vmatprep.mubr.bf16.mxu0 0
      %3154 = vmatmul.mubr.bf16.gmra.mxu0 %v1641
      %v3155 = vpop.f32.mrf.mxu0
      %v3156 = vadd.f32 0.0, %v3155
      %v3157 = vpop.f32.mrf.mxu0
      %v3158 = vpop.f32.mrf.mxu0
      %v3159 = vadd.f32 0.0, %v3158
      %v3160 = vpop.f32.mrf.mxu0
      %3161 = vdwg.mxu0
      %v3162 = vld [vmem:[%s13] sm:$0x1]
      %v3163 = vlaneseq
      %v3164 = vshrl.u32 %v3163, 7
      %v3165 = vsub.s32 0, %v3164
      %v3166 = vrot.slane %v3162, %v3165
      %v3167 = vmul.f32 %v3132, %v3166
      %v3168 = vmul.f32 %v3135, %v3166
      %v3169 = vmul.f32 %v3140, %v3166
      %v3170 = vmul.f32 %v3143, %v3166
      %v3171 = vmul.f32 %v3148, %v3166
      %v3172 = vmul.f32 %v3151, %v3166
      %v3173 = vmul.f32 %v3156, %v3166
      %v3174 = vmul.f32 %v3159, %v3166
      %v3175 = vld [vmem:[%s13 + $0x1] sm:$0x1]
      %v3176 = vlaneseq
      %v3177 = vshrl.u32 %v3176, 7
      %v3178 = vsub.s32 0, %v3177
      %v3179 = vrot.slane %v3175, %v3178
      %v3180 = vadd.f32 %v3167, %v3179
      %v3181 = vadd.f32 %v3168, %v3179
      %v3182 = vadd.f32 %v3169, %v3179
      %v3183 = vadd.f32 %v3170, %v3179
      %v3184 = vadd.f32 %v3171, %v3179
      %v3185 = vadd.f32 %v3172, %v3179
      %v3186 = vadd.f32 %v3173, %v3179
      %v3187 = vadd.f32 %v3174, %v3179
      %v3188 = vadd.f32 %v3081, %v3180
      %v3189 = vadd.f32 %v3082, %v3181
      %v3190 = vadd.f32 %v3083, %v3182
      %v3191 = vadd.f32 %v3084, %v3183
      %v3192 = vadd.f32 %v3085, %v3184
      %v3193 = vadd.f32 %v3086, %v3185
      %v3194 = vadd.f32 %v3087, %v3186
      %v3195 = vadd.f32 %v3088, %v3187
      %v3196 = vmax.f32 %v3188, 0.0
      %v3197 = vmax.f32 %v3189, 0.0
      %v3198 = vmax.f32 %v3190, 0.0
      %v3199 = vmax.f32 %v3191, 0.0
      %v3200 = vmax.f32 %v3192, 0.0
      %v3201 = vmax.f32 %v3193, 0.0
      %v3202 = vmax.f32 %v3194, 0.0
      %v3203 = vmax.f32 %v3195, 0.0
      %v3204 = vpack.c.bf16 %v3197, %v3196
      %v3205 = vpack.c.bf16 %v3199, %v3198
      %v3206 = vpack.c.bf16 %v3201, %v3200
      %v3207 = vpack.c.bf16 %v3203, %v3202
      %v3212 = vunpack.c.l.b16 %v3204
      %v3213 = vunpack.c.h.b16 %v3204
      %v3214 = vunpack.c.l.b16 %v3205
      %v3215 = vunpack.c.h.b16 %v3205
      %v3216 = vunpack.c.l.b16 %v3206
      %v3217 = vunpack.c.h.b16 %v3206
      %v3218 = vunpack.c.l.b16 %v3207
      %v3219 = vunpack.c.h.b16 %v3207
      %v3220 = vpack.c.b16 %v3212, %v3212
      %v3221 = vpack.c.b16 %v3213, %v3213
      %v3222 = vpack.c.b16 %v3214, %v3214
      %v3223 = vpack.c.b16 %v3215, %v3215
      %v3224 = vpack.c.b16 %v3216, %v3216
      %v3225 = vpack.c.b16 %v3217, %v3217
      %v3226 = vpack.c.b16 %v3218, %v3218
      %v3227 = vpack.c.b16 %v3219, %v3219
      %vm3236 = vcmask 125952
      %3237 = vst.msk [vmem:[%s467] sm:$0xf] %vm3236, %v3220
      %3238 = vst.msk [vmem:[%s467 + $0x4] sm:$0xf] %vm3236, %v3221
      %3239 = vst.msk [vmem:[%s467 + $0x8] sm:$0xf] %vm3236, %v3222
      %3240 = vst.msk [vmem:[%s467 + $0xc] sm:$0xf] %vm3236, %v3223
      %3241 = vst.msk [vmem:[%s467 + $0x10] sm:$0xf] %vm3236, %v3224
      %3242 = vst.msk [vmem:[%s467 + $0x14] sm:$0xf] %vm3236, %v3225
      %3243 = vst.msk [vmem:[%s467 + $0x18] sm:$0xf] %vm3236, %v3226
      %3244 = vst.msk [vmem:[%s467 + $0x1c] sm:$0xf] %vm3236, %v3227
      %p3245 = scmp.lt.s32.totalorder %s25, 1
      %s3246 = scalar_select %p3245, %s25, 1
      %s3247 = smul.addr %s3246, 8
      %s3248 = smul.addr %s3247, 4
      %s3249 = scalar_lea.vmem %s14, %s3248
      // Predicated region
      $region77: #{_lambda_.4} parent=75 // pred_check
        %p3250 = pneg %p342
      $region78: #{_lambda_.4} parent=75 // pred_check_branch
        %3252 = sbr.rel (%p3250) target = $region80
      $region79: #{_lambda_.4} parent=75 // pred_region
        _
      $region80: #{_lambda_.4} parent=75 // pred_fallthru
        _
    $region76: #{_lambda_.4} parent=5 // pred_fallthru
      _
    %p3253 = scmp.le.s32.totalorder 2, %s20
    // Predicated region
    $region81: #{_lambda_.4} parent=5 // pred_check
      %p3254 = pneg %p3253
    $region82: #{_lambda_.4} parent=5 // pred_check_branch
      %3256 = sbr.rel (%p3254) target = $region84
    $region83: #{_lambda_.4} parent=5 // pred_region
      %s3257 = ssub.s32 %s20, 2
      // Predicated region
      $region85: #{_lambda_.4} parent=83 // pred_check
        %p3258 = pneg %p348
      $region86: #{_lambda_.4} parent=83 // pred_check_branch
        %3260 = sbr.rel (%p3258) target = $region88
      $region87: #{_lambda_.4} parent=83 // pred_region
        %p3261 = scmp.lt.s32.totalorder %s26, 1
        %s3262 = scalar_select %p3261, %s26, 1
        %s3263 = smul.addr %s3262, 8
        %s3264 = smul.addr %s3263, 4
        %s3265 = scalar_lea.vmem %s14, %s3264
      $region88: #{_lambda_.4} parent=83 // pred_fallthru
        _
    $region84: #{_lambda_.4} parent=5 // pred_fallthru
      _
  $region6: #{_lambda_.4} parent=0 // loop_footer
    %s24 = sadd.s32 1, %s20
  $region7: #{_lambda_.4} parent=0 // loop_footer_branch
    %19 = sbr.rel target = $region3
  $region8: #{_lambda_.4} parent=0 // loop_exit
    _

// kernel: _lambda_.5
$region0: #{_lambda_.5}
  #allocation0 [shape = 'u32[]', space=smem, size = 0x4, offset = 0x4, fixed_abs, tag = 'smem constant byte address 0x4 - core index']
  #allocation1 [shape = 'u32[144,128]{1,0:T(1,128)}', space=vmem, size = 0x12000, scoped, tag = 'internal scratch']
  %s0 = inlined_call_operand.vmem [shape: bf16[2,144,16], index: 0, kind: input, shape index: {}]
  %s1 = inlined_call_operand.vmem [shape: f32[144,1], index: 1, kind: input, shape index: {}]
  %s2 = inlined_call_operand.vmem [shape: bf16[16,32], index: 2, kind: input, shape index: {}]
  %s3 = inlined_call_operand.vmem [shape: f32[2,32], index: 3, kind: input, shape index: {}, may-alias: {3,5,11,13}]
  %s4 = inlined_call_operand.vmem [shape: bf16[9,32,32], index: 4, kind: input, shape index: {}]
  %s5 = inlined_call_operand.vmem [shape: f32[2,32], index: 5, kind: input, shape index: {}, may-alias: {3,5,11,13}]
  %s6 = inlined_call_operand.vmem [shape: bf16[32,4], index: 6, kind: input, shape index: {}]
  %s7 = inlined_call_operand.vmem [shape: f32[1,4], index: 7, kind: input, shape index: {}]
  %s8 = inlined_call_operand.vmem [shape: bf16[4,32], index: 8, kind: input, shape index: {}]
  %s9 = inlined_call_operand.vmem [shape: f32[1,32], index: 9, kind: input, shape index: {}]
  %s10 = inlined_call_operand.vmem [shape: bf16[32,32], index: 10, kind: input, shape index: {}]
  %s11 = inlined_call_operand.vmem [shape: f32[2,32], index: 11, kind: input, shape index: {}, may-alias: {3,5,11,13}]
  %s12 = inlined_call_operand.vmem [shape: bf16[16,32], index: 12, kind: input, shape index: {}]
  %s13 = inlined_call_operand.vmem [shape: f32[2,32], index: 13, kind: input, shape index: {}, may-alias: {3,5,11,13}]
  %s14 = inlined_call_operand.vmem [shape: f32[4,32], index: 14, kind: input, shape index: {}]
  %s15 = inlined_call_operand.hbm [shape: f32[2,1,32], index: 15, kind: output, shape index: {}]
  %s16 = sld [smem:[#allocation0]]
  $region93: #{_lambda_.5} parent=0
    _
  %s18 = ssub.s32 1, %s16
  %s19 = scalar_select 0, %s18, %s16
  $region1: #{_lambda_.5} parent=0
    #allocation2 [shape = 'u8[1024]{0}', space=vmem, size = 0x400, scoped, tag = 'output window, operand 0']
    #allocation3 [shape = 's32[2]{0}', space=sflag, size = 0x8, scoped, tag = 'scoped memory for _lambda_.5']
    %20 = vsyncpa [#allocation3], 0
    %s21 = scalar_lea.sflag [#allocation3], 1
    %22 = vsyncpa %s21, 0
    loop: start=0, step=1, limit=4
    $region2: #{_lambda_.5} parent=1 // loop_pre_header
      _
    $region3: #{_lambda_.5} parent=1 // loop_header
      %s24 = sphi 0, %s28
      %p25 = scmp.ge.s32.totalorder %s24, 4
      %s34 = sphi 0, %s36
      %s37 = sphi 0, %s34
      %s38 = sphi 0, %s37
      %s54 = sphi 0, %s38
      %s58 = sphi 0, %s58
      %s60 = sphi 0, %s58
      %s61 = sphi 0, %s60
      %s75 = sphi 0, %s61
      %s79 = sphi 0, %s79
      %s81 = sphi 0, %s79
      %s82 = sphi 0, %s81
      %s96 = sphi 0, %s82
      %s100 = sphi 0, %s100
      %s102 = sphi 0, %s100
      %s103 = sphi 0, %s102
      %s117 = sphi 0, %s103
      %s121 = sphi 0, %s121
      %s123 = sphi 0, %s121
      %s124 = sphi 0, %s123
      %s138 = sphi 0, %s124
      %s142 = sphi 0, %s142
      %s144 = sphi 0, %s142
      %s145 = sphi 0, %s144
      %s159 = sphi 0, %s145
      %s163 = sphi 0, %s163
      %s165 = sphi 0, %s163
      %s166 = sphi 0, %s165
      %s180 = sphi 0, %s166
      %s184 = sphi 0, %s184
      %s186 = sphi 0, %s184
      %s187 = sphi 0, %s186
      %s201 = sphi 0, %s187
      %s205 = sphi 0, %s205
      %s207 = sphi 0, %s205
      %s208 = sphi 0, %s207
      %s222 = sphi 0, %s208
      %s226 = sphi 0, %s226
      %s228 = sphi 0, %s226
      %s229 = sphi 0, %s228
      %s243 = sphi 0, %s229
      %s247 = sphi 0, %s247
      %s249 = sphi 0, %s247
      %s250 = sphi 0, %s249
      %s264 = sphi 0, %s250
      %s268 = sphi 0, %s268
      %s270 = sphi 0, %s268
      %s271 = sphi 0, %s270
      %s285 = sphi 0, %s271
      %s289 = sphi 0, %s289
      %s291 = sphi 0, %s289
      %s292 = sphi 0, %s291
      %s306 = sphi 0, %s292
      %s310 = sphi 0, %s310
      %s312 = sphi 0, %s310
      %s313 = sphi 0, %s312
      %s327 = sphi 0, %s313
      %s331 = sphi 0, %s331
      %s333 = sphi 0, %s331
      %s334 = sphi 0, %s333
      %s348 = sphi 0, %s334
      %s354 = sphi 0, %s356
      %s357 = sphi 0, %s354
      %s358 = sphi 0, %s357
      %s374 = sphi 0, %s358
    $region4: #{_lambda_.5} parent=1 // loop_header_branch
      %27 = sbr.rel (%p25) target = $region8
    $region5: #{_lambda_.5} parent=1 // loop_body
      %s29 = ssub.s32 %s24, 1
      %s30 = ssub.s32 %s24, 2
      %s31 = sadd.s32 %s24, 1
      %s32 = ssub.s32 %s24, %s31
      %p33 = scmp.eq.s32.totalorder %s32, 0
      %s35 = sadd.s32 %s34, 1
      %s36 = scalar_select %p33, %s34, %s35
      %p39 = pneg %p33
      %p40 = scmp.eq.s32.totalorder %s24, 1
      %p41 = por %p39, %p40
      %p42 = scmp.ne.s32.totalorder %s34, %s37
      %p43 = scmp.eq.s32.totalorder %s24, 0
      %p44 = por %p42, %p43
      %p45 = scmp.ne.s32.totalorder %s34, %s37
      %p46 = scmp.eq.s32.totalorder %s29, 1
      %p47 = por %p45, %p46
      %p48 = scmp.ne.s32.totalorder %s37, %s38
      %p49 = scmp.eq.s32.totalorder %s29, 0
      %p50 = por %p48, %p49
      %p51 = scmp.ne.s32.totalorder %s37, %s38
      %p52 = scmp.eq.s32.totalorder %s30, 1
      %p53 = por %p51, %p52
      %p55 = scmp.ne.s32.totalorder %s38, %s54
      %p56 = scmp.eq.s32.totalorder %s30, 0
      %p57 = por %p55, %p56
      %s59 = sadd.s32 %s58, 1
      %p62 = scmp.eq.s32.totalorder %s24, 1
      %p63 = scmp.ne.s32.totalorder %s58, %s60
      %p64 = scmp.eq.s32.totalorder %s24, 0
      %p65 = por %p63, %p64
      %p66 = scmp.ne.s32.totalorder %s58, %s60
      %p67 = scmp.eq.s32.totalorder %s29, 1
      %p68 = por %p66, %p67
      %p69 = scmp.ne.s32.totalorder %s60, %s61
      %p70 = scmp.eq.s32.totalorder %s29, 0
      %p71 = por %p69, %p70
      %p72 = scmp.ne.s32.totalorder %s60, %s61
      %p73 = scmp.eq.s32.totalorder %s30, 1
      %p74 = por %p72, %p73
      %p76 = scmp.ne.s32.totalorder %s61, %s75
      %p77 = scmp.eq.s32.totalorder %s30, 0
      %p78 = por %p76, %p77
      %s80 = sadd.s32 %s79, 1
      %p83 = scmp.eq.s32.totalorder %s24, 1
      %p84 = scmp.ne.s32.totalorder %s79, %s81
      %p85 = scmp.eq.s32.totalorder %s24, 0
      %p86 = por %p84, %p85
      %p87 = scmp.ne.s32.totalorder %s79, %s81
      %p88 = scmp.eq.s32.totalorder %s29, 1
      %p89 = por %p87, %p88
      %p90 = scmp.ne.s32.totalorder %s81, %s82
      %p91 = scmp.eq.s32.totalorder %s29, 0
      %p92 = por %p90, %p91
      %p93 = scmp.ne.s32.totalorder %s81, %s82
      %p94 = scmp.eq.s32.totalorder %s30, 1
      %p95 = por %p93, %p94
      %p97 = scmp.ne.s32.totalorder %s82, %s96
      %p98 = scmp.eq.s32.totalorder %s30, 0
      %p99 = por %p97, %p98
      %s101 = sadd.s32 %s100, 1
      %p104 = scmp.eq.s32.totalorder %s24, 1
      %p105 = scmp.ne.s32.totalorder %s100, %s102
      %p106 = scmp.eq.s32.totalorder %s24, 0
      %p107 = por %p105, %p106
      %p108 = scmp.ne.s32.totalorder %s100, %s102
      %p109 = scmp.eq.s32.totalorder %s29, 1
      %p110 = por %p108, %p109
      %p111 = scmp.ne.s32.totalorder %s102, %s103
      %p112 = scmp.eq.s32.totalorder %s29, 0
      %p113 = por %p111, %p112
      %p114 = scmp.ne.s32.totalorder %s102, %s103
      %p115 = scmp.eq.s32.totalorder %s30, 1
      %p116 = por %p114, %p115
      %p118 = scmp.ne.s32.totalorder %s103, %s117
      %p119 = scmp.eq.s32.totalorder %s30, 0
      %p120 = por %p118, %p119
      %s122 = sadd.s32 %s121, 1
      %p125 = scmp.eq.s32.totalorder %s24, 1
      %p126 = scmp.ne.s32.totalorder %s121, %s123
      %p127 = scmp.eq.s32.totalorder %s24, 0
      %p128 = por %p126, %p127
      %p129 = scmp.ne.s32.totalorder %s121, %s123
      %p130 = scmp.eq.s32.totalorder %s29, 1
      %p131 = por %p129, %p130
      %p132 = scmp.ne.s32.totalorder %s123, %s124
      %p133 = scmp.eq.s32.totalorder %s29, 0
      %p134 = por %p132, %p133
      %p135 = scmp.ne.s32.totalorder %s123, %s124
      %p136 = scmp.eq.s32.totalorder %s30, 1
      %p137 = por %p135, %p136
      %p139 = scmp.ne.s32.totalorder %s124, %s138
      %p140 = scmp.eq.s32.totalorder %s30, 0
      %p141 = por %p139, %p140
      %s143 = sadd.s32 %s142, 1
      %p146 = scmp.eq.s32.totalorder %s24, 1
      %p147 = scmp.ne.s32.totalorder %s142, %s144
      %p148 = scmp.eq.s32.totalorder %s24, 0
      %p149 = por %p147, %p148
      %p150 = scmp.ne.s32.totalorder %s142, %s144
      %p151 = scmp.eq.s32.totalorder %s29, 1
      %p152 = por %p150, %p151
      %p153 = scmp.ne.s32.totalorder %s144, %s145
      %p154 = scmp.eq.s32.totalorder %s29, 0
      %p155 = por %p153, %p154
      %p156 = scmp.ne.s32.totalorder %s144, %s145
      %p157 = scmp.eq.s32.totalorder %s30, 1
      %p158 = por %p156, %p157
      %p160 = scmp.ne.s32.totalorder %s145, %s159
      %p161 = scmp.eq.s32.totalorder %s30, 0
      %p162 = por %p160, %p161
      %s164 = sadd.s32 %s163, 1
      %p167 = scmp.eq.s32.totalorder %s24, 1
      %p168 = scmp.ne.s32.totalorder %s163, %s165
      %p169 = scmp.eq.s32.totalorder %s24, 0
      %p170 = por %p168, %p169
      %p171 = scmp.ne.s32.totalorder %s163, %s165
      %p172 = scmp.eq.s32.totalorder %s29, 1
      %p173 = por %p171, %p172
      %p174 = scmp.ne.s32.totalorder %s165, %s166
      %p175 = scmp.eq.s32.totalorder %s29, 0
      %p176 = por %p174, %p175
      %p177 = scmp.ne.s32.totalorder %s165, %s166
      %p178 = scmp.eq.s32.totalorder %s30, 1
      %p179 = por %p177, %p178
      %p181 = scmp.ne.s32.totalorder %s166, %s180
      %p182 = scmp.eq.s32.totalorder %s30, 0
      %p183 = por %p181, %p182
      %s185 = sadd.s32 %s184, 1
      %p188 = scmp.eq.s32.totalorder %s24, 1
      %p189 = scmp.ne.s32.totalorder %s184, %s186
      %p190 = scmp.eq.s32.totalorder %s24, 0
      %p191 = por %p189, %p190
      %p192 = scmp.ne.s32.totalorder %s184, %s186
      %p193 = scmp.eq.s32.totalorder %s29, 1
      %p194 = por %p192, %p193
      %p195 = scmp.ne.s32.totalorder %s186, %s187
      %p196 = scmp.eq.s32.totalorder %s29, 0
      %p197 = por %p195, %p196
      %p198 = scmp.ne.s32.totalorder %s186, %s187
      %p199 = scmp.eq.s32.totalorder %s30, 1
      %p200 = por %p198, %p199
      %p202 = scmp.ne.s32.totalorder %s187, %s201
      %p203 = scmp.eq.s32.totalorder %s30, 0
      %p204 = por %p202, %p203
      %s206 = sadd.s32 %s205, 1
      %p209 = scmp.eq.s32.totalorder %s24, 1
      %p210 = scmp.ne.s32.totalorder %s205, %s207
      %p211 = scmp.eq.s32.totalorder %s24, 0
      %p212 = por %p210, %p211
      %p213 = scmp.ne.s32.totalorder %s205, %s207
      %p214 = scmp.eq.s32.totalorder %s29, 1
      %p215 = por %p213, %p214
      %p216 = scmp.ne.s32.totalorder %s207, %s208
      %p217 = scmp.eq.s32.totalorder %s29, 0
      %p218 = por %p216, %p217
      %p219 = scmp.ne.s32.totalorder %s207, %s208
      %p220 = scmp.eq.s32.totalorder %s30, 1
      %p221 = por %p219, %p220
      %p223 = scmp.ne.s32.totalorder %s208, %s222
      %p224 = scmp.eq.s32.totalorder %s30, 0
      %p225 = por %p223, %p224
      %s227 = sadd.s32 %s226, 1
      %p230 = scmp.eq.s32.totalorder %s24, 1
      %p231 = scmp.ne.s32.totalorder %s226, %s228
      %p232 = scmp.eq.s32.totalorder %s24, 0
      %p233 = por %p231, %p232
      %p234 = scmp.ne.s32.totalorder %s226, %s228
      %p235 = scmp.eq.s32.totalorder %s29, 1
      %p236 = por %p234, %p235
      %p237 = scmp.ne.s32.totalorder %s228, %s229
      %p238 = scmp.eq.s32.totalorder %s29, 0
      %p239 = por %p237, %p238
      %p240 = scmp.ne.s32.totalorder %s228, %s229
      %p241 = scmp.eq.s32.totalorder %s30, 1
      %p242 = por %p240, %p241
      %p244 = scmp.ne.s32.totalorder %s229, %s243
      %p245 = scmp.eq.s32.totalorder %s30, 0
      %p246 = por %p244, %p245
      %s248 = sadd.s32 %s247, 1
      %p251 = scmp.eq.s32.totalorder %s24, 1
      %p252 = scmp.ne.s32.totalorder %s247, %s249
      %p253 = scmp.eq.s32.totalorder %s24, 0
      %p254 = por %p252, %p253
      %p255 = scmp.ne.s32.totalorder %s247, %s249
      %p256 = scmp.eq.s32.totalorder %s29, 1
      %p257 = por %p255, %p256
      %p258 = scmp.ne.s32.totalorder %s249, %s250
      %p259 = scmp.eq.s32.totalorder %s29, 0
      %p260 = por %p258, %p259
      %p261 = scmp.ne.s32.totalorder %s249, %s250
      %p262 = scmp.eq.s32.totalorder %s30, 1
      %p263 = por %p261, %p262
      %p265 = scmp.ne.s32.totalorder %s250, %s264
      %p266 = scmp.eq.s32.totalorder %s30, 0
      %p267 = por %p265, %p266
      %s269 = sadd.s32 %s268, 1
      %p272 = scmp.eq.s32.totalorder %s24, 1
      %p273 = scmp.ne.s32.totalorder %s268, %s270
      %p274 = scmp.eq.s32.totalorder %s24, 0
      %p275 = por %p273, %p274
      %p276 = scmp.ne.s32.totalorder %s268, %s270
      %p277 = scmp.eq.s32.totalorder %s29, 1
      %p278 = por %p276, %p277
      %p279 = scmp.ne.s32.totalorder %s270, %s271
      %p280 = scmp.eq.s32.totalorder %s29, 0
      %p281 = por %p279, %p280
      %p282 = scmp.ne.s32.totalorder %s270, %s271
      %p283 = scmp.eq.s32.totalorder %s30, 1
      %p284 = por %p282, %p283
      %p286 = scmp.ne.s32.totalorder %s271, %s285
      %p287 = scmp.eq.s32.totalorder %s30, 0
      %p288 = por %p286, %p287
      %s290 = sadd.s32 %s289, 1
      %p293 = scmp.eq.s32.totalorder %s24, 1
      %p294 = scmp.ne.s32.totalorder %s289, %s291
      %p295 = scmp.eq.s32.totalorder %s24, 0
      %p296 = por %p294, %p295
      %p297 = scmp.ne.s32.totalorder %s289, %s291
      %p298 = scmp.eq.s32.totalorder %s29, 1
      %p299 = por %p297, %p298
      %p300 = scmp.ne.s32.totalorder %s291, %s292
      %p301 = scmp.eq.s32.totalorder %s29, 0
      %p302 = por %p300, %p301
      %p303 = scmp.ne.s32.totalorder %s291, %s292
      %p304 = scmp.eq.s32.totalorder %s30, 1
      %p305 = por %p303, %p304
      %p307 = scmp.ne.s32.totalorder %s292, %s306
      %p308 = scmp.eq.s32.totalorder %s30, 0
      %p309 = por %p307, %p308
      %s311 = sadd.s32 %s310, 1
      %p314 = scmp.eq.s32.totalorder %s24, 1
      %p315 = scmp.ne.s32.totalorder %s310, %s312
      %p316 = scmp.eq.s32.totalorder %s24, 0
      %p317 = por %p315, %p316
      %p318 = scmp.ne.s32.totalorder %s310, %s312
      %p319 = scmp.eq.s32.totalorder %s29, 1
      %p320 = por %p318, %p319
      %p321 = scmp.ne.s32.totalorder %s312, %s313
      %p322 = scmp.eq.s32.totalorder %s29, 0
      %p323 = por %p321, %p322
      %p324 = scmp.ne.s32.totalorder %s312, %s313
      %p325 = scmp.eq.s32.totalorder %s30, 1
      %p326 = por %p324, %p325
      %p328 = scmp.ne.s32.totalorder %s313, %s327
      %p329 = scmp.eq.s32.totalorder %s30, 0
      %p330 = por %p328, %p329
      %s332 = sadd.s32 %s331, 1
      %p335 = scmp.eq.s32.totalorder %s24, 1
      %p336 = scmp.ne.s32.totalorder %s331, %s333
      %p337 = scmp.eq.s32.totalorder %s24, 0
      %p338 = por %p336, %p337
      %p339 = scmp.ne.s32.totalorder %s331, %s333
      %p340 = scmp.eq.s32.totalorder %s29, 1
      %p341 = por %p339, %p340
      %p342 = scmp.ne.s32.totalorder %s333, %s334
      %p343 = scmp.eq.s32.totalorder %s29, 0
      %p344 = por %p342, %p343
      %p345 = scmp.ne.s32.totalorder %s333, %s334
      %p346 = scmp.eq.s32.totalorder %s30, 1
      %p347 = por %p345, %p346
      %p349 = scmp.ne.s32.totalorder %s334, %s348
      %p350 = scmp.eq.s32.totalorder %s30, 0
      %p351 = por %p349, %p350
      %s352 = ssub.s32 %s24, %s31
      %p353 = scmp.eq.s32.totalorder %s352, 0
      %s355 = sadd.s32 %s354, 1
      %s356 = scalar_select %p353, %s354, %s355
      %p359 = pneg %p353
      %p360 = scmp.eq.s32.totalorder %s24, 1
      %p361 = por %p359, %p360
      %p362 = scmp.ne.s32.totalorder %s354, %s357
      %p363 = scmp.eq.s32.totalorder %s24, 0
      %p364 = por %p362, %p363
      %p365 = scmp.ne.s32.totalorder %s354, %s357
      %p366 = scmp.eq.s32.totalorder %s29, 1
      %p367 = por %p365, %p366
      %p368 = scmp.ne.s32.totalorder %s357, %s358
      %p369 = scmp.eq.s32.totalorder %s29, 0
      %p370 = por %p368, %p369
      %p371 = scmp.ne.s32.totalorder %s357, %s358
      %p372 = scmp.eq.s32.totalorder %s30, 1
      %p373 = por %p371, %p372
      %p375 = scmp.ne.s32.totalorder %s358, %s374
      %p376 = scmp.eq.s32.totalorder %s30, 0
      %p377 = por %p375, %p376
      %p378 = scmp.le.s32.totalorder 1, %s24
      %p379 = scmp.lt.s32.totalorder %s24, 3
      %p380 = pnand %p378, %p379
      %p381 = pneg %p380
      // Predicated region
      $region9: #{_lambda_.5} parent=5 // pred_check
        _
      $region10: #{_lambda_.5} parent=5 // pred_check_branch
        %383 = sbr.rel (%p380) target = $region12
      $region11: #{_lambda_.5} parent=5 // pred_region
        %s384 = ssub.s32 %s24, 1
        // Predicated region
        $region13: #{_lambda_.5} parent=11 // pred_check
          %p385 = pneg %p71
        $region14: #{_lambda_.5} parent=11 // pred_check_branch
          %387 = sbr.rel (%p385) target = $region16
        $region15: #{_lambda_.5} parent=11 // pred_region
          _
        $region16: #{_lambda_.5} parent=11 // pred_fallthru
          _
        // Predicated region
        $region17: #{_lambda_.5} parent=11 // pred_check
          %p388 = pneg %p92
        $region18: #{_lambda_.5} parent=11 // pred_check_branch
          %390 = sbr.rel (%p388) target = $region20
        $region19: #{_lambda_.5} parent=11 // pred_region
          _
        $region20: #{_lambda_.5} parent=11 // pred_fallthru
          _
        // Predicated region
        $region21: #{_lambda_.5} parent=11 // pred_check
          %p391 = pneg %p113
        $region22: #{_lambda_.5} parent=11 // pred_check_branch
          %393 = sbr.rel (%p391) target = $region24
        $region23: #{_lambda_.5} parent=11 // pred_region
          _
        $region24: #{_lambda_.5} parent=11 // pred_fallthru
          _
        // Predicated region
        $region25: #{_lambda_.5} parent=11 // pred_check
          %p394 = pneg %p134
        $region26: #{_lambda_.5} parent=11 // pred_check_branch
          %396 = sbr.rel (%p394) target = $region28
        $region27: #{_lambda_.5} parent=11 // pred_region
          _
        $region28: #{_lambda_.5} parent=11 // pred_fallthru
          _
        // Predicated region
        $region29: #{_lambda_.5} parent=11 // pred_check
          %p397 = pneg %p155
        $region30: #{_lambda_.5} parent=11 // pred_check_branch
          %399 = sbr.rel (%p397) target = $region32
        $region31: #{_lambda_.5} parent=11 // pred_region
          _
        $region32: #{_lambda_.5} parent=11 // pred_fallthru
          _
        // Predicated region
        $region33: #{_lambda_.5} parent=11 // pred_check
          %p400 = pneg %p176
        $region34: #{_lambda_.5} parent=11 // pred_check_branch
          %402 = sbr.rel (%p400) target = $region36
        $region35: #{_lambda_.5} parent=11 // pred_region
          _
        $region36: #{_lambda_.5} parent=11 // pred_fallthru
          _
        // Predicated region
        $region37: #{_lambda_.5} parent=11 // pred_check
          %p403 = pneg %p197
        $region38: #{_lambda_.5} parent=11 // pred_check_branch
          %405 = sbr.rel (%p403) target = $region40
        $region39: #{_lambda_.5} parent=11 // pred_region
          _
        $region40: #{_lambda_.5} parent=11 // pred_fallthru
          _
        // Predicated region
        $region41: #{_lambda_.5} parent=11 // pred_check
          %p406 = pneg %p218
        $region42: #{_lambda_.5} parent=11 // pred_check_branch
          %408 = sbr.rel (%p406) target = $region44
        $region43: #{_lambda_.5} parent=11 // pred_region
          _
        $region44: #{_lambda_.5} parent=11 // pred_fallthru
          _
        // Predicated region
        $region45: #{_lambda_.5} parent=11 // pred_check
          %p409 = pneg %p239
        $region46: #{_lambda_.5} parent=11 // pred_check_branch
          %411 = sbr.rel (%p409) target = $region48
        $region47: #{_lambda_.5} parent=11 // pred_region
          _
        $region48: #{_lambda_.5} parent=11 // pred_fallthru
          _
        // Predicated region
        $region49: #{_lambda_.5} parent=11 // pred_check
          %p412 = pneg %p260
        $region50: #{_lambda_.5} parent=11 // pred_check_branch
          %414 = sbr.rel (%p412) target = $region52
        $region51: #{_lambda_.5} parent=11 // pred_region
          _
        $region52: #{_lambda_.5} parent=11 // pred_fallthru
          _
        // Predicated region
        $region53: #{_lambda_.5} parent=11 // pred_check
          %p415 = pneg %p281
        $region54: #{_lambda_.5} parent=11 // pred_check_branch
          %417 = sbr.rel (%p415) target = $region56
        $region55: #{_lambda_.5} parent=11 // pred_region
          _
        $region56: #{_lambda_.5} parent=11 // pred_fallthru
          _
        // Predicated region
        $region57: #{_lambda_.5} parent=11 // pred_check
          %p418 = pneg %p302
        $region58: #{_lambda_.5} parent=11 // pred_check_branch
          %420 = sbr.rel (%p418) target = $region60
        $region59: #{_lambda_.5} parent=11 // pred_region
          _
        $region60: #{_lambda_.5} parent=11 // pred_fallthru
          _
        // Predicated region
        $region61: #{_lambda_.5} parent=11 // pred_check
          %p421 = pneg %p323
        $region62: #{_lambda_.5} parent=11 // pred_check_branch
          %423 = sbr.rel (%p421) target = $region64
        $region63: #{_lambda_.5} parent=11 // pred_region
          _
        $region64: #{_lambda_.5} parent=11 // pred_fallthru
          _
        // Predicated region
        $region65: #{_lambda_.5} parent=11 // pred_check
          %p424 = pneg %p344
        $region66: #{_lambda_.5} parent=11 // pred_check_branch
          %426 = sbr.rel (%p424) target = $region68
        $region67: #{_lambda_.5} parent=11 // pred_region
          _
        $region68: #{_lambda_.5} parent=11 // pred_fallthru
          _
      $region12: #{_lambda_.5} parent=5 // pred_fallthru
        _
      %p427 = scmp.lt.s32.totalorder %s24, 2
      // Predicated region
      $region69: #{_lambda_.5} parent=5 // pred_check
        %p428 = pneg %p427
      $region70: #{_lambda_.5} parent=5 // pred_check_branch
        %430 = sbr.rel (%p428) target = $region72
      $region71: #{_lambda_.5} parent=5 // pred_region
        // Predicated region
        $region73: #{_lambda_.5} parent=71 // pred_check
          %p431 = pneg %p44
        $region74: #{_lambda_.5} parent=71 // pred_check_branch
          %433 = sbr.rel (%p431) target = $region76
        $region75: #{_lambda_.5} parent=71 // pred_region
          %p434 = scmp.lt.s32.totalorder %s24, 1
          %s435 = scalar_select %p434, %s24, 1
          %s436 = smul.addr %s435, 18
          %s437 = smul.addr %s436, 4
          %s438 = scalar_lea.vmem %s0, %s437
        $region76: #{_lambda_.5} parent=71 // pred_fallthru
          _
      $region72: #{_lambda_.5} parent=5 // pred_fallthru
        _
      %p439 = scmp.le.s32.totalorder 1, %s24
      %p440 = scmp.lt.s32.totalorder %s24, 3
      %p441 = pnand %p439, %p440
      %p442 = pneg %p441
      // Predicated region
      $region77: #{_lambda_.5} parent=5 // pred_check
        _
      $region78: #{_lambda_.5} parent=5 // pred_check_branch
        %444 = sbr.rel (%p441) target = $region80
      $region79: #{_lambda_.5} parent=5 // pred_region
        %s445 = ssub.s32 %s24, 1
        %p446 = scmp.lt.s32.totalorder %s29, 1
        %s447 = scalar_select %p446, %s29, 1
        %s448 = smul.addr %s447, 18
        %s449 = smul.addr %s448, 4
        %s450 = scalar_lea.vmem %s0, %s449
        %p451 = pneg %p50
        %p452 = pneg %p47
        %p453 = pneg %p71
        %p454 = pneg %p68
        %p455 = pneg %p92
        %p456 = pneg %p89
        %p457 = pneg %p113
        %p458 = pneg %p110
        %p459 = pneg %p134
        %p460 = pneg %p131
        %p461 = pneg %p155
        %p462 = pneg %p152
        %p463 = pneg %p176
        %p464 = pneg %p173
        %p465 = pneg %p197
        %p466 = pneg %p194
        %p467 = pneg %p218
        %p468 = pneg %p215
        %p469 = pneg %p239
        %p470 = pneg %p236
        %p471 = pneg %p260
        %p472 = pneg %p257
        %p473 = pneg %p281
        %p474 = pneg %p278
        %p475 = pneg %p302
        %p476 = pneg %p299
        %p477 = pneg %p323
        %p478 = pneg %p320
        %p479 = pneg %p344
        %p480 = pneg %p341
        %p481 = pneg %p370
        %p482 = pneg %p367
        %s483 = sand.u32 %s357, 1
        %s484 = scalar_lea.sflag [#allocation3], %s483
        %s485 = sand.u32 %s357, 1
        %s486 = scalar_lea.vmem [#allocation2], %s485
        %p487 = scmp.lt.s32.totalorder %s29, 1
        %s488 = scalar_select %p487, %s29, 1
        %s489 = smul.addr %s488, 18
        %s490 = smul.addr %s489, 4
        %s491 = scalar_lea.vmem %s0, %s490
        %v493 = vld [vmem:[%s491] sm:$0xf]
        %v494 = vld [vmem:[%s491 + $0x4] sm:$0xf]
        %v495 = vld [vmem:[%s2] sm:$0xf]
        %v496 = vld [vmem:[%s2 + $0x4] sm:$0xf]
        %v499 = vunpack.c.l.b16 %v493
        %v500 = vunpack.c.l.b16 %v494
        %v501 = vpack.c.b16 %v500, %v499
        %v504 = vunpack.c.l.b16 %v495
        %v505 = vunpack.c.l.b16 %v496
        %v506 = vpack.c.b16 %v505, %v504
        %vm508 = vcmask 130048
        %v510 = vsel %vm508, %v501, 0
        %512 = vmatprep.subr.bf16.mxu0 0
        %513 = vmatpush1.bf16.msra.mxu0 0
        %514 = vmatprep.subr.bf16.mxu0 0
        %515 = vmatpush1.bf16.msra.mxu0 0
        %516 = vmatprep.subr.bf16.mxu0 0
        %517 = vmatpush1.bf16.msra.mxu0 0
        %518 = vmatprep.subr.bf16.mxu0 0
        %519 = vmatpush1.bf16.msra.mxu0 0
        %520 = vmatprep.subr.bf16.mxu0 0
        %521 = vmatpush1.bf16.msra.mxu0 0
        %522 = vmatprep.subr.bf16.mxu0 0
        %523 = vmatpush1.bf16.msra.mxu0 0
        %524 = vmatprep.subr.bf16.mxu0 0
        %525 = vmatpush1.bf16.msra.mxu0 0
        %526 = vmatprep.subr.bf16.mxu0 0
        %527 = vmatpush1.bf16.msra.mxu0 %v506
        %528 = vmatprep.subr.bf16.mxu0 0
        %529 = vmatpush2.bf16.msra.mxu0 0
        %530 = vmatprep.subr.bf16.mxu0 0
        %531 = vmatpush2.bf16.msra.mxu0 0
        %532 = vmatprep.subr.bf16.mxu0 0
        %533 = vmatpush2.bf16.msra.mxu0 0
        %534 = vmatprep.subr.bf16.mxu0 0
        %535 = vmatpush2.bf16.msra.mxu0 0
        %536 = vmatprep.subr.bf16.mxu0 0
        %537 = vmatpush2.bf16.msra.mxu0 0
        %538 = vmatprep.subr.bf16.mxu0 0
        %539 = vmatpush2.bf16.msra.mxu0 0
        %540 = vmatprep.subr.bf16.mxu0 0
        %541 = vmatpush2.bf16.msra.mxu0 0
        %542 = vmatprep.subr.bf16.mxu0 0
        %543 = vmatpush2.bf16.msra.mxu0 0
        %544 = vmatprep.mubr.bf16.mxu0 0
        %545 = vmatmul.mubr.bf16.gmra.mxu0 %v510
        %v546 = vpop.f32.mrf.mxu0
        %v547 = vadd.f32 0.0, %v546
        %v548 = vpop.f32.mrf.mxu0
        %v549 = vpop.f32.mrf.mxu0
        %v550 = vadd.f32 0.0, %v549
        %v551 = vpop.f32.mrf.mxu0
        %552 = vdwg.mxu0
        %v553 = vld [vmem:[%s3] sm:$0x1]
        %v554 = vlaneseq
        %v555 = vshrl.u32 %v554, 7
        %v556 = vsub.s32 0, %v555
        %v557 = vrot.slane %v553, %v556
        %v558 = vmul.f32 %v547, %v557
        %v559 = vmul.f32 %v550, %v557
        %v560 = vld [vmem:[%s3 + $0x1] sm:$0x1]
        %v561 = vlaneseq
        %v562 = vshrl.u32 %v561, 7
        %v563 = vsub.s32 0, %v562
        %v564 = vrot.slane %v560, %v563
        %v565 = vadd.f32 %v558, %v564
        %v566 = vadd.f32 %v559, %v564
        %v567 = vmax.f32 %v565, 0.0
        %v568 = vmax.f32 %v566, 0.0
        %v569 = vld [vmem:[%s1] sm:$0xff]
        %v570 = vld [vmem:[%s1 + $0x8] sm:$0xff]
        %572 = vset.pattern.permute.xlu0 0
        %573 = vperm.xlu0 %572, %v569
        %v574 = vpop.permute.xlu0 %573
        %577 = vset.pattern.permute.xlu0 0
        %578 = vperm.xlu0 %577, %v570
        %v579 = vpop.permute.xlu0 %578
        %v581 = vmul.f32 %v567, %v574
        %v582 = vmul.f32 %v568, %v579
        %v583 = vpack.c.bf16 %v582, %v581
        %v584 = vld [vmem:[%s4] sm:$0xf]
        %v585 = vld [vmem:[%s4 + $0x4] sm:$0xf]
        %v586 = vld [vmem:[%s4 + $0x8] sm:$0xf]
        %v587 = vld [vmem:[%s4 + $0xc] sm:$0xf]
        %v588 = vld [vmem:[%s491 + $0x8] sm:$0xf]
        %v589 = vld [vmem:[%s491 + $0xc] sm:$0xf]
        %v592 = vunpack.c.l.b16 %v588
        %v593 = vunpack.c.l.b16 %v589
        %v594 = vpack.c.b16 %v593, %v592
        %v596 = vsel %vm508, %v594, 0
        %598 = vmatprep.subr.bf16.mxu0 0
        %599 = vmatpush1.bf16.msra.mxu0 0
        %600 = vmatprep.subr.bf16.mxu0 0
        %601 = vmatpush1.bf16.msra.mxu0 0
        %602 = vmatprep.subr.bf16.mxu0 0
        %603 = vmatpush1.bf16.msra.mxu0 0
        %604 = vmatprep.subr.bf16.mxu0 0
        %605 = vmatpush1.bf16.msra.mxu0 0
        %606 = vmatprep.subr.bf16.mxu0 0
        %607 = vmatpush1.bf16.msra.mxu0 0
        %608 = vmatprep.subr.bf16.mxu0 0
        %609 = vmatpush1.bf16.msra.mxu0 0
        %610 = vmatprep.subr.bf16.mxu0 0
        %611 = vmatpush1.bf16.msra.mxu0 0
        %612 = vmatprep.subr.bf16.mxu0 0
        %613 = vmatpush1.bf16.msra.mxu0 %v506
        %614 = vmatprep.subr.bf16.mxu0 0
        %615 = vmatpush2.bf16.msra.mxu0 0
        %616 = vmatprep.subr.bf16.mxu0 0
        %617 = vmatpush2.bf16.msra.mxu0 0
        %618 = vmatprep.subr.bf16.mxu0 0
        %619 = vmatpush2.bf16.msra.mxu0 0
        %620 = vmatprep.subr.bf16.mxu0 0
        %621 = vmatpush2.bf16.msra.mxu0 0
        %622 = vmatprep.subr.bf16.mxu0 0
        %623 = vmatpush2.bf16.msra.mxu0 0
        %624 = vmatprep.subr.bf16.mxu0 0
        %625 = vmatpush2.bf16.msra.mxu0 0
        %626 = vmatprep.subr.bf16.mxu0 0
        %627 = vmatpush2.bf16.msra.mxu0 0
        %628 = vmatprep.subr.bf16.mxu0 0
        %629 = vmatpush2.bf16.msra.mxu0 0
        %630 = vmatprep.mubr.bf16.mxu0 0
        %631 = vmatmul.mubr.bf16.gmra.mxu0 %v596
        %v632 = vpop.f32.mrf.mxu0
        %v633 = vadd.f32 0.0, %v632
        %v634 = vpop.f32.mrf.mxu0
        %v635 = vpop.f32.mrf.mxu0
        %v636 = vadd.f32 0.0, %v635
        %v637 = vpop.f32.mrf.mxu0
        %638 = vdwg.mxu0
        %v639 = vmul.f32 %v633, %v557
        %v640 = vmul.f32 %v636, %v557
        %v641 = vadd.f32 %v639, %v564
        %v642 = vadd.f32 %v640, %v564
        %v643 = vmax.f32 %v641, 0.0
        %v644 = vmax.f32 %v642, 0.0
        %v645 = vld [vmem:[%s1 + $0x10] sm:$0xff]
        %v646 = vld [vmem:[%s1 + $0x18] sm:$0xff]
        %648 = vset.pattern.permute.xlu0 0
        %649 = vperm.xlu0 %648, %v645
        %v650 = vpop.permute.xlu0 %649
        %653 = vset.pattern.permute.xlu0 0
        %654 = vperm.xlu0 %653, %v646
        %v655 = vpop.permute.xlu0 %654
        %v657 = vmul.f32 %v643, %v650
        %v658 = vmul.f32 %v644, %v655
        %v659 = vpack.c.bf16 %v658, %v657
        %s660 = scalar_lea.vmem %s4, 16
        %v661 = vld [vmem:[%s660] sm:$0xf]
        %v662 = vld [vmem:[%s660 + $0x4] sm:$0xf]
        %v663 = vld [vmem:[%s660 + $0x8] sm:$0xf]
        %v664 = vld [vmem:[%s660 + $0xc] sm:$0xf]
        %v669 = vunpack.c.l.b16 %v661
        %v670 = vunpack.c.l.b16 %v662
        %v671 = vunpack.c.l.b16 %v663
        %v672 = vunpack.c.l.b16 %v664
        %v673 = vpack.c.b16 %v670, %v669
        %v674 = vpack.c.b16 %v672, %v671
        %vm677 = vcmask 261120
        %v679 = vsel %vm677, %v659, 0
        %681 = vmatprep.subr.bf16.mxu0 0
        %682 = vmatpush1.bf16.msra.mxu0 0
        %683 = vmatprep.subr.bf16.mxu0 0
        %684 = vmatpush1.bf16.msra.mxu0 0
        %685 = vmatprep.subr.bf16.mxu0 0
        %686 = vmatpush1.bf16.msra.mxu0 0
        %687 = vmatprep.subr.bf16.mxu0 0
        %688 = vmatpush1.bf16.msra.mxu0 0
        %689 = vmatprep.subr.bf16.mxu0 0
        %690 = vmatpush1.bf16.msra.mxu0 0
        %691 = vmatprep.subr.bf16.mxu0 0
        %692 = vmatpush1.bf16.msra.mxu0 0
        %693 = vmatprep.subr.bf16.mxu0 0
        %694 = vmatpush1.bf16.msra.mxu0 %v674
        %695 = vmatprep.subr.bf16.mxu0 0
        %696 = vmatpush1.bf16.msra.mxu0 %v673
        %697 = vmatprep.subr.bf16.mxu0 0
        %698 = vmatpush2.bf16.msra.mxu0 0
        %699 = vmatprep.subr.bf16.mxu0 0
        %700 = vmatpush2.bf16.msra.mxu0 0
        %701 = vmatprep.subr.bf16.mxu0 0
        %702 = vmatpush2.bf16.msra.mxu0 0
        %703 = vmatprep.subr.bf16.mxu0 0
        %704 = vmatpush2.bf16.msra.mxu0 0
        %705 = vmatprep.subr.bf16.mxu0 0
        %706 = vmatpush2.bf16.msra.mxu0 0
        %707 = vmatprep.subr.bf16.mxu0 0
        %708 = vmatpush2.bf16.msra.mxu0 0
        %709 = vmatprep.subr.bf16.mxu0 0
        %710 = vmatpush2.bf16.msra.mxu0 0
        %711 = vmatprep.subr.bf16.mxu0 0
        %712 = vmatpush2.bf16.msra.mxu0 0
        %713 = vmatprep.mubr.bf16.mxu0 0
        %714 = vmatmul.mubr.bf16.gmra.mxu0 %v679
        %v715 = vpop.f32.mrf.mxu0
        %v716 = vadd.f32 0.0, %v715
        %v717 = vpop.f32.mrf.mxu0
        %v718 = vpop.f32.mrf.mxu0
        %v719 = vadd.f32 0.0, %v718
        %v720 = vpop.f32.mrf.mxu0
        %721 = vdwg.mxu0
        %v726 = vunpack.c.l.b16 %v584
        %v727 = vunpack.c.l.b16 %v585
        %v728 = vunpack.c.l.b16 %v586
        %v729 = vunpack.c.l.b16 %v587
        %v730 = vpack.c.b16 %v727, %v726
        %v731 = vpack.c.b16 %v729, %v728
        %v735 = vsel %vm677, %v583, 0
        %737 = vmatprep.subr.bf16.mxu0 0
        %738 = vmatpush1.bf16.msra.mxu0 0
        %739 = vmatprep.subr.bf16.mxu0 0
        %740 = vmatpush1.bf16.msra.mxu0 0
        %741 = vmatprep.subr.bf16.mxu0 0
        %742 = vmatpush1.bf16.msra.mxu0 0
        %743 = vmatprep.subr.bf16.mxu0 0
        %744 = vmatpush1.bf16.msra.mxu0 0
        %745 = vmatprep.subr.bf16.mxu0 0
        %746 = vmatpush1.bf16.msra.mxu0 0
        %747 = vmatprep.subr.bf16.mxu0 0
        %748 = vmatpush1.bf16.msra.mxu0 0
        %749 = vmatprep.subr.bf16.mxu0 0
        %750 = vmatpush1.bf16.msra.mxu0 %v731
        %751 = vmatprep.subr.bf16.mxu0 0
        %752 = vmatpush1.bf16.msra.mxu0 %v730
        %753 = vmatprep.subr.bf16.mxu0 0
        %754 = vmatpush2.bf16.msra.mxu0 0
        %755 = vmatprep.subr.bf16.mxu0 0
        %756 = vmatpush2.bf16.msra.mxu0 0
        %757 = vmatprep.subr.bf16.mxu0 0
        %758 = vmatpush2.bf16.msra.mxu0 0
        %759 = vmatprep.subr.bf16.mxu0 0
        %760 = vmatpush2.bf16.msra.mxu0 0
        %761 = vmatprep.subr.bf16.mxu0 0
        %762 = vmatpush2.bf16.msra.mxu0 0
        %763 = vmatprep.subr.bf16.mxu0 0
        %764 = vmatpush2.bf16.msra.mxu0 0
        %765 = vmatprep.subr.bf16.mxu0 0
        %766 = vmatpush2.bf16.msra.mxu0 0
        %767 = vmatprep.subr.bf16.mxu0 0
        %768 = vmatpush2.bf16.msra.mxu0 0
        %769 = vmatprep.mubr.bf16.mxu0 0
        %770 = vmatmul.mubr.bf16.gmra.mxu0 %v735
        %v771 = vpop.f32.mrf.mxu0
        %v772 = vadd.f32 %v716, %v771
        %v773 = vpop.f32.mrf.mxu0
        %v774 = vpop.f32.mrf.mxu0
        %v775 = vadd.f32 %v719, %v774
        %v776 = vpop.f32.mrf.mxu0
        %777 = vdwg.mxu0
        %v778 = vld [vmem:[%s491 + $0x10] sm:$0xf]
        %v779 = vld [vmem:[%s491 + $0x14] sm:$0xf]
        %v782 = vunpack.c.l.b16 %v778
        %v783 = vunpack.c.l.b16 %v779
        %v784 = vpack.c.b16 %v783, %v782
        %v786 = vsel %vm508, %v784, 0
        %788 = vmatprep.subr.bf16.mxu0 0
        %789 = vmatpush1.bf16.msra.mxu0 0
        %790 = vmatprep.subr.bf16.mxu0 0
        %791 = vmatpush1.bf16.msra.mxu0 0
        %792 = vmatprep.subr.bf16.mxu0 0
        %793 = vmatpush1.bf16.msra.mxu0 0
        %794 = vmatprep.subr.bf16.mxu0 0
        %795 = vmatpush1.bf16.msra.mxu0 0
        %796 = vmatprep.subr.bf16.mxu0 0
        %797 = vmatpush1.bf16.msra.mxu0 0
        %798 = vmatprep.subr.bf16.mxu0 0
        %799 = vmatpush1.bf16.msra.mxu0 0
        %800 = vmatprep.subr.bf16.mxu0 0
        %801 = vmatpush1.bf16.msra.mxu0 0
        %802 = vmatprep.subr.bf16.mxu0 0
        %803 = vmatpush1.bf16.msra.mxu0 %v506
        %804 = vmatprep.subr.bf16.mxu0 0
        %805 = vmatpush2.bf16.msra.mxu0 0
        %806 = vmatprep.subr.bf16.mxu0 0
        %807 = vmatpush2.bf16.msra.mxu0 0
        %808 = vmatprep.subr.bf16.mxu0 0
        %809 = vmatpush2.bf16.msra.mxu0 0
        %810 = vmatprep.subr.bf16.mxu0 0
        %811 = vmatpush2.bf16.msra.mxu0 0
        %812 = vmatprep.subr.bf16.mxu0 0
        %813 = vmatpush2.bf16.msra.mxu0 0
        %814 = vmatprep.subr.bf16.mxu0 0
        %815 = vmatpush2.bf16.msra.mxu0 0
        %816 = vmatprep.subr.bf16.mxu0 0
        %817 = vmatpush2.bf16.msra.mxu0 0
        %818 = vmatprep.subr.bf16.mxu0 0
        %819 = vmatpush2.bf16.msra.mxu0 0
        %820 = vmatprep.mubr.bf16.mxu0 0
        %821 = vmatmul.mubr.bf16.gmra.mxu0 %v786
        %v822 = vpop.f32.mrf.mxu0
        %v823 = vadd.f32 0.0, %v822
        %v824 = vpop.f32.mrf.mxu0
        %v825 = vpop.f32.mrf.mxu0
        %v826 = vadd.f32 0.0, %v825
        %v827 = vpop.f32.mrf.mxu0
        %828 = vdwg.mxu0
        %v829 = vmul.f32 %v823, %v557
        %v830 = vmul.f32 %v826, %v557
        %v831 = vadd.f32 %v829, %v564
        %v832 = vadd.f32 %v830, %v564
        %v833 = vmax.f32 %v831, 0.0
        %v834 = vmax.f32 %v832, 0.0
        %v835 = vld [vmem:[%s1 + $0x20] sm:$0xff]
        %v836 = vld [vmem:[%s1 + $0x28] sm:$0xff]
        %838 = vset.pattern.permute.xlu0 0
        %839 = vperm.xlu0 %838, %v835
        %v840 = vpop.permute.xlu0 %839
        %843 = vset.pattern.permute.xlu0 0
        %844 = vperm.xlu0 %843, %v836
        %v845 = vpop.permute.xlu0 %844
        %v847 = vmul.f32 %v833, %v840
        %v848 = vmul.f32 %v834, %v845
        %v849 = vpack.c.bf16 %v848, %v847
        %s850 = scalar_lea.vmem %s4, 32
        %v851 = vld [vmem:[%s850] sm:$0xf]
        %v852 = vld [vmem:[%s850 + $0x4] sm:$0xf]
        %v853 = vld [vmem:[%s850 + $0x8] sm:$0xf]
        %v854 = vld [vmem:[%s850 + $0xc] sm:$0xf]
        %v859 = vunpack.c.l.b16 %v851
        %v860 = vunpack.c.l.b16 %v852
        %v861 = vunpack.c.l.b16 %v853
        %v862 = vunpack.c.l.b16 %v854
        %v863 = vpack.c.b16 %v860, %v859
        %v864 = vpack.c.b16 %v862, %v861
        %v868 = vsel %vm677, %v849, 0
        %870 = vmatprep.subr.bf16.mxu0 0
        %871 = vmatpush1.bf16.msra.mxu0 0
        %872 = vmatprep.subr.bf16.mxu0 0
        %873 = vmatpush1.bf16.msra.mxu0 0
        %874 = vmatprep.subr.bf16.mxu0 0
        %875 = vmatpush1.bf16.msra.mxu0 0
        %876 = vmatprep.subr.bf16.mxu0 0
        %877 = vmatpush1.bf16.msra.mxu0 0
        %878 = vmatprep.subr.bf16.mxu0 0
        %879 = vmatpush1.bf16.msra.mxu0 0
        %880 = vmatprep.subr.bf16.mxu0 0
        %881 = vmatpush1.bf16.msra.mxu0 0
        %882 = vmatprep.subr.bf16.mxu0 0
        %883 = vmatpush1.bf16.msra.mxu0 %v864
        %884 = vmatprep.subr.bf16.mxu0 0
        %885 = vmatpush1.bf16.msra.mxu0 %v863
        %886 = vmatprep.subr.bf16.mxu0 0
        %887 = vmatpush2.bf16.msra.mxu0 0
        %888 = vmatprep.subr.bf16.mxu0 0
        %889 = vmatpush2.bf16.msra.mxu0 0
        %890 = vmatprep.subr.bf16.mxu0 0
        %891 = vmatpush2.bf16.msra.mxu0 0
        %892 = vmatprep.subr.bf16.mxu0 0
        %893 = vmatpush2.bf16.msra.mxu0 0
        %894 = vmatprep.subr.bf16.mxu0 0
        %895 = vmatpush2.bf16.msra.mxu0 0
        %896 = vmatprep.subr.bf16.mxu0 0
        %897 = vmatpush2.bf16.msra.mxu0 0
        %898 = vmatprep.subr.bf16.mxu0 0
        %899 = vmatpush2.bf16.msra.mxu0 0
        %900 = vmatprep.subr.bf16.mxu0 0
        %901 = vmatpush2.bf16.msra.mxu0 0
        %902 = vmatprep.mubr.bf16.mxu0 0
        %903 = vmatmul.mubr.bf16.gmra.mxu0 %v868
        %v904 = vpop.f32.mrf.mxu0
        %v905 = vadd.f32 0.0, %v904
        %v906 = vpop.f32.mrf.mxu0
        %v907 = vpop.f32.mrf.mxu0
        %v908 = vadd.f32 0.0, %v907
        %v909 = vpop.f32.mrf.mxu0
        %910 = vdwg.mxu0
        %v911 = vadd.f32 %v772, %v905
        %v912 = vadd.f32 %v775, %v908
        %v913 = vld [vmem:[%s491 + $0x18] sm:$0xf]
        %v914 = vld [vmem:[%s491 + $0x1c] sm:$0xf]
        %v917 = vunpack.c.l.b16 %v913
        %v918 = vunpack.c.l.b16 %v914
        %v919 = vpack.c.b16 %v918, %v917
        %v921 = vsel %vm508, %v919, 0
        %923 = vmatprep.subr.bf16.mxu0 0
        %924 = vmatpush1.bf16.msra.mxu0 0
        %925 = vmatprep.subr.bf16.mxu0 0
        %926 = vmatpush1.bf16.msra.mxu0 0
        %927 = vmatprep.subr.bf16.mxu0 0
        %928 = vmatpush1.bf16.msra.mxu0 0
        %929 = vmatprep.subr.bf16.mxu0 0
        %930 = vmatpush1.bf16.msra.mxu0 0
        %931 = vmatprep.subr.bf16.mxu0 0
        %932 = vmatpush1.bf16.msra.mxu0 0
        %933 = vmatprep.subr.bf16.mxu0 0
        %934 = vmatpush1.bf16.msra.mxu0 0
        %935 = vmatprep.subr.bf16.mxu0 0
        %936 = vmatpush1.bf16.msra.mxu0 0
        %937 = vmatprep.subr.bf16.mxu0 0
        %938 = vmatpush1.bf16.msra.mxu0 %v506
        %939 = vmatprep.subr.bf16.mxu0 0
        %940 = vmatpush2.bf16.msra.mxu0 0
        %941 = vmatprep.subr.bf16.mxu0 0
        %942 = vmatpush2.bf16.msra.mxu0 0
        %943 = vmatprep.subr.bf16.mxu0 0
        %944 = vmatpush2.bf16.msra.mxu0 0
        %945 = vmatprep.subr.bf16.mxu0 0
        %946 = vmatpush2.bf16.msra.mxu0 0
        %947 = vmatprep.subr.bf16.mxu0 0
        %948 = vmatpush2.bf16.msra.mxu0 0
        %949 = vmatprep.subr.bf16.mxu0 0
        %950 = vmatpush2.bf16.msra.mxu0 0
        %951 = vmatprep.subr.bf16.mxu0 0
        %952 = vmatpush2.bf16.msra.mxu0 0
        %953 = vmatprep.subr.bf16.mxu0 0
        %954 = vmatpush2.bf16.msra.mxu0 0
        %955 = vmatprep.mubr.bf16.mxu0 0
        %956 = vmatmul.mubr.bf16.gmra.mxu0 %v921
        %v957 = vpop.f32.mrf.mxu0
        %v958 = vadd.f32 0.0, %v957
        %v959 = vpop.f32.mrf.mxu0
        %v960 = vpop.f32.mrf.mxu0
        %v961 = vadd.f32 0.0, %v960
        %v962 = vpop.f32.mrf.mxu0
        %963 = vdwg.mxu0
        %v964 = vmul.f32 %v958, %v557
        %v965 = vmul.f32 %v961, %v557
        %v966 = vadd.f32 %v964, %v564
        %v967 = vadd.f32 %v965, %v564
        %v968 = vmax.f32 %v966, 0.0
        %v969 = vmax.f32 %v967, 0.0
        %v970 = vld [vmem:[%s1 + $0x30] sm:$0xff]
        %v971 = vld [vmem:[%s1 + $0x38] sm:$0xff]
        %973 = vset.pattern.permute.xlu0 0
        %974 = vperm.xlu0 %973, %v970
        %v975 = vpop.permute.xlu0 %974
        %978 = vset.pattern.permute.xlu0 0
        %979 = vperm.xlu0 %978, %v971
        %v980 = vpop.permute.xlu0 %979
        %v982 = vmul.f32 %v968, %v975
        %v983 = vmul.f32 %v969, %v980
        %v984 = vpack.c.bf16 %v983, %v982
        %s985 = scalar_lea.vmem %s4, 48
        %v986 = vld [vmem:[%s985] sm:$0xf]
        %v987 = vld [vmem:[%s985 + $0x4] sm:$0xf]
        %v988 = vld [vmem:[%s985 + $0x8] sm:$0xf]
        %v989 = vld [vmem:[%s985 + $0xc] sm:$0xf]
        %v994 = vunpack.c.l.b16 %v986
        %v995 = vunpack.c.l.b16 %v987
        %v996 = vunpack.c.l.b16 %v988
        %v997 = vunpack.c.l.b16 %v989
        %v998 = vpack.c.b16 %v995, %v994
        %v999 = vpack.c.b16 %v997, %v996
        %v1003 = vsel %vm677, %v984, 0
        %1005 = vmatprep.subr.bf16.mxu0 0
        %1006 = vmatpush1.bf16.msra.mxu0 0
        %1007 = vmatprep.subr.bf16.mxu0 0
        %1008 = vmatpush1.bf16.msra.mxu0 0
        %1009 = vmatprep.subr.bf16.mxu0 0
        %1010 = vmatpush1.bf16.msra.mxu0 0
        %1011 = vmatprep.subr.bf16.mxu0 0
        %1012 = vmatpush1.bf16.msra.mxu0 0
        %1013 = vmatprep.subr.bf16.mxu0 0
        %1014 = vmatpush1.bf16.msra.mxu0 0
        %1015 = vmatprep.subr.bf16.mxu0 0
        %1016 = vmatpush1.bf16.msra.mxu0 0
        %1017 = vmatprep.subr.bf16.mxu0 0
        %1018 = vmatpush1.bf16.msra.mxu0 %v999
        %1019 = vmatprep.subr.bf16.mxu0 0
        %1020 = vmatpush1.bf16.msra.mxu0 %v998
        %1021 = vmatprep.subr.bf16.mxu0 0
        %1022 = vmatpush2.bf16.msra.mxu0 0
        %1023 = vmatprep.subr.bf16.mxu0 0
        %1024 = vmatpush2.bf16.msra.mxu0 0
        %1025 = vmatprep.subr.bf16.mxu0 0
        %1026 = vmatpush2.bf16.msra.mxu0 0
        %1027 = vmatprep.subr.bf16.mxu0 0
        %1028 = vmatpush2.bf16.msra.mxu0 0
        %1029 = vmatprep.subr.bf16.mxu0 0
        %1030 = vmatpush2.bf16.msra.mxu0 0
        %1031 = vmatprep.subr.bf16.mxu0 0
        %1032 = vmatpush2.bf16.msra.mxu0 0
        %1033 = vmatprep.subr.bf16.mxu0 0
        %1034 = vmatpush2.bf16.msra.mxu0 0
        %1035 = vmatprep.subr.bf16.mxu0 0
        %1036 = vmatpush2.bf16.msra.mxu0 0
        %1037 = vmatprep.mubr.bf16.mxu0 0
        %1038 = vmatmul.mubr.bf16.gmra.mxu0 %v1003
        %v1039 = vpop.f32.mrf.mxu0
        %v1040 = vadd.f32 0.0, %v1039
        %v1041 = vpop.f32.mrf.mxu0
        %v1042 = vpop.f32.mrf.mxu0
        %v1043 = vadd.f32 0.0, %v1042
        %v1044 = vpop.f32.mrf.mxu0
        %1045 = vdwg.mxu0
        %v1046 = vadd.f32 %v911, %v1040
        %v1047 = vadd.f32 %v912, %v1043
        %v1048 = vld [vmem:[%s491 + $0x20] sm:$0xf]
        %v1049 = vld [vmem:[%s491 + $0x24] sm:$0xf]
        %v1052 = vunpack.c.l.b16 %v1048
        %v1053 = vunpack.c.l.b16 %v1049
        %v1054 = vpack.c.b16 %v1053, %v1052
        %v1056 = vsel %vm508, %v1054, 0
        %1058 = vmatprep.subr.bf16.mxu0 0
        %1059 = vmatpush1.bf16.msra.mxu0 0
        %1060 = vmatprep.subr.bf16.mxu0 0
        %1061 = vmatpush1.bf16.msra.mxu0 0
        %1062 = vmatprep.subr.bf16.mxu0 0
        %1063 = vmatpush1.bf16.msra.mxu0 0
        %1064 = vmatprep.subr.bf16.mxu0 0
        %1065 = vmatpush1.bf16.msra.mxu0 0
        %1066 = vmatprep.subr.bf16.mxu0 0
        %1067 = vmatpush1.bf16.msra.mxu0 0
        %1068 = vmatprep.subr.bf16.mxu0 0
        %1069 = vmatpush1.bf16.msra.mxu0 0
        %1070 = vmatprep.subr.bf16.mxu0 0
        %1071 = vmatpush1.bf16.msra.mxu0 0
        %1072 = vmatprep.subr.bf16.mxu0 0
        %1073 = vmatpush1.bf16.msra.mxu0 %v506
        %1074 = vmatprep.subr.bf16.mxu0 0
        %1075 = vmatpush2.bf16.msra.mxu0 0
        %1076 = vmatprep.subr.bf16.mxu0 0
        %1077 = vmatpush2.bf16.msra.mxu0 0
        %1078 = vmatprep.subr.bf16.mxu0 0
        %1079 = vmatpush2.bf16.msra.mxu0 0
        %1080 = vmatprep.subr.bf16.mxu0 0
        %1081 = vmatpush2.bf16.msra.mxu0 0
        %1082 = vmatprep.subr.bf16.mxu0 0
        %1083 = vmatpush2.bf16.msra.mxu0 0
        %1084 = vmatprep.subr.bf16.mxu0 0
        %1085 = vmatpush2.bf16.msra.mxu0 0
        %1086 = vmatprep.subr.bf16.mxu0 0
        %1087 = vmatpush2.bf16.msra.mxu0 0
        %1088 = vmatprep.subr.bf16.mxu0 0
        %1089 = vmatpush2.bf16.msra.mxu0 0
        %1090 = vmatprep.mubr.bf16.mxu0 0
        %1091 = vmatmul.mubr.bf16.gmra.mxu0 %v1056
        %v1092 = vpop.f32.mrf.mxu0
        %v1093 = vadd.f32 0.0, %v1092
        %v1094 = vpop.f32.mrf.mxu0
        %v1095 = vpop.f32.mrf.mxu0
        %v1096 = vadd.f32 0.0, %v1095
        %v1097 = vpop.f32.mrf.mxu0
        %1098 = vdwg.mxu0
        %v1099 = vmul.f32 %v1093, %v557
        %v1100 = vmul.f32 %v1096, %v557
        %v1101 = vadd.f32 %v1099, %v564
        %v1102 = vadd.f32 %v1100, %v564
        %v1103 = vmax.f32 %v1101, 0.0
        %v1104 = vmax.f32 %v1102, 0.0
        %v1105 = vpack.c.bf16 %v1104, %v1103
        %s1106 = scalar_lea.vmem %s4, 64
        %v1107 = vld [vmem:[%s1106] sm:$0xf]
        %v1108 = vld [vmem:[%s1106 + $0x4] sm:$0xf]
        %v1109 = vld [vmem:[%s1106 + $0x8] sm:$0xf]
        %v1110 = vld [vmem:[%s1106 + $0xc] sm:$0xf]
        %v1115 = vunpack.c.l.b16 %v1107
        %v1116 = vunpack.c.l.b16 %v1108
        %v1117 = vunpack.c.l.b16 %v1109
        %v1118 = vunpack.c.l.b16 %v1110
        %v1119 = vpack.c.b16 %v1116, %v1115
        %v1120 = vpack.c.b16 %v1118, %v1117
        %v1124 = vsel %vm677, %v1105, 0
        %1126 = vmatprep.subr.bf16.mxu0 0
        %1127 = vmatpush1.bf16.msra.mxu0 0
        %1128 = vmatprep.subr.bf16.mxu0 0
        %1129 = vmatpush1.bf16.msra.mxu0 0
        %1130 = vmatprep.subr.bf16.mxu0 0
        %1131 = vmatpush1.bf16.msra.mxu0 0
        %1132 = vmatprep.subr.bf16.mxu0 0
        %1133 = vmatpush1.bf16.msra.mxu0 0
        %1134 = vmatprep.subr.bf16.mxu0 0
        %1135 = vmatpush1.bf16.msra.mxu0 0
        %1136 = vmatprep.subr.bf16.mxu0 0
        %1137 = vmatpush1.bf16.msra.mxu0 0
        %1138 = vmatprep.subr.bf16.mxu0 0
        %1139 = vmatpush1.bf16.msra.mxu0 %v1120
        %1140 = vmatprep.subr.bf16.mxu0 0
        %1141 = vmatpush1.bf16.msra.mxu0 %v1119
        %1142 = vmatprep.subr.bf16.mxu0 0
        %1143 = vmatpush2.bf16.msra.mxu0 0
        %1144 = vmatprep.subr.bf16.mxu0 0
        %1145 = vmatpush2.bf16.msra.mxu0 0
        %1146 = vmatprep.subr.bf16.mxu0 0
        %1147 = vmatpush2.bf16.msra.mxu0 0
        %1148 = vmatprep.subr.bf16.mxu0 0
        %1149 = vmatpush2.bf16.msra.mxu0 0
        %1150 = vmatprep.subr.bf16.mxu0 0
        %1151 = vmatpush2.bf16.msra.mxu0 0
        %1152 = vmatprep.subr.bf16.mxu0 0
        %1153 = vmatpush2.bf16.msra.mxu0 0
        %1154 = vmatprep.subr.bf16.mxu0 0
        %1155 = vmatpush2.bf16.msra.mxu0 0
        %1156 = vmatprep.subr.bf16.mxu0 0
        %1157 = vmatpush2.bf16.msra.mxu0 0
        %1158 = vmatprep.mubr.bf16.mxu0 0
        %1159 = vmatmul.mubr.bf16.gmra.mxu0 %v1124
        %v1160 = vpop.f32.mrf.mxu0
        %v1161 = vadd.f32 0.0, %v1160
        %v1162 = vpop.f32.mrf.mxu0
        %v1163 = vpop.f32.mrf.mxu0
        %v1164 = vadd.f32 0.0, %v1163
        %v1165 = vpop.f32.mrf.mxu0
        %1166 = vdwg.mxu0
        %v1167 = vadd.f32 %v1046, %v1161
        %v1168 = vadd.f32 %v1047, %v1164
        %v1169 = vld [vmem:[%s491 + $0x28] sm:$0xf]
        %v1170 = vld [vmem:[%s491 + $0x2c] sm:$0xf]
        %v1173 = vunpack.c.l.b16 %v1169
        %v1174 = vunpack.c.l.b16 %v1170
        %v1175 = vpack.c.b16 %v1174, %v1173
        %v1177 = vsel %vm508, %v1175, 0
        %1179 = vmatprep.subr.bf16.mxu0 0
        %1180 = vmatpush1.bf16.msra.mxu0 0
        %1181 = vmatprep.subr.bf16.mxu0 0
        %1182 = vmatpush1.bf16.msra.mxu0 0
        %1183 = vmatprep.subr.bf16.mxu0 0
        %1184 = vmatpush1.bf16.msra.mxu0 0
        %1185 = vmatprep.subr.bf16.mxu0 0
        %1186 = vmatpush1.bf16.msra.mxu0 0
        %1187 = vmatprep.subr.bf16.mxu0 0
        %1188 = vmatpush1.bf16.msra.mxu0 0
        %1189 = vmatprep.subr.bf16.mxu0 0
        %1190 = vmatpush1.bf16.msra.mxu0 0
        %1191 = vmatprep.subr.bf16.mxu0 0
        %1192 = vmatpush1.bf16.msra.mxu0 0
        %1193 = vmatprep.subr.bf16.mxu0 0
        %1194 = vmatpush1.bf16.msra.mxu0 %v506
        %1195 = vmatprep.subr.bf16.mxu0 0
        %1196 = vmatpush2.bf16.msra.mxu0 0
        %1197 = vmatprep.subr.bf16.mxu0 0
        %1198 = vmatpush2.bf16.msra.mxu0 0
        %1199 = vmatprep.subr.bf16.mxu0 0
        %1200 = vmatpush2.bf16.msra.mxu0 0
        %1201 = vmatprep.subr.bf16.mxu0 0
        %1202 = vmatpush2.bf16.msra.mxu0 0
        %1203 = vmatprep.subr.bf16.mxu0 0
        %1204 = vmatpush2.bf16.msra.mxu0 0
        %1205 = vmatprep.subr.bf16.mxu0 0
        %1206 = vmatpush2.bf16.msra.mxu0 0
        %1207 = vmatprep.subr.bf16.mxu0 0
        %1208 = vmatpush2.bf16.msra.mxu0 0
        %1209 = vmatprep.subr.bf16.mxu0 0
        %1210 = vmatpush2.bf16.msra.mxu0 0
        %1211 = vmatprep.mubr.bf16.mxu0 0
        %1212 = vmatmul.mubr.bf16.gmra.mxu0 %v1177
        %v1213 = vpop.f32.mrf.mxu0
        %v1214 = vadd.f32 0.0, %v1213
        %v1215 = vpop.f32.mrf.mxu0
        %v1216 = vpop.f32.mrf.mxu0
        %v1217 = vadd.f32 0.0, %v1216
        %v1218 = vpop.f32.mrf.mxu0
        %1219 = vdwg.mxu0
        %v1220 = vmul.f32 %v1214, %v557
        %v1221 = vmul.f32 %v1217, %v557
        %v1222 = vadd.f32 %v1220, %v564
        %v1223 = vadd.f32 %v1221, %v564
        %v1224 = vmax.f32 %v1222, 0.0
        %v1225 = vmax.f32 %v1223, 0.0
        %v1226 = vpack.c.bf16 %v1225, %v1224
        %s1227 = scalar_lea.vmem %s4, 80
        %v1228 = vld [vmem:[%s1227] sm:$0xf]
        %v1229 = vld [vmem:[%s1227 + $0x4] sm:$0xf]
        %v1230 = vld [vmem:[%s1227 + $0x8] sm:$0xf]
        %v1231 = vld [vmem:[%s1227 + $0xc] sm:$0xf]
        %v1236 = vunpack.c.l.b16 %v1228
        %v1237 = vunpack.c.l.b16 %v1229
        %v1238 = vunpack.c.l.b16 %v1230
        %v1239 = vunpack.c.l.b16 %v1231
        %v1240 = vpack.c.b16 %v1237, %v1236
        %v1241 = vpack.c.b16 %v1239, %v1238
        %v1245 = vsel %vm677, %v1226, 0
        %1247 = vmatprep.subr.bf16.mxu0 0
        %1248 = vmatpush1.bf16.msra.mxu0 0
        %1249 = vmatprep.subr.bf16.mxu0 0
        %1250 = vmatpush1.bf16.msra.mxu0 0
        %1251 = vmatprep.subr.bf16.mxu0 0
        %1252 = vmatpush1.bf16.msra.mxu0 0
        %1253 = vmatprep.subr.bf16.mxu0 0
        %1254 = vmatpush1.bf16.msra.mxu0 0
        %1255 = vmatprep.subr.bf16.mxu0 0
        %1256 = vmatpush1.bf16.msra.mxu0 0
        %1257 = vmatprep.subr.bf16.mxu0 0
        %1258 = vmatpush1.bf16.msra.mxu0 0
        %1259 = vmatprep.subr.bf16.mxu0 0
        %1260 = vmatpush1.bf16.msra.mxu0 %v1241
        %1261 = vmatprep.subr.bf16.mxu0 0
        %1262 = vmatpush1.bf16.msra.mxu0 %v1240
        %1263 = vmatprep.subr.bf16.mxu0 0
        %1264 = vmatpush2.bf16.msra.mxu0 0
        %1265 = vmatprep.subr.bf16.mxu0 0
        %1266 = vmatpush2.bf16.msra.mxu0 0
        %1267 = vmatprep.subr.bf16.mxu0 0
        %1268 = vmatpush2.bf16.msra.mxu0 0
        %1269 = vmatprep.subr.bf16.mxu0 0
        %1270 = vmatpush2.bf16.msra.mxu0 0
        %1271 = vmatprep.subr.bf16.mxu0 0
        %1272 = vmatpush2.bf16.msra.mxu0 0
        %1273 = vmatprep.subr.bf16.mxu0 0
        %1274 = vmatpush2.bf16.msra.mxu0 0
        %1275 = vmatprep.subr.bf16.mxu0 0
        %1276 = vmatpush2.bf16.msra.mxu0 0
        %1277 = vmatprep.subr.bf16.mxu0 0
        %1278 = vmatpush2.bf16.msra.mxu0 0
        %1279 = vmatprep.mubr.bf16.mxu0 0
        %1280 = vmatmul.mubr.bf16.gmra.mxu0 %v1245
        %v1281 = vpop.f32.mrf.mxu0
        %v1282 = vadd.f32 0.0, %v1281
        %v1283 = vpop.f32.mrf.mxu0
        %v1284 = vpop.f32.mrf.mxu0
        %v1285 = vadd.f32 0.0, %v1284
        %v1286 = vpop.f32.mrf.mxu0
        %1287 = vdwg.mxu0
        %v1288 = vadd.f32 %v1167, %v1282
        %v1289 = vadd.f32 %v1168, %v1285
        %v1290 = vld [vmem:[%s491 + $0x30] sm:$0xf]
        %v1291 = vld [vmem:[%s491 + $0x34] sm:$0xf]
        %v1294 = vunpack.c.l.b16 %v1290
        %v1295 = vunpack.c.l.b16 %v1291
        %v1296 = vpack.c.b16 %v1295, %v1294
        %v1298 = vsel %vm508, %v1296, 0
        %1300 = vmatprep.subr.bf16.mxu0 0
        %1301 = vmatpush1.bf16.msra.mxu0 0
        %1302 = vmatprep.subr.bf16.mxu0 0
        %1303 = vmatpush1.bf16.msra.mxu0 0
        %1304 = vmatprep.subr.bf16.mxu0 0
        %1305 = vmatpush1.bf16.msra.mxu0 0
        %1306 = vmatprep.subr.bf16.mxu0 0
        %1307 = vmatpush1.bf16.msra.mxu0 0
        %1308 = vmatprep.subr.bf16.mxu0 0
        %1309 = vmatpush1.bf16.msra.mxu0 0
        %1310 = vmatprep.subr.bf16.mxu0 0
        %1311 = vmatpush1.bf16.msra.mxu0 0
        %1312 = vmatprep.subr.bf16.mxu0 0
        %1313 = vmatpush1.bf16.msra.mxu0 0
        %1314 = vmatprep.subr.bf16.mxu0 0
        %1315 = vmatpush1.bf16.msra.mxu0 %v506
        %1316 = vmatprep.subr.bf16.mxu0 0
        %1317 = vmatpush2.bf16.msra.mxu0 0
        %1318 = vmatprep.subr.bf16.mxu0 0
        %1319 = vmatpush2.bf16.msra.mxu0 0
        %1320 = vmatprep.subr.bf16.mxu0 0
        %1321 = vmatpush2.bf16.msra.mxu0 0
        %1322 = vmatprep.subr.bf16.mxu0 0
        %1323 = vmatpush2.bf16.msra.mxu0 0
        %1324 = vmatprep.subr.bf16.mxu0 0
        %1325 = vmatpush2.bf16.msra.mxu0 0
        %1326 = vmatprep.subr.bf16.mxu0 0
        %1327 = vmatpush2.bf16.msra.mxu0 0
        %1328 = vmatprep.subr.bf16.mxu0 0
        %1329 = vmatpush2.bf16.msra.mxu0 0
        %1330 = vmatprep.subr.bf16.mxu0 0
        %1331 = vmatpush2.bf16.msra.mxu0 0
        %1332 = vmatprep.mubr.bf16.mxu0 0
        %1333 = vmatmul.mubr.bf16.gmra.mxu0 %v1298
        %v1334 = vpop.f32.mrf.mxu0
        %v1335 = vadd.f32 0.0, %v1334
        %v1336 = vpop.f32.mrf.mxu0
        %v1337 = vpop.f32.mrf.mxu0
        %v1338 = vadd.f32 0.0, %v1337
        %v1339 = vpop.f32.mrf.mxu0
        %1340 = vdwg.mxu0
        %v1341 = vmul.f32 %v1335, %v557
        %v1342 = vmul.f32 %v1338, %v557
        %v1343 = vadd.f32 %v1341, %v564
        %v1344 = vadd.f32 %v1342, %v564
        %v1345 = vmax.f32 %v1343, 0.0
        %v1346 = vmax.f32 %v1344, 0.0
        %v1347 = vld [vmem:[%s1 + $0x60] sm:$0xff]
        %v1348 = vld [vmem:[%s1 + $0x68] sm:$0xff]
        %1350 = vset.pattern.permute.xlu0 0
        %1351 = vperm.xlu0 %1350, %v1347
        %v1352 = vpop.permute.xlu0 %1351
        %1355 = vset.pattern.permute.xlu0 0
        %1356 = vperm.xlu0 %1355, %v1348
        %v1357 = vpop.permute.xlu0 %1356
        %v1359 = vmul.f32 %v1345, %v1352
        %v1360 = vmul.f32 %v1346, %v1357
        %v1361 = vpack.c.bf16 %v1360, %v1359
        %s1362 = scalar_lea.vmem %s4, 96
        %v1363 = vld [vmem:[%s1362] sm:$0xf]
        %v1364 = vld [vmem:[%s1362 + $0x4] sm:$0xf]
        %v1365 = vld [vmem:[%s1362 + $0x8] sm:$0xf]
        %v1366 = vld [vmem:[%s1362 + $0xc] sm:$0xf]
        %v1371 = vunpack.c.l.b16 %v1363
        %v1372 = vunpack.c.l.b16 %v1364
        %v1373 = vunpack.c.l.b16 %v1365
        %v1374 = vunpack.c.l.b16 %v1366
        %v1375 = vpack.c.b16 %v1372, %v1371
        %v1376 = vpack.c.b16 %v1374, %v1373
        %v1380 = vsel %vm677, %v1361, 0
        %1382 = vmatprep.subr.bf16.mxu0 0
        %1383 = vmatpush1.bf16.msra.mxu0 0
        %1384 = vmatprep.subr.bf16.mxu0 0
        %1385 = vmatpush1.bf16.msra.mxu0 0
        %1386 = vmatprep.subr.bf16.mxu0 0
        %1387 = vmatpush1.bf16.msra.mxu0 0
        %1388 = vmatprep.subr.bf16.mxu0 0
        %1389 = vmatpush1.bf16.msra.mxu0 0
        %1390 = vmatprep.subr.bf16.mxu0 0
        %1391 = vmatpush1.bf16.msra.mxu0 0
        %1392 = vmatprep.subr.bf16.mxu0 0
        %1393 = vmatpush1.bf16.msra.mxu0 0
        %1394 = vmatprep.subr.bf16.mxu0 0
        %1395 = vmatpush1.bf16.msra.mxu0 %v1376
        %1396 = vmatprep.subr.bf16.mxu0 0
        %1397 = vmatpush1.bf16.msra.mxu0 %v1375
        %1398 = vmatprep.subr.bf16.mxu0 0
        %1399 = vmatpush2.bf16.msra.mxu0 0
        %1400 = vmatprep.subr.bf16.mxu0 0
        %1401 = vmatpush2.bf16.msra.mxu0 0
        %1402 = vmatprep.subr.bf16.mxu0 0
        %1403 = vmatpush2.bf16.msra.mxu0 0
        %1404 = vmatprep.subr.bf16.mxu0 0
        %1405 = vmatpush2.bf16.msra.mxu0 0
        %1406 = vmatprep.subr.bf16.mxu0 0
        %1407 = vmatpush2.bf16.msra.mxu0 0
        %1408 = vmatprep.subr.bf16.mxu0 0
        %1409 = vmatpush2.bf16.msra.mxu0 0
        %1410 = vmatprep.subr.bf16.mxu0 0
        %1411 = vmatpush2.bf16.msra.mxu0 0
        %1412 = vmatprep.subr.bf16.mxu0 0
        %1413 = vmatpush2.bf16.msra.mxu0 0
        %1414 = vmatprep.mubr.bf16.mxu0 0
        %1415 = vmatmul.mubr.bf16.gmra.mxu0 %v1380
        %v1416 = vpop.f32.mrf.mxu0
        %v1417 = vadd.f32 0.0, %v1416
        %v1418 = vpop.f32.mrf.mxu0
        %v1419 = vpop.f32.mrf.mxu0
        %v1420 = vadd.f32 0.0, %v1419
        %v1421 = vpop.f32.mrf.mxu0
        %1422 = vdwg.mxu0
        %v1423 = vadd.f32 %v1288, %v1417
        %v1424 = vadd.f32 %v1289, %v1420
        %v1425 = vld [vmem:[%s491 + $0x38] sm:$0xf]
        %v1426 = vld [vmem:[%s491 + $0x3c] sm:$0xf]
        %v1429 = vunpack.c.l.b16 %v1425
        %v1430 = vunpack.c.l.b16 %v1426
        %v1431 = vpack.c.b16 %v1430, %v1429
        %v1433 = vsel %vm508, %v1431, 0
        %1435 = vmatprep.subr.bf16.mxu0 0
        %1436 = vmatpush1.bf16.msra.mxu0 0
        %1437 = vmatprep.subr.bf16.mxu0 0
        %1438 = vmatpush1.bf16.msra.mxu0 0
        %1439 = vmatprep.subr.bf16.mxu0 0
        %1440 = vmatpush1.bf16.msra.mxu0 0
        %1441 = vmatprep.subr.bf16.mxu0 0
        %1442 = vmatpush1.bf16.msra.mxu0 0
        %1443 = vmatprep.subr.bf16.mxu0 0
        %1444 = vmatpush1.bf16.msra.mxu0 0
        %1445 = vmatprep.subr.bf16.mxu0 0
        %1446 = vmatpush1.bf16.msra.mxu0 0
        %1447 = vmatprep.subr.bf16.mxu0 0
        %1448 = vmatpush1.bf16.msra.mxu0 0
        %1449 = vmatprep.subr.bf16.mxu0 0
        %1450 = vmatpush1.bf16.msra.mxu0 %v506
        %1451 = vmatprep.subr.bf16.mxu0 0
        %1452 = vmatpush2.bf16.msra.mxu0 0
        %1453 = vmatprep.subr.bf16.mxu0 0
        %1454 = vmatpush2.bf16.msra.mxu0 0
        %1455 = vmatprep.subr.bf16.mxu0 0
        %1456 = vmatpush2.bf16.msra.mxu0 0
        %1457 = vmatprep.subr.bf16.mxu0 0
        %1458 = vmatpush2.bf16.msra.mxu0 0
        %1459 = vmatprep.subr.bf16.mxu0 0
        %1460 = vmatpush2.bf16.msra.mxu0 0
        %1461 = vmatprep.subr.bf16.mxu0 0
        %1462 = vmatpush2.bf16.msra.mxu0 0
        %1463 = vmatprep.subr.bf16.mxu0 0
        %1464 = vmatpush2.bf16.msra.mxu0 0
        %1465 = vmatprep.subr.bf16.mxu0 0
        %1466 = vmatpush2.bf16.msra.mxu0 0
        %1467 = vmatprep.mubr.bf16.mxu0 0
        %1468 = vmatmul.mubr.bf16.gmra.mxu0 %v1433
        %v1469 = vpop.f32.mrf.mxu0
        %v1470 = vadd.f32 0.0, %v1469
        %v1471 = vpop.f32.mrf.mxu0
        %v1472 = vpop.f32.mrf.mxu0
        %v1473 = vadd.f32 0.0, %v1472
        %v1474 = vpop.f32.mrf.mxu0
        %1475 = vdwg.mxu0
        %v1476 = vmul.f32 %v1470, %v557
        %v1477 = vmul.f32 %v1473, %v557
        %v1478 = vadd.f32 %v1476, %v564
        %v1479 = vadd.f32 %v1477, %v564
        %v1480 = vmax.f32 %v1478, 0.0
        %v1481 = vmax.f32 %v1479, 0.0
        %v1482 = vpack.c.bf16 %v1481, %v1480
        %s1483 = scalar_lea.vmem %s4, 112
        %v1484 = vld [vmem:[%s1483] sm:$0xf]
        %v1485 = vld [vmem:[%s1483 + $0x4] sm:$0xf]
        %v1486 = vld [vmem:[%s1483 + $0x8] sm:$0xf]
        %v1487 = vld [vmem:[%s1483 + $0xc] sm:$0xf]
        %v1492 = vunpack.c.l.b16 %v1484
        %v1493 = vunpack.c.l.b16 %v1485
        %v1494 = vunpack.c.l.b16 %v1486
        %v1495 = vunpack.c.l.b16 %v1487
        %v1496 = vpack.c.b16 %v1493, %v1492
        %v1497 = vpack.c.b16 %v1495, %v1494
        %v1501 = vsel %vm677, %v1482, 0
        %1503 = vmatprep.subr.bf16.mxu0 0
        %1504 = vmatpush1.bf16.msra.mxu0 0
        %1505 = vmatprep.subr.bf16.mxu0 0
        %1506 = vmatpush1.bf16.msra.mxu0 0
        %1507 = vmatprep.subr.bf16.mxu0 0
        %1508 = vmatpush1.bf16.msra.mxu0 0
        %1509 = vmatprep.subr.bf16.mxu0 0
        %1510 = vmatpush1.bf16.msra.mxu0 0
        %1511 = vmatprep.subr.bf16.mxu0 0
        %1512 = vmatpush1.bf16.msra.mxu0 0
        %1513 = vmatprep.subr.bf16.mxu0 0
        %1514 = vmatpush1.bf16.msra.mxu0 0
        %1515 = vmatprep.subr.bf16.mxu0 0
        %1516 = vmatpush1.bf16.msra.mxu0 %v1497
        %1517 = vmatprep.subr.bf16.mxu0 0
        %1518 = vmatpush1.bf16.msra.mxu0 %v1496
        %1519 = vmatprep.subr.bf16.mxu0 0
        %1520 = vmatpush2.bf16.msra.mxu0 0
        %1521 = vmatprep.subr.bf16.mxu0 0
        %1522 = vmatpush2.bf16.msra.mxu0 0
        %1523 = vmatprep.subr.bf16.mxu0 0
        %1524 = vmatpush2.bf16.msra.mxu0 0
        %1525 = vmatprep.subr.bf16.mxu0 0
        %1526 = vmatpush2.bf16.msra.mxu0 0
        %1527 = vmatprep.subr.bf16.mxu0 0
        %1528 = vmatpush2.bf16.msra.mxu0 0
        %1529 = vmatprep.subr.bf16.mxu0 0
        %1530 = vmatpush2.bf16.msra.mxu0 0
        %1531 = vmatprep.subr.bf16.mxu0 0
        %1532 = vmatpush2.bf16.msra.mxu0 0
        %1533 = vmatprep.subr.bf16.mxu0 0
        %1534 = vmatpush2.bf16.msra.mxu0 0
        %1535 = vmatprep.mubr.bf16.mxu0 0
        %1536 = vmatmul.mubr.bf16.gmra.mxu0 %v1501
        %v1537 = vpop.f32.mrf.mxu0
        %v1538 = vadd.f32 0.0, %v1537
        %v1539 = vpop.f32.mrf.mxu0
        %v1540 = vpop.f32.mrf.mxu0
        %v1541 = vadd.f32 0.0, %v1540
        %v1542 = vpop.f32.mrf.mxu0
        %1543 = vdwg.mxu0
        %v1544 = vadd.f32 %v1423, %v1538
        %v1545 = vadd.f32 %v1424, %v1541
        %v1546 = vld [vmem:[%s491 + $0x40] sm:$0xf]
        %v1547 = vld [vmem:[%s491 + $0x44] sm:$0xf]
        %v1550 = vunpack.c.l.b16 %v1546
        %v1551 = vunpack.c.l.b16 %v1547
        %v1552 = vpack.c.b16 %v1551, %v1550
        %v1554 = vsel %vm508, %v1552, 0
        %1556 = vmatprep.subr.bf16.mxu0 0
        %1557 = vmatpush1.bf16.msra.mxu0 0
        %1558 = vmatprep.subr.bf16.mxu0 0
        %1559 = vmatpush1.bf16.msra.mxu0 0
        %1560 = vmatprep.subr.bf16.mxu0 0
        %1561 = vmatpush1.bf16.msra.mxu0 0
        %1562 = vmatprep.subr.bf16.mxu0 0
        %1563 = vmatpush1.bf16.msra.mxu0 0
        %1564 = vmatprep.subr.bf16.mxu0 0
        %1565 = vmatpush1.bf16.msra.mxu0 0
        %1566 = vmatprep.subr.bf16.mxu0 0
        %1567 = vmatpush1.bf16.msra.mxu0 0
        %1568 = vmatprep.subr.bf16.mxu0 0
        %1569 = vmatpush1.bf16.msra.mxu0 0
        %1570 = vmatprep.subr.bf16.mxu0 0
        %1571 = vmatpush1.bf16.msra.mxu0 %v506
        %1572 = vmatprep.subr.bf16.mxu0 0
        %1573 = vmatpush2.bf16.msra.mxu0 0
        %1574 = vmatprep.subr.bf16.mxu0 0
        %1575 = vmatpush2.bf16.msra.mxu0 0
        %1576 = vmatprep.subr.bf16.mxu0 0
        %1577 = vmatpush2.bf16.msra.mxu0 0
        %1578 = vmatprep.subr.bf16.mxu0 0
        %1579 = vmatpush2.bf16.msra.mxu0 0
        %1580 = vmatprep.subr.bf16.mxu0 0
        %1581 = vmatpush2.bf16.msra.mxu0 0
        %1582 = vmatprep.subr.bf16.mxu0 0
        %1583 = vmatpush2.bf16.msra.mxu0 0
        %1584 = vmatprep.subr.bf16.mxu0 0
        %1585 = vmatpush2.bf16.msra.mxu0 0
        %1586 = vmatprep.subr.bf16.mxu0 0
        %1587 = vmatpush2.bf16.msra.mxu0 0
        %1588 = vmatprep.mubr.bf16.mxu0 0
        %1589 = vmatmul.mubr.bf16.gmra.mxu0 %v1554
        %v1590 = vpop.f32.mrf.mxu0
        %v1591 = vadd.f32 0.0, %v1590
        %v1592 = vpop.f32.mrf.mxu0
        %v1593 = vpop.f32.mrf.mxu0
        %v1594 = vadd.f32 0.0, %v1593
        %v1595 = vpop.f32.mrf.mxu0
        %1596 = vdwg.mxu0
        %v1597 = vmul.f32 %v1591, %v557
        %v1598 = vmul.f32 %v1594, %v557
        %v1599 = vadd.f32 %v1597, %v564
        %v1600 = vadd.f32 %v1598, %v564
        %v1601 = vmax.f32 %v1599, 0.0
        %v1602 = vmax.f32 %v1600, 0.0
        %v1603 = vpack.c.bf16 %v1602, %v1601
        %s1604 = scalar_lea.vmem %s4, 128
        %v1605 = vld [vmem:[%s1604] sm:$0xf]
        %v1606 = vld [vmem:[%s1604 + $0x4] sm:$0xf]
        %v1607 = vld [vmem:[%s1604 + $0x8] sm:$0xf]
        %v1608 = vld [vmem:[%s1604 + $0xc] sm:$0xf]
        %v1613 = vunpack.c.l.b16 %v1605
        %v1614 = vunpack.c.l.b16 %v1606
        %v1615 = vunpack.c.l.b16 %v1607
        %v1616 = vunpack.c.l.b16 %v1608
        %v1617 = vpack.c.b16 %v1614, %v1613
        %v1618 = vpack.c.b16 %v1616, %v1615
        %v1622 = vsel %vm677, %v1603, 0
        %1624 = vmatprep.subr.bf16.mxu0 0
        %1625 = vmatpush1.bf16.msra.mxu0 0
        %1626 = vmatprep.subr.bf16.mxu0 0
        %1627 = vmatpush1.bf16.msra.mxu0 0
        %1628 = vmatprep.subr.bf16.mxu0 0
        %1629 = vmatpush1.bf16.msra.mxu0 0
        %1630 = vmatprep.subr.bf16.mxu0 0
        %1631 = vmatpush1.bf16.msra.mxu0 0
        %1632 = vmatprep.subr.bf16.mxu0 0
        %1633 = vmatpush1.bf16.msra.mxu0 0
        %1634 = vmatprep.subr.bf16.mxu0 0
        %1635 = vmatpush1.bf16.msra.mxu0 0
        %1636 = vmatprep.subr.bf16.mxu0 0
        %1637 = vmatpush1.bf16.msra.mxu0 %v1618
        %1638 = vmatprep.subr.bf16.mxu0 0
        %1639 = vmatpush1.bf16.msra.mxu0 %v1617
        %1640 = vmatprep.subr.bf16.mxu0 0
        %1641 = vmatpush2.bf16.msra.mxu0 0
        %1642 = vmatprep.subr.bf16.mxu0 0
        %1643 = vmatpush2.bf16.msra.mxu0 0
        %1644 = vmatprep.subr.bf16.mxu0 0
        %1645 = vmatpush2.bf16.msra.mxu0 0
        %1646 = vmatprep.subr.bf16.mxu0 0
        %1647 = vmatpush2.bf16.msra.mxu0 0
        %1648 = vmatprep.subr.bf16.mxu0 0
        %1649 = vmatpush2.bf16.msra.mxu0 0
        %1650 = vmatprep.subr.bf16.mxu0 0
        %1651 = vmatpush2.bf16.msra.mxu0 0
        %1652 = vmatprep.subr.bf16.mxu0 0
        %1653 = vmatpush2.bf16.msra.mxu0 0
        %1654 = vmatprep.subr.bf16.mxu0 0
        %1655 = vmatpush2.bf16.msra.mxu0 0
        %1656 = vmatprep.mubr.bf16.mxu0 0
        %1657 = vmatmul.mubr.bf16.gmra.mxu0 %v1622
        %v1658 = vpop.f32.mrf.mxu0
        %v1659 = vadd.f32 0.0, %v1658
        %v1660 = vpop.f32.mrf.mxu0
        %v1661 = vpop.f32.mrf.mxu0
        %v1662 = vadd.f32 0.0, %v1661
        %v1663 = vpop.f32.mrf.mxu0
        %1664 = vdwg.mxu0
        %v1665 = vadd.f32 %v1544, %v1659
        %v1666 = vadd.f32 %v1545, %v1662
        %v1667 = vld [vmem:[%s5] sm:$0x1]
        %v1668 = vlaneseq
        %v1669 = vshrl.u32 %v1668, 7
        %v1670 = vsub.s32 0, %v1669
        %v1671 = vrot.slane %v1667, %v1670
        %v1672 = vmul.f32 %v1665, %v1671
        %v1673 = vmul.f32 %v1666, %v1671
        %v1674 = vld [vmem:[%s5 + $0x1] sm:$0x1]
        %v1675 = vlaneseq
        %v1676 = vshrl.u32 %v1675, 7
        %v1677 = vsub.s32 0, %v1676
        %v1678 = vrot.slane %v1674, %v1677
        %v1679 = vadd.f32 %v1672, %v1678
        %v1680 = vadd.f32 %v1673, %v1678
        %v1681 = vmax.f32 %v1679, 0.0
        %v1682 = vmax.f32 %v1680, 0.0
        %v1683 = vsel %vm677, %v1681, 0.0
        %v1684 = vsel %vm677, %v1682, 0.0
        %v1685 = vadd.f32 %v1683, %v1684
        %v1686 = vrot.slane %v1685, 4
        %v1687 = vadd.f32 %v1685, %v1686
        %v1688 = vrot.slane %v1687, 2
        %v1689 = vadd.f32 %v1687, %v1688
        %v1690 = vrot.slane %v1689, 1
        %v1691 = vadd.f32 %v1689, %v1690
        %v1692 = vrcp.pop 16.0
        %v1693 = vmul.f32 %v1691, %v1692
        %v1694 = vpack.c.bf16 %v1693, %v1693
        %v1695 = vld [vmem:[%s6] sm:$0xf]
        %v1696 = vld [vmem:[%s6 + $0x4] sm:$0xf]
        %v1697 = vld [vmem:[%s6 + $0x8] sm:$0xf]
        %v1698 = vld [vmem:[%s6 + $0xc] sm:$0xf]
        %v1699 = vld [vmem:[%s7] sm:$0x1]
        %v1704 = vunpack.c.l.b16 %v1695
        %v1705 = vunpack.c.l.b16 %v1696
        %v1706 = vunpack.c.l.b16 %v1697
        %v1707 = vunpack.c.l.b16 %v1698
        %v1708 = vpack.c.b16 %v1705, %v1704
        %v1709 = vpack.c.b16 %v1707, %v1706
        %v1713 = vsel %vm677, %v1694, 0
        %1715 = vmatprep.subr.bf16.mxu0 0
        %1716 = vmatpush1.bf16.msra.mxu0 0
        %1717 = vmatprep.subr.bf16.mxu0 0
        %1718 = vmatpush1.bf16.msra.mxu0 0
        %1719 = vmatprep.subr.bf16.mxu0 0
        %1720 = vmatpush1.bf16.msra.mxu0 0
        %1721 = vmatprep.subr.bf16.mxu0 0
        %1722 = vmatpush1.bf16.msra.mxu0 0
        %1723 = vmatprep.subr.bf16.mxu0 0
        %1724 = vmatpush1.bf16.msra.mxu0 0
        %1725 = vmatprep.subr.bf16.mxu0 0
        %1726 = vmatpush1.bf16.msra.mxu0 0
        %1727 = vmatprep.subr.bf16.mxu0 0
        %1728 = vmatpush1.bf16.msra.mxu0 %v1709
        %1729 = vmatprep.subr.bf16.mxu0 0
        %1730 = vmatpush1.bf16.msra.mxu0 %v1708
        %1731 = vmatprep.subr.bf16.mxu0 0
        %1732 = vmatpush2.bf16.msra.mxu0 0
        %1733 = vmatprep.subr.bf16.mxu0 0
        %1734 = vmatpush2.bf16.msra.mxu0 0
        %1735 = vmatprep.subr.bf16.mxu0 0
        %1736 = vmatpush2.bf16.msra.mxu0 0
        %1737 = vmatprep.subr.bf16.mxu0 0
        %1738 = vmatpush2.bf16.msra.mxu0 0
        %1739 = vmatprep.subr.bf16.mxu0 0
        %1740 = vmatpush2.bf16.msra.mxu0 0
        %1741 = vmatprep.subr.bf16.mxu0 0
        %1742 = vmatpush2.bf16.msra.mxu0 0
        %1743 = vmatprep.subr.bf16.mxu0 0
        %1744 = vmatpush2.bf16.msra.mxu0 0
        %1745 = vmatprep.subr.bf16.mxu0 0
        %1746 = vmatpush2.bf16.msra.mxu0 0
        %1747 = vmatprep.mubr.bf16.mxu0 0
        %1748 = vmatmul.mubr.bf16.gmra.mxu0 %v1713
        %v1749 = vpop.f32.mrf.mxu0
        %v1750 = vadd.f32 %v1699, %v1749
        %v1751 = vpop.f32.mrf.mxu0
        %v1752 = vpop.f32.mrf.mxu0
        %v1753 = vpop.f32.mrf.mxu0
        %1754 = vdwg.mxu0
        %v1755 = vmax.f32 %v1750, 0.0
        %v1756 = vpack.c.bf16 %v1755, %v1755
        %v1757 = vld [vmem:[%s8] sm:$0x3]
        %v1758 = vld [vmem:[%s9] sm:$0x1]
        %vm1759 = vcmask 31744
        %v1761 = vsel %vm1759, %v1756, 0
        %vm1763 = vcmask 1041408
        %v1765 = vsel %vm1763, %v1757, 0
        %1767 = vmatprep.subr.bf16.mxu0 0
        %1768 = vmatpush1.bf16.msra.mxu0 0
        %1769 = vmatprep.subr.bf16.mxu0 0
        %1770 = vmatpush1.bf16.msra.mxu0 0
        %1771 = vmatprep.subr.bf16.mxu0 0
        %1772 = vmatpush1.bf16.msra.mxu0 0
        %1773 = vmatprep.subr.bf16.mxu0 0
        %1774 = vmatpush1.bf16.msra.mxu0 0
        %1775 = vmatprep.subr.bf16.mxu0 0
        %1776 = vmatpush1.bf16.msra.mxu0 0
        %1777 = vmatprep.subr.bf16.mxu0 0
        %1778 = vmatpush1.bf16.msra.mxu0 0
        %1779 = vmatprep.subr.bf16.mxu0 0
        %1780 = vmatpush1.bf16.msra.mxu0 0
        %1781 = vmatprep.subr.bf16.mxu0 0
        %1782 = vmatpush1.bf16.msra.mxu0 %v1765
        %1783 = vmatprep.subr.bf16.mxu0 0
        %1784 = vmatpush2.bf16.msra.mxu0 0
        %1785 = vmatprep.subr.bf16.mxu0 0
        %1786 = vmatpush2.bf16.msra.mxu0 0
        %1787 = vmatprep.subr.bf16.mxu0 0
        %1788 = vmatpush2.bf16.msra.mxu0 0
        %1789 = vmatprep.subr.bf16.mxu0 0
        %1790 = vmatpush2.bf16.msra.mxu0 0
        %1791 = vmatprep.subr.bf16.mxu0 0
        %1792 = vmatpush2.bf16.msra.mxu0 0
        %1793 = vmatprep.subr.bf16.mxu0 0
        %1794 = vmatpush2.bf16.msra.mxu0 0
        %1795 = vmatprep.subr.bf16.mxu0 0
        %1796 = vmatpush2.bf16.msra.mxu0 0
        %1797 = vmatprep.subr.bf16.mxu0 0
        %1798 = vmatpush2.bf16.msra.mxu0 0
        %1799 = vmatprep.mubr.bf16.mxu0 0
        %1800 = vmatmul.mubr.bf16.gmra.mxu0 %v1761
        %v1801 = vpop.f32.mrf.mxu0
        %v1802 = vadd.f32 %v1758, %v1801
        %v1803 = vpop.f32.mrf.mxu0
        %v1804 = vpop.f32.mrf.mxu0
        %v1805 = vpop.f32.mrf.mxu0
        %1806 = vdwg.mxu0
        %v1807 = vxor.u32 %v1802, 2147483648
        %v1808 = vmul.f32 %v1807, 1.442695
        %v1809 = vpow.pop %v1808
        %v1810 = vadd.f32 %v1809, 1.0
        %v1811 = vrcp.pop %v1810
        %v1812 = vmul.f32 1.0, %v1811
        %v1813 = vlaneseq
        %v1814 = vshrl.u32 %v1813, 7
        %v1815 = vsub.s32 0, %v1814
        %v1816 = vrot.slane %v1812, %v1815
        %v1817 = vmul.f32 %v1681, %v1816
        %v1818 = vmul.f32 %v1682, %v1816
        %v1819 = vpack.c.bf16 %v1818, %v1817
        %v1820 = vld [vmem:[%s10] sm:$0xf]
        %v1821 = vld [vmem:[%s10 + $0x4] sm:$0xf]
        %v1822 = vld [vmem:[%s10 + $0x8] sm:$0xf]
        %v1823 = vld [vmem:[%s10 + $0xc] sm:$0xf]
        %v1828 = vunpack.c.l.b16 %v1820
        %v1829 = vunpack.c.l.b16 %v1821
        %v1830 = vunpack.c.l.b16 %v1822
        %v1831 = vunpack.c.l.b16 %v1823
        %v1832 = vpack.c.b16 %v1829, %v1828
        %v1833 = vpack.c.b16 %v1831, %v1830
        %v1837 = vsel %vm677, %v1819, 0
        %1839 = vmatprep.subr.bf16.mxu0 0
        %1840 = vmatpush1.bf16.msra.mxu0 0
        %1841 = vmatprep.subr.bf16.mxu0 0
        %1842 = vmatpush1.bf16.msra.mxu0 0
        %1843 = vmatprep.subr.bf16.mxu0 0
        %1844 = vmatpush1.bf16.msra.mxu0 0
        %1845 = vmatprep.subr.bf16.mxu0 0
        %1846 = vmatpush1.bf16.msra.mxu0 0
        %1847 = vmatprep.subr.bf16.mxu0 0
        %1848 = vmatpush1.bf16.msra.mxu0 0
        %1849 = vmatprep.subr.bf16.mxu0 0
        %1850 = vmatpush1.bf16.msra.mxu0 0
        %1851 = vmatprep.subr.bf16.mxu0 0
        %1852 = vmatpush1.bf16.msra.mxu0 %v1833
        %1853 = vmatprep.subr.bf16.mxu0 0
        %1854 = vmatpush1.bf16.msra.mxu0 %v1832
        %1855 = vmatprep.subr.bf16.mxu0 0
        %1856 = vmatpush2.bf16.msra.mxu0 0
        %1857 = vmatprep.subr.bf16.mxu0 0
        %1858 = vmatpush2.bf16.msra.mxu0 0
        %1859 = vmatprep.subr.bf16.mxu0 0
        %1860 = vmatpush2.bf16.msra.mxu0 0
        %1861 = vmatprep.subr.bf16.mxu0 0
        %1862 = vmatpush2.bf16.msra.mxu0 0
        %1863 = vmatprep.subr.bf16.mxu0 0
        %1864 = vmatpush2.bf16.msra.mxu0 0
        %1865 = vmatprep.subr.bf16.mxu0 0
        %1866 = vmatpush2.bf16.msra.mxu0 0
        %1867 = vmatprep.subr.bf16.mxu0 0
        %1868 = vmatpush2.bf16.msra.mxu0 0
        %1869 = vmatprep.subr.bf16.mxu0 0
        %1870 = vmatpush2.bf16.msra.mxu0 0
        %1871 = vmatprep.mubr.bf16.mxu0 0
        %1872 = vmatmul.mubr.bf16.gmra.mxu0 %v1837
        %v1873 = vpop.f32.mrf.mxu0
        %v1874 = vadd.f32 0.0, %v1873
        %v1875 = vpop.f32.mrf.mxu0
        %v1876 = vpop.f32.mrf.mxu0
        %v1877 = vadd.f32 0.0, %v1876
        %v1878 = vpop.f32.mrf.mxu0
        %1879 = vdwg.mxu0
        %v1880 = vld [vmem:[%s11] sm:$0x1]
        %v1881 = vlaneseq
        %v1882 = vshrl.u32 %v1881, 7
        %v1883 = vsub.s32 0, %v1882
        %v1884 = vrot.slane %v1880, %v1883
        %v1885 = vmul.f32 %v1874, %v1884
        %v1886 = vmul.f32 %v1877, %v1884
        %v1887 = vld [vmem:[%s11 + $0x1] sm:$0x1]
        %v1888 = vlaneseq
        %v1889 = vshrl.u32 %v1888, 7
        %v1890 = vsub.s32 0, %v1889
        %v1891 = vrot.slane %v1887, %v1890
        %v1892 = vadd.f32 %v1885, %v1891
        %v1893 = vadd.f32 %v1886, %v1891
        %v1894 = vld [vmem:[%s12] sm:$0xf]
        %v1895 = vld [vmem:[%s12 + $0x4] sm:$0xf]
        %v1898 = vunpack.c.l.b16 %v1894
        %v1899 = vunpack.c.l.b16 %v1895
        %v1900 = vpack.c.b16 %v1899, %v1898
        %1902 = vmatprep.subr.bf16.mxu0 0
        %1903 = vmatpush1.bf16.msra.mxu0 0
        %1904 = vmatprep.subr.bf16.mxu0 0
        %1905 = vmatpush1.bf16.msra.mxu0 0
        %1906 = vmatprep.subr.bf16.mxu0 0
        %1907 = vmatpush1.bf16.msra.mxu0 0
        %1908 = vmatprep.subr.bf16.mxu0 0
        %1909 = vmatpush1.bf16.msra.mxu0 0
        %1910 = vmatprep.subr.bf16.mxu0 0
        %1911 = vmatpush1.bf16.msra.mxu0 0
        %1912 = vmatprep.subr.bf16.mxu0 0
        %1913 = vmatpush1.bf16.msra.mxu0 0
        %1914 = vmatprep.subr.bf16.mxu0 0
        %1915 = vmatpush1.bf16.msra.mxu0 0
        %1916 = vmatprep.subr.bf16.mxu0 0
        %1917 = vmatpush1.bf16.msra.mxu0 %v1900
        %1918 = vmatprep.subr.bf16.mxu0 0
        %1919 = vmatpush2.bf16.msra.mxu0 0
        %1920 = vmatprep.subr.bf16.mxu0 0
        %1921 = vmatpush2.bf16.msra.mxu0 0
        %1922 = vmatprep.subr.bf16.mxu0 0
        %1923 = vmatpush2.bf16.msra.mxu0 0
        %1924 = vmatprep.subr.bf16.mxu0 0
        %1925 = vmatpush2.bf16.msra.mxu0 0
        %1926 = vmatprep.subr.bf16.mxu0 0
        %1927 = vmatpush2.bf16.msra.mxu0 0
        %1928 = vmatprep.subr.bf16.mxu0 0
        %1929 = vmatpush2.bf16.msra.mxu0 0
        %1930 = vmatprep.subr.bf16.mxu0 0
        %1931 = vmatpush2.bf16.msra.mxu0 0
        %1932 = vmatprep.subr.bf16.mxu0 0
        %1933 = vmatpush2.bf16.msra.mxu0 0
        %1934 = vmatprep.mubr.bf16.mxu0 0
        %1935 = vmatmul.mubr.bf16.gmra.mxu0 %v1056
        %v1936 = vpop.f32.mrf.mxu0
        %v1937 = vadd.f32 0.0, %v1936
        %v1938 = vpop.f32.mrf.mxu0
        %v1939 = vpop.f32.mrf.mxu0
        %v1940 = vadd.f32 0.0, %v1939
        %v1941 = vpop.f32.mrf.mxu0
        %1942 = vdwg.mxu0
        %v1943 = vld [vmem:[%s13] sm:$0x1]
        %v1944 = vlaneseq
        %v1945 = vshrl.u32 %v1944, 7
        %v1946 = vsub.s32 0, %v1945
        %v1947 = vrot.slane %v1943, %v1946
        %v1948 = vmul.f32 %v1937, %v1947
        %v1949 = vmul.f32 %v1940, %v1947
        %v1950 = vld [vmem:[%s13 + $0x1] sm:$0x1]
        %v1951 = vlaneseq
        %v1952 = vshrl.u32 %v1951, 7
        %v1953 = vsub.s32 0, %v1952
        %v1954 = vrot.slane %v1950, %v1953
        %v1955 = vadd.f32 %v1948, %v1954
        %v1956 = vadd.f32 %v1949, %v1954
        %v1957 = vadd.f32 %v1892, %v1955
        %v1958 = vadd.f32 %v1893, %v1956
        %v1959 = vmax.f32 %v1957, 0.0
        %v1960 = vmax.f32 %v1958, 0.0
        %v1961 = vsel %vm677, %v1959, 0.0
        %v1962 = vsel %vm677, %v1960, 0.0
        %v1963 = vadd.f32 %v1961, %v1962
        %v1964 = vrot.slane %v1963, 4
        %v1965 = vadd.f32 %v1963, %v1964
        %v1966 = vrot.slane %v1965, 2
        %v1967 = vadd.f32 %v1965, %v1966
        %v1968 = vrot.slane %v1967, 1
        %v1969 = vadd.f32 %v1967, %v1968
        %v1970 = vmul.f32 %v1969, %v1692
        %v1971 = vld [vmem:[%s14 + $0x2] sm:$0x1]
        %v1972 = vsub.f32 %v1970, %v1971
        %v1973 = vld [vmem:[%s14 + $0x3] sm:$0x1]
        %v1974 = vadd.f32 %v1973, 1e-05
        %v1975 = vrsqrt.pop %v1974
        %v1976 = vmul.f32 %v1972, %v1975
        %v1977 = vld [vmem:[%s14] sm:$0x1]
        %v1978 = vmul.f32 %v1976, %v1977
        %v1979 = vld [vmem:[%s14 + $0x1] sm:$0x1]
        %v1980 = vadd.f32 %v1978, %v1979
        %v1981 = vmul.f32 %v1980, %v1980
        %vm1982 = vcmask 253952
        %v1983 = vsel %vm1982, %v1981, 0.0
        %1984 = vadd.xlane.f32.xlu0 %v1983
        %v1985 = vpop.xlane.xlu0 %1984
        %v1986 = vrsqrt.pop %v1985
        %v1987 = vmul.f32 %v1985, %v1986
        %vm1988 = vcmp.eq.f32.partialorder %v1985, inf
        %v1989 = vsel %vm1988, %v1985, %v1987
        %vm1990 = vcmp.eq.f32.partialorder %v1985, 0.0
        %v1991 = vand.u32 %v1985, 2147483648
        %v1992 = vsel %vm1990, %v1991, %v1989
        %v1993 = vmax.f32 %v1992, 1e-12
        %v1994 = vrcp.pop %v1993
        %v1995 = vmul.f32 %v1980, %v1994
        %1996 = vst.msk [vmem:[%s486] sm:$0x1] %vm1982, %v1995
        %s1997 = sand.u32 %s357, 1
        %s1998 = scalar_lea.sflag [#allocation3], %s1997
        %s1999 = sand.u32 %s357, 1
        %s2000 = scalar_lea.vmem [#allocation2], %s1999
        // Predicated region
        $region81: #{_lambda_.5} parent=79 // pred_check
          %p2001 = pneg %p367
        $region82: #{_lambda_.5} parent=79 // pred_check_branch
          %2003 = sbr.rel (%p2001) target = $region84
        $region83: #{_lambda_.5} parent=79 // pred_region
          %s2005 = ssub.s32 16, 16
          %2006 = vsyncadd %s1998, %s2005
          %s2007 = smul.addr %s29, 16
          %s2008 = scalar_lea.hbm %s15, %s2007
          %s2010 = sshll.u32 %s2000, 4
          %s2011 = int_to_ptr.vmem [resolvable:$true] %s2010
          %2013 = dma.vmem_to_hbm [thread:$0]  %s2011, 16, %s2008, %s1998
        $region84: #{_lambda_.5} parent=79 // pred_fallthru
          _
      $region80: #{_lambda_.5} parent=5 // pred_fallthru
        _
      %p2014 = scmp.le.s32.totalorder 2, %s24
      // Predicated region
      $region85: #{_lambda_.5} parent=5 // pred_check
        %p2015 = pneg %p2014
      $region86: #{_lambda_.5} parent=5 // pred_check_branch
        %2017 = sbr.rel (%p2015) target = $region88
      $region87: #{_lambda_.5} parent=5 // pred_region
        %s2018 = ssub.s32 %s24, 2
        // Predicated region
        $region89: #{_lambda_.5} parent=87 // pred_check
          %p2019 = pneg %p373
        $region90: #{_lambda_.5} parent=87 // pred_check_branch
          %2021 = sbr.rel (%p2019) target = $region92
        $region91: #{_lambda_.5} parent=87 // pred_region
          %s2022 = sand.u32 %s358, 1
          %s2023 = scalar_lea.sflag [#allocation3], %s2022
          %s2024 = sand.u32 %s358, 1
          %s2025 = scalar_lea.vmem [#allocation2], %s2024
          %2026 = dma.done %s2023, 16
        $region92: #{_lambda_.5} parent=87 // pred_fallthru
          _
      $region88: #{_lambda_.5} parent=5 // pred_fallthru
        _
    $region6: #{_lambda_.5} parent=1 // loop_footer
      %s28 = sadd.s32 1, %s24
    $region7: #{_lambda_.5} parent=1 // loop_footer_branch
      %23 = sbr.rel target = $region3
    $region8: #{_lambda_.5} parent=1 // loop_exit
      _
    %2027 = vsyncpa [#allocation3], 1
    %s2028 = scalar_lea.sflag [#allocation3], 1
    %2029 = vsyncpa %s2028, 1

</llo_original>
